<compile_context>
chip_gen: v7x
topology: tpu7x:2x2x1
jax: 0.10.0
libtpu: 0.0.40
codegen_flags: <defaults>
</compile_context>

<pallas_src>
import numpy as np
import jax
import jax.numpy as jnp
from jax.experimental import pallas as pl
from jax.experimental.pallas import tpu as pltpu

_LANE = 128
_TAPS = tuple((kh, kw) for kh in range(3) for kw in range(3))


def _round_up(x, m):
    return (x + m - 1) // m * m


def _avg_pool_2x2(v, H, W):
    """2x2 average pool of a spatially-flattened (H*W, C) f32 map -> (H//2 * W//2, C)."""
    Hh, Wh, C = H // 2, W // 2, v.shape[-1]
    v = v.reshape(H * Wh, 2 * C)
    v = v[:, :C] + v[:, C:]              # sum horizontally adjacent pixels (lane-aligned slices)
    v = v.reshape(Hh, 2, Wh, C)
    v = v[:, 0] + v[:, 1]                # sum vertically adjacent pixels
    return 0.25 * v.reshape(Hh * Wh, C)


# ------------------------------ Pallas kernel -------------------------------

def _resblock_kernel(xpad_ref, w1_ref, w2_ref, wsk_ref, mod_ref, o_ref, h1_ref):
    """Fused ResBlock forward for one batch element.

    xpad_ref : (1, H+2, W+2, Cp)  bf16  zero-padded input (spatial halo + channel pad)
    w1_ref   : (9, Cp,  Cop)      bf16  conv1 taps, tap index = kh*3 + kw
    w2_ref   : (9, Cop, Cop)      bf16  conv2 taps
    wsk_ref  : (Cp, Cop)          bf16  1x1 skip conv
    mod_ref  : (1, 4, Cop)        f32   rows = (weight1, weight2, bias1, bias2)
    o_ref    : (1, Hh*Wh, Cop)    f32   output
    h1_ref   : (H+2, W+2, Cop)    bf16  VMEM scratch (zero-padded conv1 activation)
    """
    Hp, Wp, Cp = xpad_ref.shape[1], xpad_ref.shape[2], xpad_ref.shape[3]
    H, W = Hp - 2, Wp - 2
    Cop = w1_ref.shape[2]
    HW = H * W

    # ---- conv1 (3x3, pad=1): 9 shifted-tap bf16 matmuls, f32 accumulation ----
    acc1 = jnp.zeros((HW, Cop), jnp.float32)
    for t, (kh, kw) in enumerate(_TAPS):
        xt = xpad_ref[0, kh:kh + H, kw:kw + W, :].reshape(HW, Cp)
        acc1 = acc1 + jnp.dot(xt, w1_ref[t], preferred_element_type=jnp.float32)

    # class-conditional modulation + leaky_relu(0.2)
    h1 = acc1 * mod_ref[0, 0:1, :] + mod_ref[0, 2:3, :]
    h1 = jnp.maximum(h1, 0.2 * h1)

    # stage h1 into a zero-padded bf16 VMEM scratch so conv2's im2col stays in-kernel
    h1_ref[...] = jnp.zeros_like(h1_ref)
    h1_ref[1:H + 1, 1:W + 1, :] = h1.astype(h1_ref.dtype).reshape(H, W, Cop)

    # ---- conv2 (3x3, pad=1): 9 shifted-tap bf16 matmuls, f32 accumulation ----
    acc2 = jnp.zeros((HW, Cop), jnp.float32)
    for t, (kh, kw) in enumerate(_TAPS):
        ht = h1_ref[kh:kh + H, kw:kw + W, :].reshape(HW, Cop)
        acc2 = acc2 + jnp.dot(ht, w2_ref[t], preferred_element_type=jnp.float32)

    # ---- avg_pool2d(2): VPU reshape-sum; pooling commutes with the per-channel
    #      modulation and the 1x1 skip conv, so pool BEFORE the skip matmul ----
    pc2 = _avg_pool_2x2(acc2, H, W)                                         # (Hh*Wh, Cop)
    px = _avg_pool_2x2(
        xpad_ref[0, 1:H + 1, 1:W + 1, :].astype(jnp.float32).reshape(HW, Cp), H, W)
    skip = jnp.dot(px.astype(jnp.bfloat16), wsk_ref[...],
                   preferred_element_type=jnp.float32)                      # (Hh*Wh, Cop)

    out = pc2 * mod_ref[0, 1:2, :] + mod_ref[0, 3:4, :] + skip
    o_ref[0] = jnp.maximum(out, 0.2 * out)                                  # leaky_relu(0.2)


# -------------------------------- JAX glue -----------------------------------

def spectral_normalize(w, u, bound=False):
    """Single power-iteration spectral norm, identical to the PyTorch SpectralNorm hook."""
    co = w.shape[0]
    wmat = w.reshape(co, -1)
    v = wmat.T @ u
    v = v / jnp.linalg.norm(v)
    u2 = wmat @ v
    u2 = u2 / jnp.linalg.norm(u2)
    sigma = u2 @ wmat @ v
    if bound:
        return w / (sigma + 1e-6) * jnp.minimum(sigma, 1.0)
    return w / sigma


def resblock_forward(x_nchw, class_id, params):
    """Pallas implementation of ResBlock(in_ch, out_ch, n_class, downsample=True).forward."""
    N, Cin, H, W = x_nchw.shape
    Co = params['w2_orig'].shape[0]
    Cp = _round_up(Cin, _LANE)
    Cop = _round_up(Co, _LANE)
    Hh, Wh = H // 2, W // 2
    HW = H * W

    # NCHW -> NHWC, zero-pad spatially (conv padding=1) and on channels (lane alignment)
    x = jnp.transpose(x_nchw, (0, 2, 3, 1)).astype(jnp.float32)
    xpad = jnp.pad(x, ((0, 0), (1, 1), (1, 1), (0, Cp - Cin))).astype(jnp.bfloat16)

    # spectral-norm'd weights (forward_pre_hook semantics)
    w1 = spectral_normalize(params['w1_orig'], params['u1'], bound=False)
    w2 = spectral_normalize(params['w2_orig'], params['u2'], bound=True)
    wsk = spectral_normalize(params['wskip_orig'], params['uskip'], bound=False)

    # (Co, Cin, 3, 3) OIHW -> tap-major (9, Cin, Co), pad channels, cast to bf16
    w1t = jnp.transpose(w1, (2, 3, 1, 0)).reshape(9, Cin, Co)
    w1t = jnp.pad(w1t, ((0, 0), (0, Cp - Cin), (0, Cop - Co))).astype(jnp.bfloat16)
    w2t = jnp.transpose(w2, (2, 3, 1, 0)).reshape(9, Co, Co)
    w2t = jnp.pad(w2t, ((0, 0), (0, Cop - Co), (0, Cop - Co))).astype(jnp.bfloat16)
    wskm = jnp.transpose(wsk[:, :, 0, 0], (1, 0))
    wskm = jnp.pad(wskm, ((0, Cp - Cin), (0, Cop - Co))).astype(jnp.bfloat16)

    # class embedding lookup; chunk(4, dim=1) order: weight1, weight2, bias1, bias2
    embed = params['class_embed'][class_id]                        # (N, 4*Co)
    mod = embed.reshape(N, 4, Co).astype(jnp.float32)
    mod = jnp.pad(mod, ((0, 0), (0, 0), (0, Cop - Co)))            # (N, 4, Cop)

    flops = 2 * N * (HW * 9 * Cp * Cop + HW * 9 * Cop * Cop + (HW // 4) * Cp * Cop)
    bytes_accessed = (xpad.size * 2 + w1t.size * 2 + w2t.size * 2 + wskm.size * 2
                      + mod.size * 4 + N * Hh * Wh * Cop * 4)

    out = pl.pallas_call(
        _resblock_kernel,
        out_shape=jax.ShapeDtypeStruct((N, Hh * Wh, Cop), jnp.float32),
        grid=(N,),
        in_specs=[
            pl.BlockSpec((1, H + 2, W + 2, Cp), lambda n: (n, 0, 0, 0)),
            pl.BlockSpec((9, Cp, Cop), lambda n: (0, 0, 0)),
            pl.BlockSpec((9, Cop, Cop), lambda n: (0, 0, 0)),
            pl.BlockSpec((Cp, Cop), lambda n: (0, 0)),
            pl.BlockSpec((1, 4, Cop), lambda n: (n, 0, 0)),
        ],
        out_specs=pl.BlockSpec((1, Hh * Wh, Cop), lambda n: (n, 0, 0)),
        scratch_shapes=[pltpu.VMEM((H + 2, W + 2, Cop), jnp.bfloat16)],
        compiler_params=pltpu.CompilerParams(
            dimension_semantics=("parallel",),
            vmem_limit_bytes=48 * 1024 * 1024,
        ),
        cost_estimate=pl.CostEstimate(flops=int(flops), transcendentals=0,
                                      bytes_accessed=int(bytes_accessed)),
    )(xpad, w1t, w2t, wskm, mod)

    out = out[:, :, :Co].reshape(N, Hh, Wh, Co)
    return jnp.transpose(out, (0, 3, 1, 2))                        # NHWC -> NCHW


# ---------------------------- pure-JAX reference ------------------------------

def resblock_reference(x_nchw, class_id, params):
    w1 = spectral_normalize(params['w1_orig'], params['u1'], bound=False)
    w2 = spectral_normalize(params['w2_orig'], params['u2'], bound=True)
    wsk = spectral_normalize(params['wskip_orig'], params['uskip'], bound=False)
    dn = ('NCHW', 'OIHW', 'NCHW')
    Co = w1.shape[0]
    embed = params['class_embed'][class_id]
    w1m = embed[:, 0 * Co:1 * Co].reshape(-1, Co, 1, 1)
    w2m = embed[:, 1 * Co:2 * Co].reshape(-1, Co, 1, 1)
    b1m = embed[:, 2 * Co:3 * Co].reshape(-1, Co, 1, 1)
    b2m = embed[:, 3 * Co:4 * Co].reshape(-1, Co, 1, 1)
    out = jax.lax.conv_general_dilated(x_nchw, w1, (1, 1), ((1, 1), (1, 1)), dimension_numbers=dn)
    out = w1m * out + b1m
    out = jnp.where(out >= 0, out, 0.2 * out)
    out = jax.lax.conv_general_dilated(out, w2, (1, 1), ((1, 1), (1, 1)), dimension_numbers=dn)
    out = w2m * out + b2m
    skip = jax.lax.conv_general_dilated(x_nchw, wsk, (1, 1), ((0, 0), (0, 0)), dimension_numbers=dn)
    out = out + skip
    N, C, H, W = out.shape
    out = out.reshape(N, C, H // 2, 2, W // 2, 2).mean(axis=(3, 5))
    return jnp.where(out >= 0, out, 0.2 * out)


# ----------------------------------- main -------------------------------------

if __name__ == "__main__":
    key = jax.random.PRNGKey(0)
    N, Cin, Co, H, W, n_class = 2, 4, 8, 16, 16, 10
    ks = jax.random.split(key, 8)

    # Synthetic parameters matching the module's __init__:
    #   conv1: N(0,1); conv2: N(0,1e-10) with bound=True; skip 1x1: N(0,1); no conv biases
    #   (n_class is not None -> bias=False). class_embed: first 2*Co cols = 1, rest = 0.
    params = {
        'w1_orig': jax.random.normal(ks[0], (Co, Cin, 3, 3), jnp.float32),
        'u1': jax.random.normal(ks[1], (Co,), jnp.float32),
        'w2_orig': jax.random.normal(ks[2], (Co, Co, 3, 3), jnp.float32) * 1e-10,
        'u2': jax.random.normal(ks[3], (Co,), jnp.float32),
        'wskip_orig': jax.random.normal(ks[4], (Co, Cin, 1, 1), jnp.float32),
        'uskip': jax.random.normal(ks[5], (Co,), jnp.float32),
        'class_embed': jnp.concatenate(
            [jnp.ones((n_class, 2 * Co), jnp.float32),
             jnp.zeros((n_class, 2 * Co), jnp.float32)], axis=1),
    }

    x = jax.random.normal(ks[6], (N, Cin, H, W), jnp.float32)
    class_id = jax.random.randint(ks[7], (N,), 0, n_class)

    out = jax.block_until_ready(resblock_forward(x, class_id, params))
    ref = jax.block_until_ready(resblock_reference(x, class_id, params))

    assert out.shape == (N, Co, H // 2, W // 2)
    # bf16 MXU operands -> slightly looser tolerance than pure f32
    np.testing.assert_allclose(np.asarray(out), np.asarray(ref), rtol=2e-2, atol=2e-2)
    print("KERNEL_OK")
</pallas_src>

<mosaic_0001>
module attributes {stable_mosaic.version = 11 : i64} {
  func.func @_resblock_kernel(%arg0: i32, %arg1: memref<1x18x18x128xbf16, #tpu.memory_space<vmem>>, %arg2: memref<9x128x128xbf16, #tpu.memory_space<vmem>>, %arg3: memref<9x128x128xbf16, #tpu.memory_space<vmem>>, %arg4: memref<128x128xbf16, #tpu.memory_space<vmem>>, %arg5: memref<1x4x128xf32, #tpu.memory_space<vmem>>, %arg6: memref<1x64x128xf32, #tpu.memory_space<vmem>>, %arg7: memref<18x18x128xbf16, #tpu.memory_space<vmem>>) attributes {dimension_semantics = [#tpu.dimension_semantics<parallel>], iteration_bounds = array<i64: 2>, scalar_prefetch = 0 : i64, scratch_operands = 1 : i64, tpu.core_type = #tpu.core_type<tc>, window_params = [{transform_indices = @transform_0, window_bounds = array<i64: 1, 18, 18, 128>}, {pipeline_mode = #tpu.pipeline_mode<synchronous>, transform_indices = @transform_1, window_bounds = array<i64: 9, 128, 128>}, {pipeline_mode = #tpu.pipeline_mode<synchronous>, transform_indices = @transform_2, window_bounds = array<i64: 9, 128, 128>}, {pipeline_mode = #tpu.pipeline_mode<synchronous>, transform_indices = @transform_3, window_bounds = array<i64: 128, 128>}, {transform_indices = @transform_4, window_bounds = array<i64: 1, 4, 128>}, {transform_indices = @transform_5, window_bounds = array<i64: 1, 64, 128>}]} {
    %cst = arith.constant 0.000000e+00 : f32
    %0 = vector.broadcast %cst : f32 to vector<256x128xf32>
    %c0 = arith.constant 0 : index
    %c0_0 = arith.constant 0 : index
    %c0_1 = arith.constant 0 : index
    %c0_2 = arith.constant 0 : index
    %1 = vector.load %arg1[%c0, %c0_0, %c0_1, %c0_2] : memref<1x18x18x128xbf16, #tpu.memory_space<vmem>>, vector<1x16x16x128xbf16>
    %2 = vector.shape_cast %1 : vector<1x16x16x128xbf16> to vector<16x16x128xbf16>
    %3 = vector.shape_cast %2 : vector<16x16x128xbf16> to vector<256x128xbf16>
    %c0_3 = arith.constant 0 : index
    %c0_4 = arith.constant 0 : index
    %c0_5 = arith.constant 0 : index
    %4 = vector.load %arg2[%c0_3, %c0_4, %c0_5] : memref<9x128x128xbf16, #tpu.memory_space<vmem>>, vector<1x128x128xbf16>
    %5 = vector.shape_cast %4 : vector<1x128x128xbf16> to vector<128x128xbf16>
    %cst_6 = arith.constant dense<0.000000e+00> : vector<256x128xf32>
    %6 = tpu.matmul %3, %5, %cst_6 {dimension_numbers = #tpu.dot_dimension_numbers<[1], [0], [0], [1], [0, 0, 1, 1], [], []>} : vector<256x128xbf16>, vector<128x128xbf16>, vector<256x128xf32> -> vector<256x128xf32>
    %7 = arith.addf %0, %6 : vector<256x128xf32>
    %c0_7 = arith.constant 0 : index
    %c0_8 = arith.constant 0 : index
    %c1 = arith.constant 1 : index
    %c0_9 = arith.constant 0 : index
    %8 = vector.load %arg1[%c0_7, %c0_8, %c1, %c0_9] : memref<1x18x18x128xbf16, #tpu.memory_space<vmem>>, vector<1x16x16x128xbf16>
    %9 = vector.shape_cast %8 : vector<1x16x16x128xbf16> to vector<16x16x128xbf16>
    %10 = vector.shape_cast %9 : vector<16x16x128xbf16> to vector<256x128xbf16>
    %c1_10 = arith.constant 1 : index
    %c0_11 = arith.constant 0 : index
    %c0_12 = arith.constant 0 : index
    %11 = vector.load %arg2[%c1_10, %c0_11, %c0_12] : memref<9x128x128xbf16, #tpu.memory_space<vmem>>, vector<1x128x128xbf16>
    %12 = vector.shape_cast %11 : vector<1x128x128xbf16> to vector<128x128xbf16>
    %cst_13 = arith.constant dense<0.000000e+00> : vector<256x128xf32>
    %13 = tpu.matmul %10, %12, %cst_13 {dimension_numbers = #tpu.dot_dimension_numbers<[1], [0], [0], [1], [0, 0, 1, 1], [], []>} : vector<256x128xbf16>, vector<128x128xbf16>, vector<256x128xf32> -> vector<256x128xf32>
    %14 = arith.addf %7, %13 : vector<256x128xf32>
    %c0_14 = arith.constant 0 : index
    %c0_15 = arith.constant 0 : index
    %c2 = arith.constant 2 : index
    %c0_16 = arith.constant 0 : index
    %15 = vector.load %arg1[%c0_14, %c0_15, %c2, %c0_16] : memref<1x18x18x128xbf16, #tpu.memory_space<vmem>>, vector<1x16x16x128xbf16>
    %16 = vector.shape_cast %15 : vector<1x16x16x128xbf16> to vector<16x16x128xbf16>
    %17 = vector.shape_cast %16 : vector<16x16x128xbf16> to vector<256x128xbf16>
    %c2_17 = arith.constant 2 : index
    %c0_18 = arith.constant 0 : index
    %c0_19 = arith.constant 0 : index
    %18 = vector.load %arg2[%c2_17, %c0_18, %c0_19] : memref<9x128x128xbf16, #tpu.memory_space<vmem>>, vector<1x128x128xbf16>
    %19 = vector.shape_cast %18 : vector<1x128x128xbf16> to vector<128x128xbf16>
    %cst_20 = arith.constant dense<0.000000e+00> : vector<256x128xf32>
    %20 = tpu.matmul %17, %19, %cst_20 {dimension_numbers = #tpu.dot_dimension_numbers<[1], [0], [0], [1], [0, 0, 1, 1], [], []>} : vector<256x128xbf16>, vector<128x128xbf16>, vector<256x128xf32> -> vector<256x128xf32>
    %21 = arith.addf %14, %20 : vector<256x128xf32>
    %c0_21 = arith.constant 0 : index
    %c1_22 = arith.constant 1 : index
    %c0_23 = arith.constant 0 : index
    %c0_24 = arith.constant 0 : index
    %22 = vector.load %arg1[%c0_21, %c1_22, %c0_23, %c0_24] : memref<1x18x18x128xbf16, #tpu.memory_space<vmem>>, vector<1x16x16x128xbf16>
    %23 = vector.shape_cast %22 : vector<1x16x16x128xbf16> to vector<16x16x128xbf16>
    %24 = vector.shape_cast %23 : vector<16x16x128xbf16> to vector<256x128xbf16>
    %c3 = arith.constant 3 : index
    %c0_25 = arith.constant 0 : index
    %c0_26 = arith.constant 0 : index
    %25 = vector.load %arg2[%c3, %c0_25, %c0_26] : memref<9x128x128xbf16, #tpu.memory_space<vmem>>, vector<1x128x128xbf16>
    %26 = vector.shape_cast %25 : vector<1x128x128xbf16> to vector<128x128xbf16>
    %cst_27 = arith.constant dense<0.000000e+00> : vector<256x128xf32>
    %27 = tpu.matmul %24, %26, %cst_27 {dimension_numbers = #tpu.dot_dimension_numbers<[1], [0], [0], [1], [0, 0, 1, 1], [], []>} : vector<256x128xbf16>, vector<128x128xbf16>, vector<256x128xf32> -> vector<256x128xf32>
    %28 = arith.addf %21, %27 : vector<256x128xf32>
    %c0_28 = arith.constant 0 : index
    %c1_29 = arith.constant 1 : index
    %c1_30 = arith.constant 1 : index
    %c0_31 = arith.constant 0 : index
    %29 = vector.load %arg1[%c0_28, %c1_29, %c1_30, %c0_31] : memref<1x18x18x128xbf16, #tpu.memory_space<vmem>>, vector<1x16x16x128xbf16>
    %30 = vector.shape_cast %29 : vector<1x16x16x128xbf16> to vector<16x16x128xbf16>
    %31 = vector.shape_cast %30 : vector<16x16x128xbf16> to vector<256x128xbf16>
    %c4 = arith.constant 4 : index
    %c0_32 = arith.constant 0 : index
    %c0_33 = arith.constant 0 : index
    %32 = vector.load %arg2[%c4, %c0_32, %c0_33] : memref<9x128x128xbf16, #tpu.memory_space<vmem>>, vector<1x128x128xbf16>
    %33 = vector.shape_cast %32 : vector<1x128x128xbf16> to vector<128x128xbf16>
    %cst_34 = arith.constant dense<0.000000e+00> : vector<256x128xf32>
    %34 = tpu.matmul %31, %33, %cst_34 {dimension_numbers = #tpu.dot_dimension_numbers<[1], [0], [0], [1], [0, 0, 1, 1], [], []>} : vector<256x128xbf16>, vector<128x128xbf16>, vector<256x128xf32> -> vector<256x128xf32>
    %35 = arith.addf %28, %34 : vector<256x128xf32>
    %c0_35 = arith.constant 0 : index
    %c1_36 = arith.constant 1 : index
    %c2_37 = arith.constant 2 : index
    %c0_38 = arith.constant 0 : index
    %36 = vector.load %arg1[%c0_35, %c1_36, %c2_37, %c0_38] : memref<1x18x18x128xbf16, #tpu.memory_space<vmem>>, vector<1x16x16x128xbf16>
    %37 = vector.shape_cast %36 : vector<1x16x16x128xbf16> to vector<16x16x128xbf16>
    %38 = vector.shape_cast %37 : vector<16x16x128xbf16> to vector<256x128xbf16>
    %c5 = arith.constant 5 : index
    %c0_39 = arith.constant 0 : index
    %c0_40 = arith.constant 0 : index
    %39 = vector.load %arg2[%c5, %c0_39, %c0_40] : memref<9x128x128xbf16, #tpu.memory_space<vmem>>, vector<1x128x128xbf16>
    %40 = vector.shape_cast %39 : vector<1x128x128xbf16> to vector<128x128xbf16>
    %cst_41 = arith.constant dense<0.000000e+00> : vector<256x128xf32>
    %41 = tpu.matmul %38, %40, %cst_41 {dimension_numbers = #tpu.dot_dimension_numbers<[1], [0], [0], [1], [0, 0, 1, 1], [], []>} : vector<256x128xbf16>, vector<128x128xbf16>, vector<256x128xf32> -> vector<256x128xf32>
    %42 = arith.addf %35, %41 : vector<256x128xf32>
    %c0_42 = arith.constant 0 : index
    %c2_43 = arith.constant 2 : index
    %c0_44 = arith.constant 0 : index
    %c0_45 = arith.constant 0 : index
    %43 = vector.load %arg1[%c0_42, %c2_43, %c0_44, %c0_45] : memref<1x18x18x128xbf16, #tpu.memory_space<vmem>>, vector<1x16x16x128xbf16>
    %44 = vector.shape_cast %43 : vector<1x16x16x128xbf16> to vector<16x16x128xbf16>
    %45 = vector.shape_cast %44 : vector<16x16x128xbf16> to vector<256x128xbf16>
    %c6 = arith.constant 6 : index
    %c0_46 = arith.constant 0 : index
    %c0_47 = arith.constant 0 : index
    %46 = vector.load %arg2[%c6, %c0_46, %c0_47] : memref<9x128x128xbf16, #tpu.memory_space<vmem>>, vector<1x128x128xbf16>
    %47 = vector.shape_cast %46 : vector<1x128x128xbf16> to vector<128x128xbf16>
    %cst_48 = arith.constant dense<0.000000e+00> : vector<256x128xf32>
    %48 = tpu.matmul %45, %47, %cst_48 {dimension_numbers = #tpu.dot_dimension_numbers<[1], [0], [0], [1], [0, 0, 1, 1], [], []>} : vector<256x128xbf16>, vector<128x128xbf16>, vector<256x128xf32> -> vector<256x128xf32>
    %49 = arith.addf %42, %48 : vector<256x128xf32>
    %c0_49 = arith.constant 0 : index
    %c2_50 = arith.constant 2 : index
    %c1_51 = arith.constant 1 : index
    %c0_52 = arith.constant 0 : index
    %50 = vector.load %arg1[%c0_49, %c2_50, %c1_51, %c0_52] : memref<1x18x18x128xbf16, #tpu.memory_space<vmem>>, vector<1x16x16x128xbf16>
    %51 = vector.shape_cast %50 : vector<1x16x16x128xbf16> to vector<16x16x128xbf16>
    %52 = vector.shape_cast %51 : vector<16x16x128xbf16> to vector<256x128xbf16>
    %c7 = arith.constant 7 : index
    %c0_53 = arith.constant 0 : index
    %c0_54 = arith.constant 0 : index
    %53 = vector.load %arg2[%c7, %c0_53, %c0_54] : memref<9x128x128xbf16, #tpu.memory_space<vmem>>, vector<1x128x128xbf16>
    %54 = vector.shape_cast %53 : vector<1x128x128xbf16> to vector<128x128xbf16>
    %cst_55 = arith.constant dense<0.000000e+00> : vector<256x128xf32>
    %55 = tpu.matmul %52, %54, %cst_55 {dimension_numbers = #tpu.dot_dimension_numbers<[1], [0], [0], [1], [0, 0, 1, 1], [], []>} : vector<256x128xbf16>, vector<128x128xbf16>, vector<256x128xf32> -> vector<256x128xf32>
    %56 = arith.addf %49, %55 : vector<256x128xf32>
    %c0_56 = arith.constant 0 : index
    %c2_57 = arith.constant 2 : index
    %c2_58 = arith.constant 2 : index
    %c0_59 = arith.constant 0 : index
    %57 = vector.load %arg1[%c0_56, %c2_57, %c2_58, %c0_59] : memref<1x18x18x128xbf16, #tpu.memory_space<vmem>>, vector<1x16x16x128xbf16>
    %58 = vector.shape_cast %57 : vector<1x16x16x128xbf16> to vector<16x16x128xbf16>
    %59 = vector.shape_cast %58 : vector<16x16x128xbf16> to vector<256x128xbf16>
    %c8 = arith.constant 8 : index
    %c0_60 = arith.constant 0 : index
    %c0_61 = arith.constant 0 : index
    %60 = vector.load %arg2[%c8, %c0_60, %c0_61] : memref<9x128x128xbf16, #tpu.memory_space<vmem>>, vector<1x128x128xbf16>
    %61 = vector.shape_cast %60 : vector<1x128x128xbf16> to vector<128x128xbf16>
    %cst_62 = arith.constant dense<0.000000e+00> : vector<256x128xf32>
    %62 = tpu.matmul %59, %61, %cst_62 {dimension_numbers = #tpu.dot_dimension_numbers<[1], [0], [0], [1], [0, 0, 1, 1], [], []>} : vector<256x128xbf16>, vector<128x128xbf16>, vector<256x128xf32> -> vector<256x128xf32>
    %63 = arith.addf %56, %62 : vector<256x128xf32>
    %c0_63 = arith.constant 0 : index
    %c0_64 = arith.constant 0 : index
    %c0_65 = arith.constant 0 : index
    %64 = vector.load %arg5[%c0_63, %c0_64, %c0_65] : memref<1x4x128xf32, #tpu.memory_space<vmem>>, vector<1x1x128xf32>
    %65 = vector.shape_cast %64 : vector<1x1x128xf32> to vector<1x128xf32>
    %66 = vector.broadcast %65 : vector<1x128xf32> to vector<256x128xf32>
    %67 = arith.mulf %63, %66 : vector<256x128xf32>
    %c0_66 = arith.constant 0 : index
    %c2_67 = arith.constant 2 : index
    %c0_68 = arith.constant 0 : index
    %68 = vector.load %arg5[%c0_66, %c2_67, %c0_68] : memref<1x4x128xf32, #tpu.memory_space<vmem>>, vector<1x1x128xf32>
    %69 = vector.shape_cast %68 : vector<1x1x128xf32> to vector<1x128xf32>
    %70 = vector.broadcast %69 : vector<1x128xf32> to vector<256x128xf32>
    %71 = arith.addf %67, %70 : vector<256x128xf32>
    %cst_69 = arith.constant 2.000000e-01 : f32
    %72 = vector.broadcast %cst_69 : f32 to vector<256x128xf32>
    %73 = arith.mulf %72, %71 : vector<256x128xf32>
    %74 = arith.maximumf %71, %73 : vector<256x128xf32>
    %cst_70 = arith.constant 0.000000e+00 : bf16
    %75 = vector.broadcast %cst_70 : bf16 to vector<18x18x128xbf16>
    %c0_71 = arith.constant 0 : index
    %c0_72 = arith.constant 0 : index
    %c0_73 = arith.constant 0 : index
    %76 = vector.load %arg7[%c0_71, %c0_72, %c0_73] : memref<18x18x128xbf16, #tpu.memory_space<vmem>>, vector<18x18x128xbf16>
    tpu.vector_store %arg7[%c0_71, %c0_72, %c0_73], %75 {strides = array<i32>} : memref<18x18x128xbf16, #tpu.memory_space<vmem>>, vector<18x18x128xbf16>,
    %77 = arith.truncf %74 : vector<256x128xf32> to vector<256x128xbf16>
    %78 = vector.shape_cast %77 : vector<256x128xbf16> to vector<16x16x128xbf16>
    %c1_74 = arith.constant 1 : index
    %c1_75 = arith.constant 1 : index
    %c0_76 = arith.constant 0 : index
    %79 = vector.load %arg7[%c1_74, %c1_75, %c0_76] : memref<18x18x128xbf16, #tpu.memory_space<vmem>>, vector<16x16x128xbf16>
    tpu.vector_store %arg7[%c1_74, %c1_75, %c0_76], %78 {strides = array<i32>} : memref<18x18x128xbf16, #tpu.memory_space<vmem>>, vector<16x16x128xbf16>,
    %cst_77 = arith.constant 0.000000e+00 : f32
    %80 = vector.broadcast %cst_77 : f32 to vector<256x128xf32>
    %c0_78 = arith.constant 0 : index
    %c0_79 = arith.constant 0 : index
    %c0_80 = arith.constant 0 : index
    %81 = vector.load %arg7[%c0_78, %c0_79, %c0_80] : memref<18x18x128xbf16, #tpu.memory_space<vmem>>, vector<16x16x128xbf16>
    %82 = vector.shape_cast %81 : vector<16x16x128xbf16> to vector<256x128xbf16>
    %c0_81 = arith.constant 0 : index
    %c0_82 = arith.constant 0 : index
    %c0_83 = arith.constant 0 : index
    %83 = vector.load %arg3[%c0_81, %c0_82, %c0_83] : memref<9x128x128xbf16, #tpu.memory_space<vmem>>, vector<1x128x128xbf16>
    %84 = vector.shape_cast %83 : vector<1x128x128xbf16> to vector<128x128xbf16>
    %cst_84 = arith.constant dense<0.000000e+00> : vector<256x128xf32>
    %85 = tpu.matmul %82, %84, %cst_84 {dimension_numbers = #tpu.dot_dimension_numbers<[1], [0], [0], [1], [0, 0, 1, 1], [], []>} : vector<256x128xbf16>, vector<128x128xbf16>, vector<256x128xf32> -> vector<256x128xf32>
    %86 = arith.addf %80, %85 : vector<256x128xf32>
    %c0_85 = arith.constant 0 : index
    %c1_86 = arith.constant 1 : index
    %c0_87 = arith.constant 0 : index
    %87 = vector.load %arg7[%c0_85, %c1_86, %c0_87] : memref<18x18x128xbf16, #tpu.memory_space<vmem>>, vector<16x16x128xbf16>
    %88 = vector.shape_cast %87 : vector<16x16x128xbf16> to vector<256x128xbf16>
    %c1_88 = arith.constant 1 : index
    %c0_89 = arith.constant 0 : index
    %c0_90 = arith.constant 0 : index
    %89 = vector.load %arg3[%c1_88, %c0_89, %c0_90] : memref<9x128x128xbf16, #tpu.memory_space<vmem>>, vector<1x128x128xbf16>
    %90 = vector.shape_cast %89 : vector<1x128x128xbf16> to vector<128x128xbf16>
    %cst_91 = arith.constant dense<0.000000e+00> : vector<256x128xf32>
    %91 = tpu.matmul %88, %90, %cst_91 {dimension_numbers = #tpu.dot_dimension_numbers<[1], [0], [0], [1], [0, 0, 1, 1], [], []>} : vector<256x128xbf16>, vector<128x128xbf16>, vector<256x128xf32> -> vector<256x128xf32>
    %92 = arith.addf %86, %91 : vector<256x128xf32>
    %c0_92 = arith.constant 0 : index
    %c2_93 = arith.constant 2 : index
    %c0_94 = arith.constant 0 : index
    %93 = vector.load %arg7[%c0_92, %c2_93, %c0_94] : memref<18x18x128xbf16, #tpu.memory_space<vmem>>, vector<16x16x128xbf16>
    %94 = vector.shape_cast %93 : vector<16x16x128xbf16> to vector<256x128xbf16>
    %c2_95 = arith.constant 2 : index
    %c0_96 = arith.constant 0 : index
    %c0_97 = arith.constant 0 : index
    %95 = vector.load %arg3[%c2_95, %c0_96, %c0_97] : memref<9x128x128xbf16, #tpu.memory_space<vmem>>, vector<1x128x128xbf16>
    %96 = vector.shape_cast %95 : vector<1x128x128xbf16> to vector<128x128xbf16>
    %cst_98 = arith.constant dense<0.000000e+00> : vector<256x128xf32>
    %97 = tpu.matmul %94, %96, %cst_98 {dimension_numbers = #tpu.dot_dimension_numbers<[1], [0], [0], [1], [0, 0, 1, 1], [], []>} : vector<256x128xbf16>, vector<128x128xbf16>, vector<256x128xf32> -> vector<256x128xf32>
    %98 = arith.addf %92, %97 : vector<256x128xf32>
    %c1_99 = arith.constant 1 : index
    %c0_100 = arith.constant 0 : index
    %c0_101 = arith.constant 0 : index
    %99 = vector.load %arg7[%c1_99, %c0_100, %c0_101] : memref<18x18x128xbf16, #tpu.memory_space<vmem>>, vector<16x16x128xbf16>
    %100 = vector.shape_cast %99 : vector<16x16x128xbf16> to vector<256x128xbf16>
    %c3_102 = arith.constant 3 : index
    %c0_103 = arith.constant 0 : index
    %c0_104 = arith.constant 0 : index
    %101 = vector.load %arg3[%c3_102, %c0_103, %c0_104] : memref<9x128x128xbf16, #tpu.memory_space<vmem>>, vector<1x128x128xbf16>
    %102 = vector.shape_cast %101 : vector<1x128x128xbf16> to vector<128x128xbf16>
    %cst_105 = arith.constant dense<0.000000e+00> : vector<256x128xf32>
    %103 = tpu.matmul %100, %102, %cst_105 {dimension_numbers = #tpu.dot_dimension_numbers<[1], [0], [0], [1], [0, 0, 1, 1], [], []>} : vector<256x128xbf16>, vector<128x128xbf16>, vector<256x128xf32> -> vector<256x128xf32>
    %104 = arith.addf %98, %103 : vector<256x128xf32>
    %c1_106 = arith.constant 1 : index
    %c1_107 = arith.constant 1 : index
    %c0_108 = arith.constant 0 : index
    %105 = vector.load %arg7[%c1_106, %c1_107, %c0_108] : memref<18x18x128xbf16, #tpu.memory_space<vmem>>, vector<16x16x128xbf16>
    %106 = vector.shape_cast %105 : vector<16x16x128xbf16> to vector<256x128xbf16>
    %c4_109 = arith.constant 4 : index
    %c0_110 = arith.constant 0 : index
    %c0_111 = arith.constant 0 : index
    %107 = vector.load %arg3[%c4_109, %c0_110, %c0_111] : memref<9x128x128xbf16, #tpu.memory_space<vmem>>, vector<1x128x128xbf16>
    %108 = vector.shape_cast %107 : vector<1x128x128xbf16> to vector<128x128xbf16>
    %cst_112 = arith.constant dense<0.000000e+00> : vector<256x128xf32>
    %109 = tpu.matmul %106, %108, %cst_112 {dimension_numbers = #tpu.dot_dimension_numbers<[1], [0], [0], [1], [0, 0, 1, 1], [], []>} : vector<256x128xbf16>, vector<128x128xbf16>, vector<256x128xf32> -> vector<256x128xf32>
    %110 = arith.addf %104, %109 : vector<256x128xf32>
    %c1_113 = arith.constant 1 : index
    %c2_114 = arith.constant 2 : index
    %c0_115 = arith.constant 0 : index
    %111 = vector.load %arg7[%c1_113, %c2_114, %c0_115] : memref<18x18x128xbf16, #tpu.memory_space<vmem>>, vector<16x16x128xbf16>
    %112 = vector.shape_cast %111 : vector<16x16x128xbf16> to vector<256x128xbf16>
    %c5_116 = arith.constant 5 : index
    %c0_117 = arith.constant 0 : index
    %c0_118 = arith.constant 0 : index
    %113 = vector.load %arg3[%c5_116, %c0_117, %c0_118] : memref<9x128x128xbf16, #tpu.memory_space<vmem>>, vector<1x128x128xbf16>
    %114 = vector.shape_cast %113 : vector<1x128x128xbf16> to vector<128x128xbf16>
    %cst_119 = arith.constant dense<0.000000e+00> : vector<256x128xf32>
    %115 = tpu.matmul %112, %114, %cst_119 {dimension_numbers = #tpu.dot_dimension_numbers<[1], [0], [0], [1], [0, 0, 1, 1], [], []>} : vector<256x128xbf16>, vector<128x128xbf16>, vector<256x128xf32> -> vector<256x128xf32>
    %116 = arith.addf %110, %115 : vector<256x128xf32>
    %c2_120 = arith.constant 2 : index
    %c0_121 = arith.constant 0 : index
    %c0_122 = arith.constant 0 : index
    %117 = vector.load %arg7[%c2_120, %c0_121, %c0_122] : memref<18x18x128xbf16, #tpu.memory_space<vmem>>, vector<16x16x128xbf16>
    %118 = vector.shape_cast %117 : vector<16x16x128xbf16> to vector<256x128xbf16>
    %c6_123 = arith.constant 6 : index
    %c0_124 = arith.constant 0 : index
    %c0_125 = arith.constant 0 : index
    %119 = vector.load %arg3[%c6_123, %c0_124, %c0_125] : memref<9x128x128xbf16, #tpu.memory_space<vmem>>, vector<1x128x128xbf16>
    %120 = vector.shape_cast %119 : vector<1x128x128xbf16> to vector<128x128xbf16>
    %cst_126 = arith.constant dense<0.000000e+00> : vector<256x128xf32>
    %121 = tpu.matmul %118, %120, %cst_126 {dimension_numbers = #tpu.dot_dimension_numbers<[1], [0], [0], [1], [0, 0, 1, 1], [], []>} : vector<256x128xbf16>, vector<128x128xbf16>, vector<256x128xf32> -> vector<256x128xf32>
    %122 = arith.addf %116, %121 : vector<256x128xf32>
    %c2_127 = arith.constant 2 : index
    %c1_128 = arith.constant 1 : index
    %c0_129 = arith.constant 0 : index
    %123 = vector.load %arg7[%c2_127, %c1_128, %c0_129] : memref<18x18x128xbf16, #tpu.memory_space<vmem>>, vector<16x16x128xbf16>
    %124 = vector.shape_cast %123 : vector<16x16x128xbf16> to vector<256x128xbf16>
    %c7_130 = arith.constant 7 : index
    %c0_131 = arith.constant 0 : index
    %c0_132 = arith.constant 0 : index
    %125 = vector.load %arg3[%c7_130, %c0_131, %c0_132] : memref<9x128x128xbf16, #tpu.memory_space<vmem>>, vector<1x128x128xbf16>
    %126 = vector.shape_cast %125 : vector<1x128x128xbf16> to vector<128x128xbf16>
    %cst_133 = arith.constant dense<0.000000e+00> : vector<256x128xf32>
    %127 = tpu.matmul %124, %126, %cst_133 {dimension_numbers = #tpu.dot_dimension_numbers<[1], [0], [0], [1], [0, 0, 1, 1], [], []>} : vector<256x128xbf16>, vector<128x128xbf16>, vector<256x128xf32> -> vector<256x128xf32>
    %128 = arith.addf %122, %127 : vector<256x128xf32>
    %c2_134 = arith.constant 2 : index
    %c2_135 = arith.constant 2 : index
    %c0_136 = arith.constant 0 : index
    %129 = vector.load %arg7[%c2_134, %c2_135, %c0_136] : memref<18x18x128xbf16, #tpu.memory_space<vmem>>, vector<16x16x128xbf16>
    %130 = vector.shape_cast %129 : vector<16x16x128xbf16> to vector<256x128xbf16>
    %c8_137 = arith.constant 8 : index
    %c0_138 = arith.constant 0 : index
    %c0_139 = arith.constant 0 : index
    %131 = vector.load %arg3[%c8_137, %c0_138, %c0_139] : memref<9x128x128xbf16, #tpu.memory_space<vmem>>, vector<1x128x128xbf16>
    %132 = vector.shape_cast %131 : vector<1x128x128xbf16> to vector<128x128xbf16>
    %cst_140 = arith.constant dense<0.000000e+00> : vector<256x128xf32>
    %133 = tpu.matmul %130, %132, %cst_140 {dimension_numbers = #tpu.dot_dimension_numbers<[1], [0], [0], [1], [0, 0, 1, 1], [], []>} : vector<256x128xbf16>, vector<128x128xbf16>, vector<256x128xf32> -> vector<256x128xf32>
    %134 = arith.addf %128, %133 : vector<256x128xf32>
    %135 = vector.shape_cast %134 : vector<256x128xf32> to vector<128x256xf32>
    %136 = vector.extract_strided_slice %135 {offsets = [0, 0], sizes = [128, 128], strides = [1, 1]} : vector<128x256xf32> to vector<128x128xf32>
    %137 = vector.extract_strided_slice %135 {offsets = [0, 128], sizes = [128, 128], strides = [1, 1]} : vector<128x256xf32> to vector<128x128xf32>
    %138 = arith.addf %136, %137 : vector<128x128xf32>
    %139 = vector.shape_cast %138 : vector<128x128xf32> to vector<8x2x8x128xf32>
    %140 = vector.extract_strided_slice %139 {offsets = [0, 0, 0, 0], sizes = [8, 1, 8, 128], strides = [1, 1, 1, 1]} : vector<8x2x8x128xf32> to vector<8x1x8x128xf32>
    %141 = vector.shape_cast %140 : vector<8x1x8x128xf32> to vector<8x8x128xf32>
    %142 = vector.extract_strided_slice %139 {offsets = [0, 1, 0, 0], sizes = [8, 1, 8, 128], strides = [1, 1, 1, 1]} : vector<8x2x8x128xf32> to vector<8x1x8x128xf32>
    %143 = vector.shape_cast %142 : vector<8x1x8x128xf32> to vector<8x8x128xf32>
    %144 = arith.addf %141, %143 : vector<8x8x128xf32>
    %145 = vector.shape_cast %144 : vector<8x8x128xf32> to vector<64x128xf32>
    %cst_141 = arith.constant 2.500000e-01 : f32
    %146 = vector.broadcast %cst_141 : f32 to vector<64x128xf32>
    %147 = arith.mulf %146, %145 : vector<64x128xf32>
    %c0_142 = arith.constant 0 : index
    %c1_143 = arith.constant 1 : index
    %c1_144 = arith.constant 1 : index
    %c0_145 = arith.constant 0 : index
    %148 = vector.load %arg1[%c0_142, %c1_143, %c1_144, %c0_145] : memref<1x18x18x128xbf16, #tpu.memory_space<vmem>>, vector<1x16x16x128xbf16>
    %149 = vector.shape_cast %148 : vector<1x16x16x128xbf16> to vector<16x16x128xbf16>
    %150 = arith.extf %149 : vector<16x16x128xbf16> to vector<16x16x128xf32>
    %151 = vector.shape_cast %150 : vector<16x16x128xf32> to vector<256x128xf32>
    %152 = vector.shape_cast %151 : vector<256x128xf32> to vector<128x256xf32>
    %153 = vector.extract_strided_slice %152 {offsets = [0, 0], sizes = [128, 128], strides = [1, 1]} : vector<128x256xf32> to vector<128x128xf32>
    %154 = vector.extract_strided_slice %152 {offsets = [0, 128], sizes = [128, 128], strides = [1, 1]} : vector<128x256xf32> to vector<128x128xf32>
    %155 = arith.addf %153, %154 : vector<128x128xf32>
    %156 = vector.shape_cast %155 : vector<128x128xf32> to vector<8x2x8x128xf32>
    %157 = vector.extract_strided_slice %156 {offsets = [0, 0, 0, 0], sizes = [8, 1, 8, 128], strides = [1, 1, 1, 1]} : vector<8x2x8x128xf32> to vector<8x1x8x128xf32>
    %158 = vector.shape_cast %157 : vector<8x1x8x128xf32> to vector<8x8x128xf32>
    %159 = vector.extract_strided_slice %156 {offsets = [0, 1, 0, 0], sizes = [8, 1, 8, 128], strides = [1, 1, 1, 1]} : vector<8x2x8x128xf32> to vector<8x1x8x128xf32>
    %160 = vector.shape_cast %159 : vector<8x1x8x128xf32> to vector<8x8x128xf32>
    %161 = arith.addf %158, %160 : vector<8x8x128xf32>
    %162 = vector.shape_cast %161 : vector<8x8x128xf32> to vector<64x128xf32>
    %cst_146 = arith.constant 2.500000e-01 : f32
    %163 = vector.broadcast %cst_146 : f32 to vector<64x128xf32>
    %164 = arith.mulf %163, %162 : vector<64x128xf32>
    %165 = arith.truncf %164 : vector<64x128xf32> to vector<64x128xbf16>
    %c0_147 = arith.constant 0 : index
    %c0_148 = arith.constant 0 : index
    %166 = vector.load %arg4[%c0_147, %c0_148] : memref<128x128xbf16, #tpu.memory_space<vmem>>, vector<128x128xbf16>
    %cst_149 = arith.constant dense<0.000000e+00> : vector<64x128xf32>
    %167 = tpu.matmul %165, %166, %cst_149 {dimension_numbers = #tpu.dot_dimension_numbers<[1], [0], [0], [1], [0, 0, 1, 1], [], []>} : vector<64x128xbf16>, vector<128x128xbf16>, vector<64x128xf32> -> vector<64x128xf32>
    %c0_150 = arith.constant 0 : index
    %c1_151 = arith.constant 1 : index
    %c0_152 = arith.constant 0 : index
    %168 = vector.load %arg5[%c0_150, %c1_151, %c0_152] : memref<1x4x128xf32, #tpu.memory_space<vmem>>, vector<1x1x128xf32>
    %169 = vector.shape_cast %168 : vector<1x1x128xf32> to vector<1x128xf32>
    %170 = vector.broadcast %169 : vector<1x128xf32> to vector<64x128xf32>
    %171 = arith.mulf %147, %170 : vector<64x128xf32>
    %c0_153 = arith.constant 0 : index
    %c3_154 = arith.constant 3 : index
    %c0_155 = arith.constant 0 : index
    %172 = vector.load %arg5[%c0_153, %c3_154, %c0_155] : memref<1x4x128xf32, #tpu.memory_space<vmem>>, vector<1x1x128xf32>
    %173 = vector.shape_cast %172 : vector<1x1x128xf32> to vector<1x128xf32>
    %174 = vector.broadcast %173 : vector<1x128xf32> to vector<64x128xf32>
    %175 = arith.addf %171, %174 : vector<64x128xf32>
    %176 = arith.addf %175, %167 : vector<64x128xf32>
    %cst_156 = arith.constant 2.000000e-01 : f32
    %177 = vector.broadcast %cst_156 : f32 to vector<64x128xf32>
    %178 = arith.mulf %177, %176 : vector<64x128xf32>
    %179 = arith.maximumf %176, %178 : vector<64x128xf32>
    %c0_157 = arith.constant 0 : index
    %c0_158 = arith.constant 0 : index
    %c0_159 = arith.constant 0 : index
    %180 = vector.load %arg6[%c0_157, %c0_158, %c0_159] : memref<1x64x128xf32, #tpu.memory_space<vmem>>, vector<1x64x128xf32>
    %181 = vector.shape_cast %180 : vector<1x64x128xf32> to vector<64x128xf32>
    %182 = vector.shape_cast %179 : vector<64x128xf32> to vector<1x64x128xf32>
    tpu.vector_store %arg6[%c0_157, %c0_158, %c0_159], %182 {strides = array<i32>} : memref<1x64x128xf32, #tpu.memory_space<vmem>>, vector<1x64x128xf32>,
    return
  }
  func.func @transform_0(%arg0: i32) -> (i32, i32, i32, i32) {
    %c0_i32 = arith.constant 0 : i32
    %c0_i32_0 = arith.constant 0 : i32
    %c0_i32_1 = arith.constant 0 : i32
    %c0_i32_2 = arith.constant 0 : i32
    return %arg0, %c0_i32, %c0_i32_0, %c0_i32_1 : i32, i32, i32, i32
  }
  func.func @transform_1(%arg0: i32) -> (i32, i32, i32) {
    %c0_i32 = arith.constant 0 : i32
    %c0_i32_0 = arith.constant 0 : i32
    %c0_i32_1 = arith.constant 0 : i32
    %c0_i32_2 = arith.constant 0 : i32
    return %c0_i32, %c0_i32_0, %c0_i32_1 : i32, i32, i32
  }
  func.func @transform_2(%arg0: i32) -> (i32, i32, i32) {
    %c0_i32 = arith.constant 0 : i32
    %c0_i32_0 = arith.constant 0 : i32
    %c0_i32_1 = arith.constant 0 : i32
    %c0_i32_2 = arith.constant 0 : i32
    return %c0_i32, %c0_i32_0, %c0_i32_1 : i32, i32, i32
  }
  func.func @transform_3(%arg0: i32) -> (i32, i32) {
    %c0_i32 = arith.constant 0 : i32
    %c0_i32_0 = arith.constant 0 : i32
    %c0_i32_1 = arith.constant 0 : i32
    return %c0_i32, %c0_i32_0 : i32, i32
  }
  func.func @transform_4(%arg0: i32) -> (i32, i32, i32) {
    %c0_i32 = arith.constant 0 : i32
    %c0_i32_0 = arith.constant 0 : i32
    %c0_i32_1 = arith.constant 0 : i32
    return %arg0, %c0_i32, %c0_i32_0 : i32, i32, i32
  }
  func.func @transform_5(%arg0: i32) -> (i32, i32, i32) {
    %c0_i32 = arith.constant 0 : i32
    %c0_i32_0 = arith.constant 0 : i32
    %c0_i32_1 = arith.constant 0 : i32
    return %arg0, %c0_i32, %c0_i32_0 : i32, i32, i32
  }
}

</mosaic_0001>

<llo_original>
// kernel: tpu_custom_call.1
$region0: #{tpu_custom_call.1}
  #allocation0 [shape = 'u32[]', space=smem, size = 0x4, offset = 0x4, fixed_abs, tag = 'smem constant byte address 0x4 - core index']
  #allocation1 [shape = 'u32[144,128]{1,0:T(1,128)}', space=vmem, size = 0x12000, scoped, tag = 'internal scratch']
  #allocation2 [shape = 'bf16[18,18,128]{2,1,0:T(8,128)(2,1)}', space=vmem, size = 0x1b000, scoped, tag = 'scratch operand']
  %s0 = inlined_call_operand.vmem [shape: bf16[2,18,18,128], index: 0, kind: input, shape index: {}]
  %s1 = inlined_call_operand.vmem [shape: bf16[9,128,128], index: 1, kind: input, shape index: {}]
  %s2 = inlined_call_operand.hbm [shape: bf16[9,128,128], index: 2, kind: input, shape index: {}]
  %s3 = inlined_call_operand.vmem [shape: bf16[128,128], index: 3, kind: input, shape index: {}]
  %s4 = inlined_call_operand.vmem [shape: f32[2,4,128], index: 4, kind: input, shape index: {}]
  %s5 = inlined_call_operand.hbm [shape: f32[2,64,128], index: 5, kind: output, shape index: {}]
  %s6 = sld [smem:[#allocation0]]
  $region57: #{tpu_custom_call.1} parent=0
    _
  %s8 = ssub.s32 1, %s6
  %s9 = scalar_select 0, %s8, %s6
  $region1: #{tpu_custom_call.1} parent=0
    #allocation3 [shape = 'u8[294912]{0}', space=vmem, size = 0x48000, scoped, tag = 'input window, operand 2, single buffered']
    #allocation4 [shape = 's32[2]{0}', space=sflag, size = 0x8, scoped, tag = 'scoped memory for tpu_custom_call.1']
    #allocation5 [shape = 's32[2]{0}', space=sflag, size = 0x8, scoped, tag = 'scoped memory for tpu_custom_call.1']
    #allocation6 [shape = 'u8[65536]{0}', space=vmem, size = 0x10000, scoped, tag = 'output window, operand 0']
    %10 = vsyncpa [#allocation4], 0
    %11 = vsyncpa [#allocation5], 0
    %s12 = scalar_lea.sflag [#allocation5], 1
    %13 = vsyncpa %s12, 0
    loop: start=0, step=1, limit=4
    $region2: #{tpu_custom_call.1} parent=1 // loop_pre_header
      _
    $region3: #{tpu_custom_call.1} parent=1 // loop_header
      %s15 = sphi 0, %s19
      %p16 = scmp.ge.s32.totalorder %s15, 4
      %s25 = sphi 0, %s27
      %s28 = sphi 0, %s25
      %s29 = sphi 0, %s28
      %s45 = sphi 0, %s29
      %s49 = sphi 0, %s49
      %s51 = sphi 0, %s49
      %s52 = sphi 0, %s51
      %s66 = sphi 0, %s52
      %s70 = sphi 0, %s70
      %s72 = sphi 0, %s70
      %s73 = sphi 0, %s72
      %s87 = sphi 0, %s73
      %s91 = sphi 0, %s91
      %s93 = sphi 0, %s91
      %s94 = sphi 0, %s93
      %s108 = sphi 0, %s94
      %s114 = sphi 0, %s116
      %s117 = sphi 0, %s114
      %s118 = sphi 0, %s117
      %s134 = sphi 0, %s118
      %s140 = sphi 0, %s142
      %s143 = sphi 0, %s140
      %s144 = sphi 0, %s143
      %s160 = sphi 0, %s144
    $region4: #{tpu_custom_call.1} parent=1 // loop_header_branch
      %18 = sbr.rel (%p16) target = $region8
    $region5: #{tpu_custom_call.1} parent=1 // loop_body
      %s20 = ssub.s32 %s15, 1
      %s21 = ssub.s32 %s15, 2
      %s22 = sadd.s32 %s15, 1
      %s23 = ssub.s32 %s15, %s22
      %p24 = scmp.eq.s32.totalorder %s23, 0
      %s26 = sadd.s32 %s25, 1
      %s27 = scalar_select %p24, %s25, %s26
      %p30 = pneg %p24
      %p31 = scmp.eq.s32.totalorder %s15, 1
      %p32 = por %p30, %p31
      %p33 = scmp.ne.s32.totalorder %s25, %s28
      %p34 = scmp.eq.s32.totalorder %s15, 0
      %p35 = por %p33, %p34
      %p36 = scmp.ne.s32.totalorder %s25, %s28
      %p37 = scmp.eq.s32.totalorder %s20, 1
      %p38 = por %p36, %p37
      %p39 = scmp.ne.s32.totalorder %s28, %s29
      %p40 = scmp.eq.s32.totalorder %s20, 0
      %p41 = por %p39, %p40
      %p42 = scmp.ne.s32.totalorder %s28, %s29
      %p43 = scmp.eq.s32.totalorder %s21, 1
      %p44 = por %p42, %p43
      %p46 = scmp.ne.s32.totalorder %s29, %s45
      %p47 = scmp.eq.s32.totalorder %s21, 0
      %p48 = por %p46, %p47
      %s50 = sadd.s32 %s49, 1
      %p53 = scmp.eq.s32.totalorder %s15, 1
      %p54 = scmp.ne.s32.totalorder %s49, %s51
      %p55 = scmp.eq.s32.totalorder %s15, 0
      %p56 = por %p54, %p55
      %p57 = scmp.ne.s32.totalorder %s49, %s51
      %p58 = scmp.eq.s32.totalorder %s20, 1
      %p59 = por %p57, %p58
      %p60 = scmp.ne.s32.totalorder %s51, %s52
      %p61 = scmp.eq.s32.totalorder %s20, 0
      %p62 = por %p60, %p61
      %p63 = scmp.ne.s32.totalorder %s51, %s52
      %p64 = scmp.eq.s32.totalorder %s21, 1
      %p65 = por %p63, %p64
      %p67 = scmp.ne.s32.totalorder %s52, %s66
      %p68 = scmp.eq.s32.totalorder %s21, 0
      %p69 = por %p67, %p68
      %s71 = sadd.s32 %s70, 1
      %p74 = scmp.eq.s32.totalorder %s15, 1
      %p75 = scmp.ne.s32.totalorder %s70, %s72
      %p76 = scmp.eq.s32.totalorder %s15, 0
      %p77 = por %p75, %p76
      %p78 = scmp.ne.s32.totalorder %s70, %s72
      %p79 = scmp.eq.s32.totalorder %s20, 1
      %p80 = por %p78, %p79
      %p81 = scmp.ne.s32.totalorder %s72, %s73
      %p82 = scmp.eq.s32.totalorder %s20, 0
      %p83 = por %p81, %p82
      %p84 = scmp.ne.s32.totalorder %s72, %s73
      %p85 = scmp.eq.s32.totalorder %s21, 1
      %p86 = por %p84, %p85
      %p88 = scmp.ne.s32.totalorder %s73, %s87
      %p89 = scmp.eq.s32.totalorder %s21, 0
      %p90 = por %p88, %p89
      %s92 = sadd.s32 %s91, 1
      %p95 = scmp.eq.s32.totalorder %s15, 1
      %p96 = scmp.ne.s32.totalorder %s91, %s93
      %p97 = scmp.eq.s32.totalorder %s15, 0
      %p98 = por %p96, %p97
      %p99 = scmp.ne.s32.totalorder %s91, %s93
      %p100 = scmp.eq.s32.totalorder %s20, 1
      %p101 = por %p99, %p100
      %p102 = scmp.ne.s32.totalorder %s93, %s94
      %p103 = scmp.eq.s32.totalorder %s20, 0
      %p104 = por %p102, %p103
      %p105 = scmp.ne.s32.totalorder %s93, %s94
      %p106 = scmp.eq.s32.totalorder %s21, 1
      %p107 = por %p105, %p106
      %p109 = scmp.ne.s32.totalorder %s94, %s108
      %p110 = scmp.eq.s32.totalorder %s21, 0
      %p111 = por %p109, %p110
      %s112 = ssub.s32 %s15, %s22
      %p113 = scmp.eq.s32.totalorder %s112, 0
      %s115 = sadd.s32 %s114, 1
      %s116 = scalar_select %p113, %s114, %s115
      %p119 = pneg %p113
      %p120 = scmp.eq.s32.totalorder %s15, 1
      %p121 = por %p119, %p120
      %p122 = scmp.ne.s32.totalorder %s114, %s117
      %p123 = scmp.eq.s32.totalorder %s15, 0
      %p124 = por %p122, %p123
      %p125 = scmp.ne.s32.totalorder %s114, %s117
      %p126 = scmp.eq.s32.totalorder %s20, 1
      %p127 = por %p125, %p126
      %p128 = scmp.ne.s32.totalorder %s117, %s118
      %p129 = scmp.eq.s32.totalorder %s20, 0
      %p130 = por %p128, %p129
      %p131 = scmp.ne.s32.totalorder %s117, %s118
      %p132 = scmp.eq.s32.totalorder %s21, 1
      %p133 = por %p131, %p132
      %p135 = scmp.ne.s32.totalorder %s118, %s134
      %p136 = scmp.eq.s32.totalorder %s21, 0
      %p137 = por %p135, %p136
      %s138 = ssub.s32 %s15, %s22
      %p139 = scmp.eq.s32.totalorder %s138, 0
      %s141 = sadd.s32 %s140, 1
      %s142 = scalar_select %p139, %s140, %s141
      %p145 = pneg %p139
      %p146 = scmp.eq.s32.totalorder %s15, 1
      %p147 = por %p145, %p146
      %p148 = scmp.ne.s32.totalorder %s140, %s143
      %p149 = scmp.eq.s32.totalorder %s15, 0
      %p150 = por %p148, %p149
      %p151 = scmp.ne.s32.totalorder %s140, %s143
      %p152 = scmp.eq.s32.totalorder %s20, 1
      %p153 = por %p151, %p152
      %p154 = scmp.ne.s32.totalorder %s143, %s144
      %p155 = scmp.eq.s32.totalorder %s20, 0
      %p156 = por %p154, %p155
      %p157 = scmp.ne.s32.totalorder %s143, %s144
      %p158 = scmp.eq.s32.totalorder %s21, 1
      %p159 = por %p157, %p158
      %p161 = scmp.ne.s32.totalorder %s144, %s160
      %p162 = scmp.eq.s32.totalorder %s21, 0
      %p163 = por %p161, %p162
      %p164 = scmp.le.s32.totalorder 1, %s15
      %p165 = scmp.lt.s32.totalorder %s15, 3
      %p166 = pnand %p164, %p165
      %p167 = pneg %p166
      // Predicated region
      $region9: #{tpu_custom_call.1} parent=5 // pred_check
        _
      $region10: #{tpu_custom_call.1} parent=5 // pred_check_branch
        %169 = sbr.rel (%p166) target = $region12
      $region11: #{tpu_custom_call.1} parent=5 // pred_region
        %s170 = ssub.s32 %s15, 1
        // Predicated region
        $region13: #{tpu_custom_call.1} parent=11 // pred_check
          %p171 = pneg %p62
        $region14: #{tpu_custom_call.1} parent=11 // pred_check_branch
          %173 = sbr.rel (%p171) target = $region16
        $region15: #{tpu_custom_call.1} parent=11 // pred_region
          _
        $region16: #{tpu_custom_call.1} parent=11 // pred_fallthru
          _
        // Predicated region
        $region17: #{tpu_custom_call.1} parent=11 // pred_check
          %p174 = pneg %p83
        $region18: #{tpu_custom_call.1} parent=11 // pred_check_branch
          %176 = sbr.rel (%p174) target = $region20
        $region19: #{tpu_custom_call.1} parent=11 // pred_region
          %s178 = ssub.s32 9216, 9216
          %179 = vsyncadd [#allocation4], %s178
          %s180 = sshll.u32 [#allocation3], 4
          %s181 = int_to_ptr.vmem [resolvable:$true] %s180
          %186 = dma.hbm_to_vmem [thread:$0]  %s2, 9216, %s181, [#allocation4], 64, 64, 4
        $region20: #{tpu_custom_call.1} parent=11 // pred_fallthru
          _
        // Predicated region
        $region21: #{tpu_custom_call.1} parent=11 // pred_check
          %p187 = pneg %p104
        $region22: #{tpu_custom_call.1} parent=11 // pred_check_branch
          %189 = sbr.rel (%p187) target = $region24
        $region23: #{tpu_custom_call.1} parent=11 // pred_region
          _
        $region24: #{tpu_custom_call.1} parent=11 // pred_fallthru
          _
      $region12: #{tpu_custom_call.1} parent=5 // pred_fallthru
        _
      %p190 = scmp.lt.s32.totalorder %s15, 2
      // Predicated region
      $region25: #{tpu_custom_call.1} parent=5 // pred_check
        %p191 = pneg %p190
      $region26: #{tpu_custom_call.1} parent=5 // pred_check_branch
        %193 = sbr.rel (%p191) target = $region28
      $region27: #{tpu_custom_call.1} parent=5 // pred_region
        // Predicated region
        $region29: #{tpu_custom_call.1} parent=27 // pred_check
          %p194 = pneg %p35
        $region30: #{tpu_custom_call.1} parent=27 // pred_check_branch
          %196 = sbr.rel (%p194) target = $region32
        $region31: #{tpu_custom_call.1} parent=27 // pred_region
          %p197 = scmp.lt.s32.totalorder %s15, 1
          %s198 = scalar_select %p197, %s15, 1
          %s199 = smul.addr %s198, 54
          %s200 = smul.addr %s199, 4
          %s201 = scalar_lea.vmem %s0, %s200
        $region32: #{tpu_custom_call.1} parent=27 // pred_fallthru
          _
        // Predicated region
        $region33: #{tpu_custom_call.1} parent=27 // pred_check
          %p202 = pneg %p124
        $region34: #{tpu_custom_call.1} parent=27 // pred_check_branch
          %204 = sbr.rel (%p202) target = $region36
        $region35: #{tpu_custom_call.1} parent=27 // pred_region
          %p205 = scmp.lt.s32.totalorder %s15, 1
          %s206 = scalar_select %p205, %s15, 1
          %s207 = smul.addr %s206, 4
          %s208 = scalar_lea.vmem %s4, %s207
        $region36: #{tpu_custom_call.1} parent=27 // pred_fallthru
          _
      $region28: #{tpu_custom_call.1} parent=5 // pred_fallthru
        _
      %p209 = scmp.le.s32.totalorder 1, %s15
      %p210 = scmp.lt.s32.totalorder %s15, 3
      %p211 = pnand %p209, %p210
      %p212 = pneg %p211
      // Predicated region
      $region37: #{tpu_custom_call.1} parent=5 // pred_check
        _
      $region38: #{tpu_custom_call.1} parent=5 // pred_check_branch
        %214 = sbr.rel (%p211) target = $region40
      $region39: #{tpu_custom_call.1} parent=5 // pred_region
        %s215 = ssub.s32 %s15, 1
        // Predicated region
        $region41: #{tpu_custom_call.1} parent=39 // pred_check
          %p216 = pneg %p83
        $region42: #{tpu_custom_call.1} parent=39 // pred_check_branch
          %218 = sbr.rel (%p216) target = $region44
        $region43: #{tpu_custom_call.1} parent=39 // pred_region
          %219 = dma.done [#allocation4], 9216
        $region44: #{tpu_custom_call.1} parent=39 // pred_fallthru
          _
        %p220 = scmp.lt.s32.totalorder %s20, 1
        %s221 = scalar_select %p220, %s20, 1
        %s222 = smul.addr %s221, 54
        %s223 = smul.addr %s222, 4
        %s224 = scalar_lea.vmem %s0, %s223
        %p225 = pneg %p41
        %p226 = pneg %p38
        %p227 = pneg %p62
        %p228 = pneg %p59
        %p229 = pneg %p83
        %p230 = pneg %p80
        %p231 = pneg %p104
        %p232 = pneg %p101
        %p233 = scmp.lt.s32.totalorder %s20, 1
        %s234 = scalar_select %p233, %s20, 1
        %s235 = smul.addr %s234, 4
        %s236 = scalar_lea.vmem %s4, %s235
        %p237 = pneg %p130
        %p238 = pneg %p127
        %p239 = pneg %p156
        %p240 = pneg %p153
        %s241 = sand.u32 %s143, 1
        %s242 = scalar_lea.sflag [#allocation5], %s241
        %s243 = sand.u32 %s143, 1
        %s244 = smul.addr %s243, 64
        %s245 = scalar_lea.vmem [#allocation6], %s244
        %p246 = scmp.lt.s32.totalorder %s20, 1
        %s247 = scalar_select %p246, %s20, 1
        %s248 = smul.addr %s247, 54
        %s249 = smul.addr %s248, 4
        %s250 = scalar_lea.vmem %s0, %s249
        %p251 = scmp.lt.s32.totalorder %s20, 1
        %s252 = scalar_select %p251, %s20, 1
        %s253 = smul.addr %s252, 4
        %s254 = scalar_lea.vmem %s4, %s253
        %v256 = vld [vmem:[%s250] sm:$0xf]
        %v257 = vld [vmem:[%s250 + $0x4] sm:$0xf]
        %v258 = vld [vmem:[%s250 + $0xc] sm:$0xf]
        %v259 = vld [vmem:[%s250 + $0x10] sm:$0xf]
        %v260 = vld [vmem:[%s250 + $0x18] sm:$0xf]
        %v261 = vld [vmem:[%s250 + $0x1c] sm:$0xf]
        %v262 = vld [vmem:[%s250 + $0x24] sm:$0xf]
        %v263 = vld [vmem:[%s250 + $0x28] sm:$0xf]
        %v264 = vld [vmem:[%s250 + $0x30] sm:$0xf]
        %v265 = vld [vmem:[%s250 + $0x34] sm:$0xf]
        %v266 = vld [vmem:[%s250 + $0x3c] sm:$0xf]
        %v267 = vld [vmem:[%s250 + $0x40] sm:$0xf]
        %v268 = vld [vmem:[%s250 + $0x48] sm:$0xf]
        %v269 = vld [vmem:[%s250 + $0x4c] sm:$0xf]
        %v270 = vld [vmem:[%s250 + $0x54] sm:$0xf]
        %v271 = vld [vmem:[%s250 + $0x58] sm:$0xf]
        %v272 = vld [vmem:[%s250 + $0x60] sm:$0xf]
        %v273 = vld [vmem:[%s250 + $0x64] sm:$0xf]
        %v274 = vld [vmem:[%s250 + $0x6c] sm:$0xf]
        %v275 = vld [vmem:[%s250 + $0x70] sm:$0xf]
        %v276 = vld [vmem:[%s250 + $0x78] sm:$0xf]
        %v277 = vld [vmem:[%s250 + $0x7c] sm:$0xf]
        %v278 = vld [vmem:[%s250 + $0x84] sm:$0xf]
        %v279 = vld [vmem:[%s250 + $0x88] sm:$0xf]
        %v280 = vld [vmem:[%s250 + $0x90] sm:$0xf]
        %v281 = vld [vmem:[%s250 + $0x94] sm:$0xf]
        %v282 = vld [vmem:[%s250 + $0x9c] sm:$0xf]
        %v283 = vld [vmem:[%s250 + $0xa0] sm:$0xf]
        %v284 = vld [vmem:[%s250 + $0xa8] sm:$0xf]
        %v285 = vld [vmem:[%s250 + $0xac] sm:$0xf]
        %v286 = vld [vmem:[%s250 + $0xb4] sm:$0xf]
        %v287 = vld [vmem:[%s250 + $0xb8] sm:$0xf]
        %v288 = vld [vmem:[%s1] sm:$0xf]
        %v289 = vld [vmem:[%s1 + $0x4] sm:$0xf]
        %v290 = vld [vmem:[%s1 + $0x8] sm:$0xf]
        %v291 = vld [vmem:[%s1 + $0xc] sm:$0xf]
        %v292 = vld [vmem:[%s1 + $0x10] sm:$0xf]
        %v293 = vld [vmem:[%s1 + $0x14] sm:$0xf]
        %v294 = vld [vmem:[%s1 + $0x18] sm:$0xf]
        %v295 = vld [vmem:[%s1 + $0x1c] sm:$0xf]
        %v296 = vld [vmem:[%s1 + $0x20] sm:$0xf]
        %v297 = vld [vmem:[%s1 + $0x24] sm:$0xf]
        %v298 = vld [vmem:[%s1 + $0x28] sm:$0xf]
        %v299 = vld [vmem:[%s1 + $0x2c] sm:$0xf]
        %v300 = vld [vmem:[%s1 + $0x30] sm:$0xf]
        %v301 = vld [vmem:[%s1 + $0x34] sm:$0xf]
        %v302 = vld [vmem:[%s1 + $0x38] sm:$0xf]
        %v303 = vld [vmem:[%s1 + $0x3c] sm:$0xf]
        %v304 = vld [vmem:[%s250 + $0x8] sm:$0x1]
        %v305 = vld [vmem:[%s250 + $0x14] sm:$0x1]
        %v306 = vld [vmem:[%s250 + $0x20] sm:$0x1]
        %v307 = vld [vmem:[%s250 + $0x2c] sm:$0x1]
        %v308 = vld [vmem:[%s250 + $0x38] sm:$0x1]
        %v309 = vld [vmem:[%s250 + $0x44] sm:$0x1]
        %v310 = vld [vmem:[%s250 + $0x50] sm:$0x1]
        %v311 = vld [vmem:[%s250 + $0x5c] sm:$0x1]
        %v312 = vld [vmem:[%s250 + $0x68] sm:$0x1]
        %v313 = vld [vmem:[%s250 + $0x74] sm:$0x1]
        %v314 = vld [vmem:[%s250 + $0x80] sm:$0x1]
        %v315 = vld [vmem:[%s250 + $0x8c] sm:$0x1]
        %v316 = vld [vmem:[%s250 + $0x98] sm:$0x1]
        %v317 = vld [vmem:[%s250 + $0xa4] sm:$0x1]
        %v318 = vld [vmem:[%s250 + $0xb0] sm:$0x1]
        %v319 = vld [vmem:[%s250 + $0xbc] sm:$0x1]
        %vm320 = vsmask.f32 3328
        %vm321 = vsmask.f32 7440
        %vm322 = vmor %vm320, %vm321
        %v324 = vshrl.u32 %v256, 16
        %v326 = vrot.slane %v324, 4
        %v327 = vshll.u32 %v256, 16
        %v329 = vrot.slane %v327, 5
        %v330 = vor.u32 %v326, %v329
        %v331 = vrot.slane %v330, 4
        %v333 = vshll.u32 %v257, 16
        %v335 = vrot.slane %v333, 5
        %v336 = vsel %vm322, %v331, %v335
        %v337 = vshrl.u32 %v257, 16
        %v339 = vrot.slane %v337, 4
        %v340 = vor.u32 %v339, %v335
        %v341 = vrot.slane %v340, 4
        %v343 = vshll.u32 %v304, 16
        %v345 = vrot.slane %v343, 5
        %v346 = vsel %vm322, %v341, %v345
        %v348 = vshrl.u32 %v258, 16
        %v350 = vrot.slane %v348, 4
        %v351 = vshll.u32 %v258, 16
        %v353 = vrot.slane %v351, 5
        %v354 = vor.u32 %v350, %v353
        %v355 = vrot.slane %v354, 4
        %v357 = vshll.u32 %v259, 16
        %v359 = vrot.slane %v357, 5
        %v360 = vsel %vm322, %v355, %v359
        %v361 = vshrl.u32 %v259, 16
        %v363 = vrot.slane %v361, 4
        %v364 = vor.u32 %v363, %v359
        %v365 = vrot.slane %v364, 4
        %v367 = vshll.u32 %v305, 16
        %v369 = vrot.slane %v367, 5
        %v370 = vsel %vm322, %v365, %v369
        %v372 = vshrl.u32 %v260, 16
        %v374 = vrot.slane %v372, 4
        %v375 = vshll.u32 %v260, 16
        %v377 = vrot.slane %v375, 5
        %v378 = vor.u32 %v374, %v377
        %v379 = vrot.slane %v378, 4
        %v381 = vshll.u32 %v261, 16
        %v383 = vrot.slane %v381, 5
        %v384 = vsel %vm322, %v379, %v383
        %v385 = vshrl.u32 %v261, 16
        %v387 = vrot.slane %v385, 4
        %v388 = vor.u32 %v387, %v383
        %v389 = vrot.slane %v388, 4
        %v391 = vshll.u32 %v306, 16
        %v393 = vrot.slane %v391, 5
        %v394 = vsel %vm322, %v389, %v393
        %v396 = vshrl.u32 %v262, 16
        %v398 = vrot.slane %v396, 4
        %v399 = vshll.u32 %v262, 16
        %v401 = vrot.slane %v399, 5
        %v402 = vor.u32 %v398, %v401
        %v403 = vrot.slane %v402, 4
        %v405 = vshll.u32 %v263, 16
        %v407 = vrot.slane %v405, 5
        %v408 = vsel %vm322, %v403, %v407
        %v409 = vshrl.u32 %v263, 16
        %v411 = vrot.slane %v409, 4
        %v412 = vor.u32 %v411, %v407
        %v413 = vrot.slane %v412, 4
        %v415 = vshll.u32 %v307, 16
        %v417 = vrot.slane %v415, 5
        %v418 = vsel %vm322, %v413, %v417
        %v420 = vshrl.u32 %v264, 16
        %v422 = vrot.slane %v420, 4
        %v423 = vshll.u32 %v264, 16
        %v425 = vrot.slane %v423, 5
        %v426 = vor.u32 %v422, %v425
        %v427 = vrot.slane %v426, 4
        %v429 = vshll.u32 %v265, 16
        %v431 = vrot.slane %v429, 5
        %v432 = vsel %vm322, %v427, %v431
        %v433 = vshrl.u32 %v265, 16
        %v435 = vrot.slane %v433, 4
        %v436 = vor.u32 %v435, %v431
        %v437 = vrot.slane %v436, 4
        %v439 = vshll.u32 %v308, 16
        %v441 = vrot.slane %v439, 5
        %v442 = vsel %vm322, %v437, %v441
        %v444 = vshrl.u32 %v266, 16
        %v446 = vrot.slane %v444, 4
        %v447 = vshll.u32 %v266, 16
        %v449 = vrot.slane %v447, 5
        %v450 = vor.u32 %v446, %v449
        %v451 = vrot.slane %v450, 4
        %v453 = vshll.u32 %v267, 16
        %v455 = vrot.slane %v453, 5
        %v456 = vsel %vm322, %v451, %v455
        %v457 = vshrl.u32 %v267, 16
        %v459 = vrot.slane %v457, 4
        %v460 = vor.u32 %v459, %v455
        %v461 = vrot.slane %v460, 4
        %v463 = vshll.u32 %v309, 16
        %v465 = vrot.slane %v463, 5
        %v466 = vsel %vm322, %v461, %v465
        %v468 = vshrl.u32 %v268, 16
        %v470 = vrot.slane %v468, 4
        %v471 = vshll.u32 %v268, 16
        %v473 = vrot.slane %v471, 5
        %v474 = vor.u32 %v470, %v473
        %v475 = vrot.slane %v474, 4
        %v477 = vshll.u32 %v269, 16
        %v479 = vrot.slane %v477, 5
        %v480 = vsel %vm322, %v475, %v479
        %v481 = vshrl.u32 %v269, 16
        %v483 = vrot.slane %v481, 4
        %v484 = vor.u32 %v483, %v479
        %v485 = vrot.slane %v484, 4
        %v487 = vshll.u32 %v310, 16
        %v489 = vrot.slane %v487, 5
        %v490 = vsel %vm322, %v485, %v489
        %v492 = vshrl.u32 %v270, 16
        %v494 = vrot.slane %v492, 4
        %v495 = vshll.u32 %v270, 16
        %v497 = vrot.slane %v495, 5
        %v498 = vor.u32 %v494, %v497
        %v499 = vrot.slane %v498, 4
        %v501 = vshll.u32 %v271, 16
        %v503 = vrot.slane %v501, 5
        %v504 = vsel %vm322, %v499, %v503
        %v505 = vshrl.u32 %v271, 16
        %v507 = vrot.slane %v505, 4
        %v508 = vor.u32 %v507, %v503
        %v509 = vrot.slane %v508, 4
        %v511 = vshll.u32 %v311, 16
        %v513 = vrot.slane %v511, 5
        %v514 = vsel %vm322, %v509, %v513
        %v516 = vshrl.u32 %v272, 16
        %v518 = vrot.slane %v516, 4
        %v519 = vshll.u32 %v272, 16
        %v521 = vrot.slane %v519, 5
        %v522 = vor.u32 %v518, %v521
        %v523 = vrot.slane %v522, 4
        %v525 = vshll.u32 %v273, 16
        %v527 = vrot.slane %v525, 5
        %v528 = vsel %vm322, %v523, %v527
        %v529 = vshrl.u32 %v273, 16
        %v531 = vrot.slane %v529, 4
        %v532 = vor.u32 %v531, %v527
        %v533 = vrot.slane %v532, 4
        %v535 = vshll.u32 %v312, 16
        %v537 = vrot.slane %v535, 5
        %v538 = vsel %vm322, %v533, %v537
        %v540 = vshrl.u32 %v274, 16
        %v542 = vrot.slane %v540, 4
        %v543 = vshll.u32 %v274, 16
        %v545 = vrot.slane %v543, 5
        %v546 = vor.u32 %v542, %v545
        %v547 = vrot.slane %v546, 4
        %v549 = vshll.u32 %v275, 16
        %v551 = vrot.slane %v549, 5
        %v552 = vsel %vm322, %v547, %v551
        %v553 = vshrl.u32 %v275, 16
        %v555 = vrot.slane %v553, 4
        %v556 = vor.u32 %v555, %v551
        %v557 = vrot.slane %v556, 4
        %v559 = vshll.u32 %v313, 16
        %v561 = vrot.slane %v559, 5
        %v562 = vsel %vm322, %v557, %v561
        %v564 = vshrl.u32 %v276, 16
        %v566 = vrot.slane %v564, 4
        %v567 = vshll.u32 %v276, 16
        %v569 = vrot.slane %v567, 5
        %v570 = vor.u32 %v566, %v569
        %v571 = vrot.slane %v570, 4
        %v573 = vshll.u32 %v277, 16
        %v575 = vrot.slane %v573, 5
        %v576 = vsel %vm322, %v571, %v575
        %v577 = vshrl.u32 %v277, 16
        %v579 = vrot.slane %v577, 4
        %v580 = vor.u32 %v579, %v575
        %v581 = vrot.slane %v580, 4
        %v583 = vshll.u32 %v314, 16
        %v585 = vrot.slane %v583, 5
        %v586 = vsel %vm322, %v581, %v585
        %v588 = vshrl.u32 %v278, 16
        %v590 = vrot.slane %v588, 4
        %v591 = vshll.u32 %v278, 16
        %v593 = vrot.slane %v591, 5
        %v594 = vor.u32 %v590, %v593
        %v595 = vrot.slane %v594, 4
        %v597 = vshll.u32 %v279, 16
        %v599 = vrot.slane %v597, 5
        %v600 = vsel %vm322, %v595, %v599
        %v601 = vshrl.u32 %v279, 16
        %v603 = vrot.slane %v601, 4
        %v604 = vor.u32 %v603, %v599
        %v605 = vrot.slane %v604, 4
        %v607 = vshll.u32 %v315, 16
        %v609 = vrot.slane %v607, 5
        %v610 = vsel %vm322, %v605, %v609
        %v612 = vshrl.u32 %v280, 16
        %v614 = vrot.slane %v612, 4
        %v615 = vshll.u32 %v280, 16
        %v617 = vrot.slane %v615, 5
        %v618 = vor.u32 %v614, %v617
        %v619 = vrot.slane %v618, 4
        %v621 = vshll.u32 %v281, 16
        %v623 = vrot.slane %v621, 5
        %v624 = vsel %vm322, %v619, %v623
        %v625 = vshrl.u32 %v281, 16
        %v627 = vrot.slane %v625, 4
        %v628 = vor.u32 %v627, %v623
        %v629 = vrot.slane %v628, 4
        %v631 = vshll.u32 %v316, 16
        %v633 = vrot.slane %v631, 5
        %v634 = vsel %vm322, %v629, %v633
        %v636 = vshrl.u32 %v282, 16
        %v638 = vrot.slane %v636, 4
        %v639 = vshll.u32 %v282, 16
        %v641 = vrot.slane %v639, 5
        %v642 = vor.u32 %v638, %v641
        %v643 = vrot.slane %v642, 4
        %v645 = vshll.u32 %v283, 16
        %v647 = vrot.slane %v645, 5
        %v648 = vsel %vm322, %v643, %v647
        %v649 = vshrl.u32 %v283, 16
        %v651 = vrot.slane %v649, 4
        %v652 = vor.u32 %v651, %v647
        %v653 = vrot.slane %v652, 4
        %v655 = vshll.u32 %v317, 16
        %v657 = vrot.slane %v655, 5
        %v658 = vsel %vm322, %v653, %v657
        %v660 = vshrl.u32 %v284, 16
        %v662 = vrot.slane %v660, 4
        %v663 = vshll.u32 %v284, 16
        %v665 = vrot.slane %v663, 5
        %v666 = vor.u32 %v662, %v665
        %v667 = vrot.slane %v666, 4
        %v669 = vshll.u32 %v285, 16
        %v671 = vrot.slane %v669, 5
        %v672 = vsel %vm322, %v667, %v671
        %v673 = vshrl.u32 %v285, 16
        %v675 = vrot.slane %v673, 4
        %v676 = vor.u32 %v675, %v671
        %v677 = vrot.slane %v676, 4
        %v679 = vshll.u32 %v318, 16
        %v681 = vrot.slane %v679, 5
        %v682 = vsel %vm322, %v677, %v681
        %v684 = vshrl.u32 %v286, 16
        %v686 = vrot.slane %v684, 4
        %v687 = vshll.u32 %v286, 16
        %v689 = vrot.slane %v687, 5
        %v690 = vor.u32 %v686, %v689
        %v691 = vrot.slane %v690, 4
        %v693 = vshll.u32 %v287, 16
        %v695 = vrot.slane %v693, 5
        %v696 = vsel %vm322, %v691, %v695
        %v697 = vshrl.u32 %v287, 16
        %v699 = vrot.slane %v697, 4
        %v700 = vor.u32 %v699, %v695
        %v701 = vrot.slane %v700, 4
        %v703 = vshll.u32 %v319, 16
        %v705 = vrot.slane %v703, 5
        %v706 = vsel %vm322, %v701, %v705
        %s707 = scalar_lea.vmem %s1, 64
        %v708 = vld [vmem:[%s707] sm:$0xf]
        %v709 = vld [vmem:[%s707 + $0x4] sm:$0xf]
        %v710 = vld [vmem:[%s707 + $0x8] sm:$0xf]
        %v711 = vld [vmem:[%s707 + $0xc] sm:$0xf]
        %v712 = vld [vmem:[%s707 + $0x10] sm:$0xf]
        %v713 = vld [vmem:[%s707 + $0x14] sm:$0xf]
        %v714 = vld [vmem:[%s707 + $0x18] sm:$0xf]
        %v715 = vld [vmem:[%s707 + $0x1c] sm:$0xf]
        %v716 = vld [vmem:[%s707 + $0x20] sm:$0xf]
        %v717 = vld [vmem:[%s707 + $0x24] sm:$0xf]
        %v718 = vld [vmem:[%s707 + $0x28] sm:$0xf]
        %v719 = vld [vmem:[%s707 + $0x2c] sm:$0xf]
        %v720 = vld [vmem:[%s707 + $0x30] sm:$0xf]
        %v721 = vld [vmem:[%s707 + $0x34] sm:$0xf]
        %v722 = vld [vmem:[%s707 + $0x38] sm:$0xf]
        %v723 = vld [vmem:[%s707 + $0x3c] sm:$0xf]
        %v724 = vunpack.c.l.b16 %v336
        %v725 = vunpack.c.l.b16 %v346
        %v726 = vunpack.c.l.b16 %v360
        %v727 = vunpack.c.l.b16 %v370
        %v728 = vunpack.c.l.b16 %v384
        %v729 = vunpack.c.l.b16 %v394
        %v730 = vunpack.c.l.b16 %v408
        %v731 = vunpack.c.l.b16 %v418
        %v732 = vunpack.c.l.b16 %v432
        %v733 = vunpack.c.l.b16 %v442
        %v734 = vunpack.c.l.b16 %v456
        %v735 = vunpack.c.l.b16 %v466
        %v736 = vunpack.c.l.b16 %v480
        %v737 = vunpack.c.l.b16 %v490
        %v738 = vunpack.c.l.b16 %v504
        %v739 = vunpack.c.l.b16 %v514
        %v740 = vunpack.c.l.b16 %v528
        %v741 = vunpack.c.l.b16 %v538
        %v742 = vunpack.c.l.b16 %v552
        %v743 = vunpack.c.l.b16 %v562
        %v744 = vunpack.c.l.b16 %v576
        %v745 = vunpack.c.l.b16 %v586
        %v746 = vunpack.c.l.b16 %v600
        %v747 = vunpack.c.l.b16 %v610
        %v748 = vunpack.c.l.b16 %v624
        %v749 = vunpack.c.l.b16 %v634
        %v750 = vunpack.c.l.b16 %v648
        %v751 = vunpack.c.l.b16 %v658
        %v752 = vunpack.c.l.b16 %v672
        %v753 = vunpack.c.l.b16 %v682
        %v754 = vunpack.c.l.b16 %v696
        %v755 = vunpack.c.l.b16 %v706
        %v756 = vpack.c.b16 %v725, %v724
        %v757 = vpack.c.b16 %v727, %v726
        %v758 = vpack.c.b16 %v729, %v728
        %v759 = vpack.c.b16 %v731, %v730
        %v760 = vpack.c.b16 %v733, %v732
        %v761 = vpack.c.b16 %v735, %v734
        %v762 = vpack.c.b16 %v737, %v736
        %v763 = vpack.c.b16 %v739, %v738
        %v764 = vpack.c.b16 %v741, %v740
        %v765 = vpack.c.b16 %v743, %v742
        %v766 = vpack.c.b16 %v745, %v744
        %v767 = vpack.c.b16 %v747, %v746
        %v768 = vpack.c.b16 %v749, %v748
        %v769 = vpack.c.b16 %v751, %v750
        %v770 = vpack.c.b16 %v753, %v752
        %v771 = vpack.c.b16 %v755, %v754
        %v804 = vunpack.c.l.b16 %v708
        %v805 = vunpack.c.l.b16 %v709
        %v806 = vunpack.c.l.b16 %v710
        %v807 = vunpack.c.l.b16 %v711
        %v808 = vunpack.c.l.b16 %v712
        %v809 = vunpack.c.l.b16 %v713
        %v810 = vunpack.c.l.b16 %v714
        %v811 = vunpack.c.l.b16 %v715
        %v812 = vunpack.c.l.b16 %v716
        %v813 = vunpack.c.l.b16 %v717
        %v814 = vunpack.c.l.b16 %v718
        %v815 = vunpack.c.l.b16 %v719
        %v816 = vunpack.c.l.b16 %v720
        %v817 = vunpack.c.l.b16 %v721
        %v818 = vunpack.c.l.b16 %v722
        %v819 = vunpack.c.l.b16 %v723
        %v820 = vpack.c.b16 %v805, %v804
        %v821 = vpack.c.b16 %v807, %v806
        %v822 = vpack.c.b16 %v809, %v808
        %v823 = vpack.c.b16 %v811, %v810
        %v824 = vpack.c.b16 %v813, %v812
        %v825 = vpack.c.b16 %v815, %v814
        %v826 = vpack.c.b16 %v817, %v816
        %v827 = vpack.c.b16 %v819, %v818
        %836 = vmatprep.subr.bf16.mxu0 0
        %837 = vmatpush1.bf16.msra.mxu0 %v820
        %838 = vmatprep.subr.bf16.mxu0 0
        %839 = vmatpush1.bf16.msra.mxu0 %v821
        %840 = vmatprep.subr.bf16.mxu0 0
        %841 = vmatpush1.bf16.msra.mxu0 %v822
        %842 = vmatprep.subr.bf16.mxu0 0
        %843 = vmatpush1.bf16.msra.mxu0 %v823
        %844 = vmatprep.subr.bf16.mxu0 0
        %845 = vmatpush1.bf16.msra.mxu0 %v824
        %846 = vmatprep.subr.bf16.mxu0 0
        %847 = vmatpush1.bf16.msra.mxu0 %v825
        %848 = vmatprep.subr.bf16.mxu0 0
        %849 = vmatpush1.bf16.msra.mxu0 %v826
        %850 = vmatprep.subr.bf16.mxu0 0
        %851 = vmatpush1.bf16.msra.mxu0 %v827
        %852 = vmatprep.subr.bf16.mxu0 0
        %853 = vmatpush1.bf16.msra.mxu0 0
        %854 = vmatprep.subr.bf16.mxu0 0
        %855 = vmatpush1.bf16.msra.mxu0 0
        %856 = vmatprep.subr.bf16.mxu0 0
        %857 = vmatpush1.bf16.msra.mxu0 0
        %858 = vmatprep.subr.bf16.mxu0 0
        %859 = vmatpush1.bf16.msra.mxu0 0
        %860 = vmatprep.subr.bf16.mxu0 0
        %861 = vmatpush1.bf16.msra.mxu0 0
        %862 = vmatprep.subr.bf16.mxu0 0
        %863 = vmatpush1.bf16.msra.mxu0 0
        %864 = vmatprep.subr.bf16.mxu0 0
        %865 = vmatpush1.bf16.msra.mxu0 0
        %866 = vmatprep.subr.bf16.mxu0 0
        %867 = vmatpush1.bf16.msra.mxu0 0
        %868 = vmatprep.mubr.bf16.mxu0 0
        %869 = vmatmul.mubr.bf16.gmra.mrb[0].mxu0 %v756
        %v870 = vpop.f32.mrb[0].mxu0
        %v871 = vadd.f32 0.0, %v870
        %v872 = vpop.f32.mrb[0].mxu0
        %v873 = vpop.f32.mrb[0].mxu0
        %v874 = vadd.f32 0.0, %v873
        %v875 = vpop.f32.mrb[0].mxu0
        %876 = vmatprep.mubr.bf16.mxu0 0
        %877 = vmatmul.mubr.bf16.gmra.mrb[0].mxu0 %v757
        %v878 = vpop.f32.mrb[0].mxu0
        %v879 = vadd.f32 0.0, %v878
        %v880 = vpop.f32.mrb[0].mxu0
        %v881 = vpop.f32.mrb[0].mxu0
        %v882 = vadd.f32 0.0, %v881
        %v883 = vpop.f32.mrb[0].mxu0
        %884 = vmatprep.mubr.bf16.mxu0 0
        %885 = vmatmul.mubr.bf16.gmra.mrb[0].mxu0 %v758
        %v886 = vpop.f32.mrb[0].mxu0
        %v887 = vadd.f32 0.0, %v886
        %v888 = vpop.f32.mrb[0].mxu0
        %v889 = vpop.f32.mrb[0].mxu0
        %v890 = vadd.f32 0.0, %v889
        %v891 = vpop.f32.mrb[0].mxu0
        %892 = vmatprep.mubr.bf16.mxu0 0
        %893 = vmatmul.mubr.bf16.gmra.mrb[0].mxu0 %v759
        %v894 = vpop.f32.mrb[0].mxu0
        %v895 = vadd.f32 0.0, %v894
        %v896 = vpop.f32.mrb[0].mxu0
        %v897 = vpop.f32.mrb[0].mxu0
        %v898 = vadd.f32 0.0, %v897
        %v899 = vpop.f32.mrb[0].mxu0
        %900 = vmatprep.mubr.bf16.mxu0 0
        %901 = vmatmul.mubr.bf16.gmra.mrb[0].mxu0 %v760
        %v902 = vpop.f32.mrb[0].mxu0
        %v903 = vadd.f32 0.0, %v902
        %v904 = vpop.f32.mrb[0].mxu0
        %v905 = vpop.f32.mrb[0].mxu0
        %v906 = vadd.f32 0.0, %v905
        %v907 = vpop.f32.mrb[0].mxu0
        %908 = vmatprep.mubr.bf16.mxu0 0
        %909 = vmatmul.mubr.bf16.gmra.mrb[0].mxu0 %v761
        %v910 = vpop.f32.mrb[0].mxu0
        %v911 = vadd.f32 0.0, %v910
        %v912 = vpop.f32.mrb[0].mxu0
        %v913 = vpop.f32.mrb[0].mxu0
        %v914 = vadd.f32 0.0, %v913
        %v915 = vpop.f32.mrb[0].mxu0
        %916 = vmatprep.mubr.bf16.mxu0 0
        %917 = vmatmul.mubr.bf16.gmra.mrb[0].mxu0 %v762
        %v918 = vpop.f32.mrb[0].mxu0
        %v919 = vadd.f32 0.0, %v918
        %v920 = vpop.f32.mrb[0].mxu0
        %v921 = vpop.f32.mrb[0].mxu0
        %v922 = vadd.f32 0.0, %v921
        %v923 = vpop.f32.mrb[0].mxu0
        %924 = vmatprep.mubr.bf16.mxu0 0
        %925 = vmatmul.mubr.bf16.gmra.mrb[0].mxu0 %v763
        %v926 = vpop.f32.mrb[0].mxu0
        %v927 = vadd.f32 0.0, %v926
        %v928 = vpop.f32.mrb[0].mxu0
        %v929 = vpop.f32.mrb[0].mxu0
        %v930 = vadd.f32 0.0, %v929
        %v931 = vpop.f32.mrb[0].mxu0
        %932 = vmatprep.mubr.bf16.mxu0 0
        %933 = vmatmul.mubr.bf16.gmra.mrb[0].mxu0 %v764
        %v934 = vpop.f32.mrb[0].mxu0
        %v935 = vadd.f32 0.0, %v934
        %v936 = vpop.f32.mrb[0].mxu0
        %v937 = vpop.f32.mrb[0].mxu0
        %v938 = vadd.f32 0.0, %v937
        %v939 = vpop.f32.mrb[0].mxu0
        %940 = vmatprep.mubr.bf16.mxu0 0
        %941 = vmatmul.mubr.bf16.gmra.mrb[0].mxu0 %v765
        %v942 = vpop.f32.mrb[0].mxu0
        %v943 = vadd.f32 0.0, %v942
        %v944 = vpop.f32.mrb[0].mxu0
        %v945 = vpop.f32.mrb[0].mxu0
        %v946 = vadd.f32 0.0, %v945
        %v947 = vpop.f32.mrb[0].mxu0
        %948 = vmatprep.mubr.bf16.mxu0 0
        %949 = vmatmul.mubr.bf16.gmra.mrb[0].mxu0 %v766
        %v950 = vpop.f32.mrb[0].mxu0
        %v951 = vadd.f32 0.0, %v950
        %v952 = vpop.f32.mrb[0].mxu0
        %v953 = vpop.f32.mrb[0].mxu0
        %v954 = vadd.f32 0.0, %v953
        %v955 = vpop.f32.mrb[0].mxu0
        %956 = vmatprep.mubr.bf16.mxu0 0
        %957 = vmatmul.mubr.bf16.gmra.mrb[0].mxu0 %v767
        %v958 = vpop.f32.mrb[0].mxu0
        %v959 = vadd.f32 0.0, %v958
        %v960 = vpop.f32.mrb[0].mxu0
        %v961 = vpop.f32.mrb[0].mxu0
        %v962 = vadd.f32 0.0, %v961
        %v963 = vpop.f32.mrb[0].mxu0
        %964 = vmatprep.mubr.bf16.mxu0 0
        %965 = vmatmul.mubr.bf16.gmra.mrb[0].mxu0 %v768
        %v966 = vpop.f32.mrb[0].mxu0
        %v967 = vadd.f32 0.0, %v966
        %v968 = vpop.f32.mrb[0].mxu0
        %v969 = vpop.f32.mrb[0].mxu0
        %v970 = vadd.f32 0.0, %v969
        %v971 = vpop.f32.mrb[0].mxu0
        %972 = vmatprep.mubr.bf16.mxu0 0
        %973 = vmatmul.mubr.bf16.gmra.mrb[0].mxu0 %v769
        %v974 = vpop.f32.mrb[0].mxu0
        %v975 = vadd.f32 0.0, %v974
        %v976 = vpop.f32.mrb[0].mxu0
        %v977 = vpop.f32.mrb[0].mxu0
        %v978 = vadd.f32 0.0, %v977
        %v979 = vpop.f32.mrb[0].mxu0
        %980 = vmatprep.mubr.bf16.mxu0 0
        %981 = vmatmul.mubr.bf16.gmra.mrb[0].mxu0 %v770
        %v982 = vpop.f32.mrb[0].mxu0
        %v983 = vadd.f32 0.0, %v982
        %v984 = vpop.f32.mrb[0].mxu0
        %v985 = vpop.f32.mrb[0].mxu0
        %v986 = vadd.f32 0.0, %v985
        %v987 = vpop.f32.mrb[0].mxu0
        %988 = vmatprep.mubr.bf16.mxu0 0
        %989 = vmatmul.mubr.bf16.gmra.mrb[0].mxu0 %v771
        %v990 = vpop.f32.mrb[0].mxu0
        %v991 = vadd.f32 0.0, %v990
        %v992 = vpop.f32.mrb[0].mxu0
        %v993 = vpop.f32.mrb[0].mxu0
        %v994 = vadd.f32 0.0, %v993
        %v995 = vpop.f32.mrb[0].mxu0
        %996 = vdwg.mxu0
        %v1029 = vunpack.c.l.b16 %v256
        %v1030 = vunpack.c.l.b16 %v257
        %v1031 = vunpack.c.l.b16 %v258
        %v1032 = vunpack.c.l.b16 %v259
        %v1033 = vunpack.c.l.b16 %v260
        %v1034 = vunpack.c.l.b16 %v261
        %v1035 = vunpack.c.l.b16 %v262
        %v1036 = vunpack.c.l.b16 %v263
        %v1037 = vunpack.c.l.b16 %v264
        %v1038 = vunpack.c.l.b16 %v265
        %v1039 = vunpack.c.l.b16 %v266
        %v1040 = vunpack.c.l.b16 %v267
        %v1041 = vunpack.c.l.b16 %v268
        %v1042 = vunpack.c.l.b16 %v269
        %v1043 = vunpack.c.l.b16 %v270
        %v1044 = vunpack.c.l.b16 %v271
        %v1045 = vunpack.c.l.b16 %v272
        %v1046 = vunpack.c.l.b16 %v273
        %v1047 = vunpack.c.l.b16 %v274
        %v1048 = vunpack.c.l.b16 %v275
        %v1049 = vunpack.c.l.b16 %v276
        %v1050 = vunpack.c.l.b16 %v277
        %v1051 = vunpack.c.l.b16 %v278
        %v1052 = vunpack.c.l.b16 %v279
        %v1053 = vunpack.c.l.b16 %v280
        %v1054 = vunpack.c.l.b16 %v281
        %v1055 = vunpack.c.l.b16 %v282
        %v1056 = vunpack.c.l.b16 %v283
        %v1057 = vunpack.c.l.b16 %v284
        %v1058 = vunpack.c.l.b16 %v285
        %v1059 = vunpack.c.l.b16 %v286
        %v1060 = vunpack.c.l.b16 %v287
        %v1061 = vpack.c.b16 %v1030, %v1029
        %v1062 = vpack.c.b16 %v1032, %v1031
        %v1063 = vpack.c.b16 %v1034, %v1033
        %v1064 = vpack.c.b16 %v1036, %v1035
        %v1065 = vpack.c.b16 %v1038, %v1037
        %v1066 = vpack.c.b16 %v1040, %v1039
        %v1067 = vpack.c.b16 %v1042, %v1041
        %v1068 = vpack.c.b16 %v1044, %v1043
        %v1069 = vpack.c.b16 %v1046, %v1045
        %v1070 = vpack.c.b16 %v1048, %v1047
        %v1071 = vpack.c.b16 %v1050, %v1049
        %v1072 = vpack.c.b16 %v1052, %v1051
        %v1073 = vpack.c.b16 %v1054, %v1053
        %v1074 = vpack.c.b16 %v1056, %v1055
        %v1075 = vpack.c.b16 %v1058, %v1057
        %v1076 = vpack.c.b16 %v1060, %v1059
        %v1109 = vunpack.c.l.b16 %v288
        %v1110 = vunpack.c.l.b16 %v289
        %v1111 = vunpack.c.l.b16 %v290
        %v1112 = vunpack.c.l.b16 %v291
        %v1113 = vunpack.c.l.b16 %v292
        %v1114 = vunpack.c.l.b16 %v293
        %v1115 = vunpack.c.l.b16 %v294
        %v1116 = vunpack.c.l.b16 %v295
        %v1117 = vunpack.c.l.b16 %v296
        %v1118 = vunpack.c.l.b16 %v297
        %v1119 = vunpack.c.l.b16 %v298
        %v1120 = vunpack.c.l.b16 %v299
        %v1121 = vunpack.c.l.b16 %v300
        %v1122 = vunpack.c.l.b16 %v301
        %v1123 = vunpack.c.l.b16 %v302
        %v1124 = vunpack.c.l.b16 %v303
        %v1125 = vpack.c.b16 %v1110, %v1109
        %v1126 = vpack.c.b16 %v1112, %v1111
        %v1127 = vpack.c.b16 %v1114, %v1113
        %v1128 = vpack.c.b16 %v1116, %v1115
        %v1129 = vpack.c.b16 %v1118, %v1117
        %v1130 = vpack.c.b16 %v1120, %v1119
        %v1131 = vpack.c.b16 %v1122, %v1121
        %v1132 = vpack.c.b16 %v1124, %v1123
        %1141 = vmatprep.subr.bf16.mxu0 0
        %1142 = vmatpush1.bf16.msra.mxu0 %v1125
        %1143 = vmatprep.subr.bf16.mxu0 0
        %1144 = vmatpush1.bf16.msra.mxu0 %v1126
        %1145 = vmatprep.subr.bf16.mxu0 0
        %1146 = vmatpush1.bf16.msra.mxu0 %v1127
        %1147 = vmatprep.subr.bf16.mxu0 0
        %1148 = vmatpush1.bf16.msra.mxu0 %v1128
        %1149 = vmatprep.subr.bf16.mxu0 0
        %1150 = vmatpush1.bf16.msra.mxu0 %v1129
        %1151 = vmatprep.subr.bf16.mxu0 0
        %1152 = vmatpush1.bf16.msra.mxu0 %v1130
        %1153 = vmatprep.subr.bf16.mxu0 0
        %1154 = vmatpush1.bf16.msra.mxu0 %v1131
        %1155 = vmatprep.subr.bf16.mxu0 0
        %1156 = vmatpush1.bf16.msra.mxu0 %v1132
        %1157 = vmatprep.subr.bf16.mxu0 0
        %1158 = vmatpush1.bf16.msra.mxu0 0
        %1159 = vmatprep.subr.bf16.mxu0 0
        %1160 = vmatpush1.bf16.msra.mxu0 0
        %1161 = vmatprep.subr.bf16.mxu0 0
        %1162 = vmatpush1.bf16.msra.mxu0 0
        %1163 = vmatprep.subr.bf16.mxu0 0
        %1164 = vmatpush1.bf16.msra.mxu0 0
        %1165 = vmatprep.subr.bf16.mxu0 0
        %1166 = vmatpush1.bf16.msra.mxu0 0
        %1167 = vmatprep.subr.bf16.mxu0 0
        %1168 = vmatpush1.bf16.msra.mxu0 0
        %1169 = vmatprep.subr.bf16.mxu0 0
        %1170 = vmatpush1.bf16.msra.mxu0 0
        %1171 = vmatprep.subr.bf16.mxu0 0
        %1172 = vmatpush1.bf16.msra.mxu0 0
        %1173 = vmatprep.mubr.bf16.mxu0 0
        %1174 = vmatmul.mubr.bf16.gmra.mrb[0].mxu0 %v1061
        %v1175 = vpop.f32.mrb[0].mxu0
        %v1176 = vadd.f32 %v871, %v1175
        %v1177 = vpop.f32.mrb[0].mxu0
        %v1178 = vpop.f32.mrb[0].mxu0
        %v1179 = vadd.f32 %v874, %v1178
        %v1180 = vpop.f32.mrb[0].mxu0
        %1181 = vmatprep.mubr.bf16.mxu0 0
        %1182 = vmatmul.mubr.bf16.gmra.mrb[0].mxu0 %v1062
        %v1183 = vpop.f32.mrb[0].mxu0
        %v1184 = vadd.f32 %v879, %v1183
        %v1185 = vpop.f32.mrb[0].mxu0
        %v1186 = vpop.f32.mrb[0].mxu0
        %v1187 = vadd.f32 %v882, %v1186
        %v1188 = vpop.f32.mrb[0].mxu0
        %1189 = vmatprep.mubr.bf16.mxu0 0
        %1190 = vmatmul.mubr.bf16.gmra.mrb[0].mxu0 %v1063
        %v1191 = vpop.f32.mrb[0].mxu0
        %v1192 = vadd.f32 %v887, %v1191
        %v1193 = vpop.f32.mrb[0].mxu0
        %v1194 = vpop.f32.mrb[0].mxu0
        %v1195 = vadd.f32 %v890, %v1194
        %v1196 = vpop.f32.mrb[0].mxu0
        %1197 = vmatprep.mubr.bf16.mxu0 0
        %1198 = vmatmul.mubr.bf16.gmra.mrb[0].mxu0 %v1064
        %v1199 = vpop.f32.mrb[0].mxu0
        %v1200 = vadd.f32 %v895, %v1199
        %v1201 = vpop.f32.mrb[0].mxu0
        %v1202 = vpop.f32.mrb[0].mxu0
        %v1203 = vadd.f32 %v898, %v1202
        %v1204 = vpop.f32.mrb[0].mxu0
        %1205 = vmatprep.mubr.bf16.mxu0 0
        %1206 = vmatmul.mubr.bf16.gmra.mrb[0].mxu0 %v1065
        %v1207 = vpop.f32.mrb[0].mxu0
        %v1208 = vadd.f32 %v903, %v1207
        %v1209 = vpop.f32.mrb[0].mxu0
        %v1210 = vpop.f32.mrb[0].mxu0
        %v1211 = vadd.f32 %v906, %v1210
        %v1212 = vpop.f32.mrb[0].mxu0
        %1213 = vmatprep.mubr.bf16.mxu0 0
        %1214 = vmatmul.mubr.bf16.gmra.mrb[0].mxu0 %v1066
        %v1215 = vpop.f32.mrb[0].mxu0
        %v1216 = vadd.f32 %v911, %v1215
        %v1217 = vpop.f32.mrb[0].mxu0
        %v1218 = vpop.f32.mrb[0].mxu0
        %v1219 = vadd.f32 %v914, %v1218
        %v1220 = vpop.f32.mrb[0].mxu0
        %1221 = vmatprep.mubr.bf16.mxu0 0
        %1222 = vmatmul.mubr.bf16.gmra.mrb[0].mxu0 %v1067
        %v1223 = vpop.f32.mrb[0].mxu0
        %v1224 = vadd.f32 %v919, %v1223
        %v1225 = vpop.f32.mrb[0].mxu0
        %v1226 = vpop.f32.mrb[0].mxu0
        %v1227 = vadd.f32 %v922, %v1226
        %v1228 = vpop.f32.mrb[0].mxu0
        %1229 = vmatprep.mubr.bf16.mxu0 0
        %1230 = vmatmul.mubr.bf16.gmra.mrb[0].mxu0 %v1068
        %v1231 = vpop.f32.mrb[0].mxu0
        %v1232 = vadd.f32 %v927, %v1231
        %v1233 = vpop.f32.mrb[0].mxu0
        %v1234 = vpop.f32.mrb[0].mxu0
        %v1235 = vadd.f32 %v930, %v1234
        %v1236 = vpop.f32.mrb[0].mxu0
        %1237 = vmatprep.mubr.bf16.mxu0 0
        %1238 = vmatmul.mubr.bf16.gmra.mrb[0].mxu0 %v1069
        %v1239 = vpop.f32.mrb[0].mxu0
        %v1240 = vadd.f32 %v935, %v1239
        %v1241 = vpop.f32.mrb[0].mxu0
        %v1242 = vpop.f32.mrb[0].mxu0
        %v1243 = vadd.f32 %v938, %v1242
        %v1244 = vpop.f32.mrb[0].mxu0
        %1245 = vmatprep.mubr.bf16.mxu0 0
        %1246 = vmatmul.mubr.bf16.gmra.mrb[0].mxu0 %v1070
        %v1247 = vpop.f32.mrb[0].mxu0
        %v1248 = vadd.f32 %v943, %v1247
        %v1249 = vpop.f32.mrb[0].mxu0
        %v1250 = vpop.f32.mrb[0].mxu0
        %v1251 = vadd.f32 %v946, %v1250
        %v1252 = vpop.f32.mrb[0].mxu0
        %1253 = vmatprep.mubr.bf16.mxu0 0
        %1254 = vmatmul.mubr.bf16.gmra.mrb[0].mxu0 %v1071
        %v1255 = vpop.f32.mrb[0].mxu0
        %v1256 = vadd.f32 %v951, %v1255
        %v1257 = vpop.f32.mrb[0].mxu0
        %v1258 = vpop.f32.mrb[0].mxu0
        %v1259 = vadd.f32 %v954, %v1258
        %v1260 = vpop.f32.mrb[0].mxu0
        %1261 = vmatprep.mubr.bf16.mxu0 0
        %1262 = vmatmul.mubr.bf16.gmra.mrb[0].mxu0 %v1072
        %v1263 = vpop.f32.mrb[0].mxu0
        %v1264 = vadd.f32 %v959, %v1263
        %v1265 = vpop.f32.mrb[0].mxu0
        %v1266 = vpop.f32.mrb[0].mxu0
        %v1267 = vadd.f32 %v962, %v1266
        %v1268 = vpop.f32.mrb[0].mxu0
        %1269 = vmatprep.mubr.bf16.mxu0 0
        %1270 = vmatmul.mubr.bf16.gmra.mrb[0].mxu0 %v1073
        %v1271 = vpop.f32.mrb[0].mxu0
        %v1272 = vadd.f32 %v967, %v1271
        %v1273 = vpop.f32.mrb[0].mxu0
        %v1274 = vpop.f32.mrb[0].mxu0
        %v1275 = vadd.f32 %v970, %v1274
        %v1276 = vpop.f32.mrb[0].mxu0
        %1277 = vmatprep.mubr.bf16.mxu0 0
        %1278 = vmatmul.mubr.bf16.gmra.mrb[0].mxu0 %v1074
        %v1279 = vpop.f32.mrb[0].mxu0
        %v1280 = vadd.f32 %v975, %v1279
        %v1281 = vpop.f32.mrb[0].mxu0
        %v1282 = vpop.f32.mrb[0].mxu0
        %v1283 = vadd.f32 %v978, %v1282
        %v1284 = vpop.f32.mrb[0].mxu0
        %1285 = vmatprep.mubr.bf16.mxu0 0
        %1286 = vmatmul.mubr.bf16.gmra.mrb[0].mxu0 %v1075
        %v1287 = vpop.f32.mrb[0].mxu0
        %v1288 = vadd.f32 %v983, %v1287
        %v1289 = vpop.f32.mrb[0].mxu0
        %v1290 = vpop.f32.mrb[0].mxu0
        %v1291 = vadd.f32 %v986, %v1290
        %v1292 = vpop.f32.mrb[0].mxu0
        %1293 = vmatprep.mubr.bf16.mxu0 0
        %1294 = vmatmul.mubr.bf16.gmra.mrb[0].mxu0 %v1076
        %v1295 = vpop.f32.mrb[0].mxu0
        %v1296 = vadd.f32 %v991, %v1295
        %v1297 = vpop.f32.mrb[0].mxu0
        %v1298 = vpop.f32.mrb[0].mxu0
        %v1299 = vadd.f32 %v994, %v1298
        %v1300 = vpop.f32.mrb[0].mxu0
        %1301 = vdwg.mxu0
        %v1302 = vld [vmem:[%s250] sm:$0xe]
        %v1303 = vld [vmem:[%s250 + $0xc] sm:$0xe]
        %v1304 = vld [vmem:[%s250 + $0x18] sm:$0xe]
        %v1305 = vld [vmem:[%s250 + $0x24] sm:$0xe]
        %v1306 = vld [vmem:[%s250 + $0x30] sm:$0xe]
        %v1307 = vld [vmem:[%s250 + $0x3c] sm:$0xe]
        %v1308 = vld [vmem:[%s250 + $0x48] sm:$0xe]
        %v1309 = vld [vmem:[%s250 + $0x54] sm:$0xe]
        %v1310 = vld [vmem:[%s250 + $0x60] sm:$0xe]
        %v1311 = vld [vmem:[%s250 + $0x6c] sm:$0xe]
        %v1312 = vld [vmem:[%s250 + $0x78] sm:$0xe]
        %v1313 = vld [vmem:[%s250 + $0x84] sm:$0xe]
        %v1314 = vld [vmem:[%s250 + $0x90] sm:$0xe]
        %v1315 = vld [vmem:[%s250 + $0x9c] sm:$0xe]
        %v1316 = vld [vmem:[%s250 + $0xa8] sm:$0xe]
        %v1317 = vld [vmem:[%s250 + $0xb4] sm:$0xe]
        %vm1350 = vcmask 1042432
        %vm1351 = vcmask 1046532
        %vm1352 = vmor %vm1350, %vm1351
        %v1353 = vrot.slane %v1302, 5
        %v1354 = vrot.slane %v1353, 4
        %v1355 = vrot.slane %v257, 5
        %v1356 = vsel %vm1352, %v1354, %v1355
        %v1357 = vrot.slane %v1355, 4
        %v1358 = vrot.slane %v304, 5
        %v1359 = vsel %vm1352, %v1357, %v1358
        %v1360 = vrot.slane %v1303, 5
        %v1361 = vrot.slane %v1360, 4
        %v1362 = vrot.slane %v259, 5
        %v1363 = vsel %vm1352, %v1361, %v1362
        %v1364 = vrot.slane %v1362, 4
        %v1365 = vrot.slane %v305, 5
        %v1366 = vsel %vm1352, %v1364, %v1365
        %v1367 = vrot.slane %v1304, 5
        %v1368 = vrot.slane %v1367, 4
        %v1369 = vrot.slane %v261, 5
        %v1370 = vsel %vm1352, %v1368, %v1369
        %v1371 = vrot.slane %v1369, 4
        %v1372 = vrot.slane %v306, 5
        %v1373 = vsel %vm1352, %v1371, %v1372
        %v1374 = vrot.slane %v1305, 5
        %v1375 = vrot.slane %v1374, 4
        %v1376 = vrot.slane %v263, 5
        %v1377 = vsel %vm1352, %v1375, %v1376
        %v1378 = vrot.slane %v1376, 4
        %v1379 = vrot.slane %v307, 5
        %v1380 = vsel %vm1352, %v1378, %v1379
        %v1381 = vrot.slane %v1306, 5
        %v1382 = vrot.slane %v1381, 4
        %v1383 = vrot.slane %v265, 5
        %v1384 = vsel %vm1352, %v1382, %v1383
        %v1385 = vrot.slane %v1383, 4
        %v1386 = vrot.slane %v308, 5
        %v1387 = vsel %vm1352, %v1385, %v1386
        %v1388 = vrot.slane %v1307, 5
        %v1389 = vrot.slane %v1388, 4
        %v1390 = vrot.slane %v267, 5
        %v1391 = vsel %vm1352, %v1389, %v1390
        %v1392 = vrot.slane %v1390, 4
        %v1393 = vrot.slane %v309, 5
        %v1394 = vsel %vm1352, %v1392, %v1393
        %v1395 = vrot.slane %v1308, 5
        %v1396 = vrot.slane %v1395, 4
        %v1397 = vrot.slane %v269, 5
        %v1398 = vsel %vm1352, %v1396, %v1397
        %v1399 = vrot.slane %v1397, 4
        %v1400 = vrot.slane %v310, 5
        %v1401 = vsel %vm1352, %v1399, %v1400
        %v1402 = vrot.slane %v1309, 5
        %v1403 = vrot.slane %v1402, 4
        %v1404 = vrot.slane %v271, 5
        %v1405 = vsel %vm1352, %v1403, %v1404
        %v1406 = vrot.slane %v1404, 4
        %v1407 = vrot.slane %v311, 5
        %v1408 = vsel %vm1352, %v1406, %v1407
        %v1409 = vrot.slane %v1310, 5
        %v1410 = vrot.slane %v1409, 4
        %v1411 = vrot.slane %v273, 5
        %v1412 = vsel %vm1352, %v1410, %v1411
        %v1413 = vrot.slane %v1411, 4
        %v1414 = vrot.slane %v312, 5
        %v1415 = vsel %vm1352, %v1413, %v1414
        %v1416 = vrot.slane %v1311, 5
        %v1417 = vrot.slane %v1416, 4
        %v1418 = vrot.slane %v275, 5
        %v1419 = vsel %vm1352, %v1417, %v1418
        %v1420 = vrot.slane %v1418, 4
        %v1421 = vrot.slane %v313, 5
        %v1422 = vsel %vm1352, %v1420, %v1421
        %v1423 = vrot.slane %v1312, 5
        %v1424 = vrot.slane %v1423, 4
        %v1425 = vrot.slane %v277, 5
        %v1426 = vsel %vm1352, %v1424, %v1425
        %v1427 = vrot.slane %v1425, 4
        %v1428 = vrot.slane %v314, 5
        %v1429 = vsel %vm1352, %v1427, %v1428
        %v1430 = vrot.slane %v1313, 5
        %v1431 = vrot.slane %v1430, 4
        %v1432 = vrot.slane %v279, 5
        %v1433 = vsel %vm1352, %v1431, %v1432
        %v1434 = vrot.slane %v1432, 4
        %v1435 = vrot.slane %v315, 5
        %v1436 = vsel %vm1352, %v1434, %v1435
        %v1437 = vrot.slane %v1314, 5
        %v1438 = vrot.slane %v1437, 4
        %v1439 = vrot.slane %v281, 5
        %v1440 = vsel %vm1352, %v1438, %v1439
        %v1441 = vrot.slane %v1439, 4
        %v1442 = vrot.slane %v316, 5
        %v1443 = vsel %vm1352, %v1441, %v1442
        %v1444 = vrot.slane %v1315, 5
        %v1445 = vrot.slane %v1444, 4
        %v1446 = vrot.slane %v283, 5
        %v1447 = vsel %vm1352, %v1445, %v1446
        %v1448 = vrot.slane %v1446, 4
        %v1449 = vrot.slane %v317, 5
        %v1450 = vsel %vm1352, %v1448, %v1449
        %v1451 = vrot.slane %v1316, 5
        %v1452 = vrot.slane %v1451, 4
        %v1453 = vrot.slane %v285, 5
        %v1454 = vsel %vm1352, %v1452, %v1453
        %v1455 = vrot.slane %v1453, 4
        %v1456 = vrot.slane %v318, 5
        %v1457 = vsel %vm1352, %v1455, %v1456
        %v1458 = vrot.slane %v1317, 5
        %v1459 = vrot.slane %v1458, 4
        %v1460 = vrot.slane %v287, 5
        %v1461 = vsel %vm1352, %v1459, %v1460
        %v1462 = vrot.slane %v1460, 4
        %v1463 = vrot.slane %v319, 5
        %v1464 = vsel %vm1352, %v1462, %v1463
        %s1465 = scalar_lea.vmem %s1, 128
        %v1466 = vld [vmem:[%s1465] sm:$0xf]
        %v1467 = vld [vmem:[%s1465 + $0x4] sm:$0xf]
        %v1468 = vld [vmem:[%s1465 + $0x8] sm:$0xf]
        %v1469 = vld [vmem:[%s1465 + $0xc] sm:$0xf]
        %v1470 = vld [vmem:[%s1465 + $0x10] sm:$0xf]
        %v1471 = vld [vmem:[%s1465 + $0x14] sm:$0xf]
        %v1472 = vld [vmem:[%s1465 + $0x18] sm:$0xf]
        %v1473 = vld [vmem:[%s1465 + $0x1c] sm:$0xf]
        %v1474 = vld [vmem:[%s1465 + $0x20] sm:$0xf]
        %v1475 = vld [vmem:[%s1465 + $0x24] sm:$0xf]
        %v1476 = vld [vmem:[%s1465 + $0x28] sm:$0xf]
        %v1477 = vld [vmem:[%s1465 + $0x2c] sm:$0xf]
        %v1478 = vld [vmem:[%s1465 + $0x30] sm:$0xf]
        %v1479 = vld [vmem:[%s1465 + $0x34] sm:$0xf]
        %v1480 = vld [vmem:[%s1465 + $0x38] sm:$0xf]
        %v1481 = vld [vmem:[%s1465 + $0x3c] sm:$0xf]
        %v1482 = vunpack.c.l.b16 %v1356
        %v1483 = vunpack.c.l.b16 %v1359
        %v1484 = vunpack.c.l.b16 %v1363
        %v1485 = vunpack.c.l.b16 %v1366
        %v1486 = vunpack.c.l.b16 %v1370
        %v1487 = vunpack.c.l.b16 %v1373
        %v1488 = vunpack.c.l.b16 %v1377
        %v1489 = vunpack.c.l.b16 %v1380
        %v1490 = vunpack.c.l.b16 %v1384
        %v1491 = vunpack.c.l.b16 %v1387
        %v1492 = vunpack.c.l.b16 %v1391
        %v1493 = vunpack.c.l.b16 %v1394
        %v1494 = vunpack.c.l.b16 %v1398
        %v1495 = vunpack.c.l.b16 %v1401
        %v1496 = vunpack.c.l.b16 %v1405
        %v1497 = vunpack.c.l.b16 %v1408
        %v1498 = vunpack.c.l.b16 %v1412
        %v1499 = vunpack.c.l.b16 %v1415
        %v1500 = vunpack.c.l.b16 %v1419
        %v1501 = vunpack.c.l.b16 %v1422
        %v1502 = vunpack.c.l.b16 %v1426
        %v1503 = vunpack.c.l.b16 %v1429
        %v1504 = vunpack.c.l.b16 %v1433
        %v1505 = vunpack.c.l.b16 %v1436
        %v1506 = vunpack.c.l.b16 %v1440
        %v1507 = vunpack.c.l.b16 %v1443
        %v1508 = vunpack.c.l.b16 %v1447
        %v1509 = vunpack.c.l.b16 %v1450
        %v1510 = vunpack.c.l.b16 %v1454
        %v1511 = vunpack.c.l.b16 %v1457
        %v1512 = vunpack.c.l.b16 %v1461
        %v1513 = vunpack.c.l.b16 %v1464
        %v1514 = vpack.c.b16 %v1483, %v1482
        %v1515 = vpack.c.b16 %v1485, %v1484
        %v1516 = vpack.c.b16 %v1487, %v1486
        %v1517 = vpack.c.b16 %v1489, %v1488
        %v1518 = vpack.c.b16 %v1491, %v1490
        %v1519 = vpack.c.b16 %v1493, %v1492
        %v1520 = vpack.c.b16 %v1495, %v1494
        %v1521 = vpack.c.b16 %v1497, %v1496
        %v1522 = vpack.c.b16 %v1499, %v1498
        %v1523 = vpack.c.b16 %v1501, %v1500
        %v1524 = vpack.c.b16 %v1503, %v1502
        %v1525 = vpack.c.b16 %v1505, %v1504
        %v1526 = vpack.c.b16 %v1507, %v1506
        %v1527 = vpack.c.b16 %v1509, %v1508
        %v1528 = vpack.c.b16 %v1511, %v1510
        %v1529 = vpack.c.b16 %v1513, %v1512
        %v1562 = vunpack.c.l.b16 %v1466
        %v1563 = vunpack.c.l.b16 %v1467
        %v1564 = vunpack.c.l.b16 %v1468
        %v1565 = vunpack.c.l.b16 %v1469
        %v1566 = vunpack.c.l.b16 %v1470
        %v1567 = vunpack.c.l.b16 %v1471
        %v1568 = vunpack.c.l.b16 %v1472
        %v1569 = vunpack.c.l.b16 %v1473
        %v1570 = vunpack.c.l.b16 %v1474
        %v1571 = vunpack.c.l.b16 %v1475
        %v1572 = vunpack.c.l.b16 %v1476
        %v1573 = vunpack.c.l.b16 %v1477
        %v1574 = vunpack.c.l.b16 %v1478
        %v1575 = vunpack.c.l.b16 %v1479
        %v1576 = vunpack.c.l.b16 %v1480
        %v1577 = vunpack.c.l.b16 %v1481
        %v1578 = vpack.c.b16 %v1563, %v1562
        %v1579 = vpack.c.b16 %v1565, %v1564
        %v1580 = vpack.c.b16 %v1567, %v1566
        %v1581 = vpack.c.b16 %v1569, %v1568
        %v1582 = vpack.c.b16 %v1571, %v1570
        %v1583 = vpack.c.b16 %v1573, %v1572
        %v1584 = vpack.c.b16 %v1575, %v1574
        %v1585 = vpack.c.b16 %v1577, %v1576
        %1594 = vmatprep.subr.bf16.mxu0 0
        %1595 = vmatpush1.bf16.msra.mxu0 %v1578
        %1596 = vmatprep.subr.bf16.mxu0 0
        %1597 = vmatpush1.bf16.msra.mxu0 %v1579
        %1598 = vmatprep.subr.bf16.mxu0 0
        %1599 = vmatpush1.bf16.msra.mxu0 %v1580
        %1600 = vmatprep.subr.bf16.mxu0 0
        %1601 = vmatpush1.bf16.msra.mxu0 %v1581
        %1602 = vmatprep.subr.bf16.mxu0 0
        %1603 = vmatpush1.bf16.msra.mxu0 %v1582
        %1604 = vmatprep.subr.bf16.mxu0 0
        %1605 = vmatpush1.bf16.msra.mxu0 %v1583
        %1606 = vmatprep.subr.bf16.mxu0 0
        %1607 = vmatpush1.bf16.msra.mxu0 %v1584
        %1608 = vmatprep.subr.bf16.mxu0 0
        %1609 = vmatpush1.bf16.msra.mxu0 %v1585
        %1610 = vmatprep.subr.bf16.mxu0 0
        %1611 = vmatpush1.bf16.msra.mxu0 0
        %1612 = vmatprep.subr.bf16.mxu0 0
        %1613 = vmatpush1.bf16.msra.mxu0 0
        %1614 = vmatprep.subr.bf16.mxu0 0
        %1615 = vmatpush1.bf16.msra.mxu0 0
        %1616 = vmatprep.subr.bf16.mxu0 0
        %1617 = vmatpush1.bf16.msra.mxu0 0
        %1618 = vmatprep.subr.bf16.mxu0 0
        %1619 = vmatpush1.bf16.msra.mxu0 0
        %1620 = vmatprep.subr.bf16.mxu0 0
        %1621 = vmatpush1.bf16.msra.mxu0 0
        %1622 = vmatprep.subr.bf16.mxu0 0
        %1623 = vmatpush1.bf16.msra.mxu0 0
        %1624 = vmatprep.subr.bf16.mxu0 0
        %1625 = vmatpush1.bf16.msra.mxu0 0
        %1626 = vmatprep.mubr.bf16.mxu0 0
        %1627 = vmatmul.mubr.bf16.gmra.mrb[0].mxu0 %v1514
        %v1628 = vpop.f32.mrb[0].mxu0
        %v1629 = vadd.f32 0.0, %v1628
        %v1630 = vpop.f32.mrb[0].mxu0
        %v1631 = vpop.f32.mrb[0].mxu0
        %v1632 = vadd.f32 0.0, %v1631
        %v1633 = vpop.f32.mrb[0].mxu0
        %1634 = vmatprep.mubr.bf16.mxu0 0
        %1635 = vmatmul.mubr.bf16.gmra.mrb[0].mxu0 %v1515
        %v1636 = vpop.f32.mrb[0].mxu0
        %v1637 = vadd.f32 0.0, %v1636
        %v1638 = vpop.f32.mrb[0].mxu0
        %v1639 = vpop.f32.mrb[0].mxu0
        %v1640 = vadd.f32 0.0, %v1639
        %v1641 = vpop.f32.mrb[0].mxu0
        %1642 = vmatprep.mubr.bf16.mxu0 0
        %1643 = vmatmul.mubr.bf16.gmra.mrb[0].mxu0 %v1516
        %v1644 = vpop.f32.mrb[0].mxu0
        %v1645 = vadd.f32 0.0, %v1644
        %v1646 = vpop.f32.mrb[0].mxu0
        %v1647 = vpop.f32.mrb[0].mxu0
        %v1648 = vadd.f32 0.0, %v1647
        %v1649 = vpop.f32.mrb[0].mxu0
        %1650 = vmatprep.mubr.bf16.mxu0 0
        %1651 = vmatmul.mubr.bf16.gmra.mrb[0].mxu0 %v1517
        %v1652 = vpop.f32.mrb[0].mxu0
        %v1653 = vadd.f32 0.0, %v1652
        %v1654 = vpop.f32.mrb[0].mxu0
        %v1655 = vpop.f32.mrb[0].mxu0
        %v1656 = vadd.f32 0.0, %v1655
        %v1657 = vpop.f32.mrb[0].mxu0
        %1658 = vmatprep.mubr.bf16.mxu0 0
        %1659 = vmatmul.mubr.bf16.gmra.mrb[0].mxu0 %v1518
        %v1660 = vpop.f32.mrb[0].mxu0
        %v1661 = vadd.f32 0.0, %v1660
        %v1662 = vpop.f32.mrb[0].mxu0
        %v1663 = vpop.f32.mrb[0].mxu0
        %v1664 = vadd.f32 0.0, %v1663
        %v1665 = vpop.f32.mrb[0].mxu0
        %1666 = vmatprep.mubr.bf16.mxu0 0
        %1667 = vmatmul.mubr.bf16.gmra.mrb[0].mxu0 %v1519
        %v1668 = vpop.f32.mrb[0].mxu0
        %v1669 = vadd.f32 0.0, %v1668
        %v1670 = vpop.f32.mrb[0].mxu0
        %v1671 = vpop.f32.mrb[0].mxu0
        %v1672 = vadd.f32 0.0, %v1671
        %v1673 = vpop.f32.mrb[0].mxu0
        %1674 = vmatprep.mubr.bf16.mxu0 0
        %1675 = vmatmul.mubr.bf16.gmra.mrb[0].mxu0 %v1520
        %v1676 = vpop.f32.mrb[0].mxu0
        %v1677 = vadd.f32 0.0, %v1676
        %v1678 = vpop.f32.mrb[0].mxu0
        %v1679 = vpop.f32.mrb[0].mxu0
        %v1680 = vadd.f32 0.0, %v1679
        %v1681 = vpop.f32.mrb[0].mxu0
        %1682 = vmatprep.mubr.bf16.mxu0 0
        %1683 = vmatmul.mubr.bf16.gmra.mrb[0].mxu0 %v1521
        %v1684 = vpop.f32.mrb[0].mxu0
        %v1685 = vadd.f32 0.0, %v1684
        %v1686 = vpop.f32.mrb[0].mxu0
        %v1687 = vpop.f32.mrb[0].mxu0
        %v1688 = vadd.f32 0.0, %v1687
        %v1689 = vpop.f32.mrb[0].mxu0
        %1690 = vmatprep.mubr.bf16.mxu0 0
        %1691 = vmatmul.mubr.bf16.gmra.mrb[0].mxu0 %v1522
        %v1692 = vpop.f32.mrb[0].mxu0
        %v1693 = vadd.f32 0.0, %v1692
        %v1694 = vpop.f32.mrb[0].mxu0
        %v1695 = vpop.f32.mrb[0].mxu0
        %v1696 = vadd.f32 0.0, %v1695
        %v1697 = vpop.f32.mrb[0].mxu0
        %1698 = vmatprep.mubr.bf16.mxu0 0
        %1699 = vmatmul.mubr.bf16.gmra.mrb[0].mxu0 %v1523
        %v1700 = vpop.f32.mrb[0].mxu0
        %v1701 = vadd.f32 0.0, %v1700
        %v1702 = vpop.f32.mrb[0].mxu0
        %v1703 = vpop.f32.mrb[0].mxu0
        %v1704 = vadd.f32 0.0, %v1703
        %v1705 = vpop.f32.mrb[0].mxu0
        %1706 = vmatprep.mubr.bf16.mxu0 0
        %1707 = vmatmul.mubr.bf16.gmra.mrb[0].mxu0 %v1524
        %v1708 = vpop.f32.mrb[0].mxu0
        %v1709 = vadd.f32 0.0, %v1708
        %v1710 = vpop.f32.mrb[0].mxu0
        %v1711 = vpop.f32.mrb[0].mxu0
        %v1712 = vadd.f32 0.0, %v1711
        %v1713 = vpop.f32.mrb[0].mxu0
        %1714 = vmatprep.mubr.bf16.mxu0 0
        %1715 = vmatmul.mubr.bf16.gmra.mrb[0].mxu0 %v1525
        %v1716 = vpop.f32.mrb[0].mxu0
        %v1717 = vadd.f32 0.0, %v1716
        %v1718 = vpop.f32.mrb[0].mxu0
        %v1719 = vpop.f32.mrb[0].mxu0
        %v1720 = vadd.f32 0.0, %v1719
        %v1721 = vpop.f32.mrb[0].mxu0
        %1722 = vmatprep.mubr.bf16.mxu0 0
        %1723 = vmatmul.mubr.bf16.gmra.mrb[0].mxu0 %v1526
        %v1724 = vpop.f32.mrb[0].mxu0
        %v1725 = vadd.f32 0.0, %v1724
        %v1726 = vpop.f32.mrb[0].mxu0
        %v1727 = vpop.f32.mrb[0].mxu0
        %v1728 = vadd.f32 0.0, %v1727
        %v1729 = vpop.f32.mrb[0].mxu0
        %1730 = vmatprep.mubr.bf16.mxu0 0
        %1731 = vmatmul.mubr.bf16.gmra.mrb[0].mxu0 %v1527
        %v1732 = vpop.f32.mrb[0].mxu0
        %v1733 = vadd.f32 0.0, %v1732
        %v1734 = vpop.f32.mrb[0].mxu0
        %v1735 = vpop.f32.mrb[0].mxu0
        %v1736 = vadd.f32 0.0, %v1735
        %v1737 = vpop.f32.mrb[0].mxu0
        %1738 = vmatprep.mubr.bf16.mxu0 0
        %1739 = vmatmul.mubr.bf16.gmra.mrb[0].mxu0 %v1528
        %v1740 = vpop.f32.mrb[0].mxu0
        %v1741 = vadd.f32 0.0, %v1740
        %v1742 = vpop.f32.mrb[0].mxu0
        %v1743 = vpop.f32.mrb[0].mxu0
        %v1744 = vadd.f32 0.0, %v1743
        %v1745 = vpop.f32.mrb[0].mxu0
        %1746 = vmatprep.mubr.bf16.mxu0 0
        %1747 = vmatmul.mubr.bf16.gmra.mrb[0].mxu0 %v1529
        %v1748 = vpop.f32.mrb[0].mxu0
        %v1749 = vadd.f32 0.0, %v1748
        %v1750 = vpop.f32.mrb[0].mxu0
        %v1751 = vpop.f32.mrb[0].mxu0
        %v1752 = vadd.f32 0.0, %v1751
        %v1753 = vpop.f32.mrb[0].mxu0
        %1754 = vdwg.mxu0
        %v1755 = vadd.f32 %v1176, %v1629
        %v1756 = vadd.f32 %v1179, %v1632
        %v1757 = vadd.f32 %v1184, %v1637
        %v1758 = vadd.f32 %v1187, %v1640
        %v1759 = vadd.f32 %v1192, %v1645
        %v1760 = vadd.f32 %v1195, %v1648
        %v1761 = vadd.f32 %v1200, %v1653
        %v1762 = vadd.f32 %v1203, %v1656
        %v1763 = vadd.f32 %v1208, %v1661
        %v1764 = vadd.f32 %v1211, %v1664
        %v1765 = vadd.f32 %v1216, %v1669
        %v1766 = vadd.f32 %v1219, %v1672
        %v1767 = vadd.f32 %v1224, %v1677
        %v1768 = vadd.f32 %v1227, %v1680
        %v1769 = vadd.f32 %v1232, %v1685
        %v1770 = vadd.f32 %v1235, %v1688
        %v1771 = vadd.f32 %v1240, %v1693
        %v1772 = vadd.f32 %v1243, %v1696
        %v1773 = vadd.f32 %v1248, %v1701
        %v1774 = vadd.f32 %v1251, %v1704
        %v1775 = vadd.f32 %v1256, %v1709
        %v1776 = vadd.f32 %v1259, %v1712
        %v1777 = vadd.f32 %v1264, %v1717
        %v1778 = vadd.f32 %v1267, %v1720
        %v1779 = vadd.f32 %v1272, %v1725
        %v1780 = vadd.f32 %v1275, %v1728
        %v1781 = vadd.f32 %v1280, %v1733
        %v1782 = vadd.f32 %v1283, %v1736
        %v1783 = vadd.f32 %v1288, %v1741
        %v1784 = vadd.f32 %v1291, %v1744
        %v1785 = vadd.f32 %v1296, %v1749
        %v1786 = vadd.f32 %v1299, %v1752
        %s1787 = scalar_lea.vmem %s250, 12
        %v1788 = vld [vmem:[%s1787] sm:$0xf]
        %v1789 = vld [vmem:[%s1787 + $0x4] sm:$0xf]
        %v1790 = vld [vmem:[%s1787 + $0xc] sm:$0xf]
        %v1791 = vld [vmem:[%s1787 + $0x10] sm:$0xf]
        %v1792 = vld [vmem:[%s1787 + $0x18] sm:$0xf]
        %v1793 = vld [vmem:[%s1787 + $0x1c] sm:$0xf]
        %v1794 = vld [vmem:[%s1787 + $0x24] sm:$0xf]
        %v1795 = vld [vmem:[%s1787 + $0x28] sm:$0xf]
        %v1796 = vld [vmem:[%s1787 + $0x30] sm:$0xf]
        %v1797 = vld [vmem:[%s1787 + $0x34] sm:$0xf]
        %v1798 = vld [vmem:[%s1787 + $0x3c] sm:$0xf]
        %v1799 = vld [vmem:[%s1787 + $0x40] sm:$0xf]
        %v1800 = vld [vmem:[%s1787 + $0x48] sm:$0xf]
        %v1801 = vld [vmem:[%s1787 + $0x4c] sm:$0xf]
        %v1802 = vld [vmem:[%s1787 + $0x54] sm:$0xf]
        %v1803 = vld [vmem:[%s1787 + $0x58] sm:$0xf]
        %v1804 = vld [vmem:[%s1787 + $0x60] sm:$0xf]
        %v1805 = vld [vmem:[%s1787 + $0x64] sm:$0xf]
        %v1806 = vld [vmem:[%s1787 + $0x6c] sm:$0xf]
        %v1807 = vld [vmem:[%s1787 + $0x70] sm:$0xf]
        %v1808 = vld [vmem:[%s1787 + $0x78] sm:$0xf]
        %v1809 = vld [vmem:[%s1787 + $0x7c] sm:$0xf]
        %v1810 = vld [vmem:[%s1787 + $0x84] sm:$0xf]
        %v1811 = vld [vmem:[%s1787 + $0x88] sm:$0xf]
        %v1812 = vld [vmem:[%s1787 + $0x90] sm:$0xf]
        %v1813 = vld [vmem:[%s1787 + $0x94] sm:$0xf]
        %v1814 = vld [vmem:[%s1787 + $0x9c] sm:$0xf]
        %v1815 = vld [vmem:[%s1787 + $0xa0] sm:$0xf]
        %v1816 = vld [vmem:[%s1787 + $0xa8] sm:$0xf]
        %v1817 = vld [vmem:[%s1787 + $0xac] sm:$0xf]
        %v1818 = vld [vmem:[%s1787 + $0xb4] sm:$0xf]
        %v1819 = vld [vmem:[%s1787 + $0xb8] sm:$0xf]
        %s1820 = scalar_lea.vmem %s1, 192
        %v1821 = vld [vmem:[%s1820] sm:$0xf]
        %v1822 = vld [vmem:[%s1820 + $0x4] sm:$0xf]
        %v1823 = vld [vmem:[%s1820 + $0x8] sm:$0xf]
        %v1824 = vld [vmem:[%s1820 + $0xc] sm:$0xf]
        %v1825 = vld [vmem:[%s1820 + $0x10] sm:$0xf]
        %v1826 = vld [vmem:[%s1820 + $0x14] sm:$0xf]
        %v1827 = vld [vmem:[%s1820 + $0x18] sm:$0xf]
        %v1828 = vld [vmem:[%s1820 + $0x1c] sm:$0xf]
        %v1829 = vld [vmem:[%s1820 + $0x20] sm:$0xf]
        %v1830 = vld [vmem:[%s1820 + $0x24] sm:$0xf]
        %v1831 = vld [vmem:[%s1820 + $0x28] sm:$0xf]
        %v1832 = vld [vmem:[%s1820 + $0x2c] sm:$0xf]
        %v1833 = vld [vmem:[%s1820 + $0x30] sm:$0xf]
        %v1834 = vld [vmem:[%s1820 + $0x34] sm:$0xf]
        %v1835 = vld [vmem:[%s1820 + $0x38] sm:$0xf]
        %v1836 = vld [vmem:[%s1820 + $0x3c] sm:$0xf]
        %v1869 = vunpack.c.l.b16 %v1788
        %v1870 = vunpack.c.l.b16 %v1789
        %v1871 = vunpack.c.l.b16 %v1790
        %v1872 = vunpack.c.l.b16 %v1791
        %v1873 = vunpack.c.l.b16 %v1792
        %v1874 = vunpack.c.l.b16 %v1793
        %v1875 = vunpack.c.l.b16 %v1794
        %v1876 = vunpack.c.l.b16 %v1795
        %v1877 = vunpack.c.l.b16 %v1796
        %v1878 = vunpack.c.l.b16 %v1797
        %v1879 = vunpack.c.l.b16 %v1798
        %v1880 = vunpack.c.l.b16 %v1799
        %v1881 = vunpack.c.l.b16 %v1800
        %v1882 = vunpack.c.l.b16 %v1801
        %v1883 = vunpack.c.l.b16 %v1802
        %v1884 = vunpack.c.l.b16 %v1803
        %v1885 = vunpack.c.l.b16 %v1804
        %v1886 = vunpack.c.l.b16 %v1805
        %v1887 = vunpack.c.l.b16 %v1806
        %v1888 = vunpack.c.l.b16 %v1807
        %v1889 = vunpack.c.l.b16 %v1808
        %v1890 = vunpack.c.l.b16 %v1809
        %v1891 = vunpack.c.l.b16 %v1810
        %v1892 = vunpack.c.l.b16 %v1811
        %v1893 = vunpack.c.l.b16 %v1812
        %v1894 = vunpack.c.l.b16 %v1813
        %v1895 = vunpack.c.l.b16 %v1814
        %v1896 = vunpack.c.l.b16 %v1815
        %v1897 = vunpack.c.l.b16 %v1816
        %v1898 = vunpack.c.l.b16 %v1817
        %v1899 = vunpack.c.l.b16 %v1818
        %v1900 = vunpack.c.l.b16 %v1819
        %v1901 = vpack.c.b16 %v1870, %v1869
        %v1902 = vpack.c.b16 %v1872, %v1871
        %v1903 = vpack.c.b16 %v1874, %v1873
        %v1904 = vpack.c.b16 %v1876, %v1875
        %v1905 = vpack.c.b16 %v1878, %v1877
        %v1906 = vpack.c.b16 %v1880, %v1879
        %v1907 = vpack.c.b16 %v1882, %v1881
        %v1908 = vpack.c.b16 %v1884, %v1883
        %v1909 = vpack.c.b16 %v1886, %v1885
        %v1910 = vpack.c.b16 %v1888, %v1887
        %v1911 = vpack.c.b16 %v1890, %v1889
        %v1912 = vpack.c.b16 %v1892, %v1891
        %v1913 = vpack.c.b16 %v1894, %v1893
        %v1914 = vpack.c.b16 %v1896, %v1895
        %v1915 = vpack.c.b16 %v1898, %v1897
        %v1916 = vpack.c.b16 %v1900, %v1899
        %v1949 = vunpack.c.l.b16 %v1821
        %v1950 = vunpack.c.l.b16 %v1822
        %v1951 = vunpack.c.l.b16 %v1823
        %v1952 = vunpack.c.l.b16 %v1824
        %v1953 = vunpack.c.l.b16 %v1825
        %v1954 = vunpack.c.l.b16 %v1826
        %v1955 = vunpack.c.l.b16 %v1827
        %v1956 = vunpack.c.l.b16 %v1828
        %v1957 = vunpack.c.l.b16 %v1829
        %v1958 = vunpack.c.l.b16 %v1830
        %v1959 = vunpack.c.l.b16 %v1831
        %v1960 = vunpack.c.l.b16 %v1832
        %v1961 = vunpack.c.l.b16 %v1833
        %v1962 = vunpack.c.l.b16 %v1834
        %v1963 = vunpack.c.l.b16 %v1835
        %v1964 = vunpack.c.l.b16 %v1836
        %v1965 = vpack.c.b16 %v1950, %v1949
        %v1966 = vpack.c.b16 %v1952, %v1951
        %v1967 = vpack.c.b16 %v1954, %v1953
        %v1968 = vpack.c.b16 %v1956, %v1955
        %v1969 = vpack.c.b16 %v1958, %v1957
        %v1970 = vpack.c.b16 %v1960, %v1959
        %v1971 = vpack.c.b16 %v1962, %v1961
        %v1972 = vpack.c.b16 %v1964, %v1963
        %1981 = vmatprep.subr.bf16.mxu0 0
        %1982 = vmatpush1.bf16.msra.mxu0 %v1965
        %1983 = vmatprep.subr.bf16.mxu0 0
        %1984 = vmatpush1.bf16.msra.mxu0 %v1966
        %1985 = vmatprep.subr.bf16.mxu0 0
        %1986 = vmatpush1.bf16.msra.mxu0 %v1967
        %1987 = vmatprep.subr.bf16.mxu0 0
        %1988 = vmatpush1.bf16.msra.mxu0 %v1968
        %1989 = vmatprep.subr.bf16.mxu0 0
        %1990 = vmatpush1.bf16.msra.mxu0 %v1969
        %1991 = vmatprep.subr.bf16.mxu0 0
        %1992 = vmatpush1.bf16.msra.mxu0 %v1970
        %1993 = vmatprep.subr.bf16.mxu0 0
        %1994 = vmatpush1.bf16.msra.mxu0 %v1971
        %1995 = vmatprep.subr.bf16.mxu0 0
        %1996 = vmatpush1.bf16.msra.mxu0 %v1972
        %1997 = vmatprep.subr.bf16.mxu0 0
        %1998 = vmatpush1.bf16.msra.mxu0 0
        %1999 = vmatprep.subr.bf16.mxu0 0
        %2000 = vmatpush1.bf16.msra.mxu0 0
        %2001 = vmatprep.subr.bf16.mxu0 0
        %2002 = vmatpush1.bf16.msra.mxu0 0
        %2003 = vmatprep.subr.bf16.mxu0 0
        %2004 = vmatpush1.bf16.msra.mxu0 0
        %2005 = vmatprep.subr.bf16.mxu0 0
        %2006 = vmatpush1.bf16.msra.mxu0 0
        %2007 = vmatprep.subr.bf16.mxu0 0
        %2008 = vmatpush1.bf16.msra.mxu0 0
        %2009 = vmatprep.subr.bf16.mxu0 0
        %2010 = vmatpush1.bf16.msra.mxu0 0
        %2011 = vmatprep.subr.bf16.mxu0 0
        %2012 = vmatpush1.bf16.msra.mxu0 0
        %2013 = vmatprep.mubr.bf16.mxu0 0
        %2014 = vmatmul.mubr.bf16.gmra.mrb[0].mxu0 %v1901
        %v2015 = vpop.f32.mrb[0].mxu0
        %v2016 = vadd.f32 0.0, %v2015
        %v2017 = vpop.f32.mrb[0].mxu0
        %v2018 = vpop.f32.mrb[0].mxu0
        %v2019 = vadd.f32 0.0, %v2018
        %v2020 = vpop.f32.mrb[0].mxu0
        %2021 = vmatprep.mubr.bf16.mxu0 0
        %2022 = vmatmul.mubr.bf16.gmra.mrb[0].mxu0 %v1902
        %v2023 = vpop.f32.mrb[0].mxu0
        %v2024 = vadd.f32 0.0, %v2023
        %v2025 = vpop.f32.mrb[0].mxu0
        %v2026 = vpop.f32.mrb[0].mxu0
        %v2027 = vadd.f32 0.0, %v2026
        %v2028 = vpop.f32.mrb[0].mxu0
        %2029 = vmatprep.mubr.bf16.mxu0 0
        %2030 = vmatmul.mubr.bf16.gmra.mrb[0].mxu0 %v1903
        %v2031 = vpop.f32.mrb[0].mxu0
        %v2032 = vadd.f32 0.0, %v2031
        %v2033 = vpop.f32.mrb[0].mxu0
        %v2034 = vpop.f32.mrb[0].mxu0
        %v2035 = vadd.f32 0.0, %v2034
        %v2036 = vpop.f32.mrb[0].mxu0
        %2037 = vmatprep.mubr.bf16.mxu0 0
        %2038 = vmatmul.mubr.bf16.gmra.mrb[0].mxu0 %v1904
        %v2039 = vpop.f32.mrb[0].mxu0
        %v2040 = vadd.f32 0.0, %v2039
        %v2041 = vpop.f32.mrb[0].mxu0
        %v2042 = vpop.f32.mrb[0].mxu0
        %v2043 = vadd.f32 0.0, %v2042
        %v2044 = vpop.f32.mrb[0].mxu0
        %2045 = vmatprep.mubr.bf16.mxu0 0
        %2046 = vmatmul.mubr.bf16.gmra.mrb[0].mxu0 %v1905
        %v2047 = vpop.f32.mrb[0].mxu0
        %v2048 = vadd.f32 0.0, %v2047
        %v2049 = vpop.f32.mrb[0].mxu0
        %v2050 = vpop.f32.mrb[0].mxu0
        %v2051 = vadd.f32 0.0, %v2050
        %v2052 = vpop.f32.mrb[0].mxu0
        %2053 = vmatprep.mubr.bf16.mxu0 0
        %2054 = vmatmul.mubr.bf16.gmra.mrb[0].mxu0 %v1906
        %v2055 = vpop.f32.mrb[0].mxu0
        %v2056 = vadd.f32 0.0, %v2055
        %v2057 = vpop.f32.mrb[0].mxu0
        %v2058 = vpop.f32.mrb[0].mxu0
        %v2059 = vadd.f32 0.0, %v2058
        %v2060 = vpop.f32.mrb[0].mxu0
        %2061 = vmatprep.mubr.bf16.mxu0 0
        %2062 = vmatmul.mubr.bf16.gmra.mrb[0].mxu0 %v1907
        %v2063 = vpop.f32.mrb[0].mxu0
        %v2064 = vadd.f32 0.0, %v2063
        %v2065 = vpop.f32.mrb[0].mxu0
        %v2066 = vpop.f32.mrb[0].mxu0
        %v2067 = vadd.f32 0.0, %v2066
        %v2068 = vpop.f32.mrb[0].mxu0
        %2069 = vmatprep.mubr.bf16.mxu0 0
        %2070 = vmatmul.mubr.bf16.gmra.mrb[0].mxu0 %v1908
        %v2071 = vpop.f32.mrb[0].mxu0
        %v2072 = vadd.f32 0.0, %v2071
        %v2073 = vpop.f32.mrb[0].mxu0
        %v2074 = vpop.f32.mrb[0].mxu0
        %v2075 = vadd.f32 0.0, %v2074
        %v2076 = vpop.f32.mrb[0].mxu0
        %2077 = vmatprep.mubr.bf16.mxu0 0
        %2078 = vmatmul.mubr.bf16.gmra.mrb[0].mxu0 %v1909
        %v2079 = vpop.f32.mrb[0].mxu0
        %v2080 = vadd.f32 0.0, %v2079
        %v2081 = vpop.f32.mrb[0].mxu0
        %v2082 = vpop.f32.mrb[0].mxu0
        %v2083 = vadd.f32 0.0, %v2082
        %v2084 = vpop.f32.mrb[0].mxu0
        %2085 = vmatprep.mubr.bf16.mxu0 0
        %2086 = vmatmul.mubr.bf16.gmra.mrb[0].mxu0 %v1910
        %v2087 = vpop.f32.mrb[0].mxu0
        %v2088 = vadd.f32 0.0, %v2087
        %v2089 = vpop.f32.mrb[0].mxu0
        %v2090 = vpop.f32.mrb[0].mxu0
        %v2091 = vadd.f32 0.0, %v2090
        %v2092 = vpop.f32.mrb[0].mxu0
        %2093 = vmatprep.mubr.bf16.mxu0 0
        %2094 = vmatmul.mubr.bf16.gmra.mrb[0].mxu0 %v1911
        %v2095 = vpop.f32.mrb[0].mxu0
        %v2096 = vadd.f32 0.0, %v2095
        %v2097 = vpop.f32.mrb[0].mxu0
        %v2098 = vpop.f32.mrb[0].mxu0
        %v2099 = vadd.f32 0.0, %v2098
        %v2100 = vpop.f32.mrb[0].mxu0
        %2101 = vmatprep.mubr.bf16.mxu0 0
        %2102 = vmatmul.mubr.bf16.gmra.mrb[0].mxu0 %v1912
        %v2103 = vpop.f32.mrb[0].mxu0
        %v2104 = vadd.f32 0.0, %v2103
        %v2105 = vpop.f32.mrb[0].mxu0
        %v2106 = vpop.f32.mrb[0].mxu0
        %v2107 = vadd.f32 0.0, %v2106
        %v2108 = vpop.f32.mrb[0].mxu0
        %2109 = vmatprep.mubr.bf16.mxu0 0
        %2110 = vmatmul.mubr.bf16.gmra.mrb[0].mxu0 %v1913
        %v2111 = vpop.f32.mrb[0].mxu0
        %v2112 = vadd.f32 0.0, %v2111
        %v2113 = vpop.f32.mrb[0].mxu0
        %v2114 = vpop.f32.mrb[0].mxu0
        %v2115 = vadd.f32 0.0, %v2114
        %v2116 = vpop.f32.mrb[0].mxu0
        %2117 = vmatprep.mubr.bf16.mxu0 0
        %2118 = vmatmul.mubr.bf16.gmra.mrb[0].mxu0 %v1914
        %v2119 = vpop.f32.mrb[0].mxu0
        %v2120 = vadd.f32 0.0, %v2119
        %v2121 = vpop.f32.mrb[0].mxu0
        %v2122 = vpop.f32.mrb[0].mxu0
        %v2123 = vadd.f32 0.0, %v2122
        %v2124 = vpop.f32.mrb[0].mxu0
        %2125 = vmatprep.mubr.bf16.mxu0 0
        %2126 = vmatmul.mubr.bf16.gmra.mrb[0].mxu0 %v1915
        %v2127 = vpop.f32.mrb[0].mxu0
        %v2128 = vadd.f32 0.0, %v2127
        %v2129 = vpop.f32.mrb[0].mxu0
        %v2130 = vpop.f32.mrb[0].mxu0
        %v2131 = vadd.f32 0.0, %v2130
        %v2132 = vpop.f32.mrb[0].mxu0
        %2133 = vmatprep.mubr.bf16.mxu0 0
        %2134 = vmatmul.mubr.bf16.gmra.mrb[0].mxu0 %v1916
        %v2135 = vpop.f32.mrb[0].mxu0
        %v2136 = vadd.f32 0.0, %v2135
        %v2137 = vpop.f32.mrb[0].mxu0
        %v2138 = vpop.f32.mrb[0].mxu0
        %v2139 = vadd.f32 0.0, %v2138
        %v2140 = vpop.f32.mrb[0].mxu0
        %2141 = vdwg.mxu0
        %v2142 = vadd.f32 %v1755, %v2016
        %v2143 = vadd.f32 %v1756, %v2019
        %v2144 = vadd.f32 %v1757, %v2024
        %v2145 = vadd.f32 %v1758, %v2027
        %v2146 = vadd.f32 %v1759, %v2032
        %v2147 = vadd.f32 %v1760, %v2035
        %v2148 = vadd.f32 %v1761, %v2040
        %v2149 = vadd.f32 %v1762, %v2043
        %v2150 = vadd.f32 %v1763, %v2048
        %v2151 = vadd.f32 %v1764, %v2051
        %v2152 = vadd.f32 %v1765, %v2056
        %v2153 = vadd.f32 %v1766, %v2059
        %v2154 = vadd.f32 %v1767, %v2064
        %v2155 = vadd.f32 %v1768, %v2067
        %v2156 = vadd.f32 %v1769, %v2072
        %v2157 = vadd.f32 %v1770, %v2075
        %v2158 = vadd.f32 %v1771, %v2080
        %v2159 = vadd.f32 %v1772, %v2083
        %v2160 = vadd.f32 %v1773, %v2088
        %v2161 = vadd.f32 %v1774, %v2091
        %v2162 = vadd.f32 %v1775, %v2096
        %v2163 = vadd.f32 %v1776, %v2099
        %v2164 = vadd.f32 %v1777, %v2104
        %v2165 = vadd.f32 %v1778, %v2107
        %v2166 = vadd.f32 %v1779, %v2112
        %v2167 = vadd.f32 %v1780, %v2115
        %v2168 = vadd.f32 %v1781, %v2120
        %v2169 = vadd.f32 %v1782, %v2123
        %v2170 = vadd.f32 %v1783, %v2128
        %v2171 = vadd.f32 %v1784, %v2131
        %v2172 = vadd.f32 %v1785, %v2136
        %v2173 = vadd.f32 %v1786, %v2139
        %v2174 = vld [vmem:[%s1787] sm:$0xf]
        %v2175 = vld [vmem:[%s1787 + $0x4] sm:$0xf]
        %v2176 = vld [vmem:[%s1787 + $0x8] sm:$0x1]
        %v2177 = vld [vmem:[%s1787 + $0xc] sm:$0xf]
        %v2178 = vld [vmem:[%s1787 + $0x10] sm:$0xf]
        %v2179 = vld [vmem:[%s1787 + $0x14] sm:$0x1]
        %v2180 = vld [vmem:[%s1787 + $0x18] sm:$0xf]
        %v2181 = vld [vmem:[%s1787 + $0x1c] sm:$0xf]
        %v2182 = vld [vmem:[%s1787 + $0x20] sm:$0x1]
        %v2183 = vld [vmem:[%s1787 + $0x24] sm:$0xf]
        %v2184 = vld [vmem:[%s1787 + $0x28] sm:$0xf]
        %v2185 = vld [vmem:[%s1787 + $0x2c] sm:$0x1]
        %v2186 = vld [vmem:[%s1787 + $0x30] sm:$0xf]
        %v2187 = vld [vmem:[%s1787 + $0x34] sm:$0xf]
        %v2188 = vld [vmem:[%s1787 + $0x38] sm:$0x1]
        %v2189 = vld [vmem:[%s1787 + $0x3c] sm:$0xf]
        %v2190 = vld [vmem:[%s1787 + $0x40] sm:$0xf]
        %v2191 = vld [vmem:[%s1787 + $0x44] sm:$0x1]
        %v2192 = vld [vmem:[%s1787 + $0x48] sm:$0xf]
        %v2193 = vld [vmem:[%s1787 + $0x4c] sm:$0xf]
        %v2194 = vld [vmem:[%s1787 + $0x50] sm:$0x1]
        %v2195 = vld [vmem:[%s1787 + $0x54] sm:$0xf]
        %v2196 = vld [vmem:[%s1787 + $0x58] sm:$0xf]
        %v2197 = vld [vmem:[%s1787 + $0x5c] sm:$0x1]
        %v2198 = vld [vmem:[%s1787 + $0x60] sm:$0xf]
        %v2199 = vld [vmem:[%s1787 + $0x64] sm:$0xf]
        %v2200 = vld [vmem:[%s1787 + $0x68] sm:$0x1]
        %v2201 = vld [vmem:[%s1787 + $0x6c] sm:$0xf]
        %v2202 = vld [vmem:[%s1787 + $0x70] sm:$0xf]
        %v2203 = vld [vmem:[%s1787 + $0x74] sm:$0x1]
        %v2204 = vld [vmem:[%s1787 + $0x78] sm:$0xf]
        %v2205 = vld [vmem:[%s1787 + $0x7c] sm:$0xf]
        %v2206 = vld [vmem:[%s1787 + $0x80] sm:$0x1]
        %v2207 = vld [vmem:[%s1787 + $0x84] sm:$0xf]
        %v2208 = vld [vmem:[%s1787 + $0x88] sm:$0xf]
        %v2209 = vld [vmem:[%s1787 + $0x8c] sm:$0x1]
        %v2210 = vld [vmem:[%s1787 + $0x90] sm:$0xf]
        %v2211 = vld [vmem:[%s1787 + $0x94] sm:$0xf]
        %v2212 = vld [vmem:[%s1787 + $0x98] sm:$0x1]
        %v2213 = vld [vmem:[%s1787 + $0x9c] sm:$0xf]
        %v2214 = vld [vmem:[%s1787 + $0xa0] sm:$0xf]
        %v2215 = vld [vmem:[%s1787 + $0xa4] sm:$0x1]
        %v2216 = vld [vmem:[%s1787 + $0xa8] sm:$0xf]
        %v2217 = vld [vmem:[%s1787 + $0xac] sm:$0xf]
        %v2218 = vld [vmem:[%s1787 + $0xb0] sm:$0x1]
        %v2219 = vld [vmem:[%s1787 + $0xb4] sm:$0xf]
        %v2220 = vld [vmem:[%s1787 + $0xb8] sm:$0xf]
        %v2221 = vld [vmem:[%s1787 + $0xbc] sm:$0x1]
        %v2223 = vshrl.u32 %v2174, 16
        %v2225 = vrot.slane %v2223, 4
        %v2226 = vshll.u32 %v2174, 16
        %v2228 = vrot.slane %v2226, 5
        %v2229 = vor.u32 %v2225, %v2228
        %v2230 = vrot.slane %v2229, 4
        %v2232 = vshll.u32 %v2175, 16
        %v2234 = vrot.slane %v2232, 5
        %v2235 = vsel %vm322, %v2230, %v2234
        %v2236 = vshrl.u32 %v2175, 16
        %v2238 = vrot.slane %v2236, 4
        %v2239 = vor.u32 %v2238, %v2234
        %v2240 = vrot.slane %v2239, 4
        %v2242 = vshll.u32 %v2176, 16
        %v2244 = vrot.slane %v2242, 5
        %v2245 = vsel %vm322, %v2240, %v2244
        %v2247 = vshrl.u32 %v2177, 16
        %v2249 = vrot.slane %v2247, 4
        %v2250 = vshll.u32 %v2177, 16
        %v2252 = vrot.slane %v2250, 5
        %v2253 = vor.u32 %v2249, %v2252
        %v2254 = vrot.slane %v2253, 4
        %v2256 = vshll.u32 %v2178, 16
        %v2258 = vrot.slane %v2256, 5
        %v2259 = vsel %vm322, %v2254, %v2258
        %v2260 = vshrl.u32 %v2178, 16
        %v2262 = vrot.slane %v2260, 4
        %v2263 = vor.u32 %v2262, %v2258
        %v2264 = vrot.slane %v2263, 4
        %v2266 = vshll.u32 %v2179, 16
        %v2268 = vrot.slane %v2266, 5
        %v2269 = vsel %vm322, %v2264, %v2268
        %v2271 = vshrl.u32 %v2180, 16
        %v2273 = vrot.slane %v2271, 4
        %v2274 = vshll.u32 %v2180, 16
        %v2276 = vrot.slane %v2274, 5
        %v2277 = vor.u32 %v2273, %v2276
        %v2278 = vrot.slane %v2277, 4
        %v2280 = vshll.u32 %v2181, 16
        %v2282 = vrot.slane %v2280, 5
        %v2283 = vsel %vm322, %v2278, %v2282
        %v2284 = vshrl.u32 %v2181, 16
        %v2286 = vrot.slane %v2284, 4
        %v2287 = vor.u32 %v2286, %v2282
        %v2288 = vrot.slane %v2287, 4
        %v2290 = vshll.u32 %v2182, 16
        %v2292 = vrot.slane %v2290, 5
        %v2293 = vsel %vm322, %v2288, %v2292
        %v2295 = vshrl.u32 %v2183, 16
        %v2297 = vrot.slane %v2295, 4
        %v2298 = vshll.u32 %v2183, 16
        %v2300 = vrot.slane %v2298, 5
        %v2301 = vor.u32 %v2297, %v2300
        %v2302 = vrot.slane %v2301, 4
        %v2304 = vshll.u32 %v2184, 16
        %v2306 = vrot.slane %v2304, 5
        %v2307 = vsel %vm322, %v2302, %v2306
        %v2308 = vshrl.u32 %v2184, 16
        %v2310 = vrot.slane %v2308, 4
        %v2311 = vor.u32 %v2310, %v2306
        %v2312 = vrot.slane %v2311, 4
        %v2314 = vshll.u32 %v2185, 16
        %v2316 = vrot.slane %v2314, 5
        %v2317 = vsel %vm322, %v2312, %v2316
        %v2319 = vshrl.u32 %v2186, 16
        %v2321 = vrot.slane %v2319, 4
        %v2322 = vshll.u32 %v2186, 16
        %v2324 = vrot.slane %v2322, 5
        %v2325 = vor.u32 %v2321, %v2324
        %v2326 = vrot.slane %v2325, 4
        %v2328 = vshll.u32 %v2187, 16
        %v2330 = vrot.slane %v2328, 5
        %v2331 = vsel %vm322, %v2326, %v2330
        %v2332 = vshrl.u32 %v2187, 16
        %v2334 = vrot.slane %v2332, 4
        %v2335 = vor.u32 %v2334, %v2330
        %v2336 = vrot.slane %v2335, 4
        %v2338 = vshll.u32 %v2188, 16
        %v2340 = vrot.slane %v2338, 5
        %v2341 = vsel %vm322, %v2336, %v2340
        %v2343 = vshrl.u32 %v2189, 16
        %v2345 = vrot.slane %v2343, 4
        %v2346 = vshll.u32 %v2189, 16
        %v2348 = vrot.slane %v2346, 5
        %v2349 = vor.u32 %v2345, %v2348
        %v2350 = vrot.slane %v2349, 4
        %v2352 = vshll.u32 %v2190, 16
        %v2354 = vrot.slane %v2352, 5
        %v2355 = vsel %vm322, %v2350, %v2354
        %v2356 = vshrl.u32 %v2190, 16
        %v2358 = vrot.slane %v2356, 4
        %v2359 = vor.u32 %v2358, %v2354
        %v2360 = vrot.slane %v2359, 4
        %v2362 = vshll.u32 %v2191, 16
        %v2364 = vrot.slane %v2362, 5
        %v2365 = vsel %vm322, %v2360, %v2364
        %v2367 = vshrl.u32 %v2192, 16
        %v2369 = vrot.slane %v2367, 4
        %v2370 = vshll.u32 %v2192, 16
        %v2372 = vrot.slane %v2370, 5
        %v2373 = vor.u32 %v2369, %v2372
        %v2374 = vrot.slane %v2373, 4
        %v2376 = vshll.u32 %v2193, 16
        %v2378 = vrot.slane %v2376, 5
        %v2379 = vsel %vm322, %v2374, %v2378
        %v2380 = vshrl.u32 %v2193, 16
        %v2382 = vrot.slane %v2380, 4
        %v2383 = vor.u32 %v2382, %v2378
        %v2384 = vrot.slane %v2383, 4
        %v2386 = vshll.u32 %v2194, 16
        %v2388 = vrot.slane %v2386, 5
        %v2389 = vsel %vm322, %v2384, %v2388
        %v2391 = vshrl.u32 %v2195, 16
        %v2393 = vrot.slane %v2391, 4
        %v2394 = vshll.u32 %v2195, 16
        %v2396 = vrot.slane %v2394, 5
        %v2397 = vor.u32 %v2393, %v2396
        %v2398 = vrot.slane %v2397, 4
        %v2400 = vshll.u32 %v2196, 16
        %v2402 = vrot.slane %v2400, 5
        %v2403 = vsel %vm322, %v2398, %v2402
        %v2404 = vshrl.u32 %v2196, 16
        %v2406 = vrot.slane %v2404, 4
        %v2407 = vor.u32 %v2406, %v2402
        %v2408 = vrot.slane %v2407, 4
        %v2410 = vshll.u32 %v2197, 16
        %v2412 = vrot.slane %v2410, 5
        %v2413 = vsel %vm322, %v2408, %v2412
        %v2415 = vshrl.u32 %v2198, 16
        %v2417 = vrot.slane %v2415, 4
        %v2418 = vshll.u32 %v2198, 16
        %v2420 = vrot.slane %v2418, 5
        %v2421 = vor.u32 %v2417, %v2420
        %v2422 = vrot.slane %v2421, 4
        %v2424 = vshll.u32 %v2199, 16
        %v2426 = vrot.slane %v2424, 5
        %v2427 = vsel %vm322, %v2422, %v2426
        %v2428 = vshrl.u32 %v2199, 16
        %v2430 = vrot.slane %v2428, 4
        %v2431 = vor.u32 %v2430, %v2426
        %v2432 = vrot.slane %v2431, 4
        %v2434 = vshll.u32 %v2200, 16
        %v2436 = vrot.slane %v2434, 5
        %v2437 = vsel %vm322, %v2432, %v2436
        %v2439 = vshrl.u32 %v2201, 16
        %v2441 = vrot.slane %v2439, 4
        %v2442 = vshll.u32 %v2201, 16
        %v2444 = vrot.slane %v2442, 5
        %v2445 = vor.u32 %v2441, %v2444
        %v2446 = vrot.slane %v2445, 4
        %v2448 = vshll.u32 %v2202, 16
        %v2450 = vrot.slane %v2448, 5
        %v2451 = vsel %vm322, %v2446, %v2450
        %v2452 = vshrl.u32 %v2202, 16
        %v2454 = vrot.slane %v2452, 4
        %v2455 = vor.u32 %v2454, %v2450
        %v2456 = vrot.slane %v2455, 4
        %v2458 = vshll.u32 %v2203, 16
        %v2460 = vrot.slane %v2458, 5
        %v2461 = vsel %vm322, %v2456, %v2460
        %v2463 = vshrl.u32 %v2204, 16
        %v2465 = vrot.slane %v2463, 4
        %v2466 = vshll.u32 %v2204, 16
        %v2468 = vrot.slane %v2466, 5
        %v2469 = vor.u32 %v2465, %v2468
        %v2470 = vrot.slane %v2469, 4
        %v2472 = vshll.u32 %v2205, 16
        %v2474 = vrot.slane %v2472, 5
        %v2475 = vsel %vm322, %v2470, %v2474
        %v2476 = vshrl.u32 %v2205, 16
        %v2478 = vrot.slane %v2476, 4
        %v2479 = vor.u32 %v2478, %v2474
        %v2480 = vrot.slane %v2479, 4
        %v2482 = vshll.u32 %v2206, 16
        %v2484 = vrot.slane %v2482, 5
        %v2485 = vsel %vm322, %v2480, %v2484
        %v2487 = vshrl.u32 %v2207, 16
        %v2489 = vrot.slane %v2487, 4
        %v2490 = vshll.u32 %v2207, 16
        %v2492 = vrot.slane %v2490, 5
        %v2493 = vor.u32 %v2489, %v2492
        %v2494 = vrot.slane %v2493, 4
        %v2496 = vshll.u32 %v2208, 16
        %v2498 = vrot.slane %v2496, 5
        %v2499 = vsel %vm322, %v2494, %v2498
        %v2500 = vshrl.u32 %v2208, 16
        %v2502 = vrot.slane %v2500, 4
        %v2503 = vor.u32 %v2502, %v2498
        %v2504 = vrot.slane %v2503, 4
        %v2506 = vshll.u32 %v2209, 16
        %v2508 = vrot.slane %v2506, 5
        %v2509 = vsel %vm322, %v2504, %v2508
        %v2511 = vshrl.u32 %v2210, 16
        %v2513 = vrot.slane %v2511, 4
        %v2514 = vshll.u32 %v2210, 16
        %v2516 = vrot.slane %v2514, 5
        %v2517 = vor.u32 %v2513, %v2516
        %v2518 = vrot.slane %v2517, 4
        %v2520 = vshll.u32 %v2211, 16
        %v2522 = vrot.slane %v2520, 5
        %v2523 = vsel %vm322, %v2518, %v2522
        %v2524 = vshrl.u32 %v2211, 16
        %v2526 = vrot.slane %v2524, 4
        %v2527 = vor.u32 %v2526, %v2522
        %v2528 = vrot.slane %v2527, 4
        %v2530 = vshll.u32 %v2212, 16
        %v2532 = vrot.slane %v2530, 5
        %v2533 = vsel %vm322, %v2528, %v2532
        %v2535 = vshrl.u32 %v2213, 16
        %v2537 = vrot.slane %v2535, 4
        %v2538 = vshll.u32 %v2213, 16
        %v2540 = vrot.slane %v2538, 5
        %v2541 = vor.u32 %v2537, %v2540
        %v2542 = vrot.slane %v2541, 4
        %v2544 = vshll.u32 %v2214, 16
        %v2546 = vrot.slane %v2544, 5
        %v2547 = vsel %vm322, %v2542, %v2546
        %v2548 = vshrl.u32 %v2214, 16
        %v2550 = vrot.slane %v2548, 4
        %v2551 = vor.u32 %v2550, %v2546
        %v2552 = vrot.slane %v2551, 4
        %v2554 = vshll.u32 %v2215, 16
        %v2556 = vrot.slane %v2554, 5
        %v2557 = vsel %vm322, %v2552, %v2556
        %v2559 = vshrl.u32 %v2216, 16
        %v2561 = vrot.slane %v2559, 4
        %v2562 = vshll.u32 %v2216, 16
        %v2564 = vrot.slane %v2562, 5
        %v2565 = vor.u32 %v2561, %v2564
        %v2566 = vrot.slane %v2565, 4
        %v2568 = vshll.u32 %v2217, 16
        %v2570 = vrot.slane %v2568, 5
        %v2571 = vsel %vm322, %v2566, %v2570
        %v2572 = vshrl.u32 %v2217, 16
        %v2574 = vrot.slane %v2572, 4
        %v2575 = vor.u32 %v2574, %v2570
        %v2576 = vrot.slane %v2575, 4
        %v2578 = vshll.u32 %v2218, 16
        %v2580 = vrot.slane %v2578, 5
        %v2581 = vsel %vm322, %v2576, %v2580
        %v2583 = vshrl.u32 %v2219, 16
        %v2585 = vrot.slane %v2583, 4
        %v2586 = vshll.u32 %v2219, 16
        %v2588 = vrot.slane %v2586, 5
        %v2589 = vor.u32 %v2585, %v2588
        %v2590 = vrot.slane %v2589, 4
        %v2592 = vshll.u32 %v2220, 16
        %v2594 = vrot.slane %v2592, 5
        %v2595 = vsel %vm322, %v2590, %v2594
        %v2596 = vshrl.u32 %v2220, 16
        %v2598 = vrot.slane %v2596, 4
        %v2599 = vor.u32 %v2598, %v2594
        %v2600 = vrot.slane %v2599, 4
        %v2602 = vshll.u32 %v2221, 16
        %v2604 = vrot.slane %v2602, 5
        %v2605 = vsel %vm322, %v2600, %v2604
        %s2606 = scalar_lea.vmem %s1, 256
        %v2607 = vld [vmem:[%s2606] sm:$0xf]
        %v2608 = vld [vmem:[%s2606 + $0x4] sm:$0xf]
        %v2609 = vld [vmem:[%s2606 + $0x8] sm:$0xf]
        %v2610 = vld [vmem:[%s2606 + $0xc] sm:$0xf]
        %v2611 = vld [vmem:[%s2606 + $0x10] sm:$0xf]
        %v2612 = vld [vmem:[%s2606 + $0x14] sm:$0xf]
        %v2613 = vld [vmem:[%s2606 + $0x18] sm:$0xf]
        %v2614 = vld [vmem:[%s2606 + $0x1c] sm:$0xf]
        %v2615 = vld [vmem:[%s2606 + $0x20] sm:$0xf]
        %v2616 = vld [vmem:[%s2606 + $0x24] sm:$0xf]
        %v2617 = vld [vmem:[%s2606 + $0x28] sm:$0xf]
        %v2618 = vld [vmem:[%s2606 + $0x2c] sm:$0xf]
        %v2619 = vld [vmem:[%s2606 + $0x30] sm:$0xf]
        %v2620 = vld [vmem:[%s2606 + $0x34] sm:$0xf]
        %v2621 = vld [vmem:[%s2606 + $0x38] sm:$0xf]
        %v2622 = vld [vmem:[%s2606 + $0x3c] sm:$0xf]
        %v2623 = vunpack.c.l.b16 %v2235
        %v2624 = vunpack.c.l.b16 %v2245
        %v2625 = vunpack.c.l.b16 %v2259
        %v2626 = vunpack.c.l.b16 %v2269
        %v2627 = vunpack.c.l.b16 %v2283
        %v2628 = vunpack.c.l.b16 %v2293
        %v2629 = vunpack.c.l.b16 %v2307
        %v2630 = vunpack.c.l.b16 %v2317
        %v2631 = vunpack.c.l.b16 %v2331
        %v2632 = vunpack.c.l.b16 %v2341
        %v2633 = vunpack.c.l.b16 %v2355
        %v2634 = vunpack.c.l.b16 %v2365
        %v2635 = vunpack.c.l.b16 %v2379
        %v2636 = vunpack.c.l.b16 %v2389
        %v2637 = vunpack.c.l.b16 %v2403
        %v2638 = vunpack.c.l.b16 %v2413
        %v2639 = vunpack.c.l.b16 %v2427
        %v2640 = vunpack.c.l.b16 %v2437
        %v2641 = vunpack.c.l.b16 %v2451
        %v2642 = vunpack.c.l.b16 %v2461
        %v2643 = vunpack.c.l.b16 %v2475
        %v2644 = vunpack.c.l.b16 %v2485
        %v2645 = vunpack.c.l.b16 %v2499
        %v2646 = vunpack.c.l.b16 %v2509
        %v2647 = vunpack.c.l.b16 %v2523
        %v2648 = vunpack.c.l.b16 %v2533
        %v2649 = vunpack.c.l.b16 %v2547
        %v2650 = vunpack.c.l.b16 %v2557
        %v2651 = vunpack.c.l.b16 %v2571
        %v2652 = vunpack.c.l.b16 %v2581
        %v2653 = vunpack.c.l.b16 %v2595
        %v2654 = vunpack.c.l.b16 %v2605
        %v2655 = vpack.c.b16 %v2624, %v2623
        %v2656 = vpack.c.b16 %v2626, %v2625
        %v2657 = vpack.c.b16 %v2628, %v2627
        %v2658 = vpack.c.b16 %v2630, %v2629
        %v2659 = vpack.c.b16 %v2632, %v2631
        %v2660 = vpack.c.b16 %v2634, %v2633
        %v2661 = vpack.c.b16 %v2636, %v2635
        %v2662 = vpack.c.b16 %v2638, %v2637
        %v2663 = vpack.c.b16 %v2640, %v2639
        %v2664 = vpack.c.b16 %v2642, %v2641
        %v2665 = vpack.c.b16 %v2644, %v2643
        %v2666 = vpack.c.b16 %v2646, %v2645
        %v2667 = vpack.c.b16 %v2648, %v2647
        %v2668 = vpack.c.b16 %v2650, %v2649
        %v2669 = vpack.c.b16 %v2652, %v2651
        %v2670 = vpack.c.b16 %v2654, %v2653
        %v2703 = vunpack.c.l.b16 %v2607
        %v2704 = vunpack.c.l.b16 %v2608
        %v2705 = vunpack.c.l.b16 %v2609
        %v2706 = vunpack.c.l.b16 %v2610
        %v2707 = vunpack.c.l.b16 %v2611
        %v2708 = vunpack.c.l.b16 %v2612
        %v2709 = vunpack.c.l.b16 %v2613
        %v2710 = vunpack.c.l.b16 %v2614
        %v2711 = vunpack.c.l.b16 %v2615
        %v2712 = vunpack.c.l.b16 %v2616
        %v2713 = vunpack.c.l.b16 %v2617
        %v2714 = vunpack.c.l.b16 %v2618
        %v2715 = vunpack.c.l.b16 %v2619
        %v2716 = vunpack.c.l.b16 %v2620
        %v2717 = vunpack.c.l.b16 %v2621
        %v2718 = vunpack.c.l.b16 %v2622
        %v2719 = vpack.c.b16 %v2704, %v2703
        %v2720 = vpack.c.b16 %v2706, %v2705
        %v2721 = vpack.c.b16 %v2708, %v2707
        %v2722 = vpack.c.b16 %v2710, %v2709
        %v2723 = vpack.c.b16 %v2712, %v2711
        %v2724 = vpack.c.b16 %v2714, %v2713
        %v2725 = vpack.c.b16 %v2716, %v2715
        %v2726 = vpack.c.b16 %v2718, %v2717
        %2735 = vmatprep.subr.bf16.mxu0 0
        %2736 = vmatpush1.bf16.msra.mxu0 %v2719
        %2737 = vmatprep.subr.bf16.mxu0 0
        %2738 = vmatpush1.bf16.msra.mxu0 %v2720
        %2739 = vmatprep.subr.bf16.mxu0 0
        %2740 = vmatpush1.bf16.msra.mxu0 %v2721
        %2741 = vmatprep.subr.bf16.mxu0 0
        %2742 = vmatpush1.bf16.msra.mxu0 %v2722
        %2743 = vmatprep.subr.bf16.mxu0 0
        %2744 = vmatpush1.bf16.msra.mxu0 %v2723
        %2745 = vmatprep.subr.bf16.mxu0 0
        %2746 = vmatpush1.bf16.msra.mxu0 %v2724
        %2747 = vmatprep.subr.bf16.mxu0 0
        %2748 = vmatpush1.bf16.msra.mxu0 %v2725
        %2749 = vmatprep.subr.bf16.mxu0 0
        %2750 = vmatpush1.bf16.msra.mxu0 %v2726
        %2751 = vmatprep.subr.bf16.mxu0 0
        %2752 = vmatpush1.bf16.msra.mxu0 0
        %2753 = vmatprep.subr.bf16.mxu0 0
        %2754 = vmatpush1.bf16.msra.mxu0 0
        %2755 = vmatprep.subr.bf16.mxu0 0
        %2756 = vmatpush1.bf16.msra.mxu0 0
        %2757 = vmatprep.subr.bf16.mxu0 0
        %2758 = vmatpush1.bf16.msra.mxu0 0
        %2759 = vmatprep.subr.bf16.mxu0 0
        %2760 = vmatpush1.bf16.msra.mxu0 0
        %2761 = vmatprep.subr.bf16.mxu0 0
        %2762 = vmatpush1.bf16.msra.mxu0 0
        %2763 = vmatprep.subr.bf16.mxu0 0
        %2764 = vmatpush1.bf16.msra.mxu0 0
        %2765 = vmatprep.subr.bf16.mxu0 0
        %2766 = vmatpush1.bf16.msra.mxu0 0
        %2767 = vmatprep.mubr.bf16.mxu0 0
        %2768 = vmatmul.mubr.bf16.gmra.mrb[0].mxu0 %v2655
        %v2769 = vpop.f32.mrb[0].mxu0
        %v2770 = vadd.f32 0.0, %v2769
        %v2771 = vpop.f32.mrb[0].mxu0
        %v2772 = vpop.f32.mrb[0].mxu0
        %v2773 = vadd.f32 0.0, %v2772
        %v2774 = vpop.f32.mrb[0].mxu0
        %2775 = vmatprep.mubr.bf16.mxu0 0
        %2776 = vmatmul.mubr.bf16.gmra.mrb[0].mxu0 %v2656
        %v2777 = vpop.f32.mrb[0].mxu0
        %v2778 = vadd.f32 0.0, %v2777
        %v2779 = vpop.f32.mrb[0].mxu0
        %v2780 = vpop.f32.mrb[0].mxu0
        %v2781 = vadd.f32 0.0, %v2780
        %v2782 = vpop.f32.mrb[0].mxu0
        %2783 = vmatprep.mubr.bf16.mxu0 0
        %2784 = vmatmul.mubr.bf16.gmra.mrb[0].mxu0 %v2657
        %v2785 = vpop.f32.mrb[0].mxu0
        %v2786 = vadd.f32 0.0, %v2785
        %v2787 = vpop.f32.mrb[0].mxu0
        %v2788 = vpop.f32.mrb[0].mxu0
        %v2789 = vadd.f32 0.0, %v2788
        %v2790 = vpop.f32.mrb[0].mxu0
        %2791 = vmatprep.mubr.bf16.mxu0 0
        %2792 = vmatmul.mubr.bf16.gmra.mrb[0].mxu0 %v2658
        %v2793 = vpop.f32.mrb[0].mxu0
        %v2794 = vadd.f32 0.0, %v2793
        %v2795 = vpop.f32.mrb[0].mxu0
        %v2796 = vpop.f32.mrb[0].mxu0
        %v2797 = vadd.f32 0.0, %v2796
        %v2798 = vpop.f32.mrb[0].mxu0
        %2799 = vmatprep.mubr.bf16.mxu0 0
        %2800 = vmatmul.mubr.bf16.gmra.mrb[0].mxu0 %v2659
        %v2801 = vpop.f32.mrb[0].mxu0
        %v2802 = vadd.f32 0.0, %v2801
        %v2803 = vpop.f32.mrb[0].mxu0
        %v2804 = vpop.f32.mrb[0].mxu0
        %v2805 = vadd.f32 0.0, %v2804
        %v2806 = vpop.f32.mrb[0].mxu0
        %2807 = vmatprep.mubr.bf16.mxu0 0
        %2808 = vmatmul.mubr.bf16.gmra.mrb[0].mxu0 %v2660
        %v2809 = vpop.f32.mrb[0].mxu0
        %v2810 = vadd.f32 0.0, %v2809
        %v2811 = vpop.f32.mrb[0].mxu0
        %v2812 = vpop.f32.mrb[0].mxu0
        %v2813 = vadd.f32 0.0, %v2812
        %v2814 = vpop.f32.mrb[0].mxu0
        %2815 = vmatprep.mubr.bf16.mxu0 0
        %2816 = vmatmul.mubr.bf16.gmra.mrb[0].mxu0 %v2661
        %v2817 = vpop.f32.mrb[0].mxu0
        %v2818 = vadd.f32 0.0, %v2817
        %v2819 = vpop.f32.mrb[0].mxu0
        %v2820 = vpop.f32.mrb[0].mxu0
        %v2821 = vadd.f32 0.0, %v2820
        %v2822 = vpop.f32.mrb[0].mxu0
        %2823 = vmatprep.mubr.bf16.mxu0 0
        %2824 = vmatmul.mubr.bf16.gmra.mrb[0].mxu0 %v2662
        %v2825 = vpop.f32.mrb[0].mxu0
        %v2826 = vadd.f32 0.0, %v2825
        %v2827 = vpop.f32.mrb[0].mxu0
        %v2828 = vpop.f32.mrb[0].mxu0
        %v2829 = vadd.f32 0.0, %v2828
        %v2830 = vpop.f32.mrb[0].mxu0
        %2831 = vmatprep.mubr.bf16.mxu0 0
        %2832 = vmatmul.mubr.bf16.gmra.mrb[0].mxu0 %v2663
        %v2833 = vpop.f32.mrb[0].mxu0
        %v2834 = vadd.f32 0.0, %v2833
        %v2835 = vpop.f32.mrb[0].mxu0
        %v2836 = vpop.f32.mrb[0].mxu0
        %v2837 = vadd.f32 0.0, %v2836
        %v2838 = vpop.f32.mrb[0].mxu0
        %2839 = vmatprep.mubr.bf16.mxu0 0
        %2840 = vmatmul.mubr.bf16.gmra.mrb[0].mxu0 %v2664
        %v2841 = vpop.f32.mrb[0].mxu0
        %v2842 = vadd.f32 0.0, %v2841
        %v2843 = vpop.f32.mrb[0].mxu0
        %v2844 = vpop.f32.mrb[0].mxu0
        %v2845 = vadd.f32 0.0, %v2844
        %v2846 = vpop.f32.mrb[0].mxu0
        %2847 = vmatprep.mubr.bf16.mxu0 0
        %2848 = vmatmul.mubr.bf16.gmra.mrb[0].mxu0 %v2665
        %v2849 = vpop.f32.mrb[0].mxu0
        %v2850 = vadd.f32 0.0, %v2849
        %v2851 = vpop.f32.mrb[0].mxu0
        %v2852 = vpop.f32.mrb[0].mxu0
        %v2853 = vadd.f32 0.0, %v2852
        %v2854 = vpop.f32.mrb[0].mxu0
        %2855 = vmatprep.mubr.bf16.mxu0 0
        %2856 = vmatmul.mubr.bf16.gmra.mrb[0].mxu0 %v2666
        %v2857 = vpop.f32.mrb[0].mxu0
        %v2858 = vadd.f32 0.0, %v2857
        %v2859 = vpop.f32.mrb[0].mxu0
        %v2860 = vpop.f32.mrb[0].mxu0
        %v2861 = vadd.f32 0.0, %v2860
        %v2862 = vpop.f32.mrb[0].mxu0
        %2863 = vmatprep.mubr.bf16.mxu0 0
        %2864 = vmatmul.mubr.bf16.gmra.mrb[0].mxu0 %v2667
        %v2865 = vpop.f32.mrb[0].mxu0
        %v2866 = vadd.f32 0.0, %v2865
        %v2867 = vpop.f32.mrb[0].mxu0
        %v2868 = vpop.f32.mrb[0].mxu0
        %v2869 = vadd.f32 0.0, %v2868
        %v2870 = vpop.f32.mrb[0].mxu0
        %2871 = vmatprep.mubr.bf16.mxu0 0
        %2872 = vmatmul.mubr.bf16.gmra.mrb[0].mxu0 %v2668
        %v2873 = vpop.f32.mrb[0].mxu0
        %v2874 = vadd.f32 0.0, %v2873
        %v2875 = vpop.f32.mrb[0].mxu0
        %v2876 = vpop.f32.mrb[0].mxu0
        %v2877 = vadd.f32 0.0, %v2876
        %v2878 = vpop.f32.mrb[0].mxu0
        %2879 = vmatprep.mubr.bf16.mxu0 0
        %2880 = vmatmul.mubr.bf16.gmra.mrb[0].mxu0 %v2669
        %v2881 = vpop.f32.mrb[0].mxu0
        %v2882 = vadd.f32 0.0, %v2881
        %v2883 = vpop.f32.mrb[0].mxu0
        %v2884 = vpop.f32.mrb[0].mxu0
        %v2885 = vadd.f32 0.0, %v2884
        %v2886 = vpop.f32.mrb[0].mxu0
        %2887 = vmatprep.mubr.bf16.mxu0 0
        %2888 = vmatmul.mubr.bf16.gmra.mrb[0].mxu0 %v2670
        %v2889 = vpop.f32.mrb[0].mxu0
        %v2890 = vadd.f32 0.0, %v2889
        %v2891 = vpop.f32.mrb[0].mxu0
        %v2892 = vpop.f32.mrb[0].mxu0
        %v2893 = vadd.f32 0.0, %v2892
        %v2894 = vpop.f32.mrb[0].mxu0
        %2895 = vdwg.mxu0
        %v2896 = vadd.f32 %v2142, %v2770
        %v2897 = vadd.f32 %v2143, %v2773
        %v2898 = vadd.f32 %v2144, %v2778
        %v2899 = vadd.f32 %v2145, %v2781
        %v2900 = vadd.f32 %v2146, %v2786
        %v2901 = vadd.f32 %v2147, %v2789
        %v2902 = vadd.f32 %v2148, %v2794
        %v2903 = vadd.f32 %v2149, %v2797
        %v2904 = vadd.f32 %v2150, %v2802
        %v2905 = vadd.f32 %v2151, %v2805
        %v2906 = vadd.f32 %v2152, %v2810
        %v2907 = vadd.f32 %v2153, %v2813
        %v2908 = vadd.f32 %v2154, %v2818
        %v2909 = vadd.f32 %v2155, %v2821
        %v2910 = vadd.f32 %v2156, %v2826
        %v2911 = vadd.f32 %v2157, %v2829
        %v2912 = vadd.f32 %v2158, %v2834
        %v2913 = vadd.f32 %v2159, %v2837
        %v2914 = vadd.f32 %v2160, %v2842
        %v2915 = vadd.f32 %v2161, %v2845
        %v2916 = vadd.f32 %v2162, %v2850
        %v2917 = vadd.f32 %v2163, %v2853
        %v2918 = vadd.f32 %v2164, %v2858
        %v2919 = vadd.f32 %v2165, %v2861
        %v2920 = vadd.f32 %v2166, %v2866
        %v2921 = vadd.f32 %v2167, %v2869
        %v2922 = vadd.f32 %v2168, %v2874
        %v2923 = vadd.f32 %v2169, %v2877
        %v2924 = vadd.f32 %v2170, %v2882
        %v2925 = vadd.f32 %v2171, %v2885
        %v2926 = vadd.f32 %v2172, %v2890
        %v2927 = vadd.f32 %v2173, %v2893
        %v2928 = vld [vmem:[%s1787] sm:$0xe]
        %v2929 = vld [vmem:[%s1787 + $0xc] sm:$0xe]
        %v2930 = vld [vmem:[%s1787 + $0x18] sm:$0xe]
        %v2931 = vld [vmem:[%s1787 + $0x24] sm:$0xe]
        %v2932 = vld [vmem:[%s1787 + $0x30] sm:$0xe]
        %v2933 = vld [vmem:[%s1787 + $0x3c] sm:$0xe]
        %v2934 = vld [vmem:[%s1787 + $0x48] sm:$0xe]
        %v2935 = vld [vmem:[%s1787 + $0x54] sm:$0xe]
        %v2936 = vld [vmem:[%s1787 + $0x60] sm:$0xe]
        %v2937 = vld [vmem:[%s1787 + $0x6c] sm:$0xe]
        %v2938 = vld [vmem:[%s1787 + $0x78] sm:$0xe]
        %v2939 = vld [vmem:[%s1787 + $0x84] sm:$0xe]
        %v2940 = vld [vmem:[%s1787 + $0x90] sm:$0xe]
        %v2941 = vld [vmem:[%s1787 + $0x9c] sm:$0xe]
        %v2942 = vld [vmem:[%s1787 + $0xa8] sm:$0xe]
        %v2943 = vld [vmem:[%s1787 + $0xb4] sm:$0xe]
        %v2992 = vrot.slane %v2928, 5
        %v2993 = vrot.slane %v2992, 4
        %v2994 = vrot.slane %v2175, 5
        %v2995 = vsel %vm1352, %v2993, %v2994
        %v2996 = vrot.slane %v2994, 4
        %v2997 = vrot.slane %v2176, 5
        %v2998 = vsel %vm1352, %v2996, %v2997
        %v2999 = vrot.slane %v2929, 5
        %v3000 = vrot.slane %v2999, 4
        %v3001 = vrot.slane %v2178, 5
        %v3002 = vsel %vm1352, %v3000, %v3001
        %v3003 = vrot.slane %v3001, 4
        %v3004 = vrot.slane %v2179, 5
        %v3005 = vsel %vm1352, %v3003, %v3004
        %v3006 = vrot.slane %v2930, 5
        %v3007 = vrot.slane %v3006, 4
        %v3008 = vrot.slane %v2181, 5
        %v3009 = vsel %vm1352, %v3007, %v3008
        %v3010 = vrot.slane %v3008, 4
        %v3011 = vrot.slane %v2182, 5
        %v3012 = vsel %vm1352, %v3010, %v3011
        %v3013 = vrot.slane %v2931, 5
        %v3014 = vrot.slane %v3013, 4
        %v3015 = vrot.slane %v2184, 5
        %v3016 = vsel %vm1352, %v3014, %v3015
        %v3017 = vrot.slane %v3015, 4
        %v3018 = vrot.slane %v2185, 5
        %v3019 = vsel %vm1352, %v3017, %v3018
        %v3020 = vrot.slane %v2932, 5
        %v3021 = vrot.slane %v3020, 4
        %v3022 = vrot.slane %v2187, 5
        %v3023 = vsel %vm1352, %v3021, %v3022
        %v3024 = vrot.slane %v3022, 4
        %v3025 = vrot.slane %v2188, 5
        %v3026 = vsel %vm1352, %v3024, %v3025
        %v3027 = vrot.slane %v2933, 5
        %v3028 = vrot.slane %v3027, 4
        %v3029 = vrot.slane %v2190, 5
        %v3030 = vsel %vm1352, %v3028, %v3029
        %v3031 = vrot.slane %v3029, 4
        %v3032 = vrot.slane %v2191, 5
        %v3033 = vsel %vm1352, %v3031, %v3032
        %v3034 = vrot.slane %v2934, 5
        %v3035 = vrot.slane %v3034, 4
        %v3036 = vrot.slane %v2193, 5
        %v3037 = vsel %vm1352, %v3035, %v3036
        %v3038 = vrot.slane %v3036, 4
        %v3039 = vrot.slane %v2194, 5
        %v3040 = vsel %vm1352, %v3038, %v3039
        %v3041 = vrot.slane %v2935, 5
        %v3042 = vrot.slane %v3041, 4
        %v3043 = vrot.slane %v2196, 5
        %v3044 = vsel %vm1352, %v3042, %v3043
        %v3045 = vrot.slane %v3043, 4
        %v3046 = vrot.slane %v2197, 5
        %v3047 = vsel %vm1352, %v3045, %v3046
        %v3048 = vrot.slane %v2936, 5
        %v3049 = vrot.slane %v3048, 4
        %v3050 = vrot.slane %v2199, 5
        %v3051 = vsel %vm1352, %v3049, %v3050
        %v3052 = vrot.slane %v3050, 4
        %v3053 = vrot.slane %v2200, 5
        %v3054 = vsel %vm1352, %v3052, %v3053
        %v3055 = vrot.slane %v2937, 5
        %v3056 = vrot.slane %v3055, 4
        %v3057 = vrot.slane %v2202, 5
        %v3058 = vsel %vm1352, %v3056, %v3057
        %v3059 = vrot.slane %v3057, 4
        %v3060 = vrot.slane %v2203, 5
        %v3061 = vsel %vm1352, %v3059, %v3060
        %v3062 = vrot.slane %v2938, 5
        %v3063 = vrot.slane %v3062, 4
        %v3064 = vrot.slane %v2205, 5
        %v3065 = vsel %vm1352, %v3063, %v3064
        %v3066 = vrot.slane %v3064, 4
        %v3067 = vrot.slane %v2206, 5
        %v3068 = vsel %vm1352, %v3066, %v3067
        %v3069 = vrot.slane %v2939, 5
        %v3070 = vrot.slane %v3069, 4
        %v3071 = vrot.slane %v2208, 5
        %v3072 = vsel %vm1352, %v3070, %v3071
        %v3073 = vrot.slane %v3071, 4
        %v3074 = vrot.slane %v2209, 5
        %v3075 = vsel %vm1352, %v3073, %v3074
        %v3076 = vrot.slane %v2940, 5
        %v3077 = vrot.slane %v3076, 4
        %v3078 = vrot.slane %v2211, 5
        %v3079 = vsel %vm1352, %v3077, %v3078
        %v3080 = vrot.slane %v3078, 4
        %v3081 = vrot.slane %v2212, 5
        %v3082 = vsel %vm1352, %v3080, %v3081
        %v3083 = vrot.slane %v2941, 5
        %v3084 = vrot.slane %v3083, 4
        %v3085 = vrot.slane %v2214, 5
        %v3086 = vsel %vm1352, %v3084, %v3085
        %v3087 = vrot.slane %v3085, 4
        %v3088 = vrot.slane %v2215, 5
        %v3089 = vsel %vm1352, %v3087, %v3088
        %v3090 = vrot.slane %v2942, 5
        %v3091 = vrot.slane %v3090, 4
        %v3092 = vrot.slane %v2217, 5
        %v3093 = vsel %vm1352, %v3091, %v3092
        %v3094 = vrot.slane %v3092, 4
        %v3095 = vrot.slane %v2218, 5
        %v3096 = vsel %vm1352, %v3094, %v3095
        %v3097 = vrot.slane %v2943, 5
        %v3098 = vrot.slane %v3097, 4
        %v3099 = vrot.slane %v2220, 5
        %v3100 = vsel %vm1352, %v3098, %v3099
        %v3101 = vrot.slane %v3099, 4
        %v3102 = vrot.slane %v2221, 5
        %v3103 = vsel %vm1352, %v3101, %v3102
        %s3104 = scalar_lea.vmem %s1, 320
        %v3105 = vld [vmem:[%s3104] sm:$0xf]
        %v3106 = vld [vmem:[%s3104 + $0x4] sm:$0xf]
        %v3107 = vld [vmem:[%s3104 + $0x8] sm:$0xf]
        %v3108 = vld [vmem:[%s3104 + $0xc] sm:$0xf]
        %v3109 = vld [vmem:[%s3104 + $0x10] sm:$0xf]
        %v3110 = vld [vmem:[%s3104 + $0x14] sm:$0xf]
        %v3111 = vld [vmem:[%s3104 + $0x18] sm:$0xf]
        %v3112 = vld [vmem:[%s3104 + $0x1c] sm:$0xf]
        %v3113 = vld [vmem:[%s3104 + $0x20] sm:$0xf]
        %v3114 = vld [vmem:[%s3104 + $0x24] sm:$0xf]
        %v3115 = vld [vmem:[%s3104 + $0x28] sm:$0xf]
        %v3116 = vld [vmem:[%s3104 + $0x2c] sm:$0xf]
        %v3117 = vld [vmem:[%s3104 + $0x30] sm:$0xf]
        %v3118 = vld [vmem:[%s3104 + $0x34] sm:$0xf]
        %v3119 = vld [vmem:[%s3104 + $0x38] sm:$0xf]
        %v3120 = vld [vmem:[%s3104 + $0x3c] sm:$0xf]
        %v3121 = vunpack.c.l.b16 %v2995
        %v3122 = vunpack.c.l.b16 %v2998
        %v3123 = vunpack.c.l.b16 %v3002
        %v3124 = vunpack.c.l.b16 %v3005
        %v3125 = vunpack.c.l.b16 %v3009
        %v3126 = vunpack.c.l.b16 %v3012
        %v3127 = vunpack.c.l.b16 %v3016
        %v3128 = vunpack.c.l.b16 %v3019
        %v3129 = vunpack.c.l.b16 %v3023
        %v3130 = vunpack.c.l.b16 %v3026
        %v3131 = vunpack.c.l.b16 %v3030
        %v3132 = vunpack.c.l.b16 %v3033
        %v3133 = vunpack.c.l.b16 %v3037
        %v3134 = vunpack.c.l.b16 %v3040
        %v3135 = vunpack.c.l.b16 %v3044
        %v3136 = vunpack.c.l.b16 %v3047
        %v3137 = vunpack.c.l.b16 %v3051
        %v3138 = vunpack.c.l.b16 %v3054
        %v3139 = vunpack.c.l.b16 %v3058
        %v3140 = vunpack.c.l.b16 %v3061
        %v3141 = vunpack.c.l.b16 %v3065
        %v3142 = vunpack.c.l.b16 %v3068
        %v3143 = vunpack.c.l.b16 %v3072
        %v3144 = vunpack.c.l.b16 %v3075
        %v3145 = vunpack.c.l.b16 %v3079
        %v3146 = vunpack.c.l.b16 %v3082
        %v3147 = vunpack.c.l.b16 %v3086
        %v3148 = vunpack.c.l.b16 %v3089
        %v3149 = vunpack.c.l.b16 %v3093
        %v3150 = vunpack.c.l.b16 %v3096
        %v3151 = vunpack.c.l.b16 %v3100
        %v3152 = vunpack.c.l.b16 %v3103
        %v3153 = vpack.c.b16 %v3122, %v3121
        %v3154 = vpack.c.b16 %v3124, %v3123
        %v3155 = vpack.c.b16 %v3126, %v3125
        %v3156 = vpack.c.b16 %v3128, %v3127
        %v3157 = vpack.c.b16 %v3130, %v3129
        %v3158 = vpack.c.b16 %v3132, %v3131
        %v3159 = vpack.c.b16 %v3134, %v3133
        %v3160 = vpack.c.b16 %v3136, %v3135
        %v3161 = vpack.c.b16 %v3138, %v3137
        %v3162 = vpack.c.b16 %v3140, %v3139
        %v3163 = vpack.c.b16 %v3142, %v3141
        %v3164 = vpack.c.b16 %v3144, %v3143
        %v3165 = vpack.c.b16 %v3146, %v3145
        %v3166 = vpack.c.b16 %v3148, %v3147
        %v3167 = vpack.c.b16 %v3150, %v3149
        %v3168 = vpack.c.b16 %v3152, %v3151
        %v3201 = vunpack.c.l.b16 %v3105
        %v3202 = vunpack.c.l.b16 %v3106
        %v3203 = vunpack.c.l.b16 %v3107
        %v3204 = vunpack.c.l.b16 %v3108
        %v3205 = vunpack.c.l.b16 %v3109
        %v3206 = vunpack.c.l.b16 %v3110
        %v3207 = vunpack.c.l.b16 %v3111
        %v3208 = vunpack.c.l.b16 %v3112
        %v3209 = vunpack.c.l.b16 %v3113
        %v3210 = vunpack.c.l.b16 %v3114
        %v3211 = vunpack.c.l.b16 %v3115
        %v3212 = vunpack.c.l.b16 %v3116
        %v3213 = vunpack.c.l.b16 %v3117
        %v3214 = vunpack.c.l.b16 %v3118
        %v3215 = vunpack.c.l.b16 %v3119
        %v3216 = vunpack.c.l.b16 %v3120
        %v3217 = vpack.c.b16 %v3202, %v3201
        %v3218 = vpack.c.b16 %v3204, %v3203
        %v3219 = vpack.c.b16 %v3206, %v3205
        %v3220 = vpack.c.b16 %v3208, %v3207
        %v3221 = vpack.c.b16 %v3210, %v3209
        %v3222 = vpack.c.b16 %v3212, %v3211
        %v3223 = vpack.c.b16 %v3214, %v3213
        %v3224 = vpack.c.b16 %v3216, %v3215
        %3233 = vmatprep.subr.bf16.mxu0 0
        %3234 = vmatpush1.bf16.msra.mxu0 %v3217
        %3235 = vmatprep.subr.bf16.mxu0 0
        %3236 = vmatpush1.bf16.msra.mxu0 %v3218
        %3237 = vmatprep.subr.bf16.mxu0 0
        %3238 = vmatpush1.bf16.msra.mxu0 %v3219
        %3239 = vmatprep.subr.bf16.mxu0 0
        %3240 = vmatpush1.bf16.msra.mxu0 %v3220
        %3241 = vmatprep.subr.bf16.mxu0 0
        %3242 = vmatpush1.bf16.msra.mxu0 %v3221
        %3243 = vmatprep.subr.bf16.mxu0 0
        %3244 = vmatpush1.bf16.msra.mxu0 %v3222
        %3245 = vmatprep.subr.bf16.mxu0 0
        %3246 = vmatpush1.bf16.msra.mxu0 %v3223
        %3247 = vmatprep.subr.bf16.mxu0 0
        %3248 = vmatpush1.bf16.msra.mxu0 %v3224
        %3249 = vmatprep.subr.bf16.mxu0 0
        %3250 = vmatpush1.bf16.msra.mxu0 0
        %3251 = vmatprep.subr.bf16.mxu0 0
        %3252 = vmatpush1.bf16.msra.mxu0 0
        %3253 = vmatprep.subr.bf16.mxu0 0
        %3254 = vmatpush1.bf16.msra.mxu0 0
        %3255 = vmatprep.subr.bf16.mxu0 0
        %3256 = vmatpush1.bf16.msra.mxu0 0
        %3257 = vmatprep.subr.bf16.mxu0 0
        %3258 = vmatpush1.bf16.msra.mxu0 0
        %3259 = vmatprep.subr.bf16.mxu0 0
        %3260 = vmatpush1.bf16.msra.mxu0 0
        %3261 = vmatprep.subr.bf16.mxu0 0
        %3262 = vmatpush1.bf16.msra.mxu0 0
        %3263 = vmatprep.subr.bf16.mxu0 0
        %3264 = vmatpush1.bf16.msra.mxu0 0
        %3265 = vmatprep.mubr.bf16.mxu0 0
        %3266 = vmatmul.mubr.bf16.gmra.mrb[0].mxu0 %v3153
        %v3267 = vpop.f32.mrb[0].mxu0
        %v3268 = vadd.f32 0.0, %v3267
        %v3269 = vpop.f32.mrb[0].mxu0
        %v3270 = vpop.f32.mrb[0].mxu0
        %v3271 = vadd.f32 0.0, %v3270
        %v3272 = vpop.f32.mrb[0].mxu0
        %3273 = vmatprep.mubr.bf16.mxu0 0
        %3274 = vmatmul.mubr.bf16.gmra.mrb[0].mxu0 %v3154
        %v3275 = vpop.f32.mrb[0].mxu0
        %v3276 = vadd.f32 0.0, %v3275
        %v3277 = vpop.f32.mrb[0].mxu0
        %v3278 = vpop.f32.mrb[0].mxu0
        %v3279 = vadd.f32 0.0, %v3278
        %v3280 = vpop.f32.mrb[0].mxu0
        %3281 = vmatprep.mubr.bf16.mxu0 0
        %3282 = vmatmul.mubr.bf16.gmra.mrb[0].mxu0 %v3155
        %v3283 = vpop.f32.mrb[0].mxu0
        %v3284 = vadd.f32 0.0, %v3283
        %v3285 = vpop.f32.mrb[0].mxu0
        %v3286 = vpop.f32.mrb[0].mxu0
        %v3287 = vadd.f32 0.0, %v3286
        %v3288 = vpop.f32.mrb[0].mxu0
        %3289 = vmatprep.mubr.bf16.mxu0 0
        %3290 = vmatmul.mubr.bf16.gmra.mrb[0].mxu0 %v3156
        %v3291 = vpop.f32.mrb[0].mxu0
        %v3292 = vadd.f32 0.0, %v3291
        %v3293 = vpop.f32.mrb[0].mxu0
        %v3294 = vpop.f32.mrb[0].mxu0
        %v3295 = vadd.f32 0.0, %v3294
        %v3296 = vpop.f32.mrb[0].mxu0
        %3297 = vmatprep.mubr.bf16.mxu0 0
        %3298 = vmatmul.mubr.bf16.gmra.mrb[0].mxu0 %v3157
        %v3299 = vpop.f32.mrb[0].mxu0
        %v3300 = vadd.f32 0.0, %v3299
        %v3301 = vpop.f32.mrb[0].mxu0
        %v3302 = vpop.f32.mrb[0].mxu0
        %v3303 = vadd.f32 0.0, %v3302
        %v3304 = vpop.f32.mrb[0].mxu0
        %3305 = vmatprep.mubr.bf16.mxu0 0
        %3306 = vmatmul.mubr.bf16.gmra.mrb[0].mxu0 %v3158
        %v3307 = vpop.f32.mrb[0].mxu0
        %v3308 = vadd.f32 0.0, %v3307
        %v3309 = vpop.f32.mrb[0].mxu0
        %v3310 = vpop.f32.mrb[0].mxu0
        %v3311 = vadd.f32 0.0, %v3310
        %v3312 = vpop.f32.mrb[0].mxu0
        %3313 = vmatprep.mubr.bf16.mxu0 0
        %3314 = vmatmul.mubr.bf16.gmra.mrb[0].mxu0 %v3159
        %v3315 = vpop.f32.mrb[0].mxu0
        %v3316 = vadd.f32 0.0, %v3315
        %v3317 = vpop.f32.mrb[0].mxu0
        %v3318 = vpop.f32.mrb[0].mxu0
        %v3319 = vadd.f32 0.0, %v3318
        %v3320 = vpop.f32.mrb[0].mxu0
        %3321 = vmatprep.mubr.bf16.mxu0 0
        %3322 = vmatmul.mubr.bf16.gmra.mrb[0].mxu0 %v3160
        %v3323 = vpop.f32.mrb[0].mxu0
        %v3324 = vadd.f32 0.0, %v3323
        %v3325 = vpop.f32.mrb[0].mxu0
        %v3326 = vpop.f32.mrb[0].mxu0
        %v3327 = vadd.f32 0.0, %v3326
        %v3328 = vpop.f32.mrb[0].mxu0
        %3329 = vmatprep.mubr.bf16.mxu0 0
        %3330 = vmatmul.mubr.bf16.gmra.mrb[0].mxu0 %v3161
        %v3331 = vpop.f32.mrb[0].mxu0
        %v3332 = vadd.f32 0.0, %v3331
        %v3333 = vpop.f32.mrb[0].mxu0
        %v3334 = vpop.f32.mrb[0].mxu0
        %v3335 = vadd.f32 0.0, %v3334
        %v3336 = vpop.f32.mrb[0].mxu0
        %3337 = vmatprep.mubr.bf16.mxu0 0
        %3338 = vmatmul.mubr.bf16.gmra.mrb[0].mxu0 %v3162
        %v3339 = vpop.f32.mrb[0].mxu0
        %v3340 = vadd.f32 0.0, %v3339
        %v3341 = vpop.f32.mrb[0].mxu0
        %v3342 = vpop.f32.mrb[0].mxu0
        %v3343 = vadd.f32 0.0, %v3342
        %v3344 = vpop.f32.mrb[0].mxu0
        %3345 = vmatprep.mubr.bf16.mxu0 0
        %3346 = vmatmul.mubr.bf16.gmra.mrb[0].mxu0 %v3163
        %v3347 = vpop.f32.mrb[0].mxu0
        %v3348 = vadd.f32 0.0, %v3347
        %v3349 = vpop.f32.mrb[0].mxu0
        %v3350 = vpop.f32.mrb[0].mxu0
        %v3351 = vadd.f32 0.0, %v3350
        %v3352 = vpop.f32.mrb[0].mxu0
        %3353 = vmatprep.mubr.bf16.mxu0 0
        %3354 = vmatmul.mubr.bf16.gmra.mrb[0].mxu0 %v3164
        %v3355 = vpop.f32.mrb[0].mxu0
        %v3356 = vadd.f32 0.0, %v3355
        %v3357 = vpop.f32.mrb[0].mxu0
        %v3358 = vpop.f32.mrb[0].mxu0
        %v3359 = vadd.f32 0.0, %v3358
        %v3360 = vpop.f32.mrb[0].mxu0
        %3361 = vmatprep.mubr.bf16.mxu0 0
        %3362 = vmatmul.mubr.bf16.gmra.mrb[0].mxu0 %v3165
        %v3363 = vpop.f32.mrb[0].mxu0
        %v3364 = vadd.f32 0.0, %v3363
        %v3365 = vpop.f32.mrb[0].mxu0
        %v3366 = vpop.f32.mrb[0].mxu0
        %v3367 = vadd.f32 0.0, %v3366
        %v3368 = vpop.f32.mrb[0].mxu0
        %3369 = vmatprep.mubr.bf16.mxu0 0
        %3370 = vmatmul.mubr.bf16.gmra.mrb[0].mxu0 %v3166
        %v3371 = vpop.f32.mrb[0].mxu0
        %v3372 = vadd.f32 0.0, %v3371
        %v3373 = vpop.f32.mrb[0].mxu0
        %v3374 = vpop.f32.mrb[0].mxu0
        %v3375 = vadd.f32 0.0, %v3374
        %v3376 = vpop.f32.mrb[0].mxu0
        %3377 = vmatprep.mubr.bf16.mxu0 0
        %3378 = vmatmul.mubr.bf16.gmra.mrb[0].mxu0 %v3167
        %v3379 = vpop.f32.mrb[0].mxu0
        %v3380 = vadd.f32 0.0, %v3379
        %v3381 = vpop.f32.mrb[0].mxu0
        %v3382 = vpop.f32.mrb[0].mxu0
        %v3383 = vadd.f32 0.0, %v3382
        %v3384 = vpop.f32.mrb[0].mxu0
        %3385 = vmatprep.mubr.bf16.mxu0 0
        %3386 = vmatmul.mubr.bf16.gmra.mrb[0].mxu0 %v3168
        %v3387 = vpop.f32.mrb[0].mxu0
        %v3388 = vadd.f32 0.0, %v3387
        %v3389 = vpop.f32.mrb[0].mxu0
        %v3390 = vpop.f32.mrb[0].mxu0
        %v3391 = vadd.f32 0.0, %v3390
        %v3392 = vpop.f32.mrb[0].mxu0
        %3393 = vdwg.mxu0
        %v3394 = vadd.f32 %v2896, %v3268
        %v3395 = vadd.f32 %v2897, %v3271
        %v3396 = vadd.f32 %v2898, %v3276
        %v3397 = vadd.f32 %v2899, %v3279
        %v3398 = vadd.f32 %v2900, %v3284
        %v3399 = vadd.f32 %v2901, %v3287
        %v3400 = vadd.f32 %v2902, %v3292
        %v3401 = vadd.f32 %v2903, %v3295
        %v3402 = vadd.f32 %v2904, %v3300
        %v3403 = vadd.f32 %v2905, %v3303
        %v3404 = vadd.f32 %v2906, %v3308
        %v3405 = vadd.f32 %v2907, %v3311
        %v3406 = vadd.f32 %v2908, %v3316
        %v3407 = vadd.f32 %v2909, %v3319
        %v3408 = vadd.f32 %v2910, %v3324
        %v3409 = vadd.f32 %v2911, %v3327
        %v3410 = vadd.f32 %v2912, %v3332
        %v3411 = vadd.f32 %v2913, %v3335
        %v3412 = vadd.f32 %v2914, %v3340
        %v3413 = vadd.f32 %v2915, %v3343
        %v3414 = vadd.f32 %v2916, %v3348
        %v3415 = vadd.f32 %v2917, %v3351
        %v3416 = vadd.f32 %v2918, %v3356
        %v3417 = vadd.f32 %v2919, %v3359
        %v3418 = vadd.f32 %v2920, %v3364
        %v3419 = vadd.f32 %v2921, %v3367
        %v3420 = vadd.f32 %v2922, %v3372
        %v3421 = vadd.f32 %v2923, %v3375
        %v3422 = vadd.f32 %v2924, %v3380
        %v3423 = vadd.f32 %v2925, %v3383
        %v3424 = vadd.f32 %v2926, %v3388
        %v3425 = vadd.f32 %v2927, %v3391
        %s3426 = scalar_lea.vmem %s250, 24
        %v3427 = vld [vmem:[%s3426] sm:$0xf]
        %v3428 = vld [vmem:[%s3426 + $0x4] sm:$0xf]
        %v3429 = vld [vmem:[%s3426 + $0xc] sm:$0xf]
        %v3430 = vld [vmem:[%s3426 + $0x10] sm:$0xf]
        %v3431 = vld [vmem:[%s3426 + $0x18] sm:$0xf]
        %v3432 = vld [vmem:[%s3426 + $0x1c] sm:$0xf]
        %v3433 = vld [vmem:[%s3426 + $0x24] sm:$0xf]
        %v3434 = vld [vmem:[%s3426 + $0x28] sm:$0xf]
        %v3435 = vld [vmem:[%s3426 + $0x30] sm:$0xf]
        %v3436 = vld [vmem:[%s3426 + $0x34] sm:$0xf]
        %v3437 = vld [vmem:[%s3426 + $0x3c] sm:$0xf]
        %v3438 = vld [vmem:[%s3426 + $0x40] sm:$0xf]
        %v3439 = vld [vmem:[%s3426 + $0x48] sm:$0xf]
        %v3440 = vld [vmem:[%s3426 + $0x4c] sm:$0xf]
        %v3441 = vld [vmem:[%s3426 + $0x54] sm:$0xf]
        %v3442 = vld [vmem:[%s3426 + $0x58] sm:$0xf]
        %v3443 = vld [vmem:[%s3426 + $0x60] sm:$0xf]
        %v3444 = vld [vmem:[%s3426 + $0x64] sm:$0xf]
        %v3445 = vld [vmem:[%s3426 + $0x6c] sm:$0xf]
        %v3446 = vld [vmem:[%s3426 + $0x70] sm:$0xf]
        %v3447 = vld [vmem:[%s3426 + $0x78] sm:$0xf]
        %v3448 = vld [vmem:[%s3426 + $0x7c] sm:$0xf]
        %v3449 = vld [vmem:[%s3426 + $0x84] sm:$0xf]
        %v3450 = vld [vmem:[%s3426 + $0x88] sm:$0xf]
        %v3451 = vld [vmem:[%s3426 + $0x90] sm:$0xf]
        %v3452 = vld [vmem:[%s3426 + $0x94] sm:$0xf]
        %v3453 = vld [vmem:[%s3426 + $0x9c] sm:$0xf]
        %v3454 = vld [vmem:[%s3426 + $0xa0] sm:$0xf]
        %v3455 = vld [vmem:[%s3426 + $0xa8] sm:$0xf]
        %v3456 = vld [vmem:[%s3426 + $0xac] sm:$0xf]
        %v3457 = vld [vmem:[%s3426 + $0xb4] sm:$0xf]
        %v3458 = vld [vmem:[%s3426 + $0xb8] sm:$0xf]
        %s3459 = scalar_lea.vmem %s1, 384
        %v3460 = vld [vmem:[%s3459] sm:$0xf]
        %v3461 = vld [vmem:[%s3459 + $0x4] sm:$0xf]
        %v3462 = vld [vmem:[%s3459 + $0x8] sm:$0xf]
        %v3463 = vld [vmem:[%s3459 + $0xc] sm:$0xf]
        %v3464 = vld [vmem:[%s3459 + $0x10] sm:$0xf]
        %v3465 = vld [vmem:[%s3459 + $0x14] sm:$0xf]
        %v3466 = vld [vmem:[%s3459 + $0x18] sm:$0xf]
        %v3467 = vld [vmem:[%s3459 + $0x1c] sm:$0xf]
        %v3468 = vld [vmem:[%s3459 + $0x20] sm:$0xf]
        %v3469 = vld [vmem:[%s3459 + $0x24] sm:$0xf]
        %v3470 = vld [vmem:[%s3459 + $0x28] sm:$0xf]
        %v3471 = vld [vmem:[%s3459 + $0x2c] sm:$0xf]
        %v3472 = vld [vmem:[%s3459 + $0x30] sm:$0xf]
        %v3473 = vld [vmem:[%s3459 + $0x34] sm:$0xf]
        %v3474 = vld [vmem:[%s3459 + $0x38] sm:$0xf]
        %v3475 = vld [vmem:[%s3459 + $0x3c] sm:$0xf]
        %v3508 = vunpack.c.l.b16 %v3427
        %v3509 = vunpack.c.l.b16 %v3428
        %v3510 = vunpack.c.l.b16 %v3429
        %v3511 = vunpack.c.l.b16 %v3430
        %v3512 = vunpack.c.l.b16 %v3431
        %v3513 = vunpack.c.l.b16 %v3432
        %v3514 = vunpack.c.l.b16 %v3433
        %v3515 = vunpack.c.l.b16 %v3434
        %v3516 = vunpack.c.l.b16 %v3435
        %v3517 = vunpack.c.l.b16 %v3436
        %v3518 = vunpack.c.l.b16 %v3437
        %v3519 = vunpack.c.l.b16 %v3438
        %v3520 = vunpack.c.l.b16 %v3439
        %v3521 = vunpack.c.l.b16 %v3440
        %v3522 = vunpack.c.l.b16 %v3441
        %v3523 = vunpack.c.l.b16 %v3442
        %v3524 = vunpack.c.l.b16 %v3443
        %v3525 = vunpack.c.l.b16 %v3444
        %v3526 = vunpack.c.l.b16 %v3445
        %v3527 = vunpack.c.l.b16 %v3446
        %v3528 = vunpack.c.l.b16 %v3447
        %v3529 = vunpack.c.l.b16 %v3448
        %v3530 = vunpack.c.l.b16 %v3449
        %v3531 = vunpack.c.l.b16 %v3450
        %v3532 = vunpack.c.l.b16 %v3451
        %v3533 = vunpack.c.l.b16 %v3452
        %v3534 = vunpack.c.l.b16 %v3453
        %v3535 = vunpack.c.l.b16 %v3454
        %v3536 = vunpack.c.l.b16 %v3455
        %v3537 = vunpack.c.l.b16 %v3456
        %v3538 = vunpack.c.l.b16 %v3457
        %v3539 = vunpack.c.l.b16 %v3458
        %v3540 = vpack.c.b16 %v3509, %v3508
        %v3541 = vpack.c.b16 %v3511, %v3510
        %v3542 = vpack.c.b16 %v3513, %v3512
        %v3543 = vpack.c.b16 %v3515, %v3514
        %v3544 = vpack.c.b16 %v3517, %v3516
        %v3545 = vpack.c.b16 %v3519, %v3518
        %v3546 = vpack.c.b16 %v3521, %v3520
        %v3547 = vpack.c.b16 %v3523, %v3522
        %v3548 = vpack.c.b16 %v3525, %v3524
        %v3549 = vpack.c.b16 %v3527, %v3526
        %v3550 = vpack.c.b16 %v3529, %v3528
        %v3551 = vpack.c.b16 %v3531, %v3530
        %v3552 = vpack.c.b16 %v3533, %v3532
        %v3553 = vpack.c.b16 %v3535, %v3534
        %v3554 = vpack.c.b16 %v3537, %v3536
        %v3555 = vpack.c.b16 %v3539, %v3538
        %v3588 = vunpack.c.l.b16 %v3460
        %v3589 = vunpack.c.l.b16 %v3461
        %v3590 = vunpack.c.l.b16 %v3462
        %v3591 = vunpack.c.l.b16 %v3463
        %v3592 = vunpack.c.l.b16 %v3464
        %v3593 = vunpack.c.l.b16 %v3465
        %v3594 = vunpack.c.l.b16 %v3466
        %v3595 = vunpack.c.l.b16 %v3467
        %v3596 = vunpack.c.l.b16 %v3468
        %v3597 = vunpack.c.l.b16 %v3469
        %v3598 = vunpack.c.l.b16 %v3470
        %v3599 = vunpack.c.l.b16 %v3471
        %v3600 = vunpack.c.l.b16 %v3472
        %v3601 = vunpack.c.l.b16 %v3473
        %v3602 = vunpack.c.l.b16 %v3474
        %v3603 = vunpack.c.l.b16 %v3475
        %v3604 = vpack.c.b16 %v3589, %v3588
        %v3605 = vpack.c.b16 %v3591, %v3590
        %v3606 = vpack.c.b16 %v3593, %v3592
        %v3607 = vpack.c.b16 %v3595, %v3594
        %v3608 = vpack.c.b16 %v3597, %v3596
        %v3609 = vpack.c.b16 %v3599, %v3598
        %v3610 = vpack.c.b16 %v3601, %v3600
        %v3611 = vpack.c.b16 %v3603, %v3602
        %3620 = vmatprep.subr.bf16.mxu0 0
        %3621 = vmatpush1.bf16.msra.mxu0 %v3604
        %3622 = vmatprep.subr.bf16.mxu0 0
        %3623 = vmatpush1.bf16.msra.mxu0 %v3605
        %3624 = vmatprep.subr.bf16.mxu0 0
        %3625 = vmatpush1.bf16.msra.mxu0 %v3606
        %3626 = vmatprep.subr.bf16.mxu0 0
        %3627 = vmatpush1.bf16.msra.mxu0 %v3607
        %3628 = vmatprep.subr.bf16.mxu0 0
        %3629 = vmatpush1.bf16.msra.mxu0 %v3608
        %3630 = vmatprep.subr.bf16.mxu0 0
        %3631 = vmatpush1.bf16.msra.mxu0 %v3609
        %3632 = vmatprep.subr.bf16.mxu0 0
        %3633 = vmatpush1.bf16.msra.mxu0 %v3610
        %3634 = vmatprep.subr.bf16.mxu0 0
        %3635 = vmatpush1.bf16.msra.mxu0 %v3611
        %3636 = vmatprep.subr.bf16.mxu0 0
        %3637 = vmatpush1.bf16.msra.mxu0 0
        %3638 = vmatprep.subr.bf16.mxu0 0
        %3639 = vmatpush1.bf16.msra.mxu0 0
        %3640 = vmatprep.subr.bf16.mxu0 0
        %3641 = vmatpush1.bf16.msra.mxu0 0
        %3642 = vmatprep.subr.bf16.mxu0 0
        %3643 = vmatpush1.bf16.msra.mxu0 0
        %3644 = vmatprep.subr.bf16.mxu0 0
        %3645 = vmatpush1.bf16.msra.mxu0 0
        %3646 = vmatprep.subr.bf16.mxu0 0
        %3647 = vmatpush1.bf16.msra.mxu0 0
        %3648 = vmatprep.subr.bf16.mxu0 0
        %3649 = vmatpush1.bf16.msra.mxu0 0
        %3650 = vmatprep.subr.bf16.mxu0 0
        %3651 = vmatpush1.bf16.msra.mxu0 0
        %3652 = vmatprep.mubr.bf16.mxu0 0
        %3653 = vmatmul.mubr.bf16.gmra.mrb[0].mxu0 %v3540
        %v3654 = vpop.f32.mrb[0].mxu0
        %v3655 = vadd.f32 0.0, %v3654
        %v3656 = vpop.f32.mrb[0].mxu0
        %v3657 = vpop.f32.mrb[0].mxu0
        %v3658 = vadd.f32 0.0, %v3657
        %v3659 = vpop.f32.mrb[0].mxu0
        %3660 = vmatprep.mubr.bf16.mxu0 0
        %3661 = vmatmul.mubr.bf16.gmra.mrb[0].mxu0 %v3541
        %v3662 = vpop.f32.mrb[0].mxu0
        %v3663 = vadd.f32 0.0, %v3662
        %v3664 = vpop.f32.mrb[0].mxu0
        %v3665 = vpop.f32.mrb[0].mxu0
        %v3666 = vadd.f32 0.0, %v3665
        %v3667 = vpop.f32.mrb[0].mxu0
        %3668 = vmatprep.mubr.bf16.mxu0 0
        %3669 = vmatmul.mubr.bf16.gmra.mrb[0].mxu0 %v3542
        %v3670 = vpop.f32.mrb[0].mxu0
        %v3671 = vadd.f32 0.0, %v3670
        %v3672 = vpop.f32.mrb[0].mxu0
        %v3673 = vpop.f32.mrb[0].mxu0
        %v3674 = vadd.f32 0.0, %v3673
        %v3675 = vpop.f32.mrb[0].mxu0
        %3676 = vmatprep.mubr.bf16.mxu0 0
        %3677 = vmatmul.mubr.bf16.gmra.mrb[0].mxu0 %v3543
        %v3678 = vpop.f32.mrb[0].mxu0
        %v3679 = vadd.f32 0.0, %v3678
        %v3680 = vpop.f32.mrb[0].mxu0
        %v3681 = vpop.f32.mrb[0].mxu0
        %v3682 = vadd.f32 0.0, %v3681
        %v3683 = vpop.f32.mrb[0].mxu0
        %3684 = vmatprep.mubr.bf16.mxu0 0
        %3685 = vmatmul.mubr.bf16.gmra.mrb[0].mxu0 %v3544
        %v3686 = vpop.f32.mrb[0].mxu0
        %v3687 = vadd.f32 0.0, %v3686
        %v3688 = vpop.f32.mrb[0].mxu0
        %v3689 = vpop.f32.mrb[0].mxu0
        %v3690 = vadd.f32 0.0, %v3689
        %v3691 = vpop.f32.mrb[0].mxu0
        %3692 = vmatprep.mubr.bf16.mxu0 0
        %3693 = vmatmul.mubr.bf16.gmra.mrb[0].mxu0 %v3545
        %v3694 = vpop.f32.mrb[0].mxu0
        %v3695 = vadd.f32 0.0, %v3694
        %v3696 = vpop.f32.mrb[0].mxu0
        %v3697 = vpop.f32.mrb[0].mxu0
        %v3698 = vadd.f32 0.0, %v3697
        %v3699 = vpop.f32.mrb[0].mxu0
        %3700 = vmatprep.mubr.bf16.mxu0 0
        %3701 = vmatmul.mubr.bf16.gmra.mrb[0].mxu0 %v3546
        %v3702 = vpop.f32.mrb[0].mxu0
        %v3703 = vadd.f32 0.0, %v3702
        %v3704 = vpop.f32.mrb[0].mxu0
        %v3705 = vpop.f32.mrb[0].mxu0
        %v3706 = vadd.f32 0.0, %v3705
        %v3707 = vpop.f32.mrb[0].mxu0
        %3708 = vmatprep.mubr.bf16.mxu0 0
        %3709 = vmatmul.mubr.bf16.gmra.mrb[0].mxu0 %v3547
        %v3710 = vpop.f32.mrb[0].mxu0
        %v3711 = vadd.f32 0.0, %v3710
        %v3712 = vpop.f32.mrb[0].mxu0
        %v3713 = vpop.f32.mrb[0].mxu0
        %v3714 = vadd.f32 0.0, %v3713
        %v3715 = vpop.f32.mrb[0].mxu0
        %3716 = vmatprep.mubr.bf16.mxu0 0
        %3717 = vmatmul.mubr.bf16.gmra.mrb[0].mxu0 %v3548
        %v3718 = vpop.f32.mrb[0].mxu0
        %v3719 = vadd.f32 0.0, %v3718
        %v3720 = vpop.f32.mrb[0].mxu0
        %v3721 = vpop.f32.mrb[0].mxu0
        %v3722 = vadd.f32 0.0, %v3721
        %v3723 = vpop.f32.mrb[0].mxu0
        %3724 = vmatprep.mubr.bf16.mxu0 0
        %3725 = vmatmul.mubr.bf16.gmra.mrb[0].mxu0 %v3549
        %v3726 = vpop.f32.mrb[0].mxu0
        %v3727 = vadd.f32 0.0, %v3726
        %v3728 = vpop.f32.mrb[0].mxu0
        %v3729 = vpop.f32.mrb[0].mxu0
        %v3730 = vadd.f32 0.0, %v3729
        %v3731 = vpop.f32.mrb[0].mxu0
        %3732 = vmatprep.mubr.bf16.mxu0 0
        %3733 = vmatmul.mubr.bf16.gmra.mrb[0].mxu0 %v3550
        %v3734 = vpop.f32.mrb[0].mxu0
        %v3735 = vadd.f32 0.0, %v3734
        %v3736 = vpop.f32.mrb[0].mxu0
        %v3737 = vpop.f32.mrb[0].mxu0
        %v3738 = vadd.f32 0.0, %v3737
        %v3739 = vpop.f32.mrb[0].mxu0
        %3740 = vmatprep.mubr.bf16.mxu0 0
        %3741 = vmatmul.mubr.bf16.gmra.mrb[0].mxu0 %v3551
        %v3742 = vpop.f32.mrb[0].mxu0
        %v3743 = vadd.f32 0.0, %v3742
        %v3744 = vpop.f32.mrb[0].mxu0
        %v3745 = vpop.f32.mrb[0].mxu0
        %v3746 = vadd.f32 0.0, %v3745
        %v3747 = vpop.f32.mrb[0].mxu0
        %3748 = vmatprep.mubr.bf16.mxu0 0
        %3749 = vmatmul.mubr.bf16.gmra.mrb[0].mxu0 %v3552
        %v3750 = vpop.f32.mrb[0].mxu0
        %v3751 = vadd.f32 0.0, %v3750
        %v3752 = vpop.f32.mrb[0].mxu0
        %v3753 = vpop.f32.mrb[0].mxu0
        %v3754 = vadd.f32 0.0, %v3753
        %v3755 = vpop.f32.mrb[0].mxu0
        %3756 = vmatprep.mubr.bf16.mxu0 0
        %3757 = vmatmul.mubr.bf16.gmra.mrb[0].mxu0 %v3553
        %v3758 = vpop.f32.mrb[0].mxu0
        %v3759 = vadd.f32 0.0, %v3758
        %v3760 = vpop.f32.mrb[0].mxu0
        %v3761 = vpop.f32.mrb[0].mxu0
        %v3762 = vadd.f32 0.0, %v3761
        %v3763 = vpop.f32.mrb[0].mxu0
        %3764 = vmatprep.mubr.bf16.mxu0 0
        %3765 = vmatmul.mubr.bf16.gmra.mrb[0].mxu0 %v3554
        %v3766 = vpop.f32.mrb[0].mxu0
        %v3767 = vadd.f32 0.0, %v3766
        %v3768 = vpop.f32.mrb[0].mxu0
        %v3769 = vpop.f32.mrb[0].mxu0
        %v3770 = vadd.f32 0.0, %v3769
        %v3771 = vpop.f32.mrb[0].mxu0
        %3772 = vmatprep.mubr.bf16.mxu0 0
        %3773 = vmatmul.mubr.bf16.gmra.mrb[0].mxu0 %v3555
        %v3774 = vpop.f32.mrb[0].mxu0
        %v3775 = vadd.f32 0.0, %v3774
        %v3776 = vpop.f32.mrb[0].mxu0
        %v3777 = vpop.f32.mrb[0].mxu0
        %v3778 = vadd.f32 0.0, %v3777
        %v3779 = vpop.f32.mrb[0].mxu0
        %3780 = vdwg.mxu0
        %v3781 = vadd.f32 %v3394, %v3655
        %v3782 = vadd.f32 %v3395, %v3658
        %v3783 = vadd.f32 %v3396, %v3663
        %v3784 = vadd.f32 %v3397, %v3666
        %v3785 = vadd.f32 %v3398, %v3671
        %v3786 = vadd.f32 %v3399, %v3674
        %v3787 = vadd.f32 %v3400, %v3679
        %v3788 = vadd.f32 %v3401, %v3682
        %v3789 = vadd.f32 %v3402, %v3687
        %v3790 = vadd.f32 %v3403, %v3690
        %v3791 = vadd.f32 %v3404, %v3695
        %v3792 = vadd.f32 %v3405, %v3698
        %v3793 = vadd.f32 %v3406, %v3703
        %v3794 = vadd.f32 %v3407, %v3706
        %v3795 = vadd.f32 %v3408, %v3711
        %v3796 = vadd.f32 %v3409, %v3714
        %v3797 = vadd.f32 %v3410, %v3719
        %v3798 = vadd.f32 %v3411, %v3722
        %v3799 = vadd.f32 %v3412, %v3727
        %v3800 = vadd.f32 %v3413, %v3730
        %v3801 = vadd.f32 %v3414, %v3735
        %v3802 = vadd.f32 %v3415, %v3738
        %v3803 = vadd.f32 %v3416, %v3743
        %v3804 = vadd.f32 %v3417, %v3746
        %v3805 = vadd.f32 %v3418, %v3751
        %v3806 = vadd.f32 %v3419, %v3754
        %v3807 = vadd.f32 %v3420, %v3759
        %v3808 = vadd.f32 %v3421, %v3762
        %v3809 = vadd.f32 %v3422, %v3767
        %v3810 = vadd.f32 %v3423, %v3770
        %v3811 = vadd.f32 %v3424, %v3775
        %v3812 = vadd.f32 %v3425, %v3778
        %v3813 = vld [vmem:[%s3426] sm:$0xf]
        %v3814 = vld [vmem:[%s3426 + $0x4] sm:$0xf]
        %v3815 = vld [vmem:[%s3426 + $0x8] sm:$0x1]
        %v3816 = vld [vmem:[%s3426 + $0xc] sm:$0xf]
        %v3817 = vld [vmem:[%s3426 + $0x10] sm:$0xf]
        %v3818 = vld [vmem:[%s3426 + $0x14] sm:$0x1]
        %v3819 = vld [vmem:[%s3426 + $0x18] sm:$0xf]
        %v3820 = vld [vmem:[%s3426 + $0x1c] sm:$0xf]
        %v3821 = vld [vmem:[%s3426 + $0x20] sm:$0x1]
        %v3822 = vld [vmem:[%s3426 + $0x24] sm:$0xf]
        %v3823 = vld [vmem:[%s3426 + $0x28] sm:$0xf]
        %v3824 = vld [vmem:[%s3426 + $0x2c] sm:$0x1]
        %v3825 = vld [vmem:[%s3426 + $0x30] sm:$0xf]
        %v3826 = vld [vmem:[%s3426 + $0x34] sm:$0xf]
        %v3827 = vld [vmem:[%s3426 + $0x38] sm:$0x1]
        %v3828 = vld [vmem:[%s3426 + $0x3c] sm:$0xf]
        %v3829 = vld [vmem:[%s3426 + $0x40] sm:$0xf]
        %v3830 = vld [vmem:[%s3426 + $0x44] sm:$0x1]
        %v3831 = vld [vmem:[%s3426 + $0x48] sm:$0xf]
        %v3832 = vld [vmem:[%s3426 + $0x4c] sm:$0xf]
        %v3833 = vld [vmem:[%s3426 + $0x50] sm:$0x1]
        %v3834 = vld [vmem:[%s3426 + $0x54] sm:$0xf]
        %v3835 = vld [vmem:[%s3426 + $0x58] sm:$0xf]
        %v3836 = vld [vmem:[%s3426 + $0x5c] sm:$0x1]
        %v3837 = vld [vmem:[%s3426 + $0x60] sm:$0xf]
        %v3838 = vld [vmem:[%s3426 + $0x64] sm:$0xf]
        %v3839 = vld [vmem:[%s3426 + $0x68] sm:$0x1]
        %v3840 = vld [vmem:[%s3426 + $0x6c] sm:$0xf]
        %v3841 = vld [vmem:[%s3426 + $0x70] sm:$0xf]
        %v3842 = vld [vmem:[%s3426 + $0x74] sm:$0x1]
        %v3843 = vld [vmem:[%s3426 + $0x78] sm:$0xf]
        %v3844 = vld [vmem:[%s3426 + $0x7c] sm:$0xf]
        %v3845 = vld [vmem:[%s3426 + $0x80] sm:$0x1]
        %v3846 = vld [vmem:[%s3426 + $0x84] sm:$0xf]
        %v3847 = vld [vmem:[%s3426 + $0x88] sm:$0xf]
        %v3848 = vld [vmem:[%s3426 + $0x8c] sm:$0x1]
        %v3849 = vld [vmem:[%s3426 + $0x90] sm:$0xf]
        %v3850 = vld [vmem:[%s3426 + $0x94] sm:$0xf]
        %v3851 = vld [vmem:[%s3426 + $0x98] sm:$0x1]
        %v3852 = vld [vmem:[%s3426 + $0x9c] sm:$0xf]
        %v3853 = vld [vmem:[%s3426 + $0xa0] sm:$0xf]
        %v3854 = vld [vmem:[%s3426 + $0xa4] sm:$0x1]
        %v3855 = vld [vmem:[%s3426 + $0xa8] sm:$0xf]
        %v3856 = vld [vmem:[%s3426 + $0xac] sm:$0xf]
        %v3857 = vld [vmem:[%s3426 + $0xb0] sm:$0x1]
        %v3858 = vld [vmem:[%s3426 + $0xb4] sm:$0xf]
        %v3859 = vld [vmem:[%s3426 + $0xb8] sm:$0xf]
        %v3860 = vld [vmem:[%s3426 + $0xbc] sm:$0x1]
        %v3862 = vshrl.u32 %v3813, 16
        %v3864 = vrot.slane %v3862, 4
        %v3865 = vshll.u32 %v3813, 16
        %v3867 = vrot.slane %v3865, 5
        %v3868 = vor.u32 %v3864, %v3867
        %v3869 = vrot.slane %v3868, 4
        %v3871 = vshll.u32 %v3814, 16
        %v3873 = vrot.slane %v3871, 5
        %v3874 = vsel %vm322, %v3869, %v3873
        %v3875 = vshrl.u32 %v3814, 16
        %v3877 = vrot.slane %v3875, 4
        %v3878 = vor.u32 %v3877, %v3873
        %v3879 = vrot.slane %v3878, 4
        %v3881 = vshll.u32 %v3815, 16
        %v3883 = vrot.slane %v3881, 5
        %v3884 = vsel %vm322, %v3879, %v3883
        %v3886 = vshrl.u32 %v3816, 16
        %v3888 = vrot.slane %v3886, 4
        %v3889 = vshll.u32 %v3816, 16
        %v3891 = vrot.slane %v3889, 5
        %v3892 = vor.u32 %v3888, %v3891
        %v3893 = vrot.slane %v3892, 4
        %v3895 = vshll.u32 %v3817, 16
        %v3897 = vrot.slane %v3895, 5
        %v3898 = vsel %vm322, %v3893, %v3897
        %v3899 = vshrl.u32 %v3817, 16
        %v3901 = vrot.slane %v3899, 4
        %v3902 = vor.u32 %v3901, %v3897
        %v3903 = vrot.slane %v3902, 4
        %v3905 = vshll.u32 %v3818, 16
        %v3907 = vrot.slane %v3905, 5
        %v3908 = vsel %vm322, %v3903, %v3907
        %v3910 = vshrl.u32 %v3819, 16
        %v3912 = vrot.slane %v3910, 4
        %v3913 = vshll.u32 %v3819, 16
        %v3915 = vrot.slane %v3913, 5
        %v3916 = vor.u32 %v3912, %v3915
        %v3917 = vrot.slane %v3916, 4
        %v3919 = vshll.u32 %v3820, 16
        %v3921 = vrot.slane %v3919, 5
        %v3922 = vsel %vm322, %v3917, %v3921
        %v3923 = vshrl.u32 %v3820, 16
        %v3925 = vrot.slane %v3923, 4
        %v3926 = vor.u32 %v3925, %v3921
        %v3927 = vrot.slane %v3926, 4
        %v3929 = vshll.u32 %v3821, 16
        %v3931 = vrot.slane %v3929, 5
        %v3932 = vsel %vm322, %v3927, %v3931
        %v3934 = vshrl.u32 %v3822, 16
        %v3936 = vrot.slane %v3934, 4
        %v3937 = vshll.u32 %v3822, 16
        %v3939 = vrot.slane %v3937, 5
        %v3940 = vor.u32 %v3936, %v3939
        %v3941 = vrot.slane %v3940, 4
        %v3943 = vshll.u32 %v3823, 16
        %v3945 = vrot.slane %v3943, 5
        %v3946 = vsel %vm322, %v3941, %v3945
        %v3947 = vshrl.u32 %v3823, 16
        %v3949 = vrot.slane %v3947, 4
        %v3950 = vor.u32 %v3949, %v3945
        %v3951 = vrot.slane %v3950, 4
        %v3953 = vshll.u32 %v3824, 16
        %v3955 = vrot.slane %v3953, 5
        %v3956 = vsel %vm322, %v3951, %v3955
        %v3958 = vshrl.u32 %v3825, 16
        %v3960 = vrot.slane %v3958, 4
        %v3961 = vshll.u32 %v3825, 16
        %v3963 = vrot.slane %v3961, 5
        %v3964 = vor.u32 %v3960, %v3963
        %v3965 = vrot.slane %v3964, 4
        %v3967 = vshll.u32 %v3826, 16
        %v3969 = vrot.slane %v3967, 5
        %v3970 = vsel %vm322, %v3965, %v3969
        %v3971 = vshrl.u32 %v3826, 16
        %v3973 = vrot.slane %v3971, 4
        %v3974 = vor.u32 %v3973, %v3969
        %v3975 = vrot.slane %v3974, 4
        %v3977 = vshll.u32 %v3827, 16
        %v3979 = vrot.slane %v3977, 5
        %v3980 = vsel %vm322, %v3975, %v3979
        %v3982 = vshrl.u32 %v3828, 16
        %v3984 = vrot.slane %v3982, 4
        %v3985 = vshll.u32 %v3828, 16
        %v3987 = vrot.slane %v3985, 5
        %v3988 = vor.u32 %v3984, %v3987
        %v3989 = vrot.slane %v3988, 4
        %v3991 = vshll.u32 %v3829, 16
        %v3993 = vrot.slane %v3991, 5
        %v3994 = vsel %vm322, %v3989, %v3993
        %v3995 = vshrl.u32 %v3829, 16
        %v3997 = vrot.slane %v3995, 4
        %v3998 = vor.u32 %v3997, %v3993
        %v3999 = vrot.slane %v3998, 4
        %v4001 = vshll.u32 %v3830, 16
        %v4003 = vrot.slane %v4001, 5
        %v4004 = vsel %vm322, %v3999, %v4003
        %v4006 = vshrl.u32 %v3831, 16
        %v4008 = vrot.slane %v4006, 4
        %v4009 = vshll.u32 %v3831, 16
        %v4011 = vrot.slane %v4009, 5
        %v4012 = vor.u32 %v4008, %v4011
        %v4013 = vrot.slane %v4012, 4
        %v4015 = vshll.u32 %v3832, 16
        %v4017 = vrot.slane %v4015, 5
        %v4018 = vsel %vm322, %v4013, %v4017
        %v4019 = vshrl.u32 %v3832, 16
        %v4021 = vrot.slane %v4019, 4
        %v4022 = vor.u32 %v4021, %v4017
        %v4023 = vrot.slane %v4022, 4
        %v4025 = vshll.u32 %v3833, 16
        %v4027 = vrot.slane %v4025, 5
        %v4028 = vsel %vm322, %v4023, %v4027
        %v4030 = vshrl.u32 %v3834, 16
        %v4032 = vrot.slane %v4030, 4
        %v4033 = vshll.u32 %v3834, 16
        %v4035 = vrot.slane %v4033, 5
        %v4036 = vor.u32 %v4032, %v4035
        %v4037 = vrot.slane %v4036, 4
        %v4039 = vshll.u32 %v3835, 16
        %v4041 = vrot.slane %v4039, 5
        %v4042 = vsel %vm322, %v4037, %v4041
        %v4043 = vshrl.u32 %v3835, 16
        %v4045 = vrot.slane %v4043, 4
        %v4046 = vor.u32 %v4045, %v4041
        %v4047 = vrot.slane %v4046, 4
        %v4049 = vshll.u32 %v3836, 16
        %v4051 = vrot.slane %v4049, 5
        %v4052 = vsel %vm322, %v4047, %v4051
        %v4054 = vshrl.u32 %v3837, 16
        %v4056 = vrot.slane %v4054, 4
        %v4057 = vshll.u32 %v3837, 16
        %v4059 = vrot.slane %v4057, 5
        %v4060 = vor.u32 %v4056, %v4059
        %v4061 = vrot.slane %v4060, 4
        %v4063 = vshll.u32 %v3838, 16
        %v4065 = vrot.slane %v4063, 5
        %v4066 = vsel %vm322, %v4061, %v4065
        %v4067 = vshrl.u32 %v3838, 16
        %v4069 = vrot.slane %v4067, 4
        %v4070 = vor.u32 %v4069, %v4065
        %v4071 = vrot.slane %v4070, 4
        %v4073 = vshll.u32 %v3839, 16
        %v4075 = vrot.slane %v4073, 5
        %v4076 = vsel %vm322, %v4071, %v4075
        %v4078 = vshrl.u32 %v3840, 16
        %v4080 = vrot.slane %v4078, 4
        %v4081 = vshll.u32 %v3840, 16
        %v4083 = vrot.slane %v4081, 5
        %v4084 = vor.u32 %v4080, %v4083
        %v4085 = vrot.slane %v4084, 4
        %v4087 = vshll.u32 %v3841, 16
        %v4089 = vrot.slane %v4087, 5
        %v4090 = vsel %vm322, %v4085, %v4089
        %v4091 = vshrl.u32 %v3841, 16
        %v4093 = vrot.slane %v4091, 4
        %v4094 = vor.u32 %v4093, %v4089
        %v4095 = vrot.slane %v4094, 4
        %v4097 = vshll.u32 %v3842, 16
        %v4099 = vrot.slane %v4097, 5
        %v4100 = vsel %vm322, %v4095, %v4099
        %v4102 = vshrl.u32 %v3843, 16
        %v4104 = vrot.slane %v4102, 4
        %v4105 = vshll.u32 %v3843, 16
        %v4107 = vrot.slane %v4105, 5
        %v4108 = vor.u32 %v4104, %v4107
        %v4109 = vrot.slane %v4108, 4
        %v4111 = vshll.u32 %v3844, 16
        %v4113 = vrot.slane %v4111, 5
        %v4114 = vsel %vm322, %v4109, %v4113
        %v4115 = vshrl.u32 %v3844, 16
        %v4117 = vrot.slane %v4115, 4
        %v4118 = vor.u32 %v4117, %v4113
        %v4119 = vrot.slane %v4118, 4
        %v4121 = vshll.u32 %v3845, 16
        %v4123 = vrot.slane %v4121, 5
        %v4124 = vsel %vm322, %v4119, %v4123
        %v4126 = vshrl.u32 %v3846, 16
        %v4128 = vrot.slane %v4126, 4
        %v4129 = vshll.u32 %v3846, 16
        %v4131 = vrot.slane %v4129, 5
        %v4132 = vor.u32 %v4128, %v4131
        %v4133 = vrot.slane %v4132, 4
        %v4135 = vshll.u32 %v3847, 16
        %v4137 = vrot.slane %v4135, 5
        %v4138 = vsel %vm322, %v4133, %v4137
        %v4139 = vshrl.u32 %v3847, 16
        %v4141 = vrot.slane %v4139, 4
        %v4142 = vor.u32 %v4141, %v4137
        %v4143 = vrot.slane %v4142, 4
        %v4145 = vshll.u32 %v3848, 16
        %v4147 = vrot.slane %v4145, 5
        %v4148 = vsel %vm322, %v4143, %v4147
        %v4150 = vshrl.u32 %v3849, 16
        %v4152 = vrot.slane %v4150, 4
        %v4153 = vshll.u32 %v3849, 16
        %v4155 = vrot.slane %v4153, 5
        %v4156 = vor.u32 %v4152, %v4155
        %v4157 = vrot.slane %v4156, 4
        %v4159 = vshll.u32 %v3850, 16
        %v4161 = vrot.slane %v4159, 5
        %v4162 = vsel %vm322, %v4157, %v4161
        %v4163 = vshrl.u32 %v3850, 16
        %v4165 = vrot.slane %v4163, 4
        %v4166 = vor.u32 %v4165, %v4161
        %v4167 = vrot.slane %v4166, 4
        %v4169 = vshll.u32 %v3851, 16
        %v4171 = vrot.slane %v4169, 5
        %v4172 = vsel %vm322, %v4167, %v4171
        %v4174 = vshrl.u32 %v3852, 16
        %v4176 = vrot.slane %v4174, 4
        %v4177 = vshll.u32 %v3852, 16
        %v4179 = vrot.slane %v4177, 5
        %v4180 = vor.u32 %v4176, %v4179
        %v4181 = vrot.slane %v4180, 4
        %v4183 = vshll.u32 %v3853, 16
        %v4185 = vrot.slane %v4183, 5
        %v4186 = vsel %vm322, %v4181, %v4185
        %v4187 = vshrl.u32 %v3853, 16
        %v4189 = vrot.slane %v4187, 4
        %v4190 = vor.u32 %v4189, %v4185
        %v4191 = vrot.slane %v4190, 4
        %v4193 = vshll.u32 %v3854, 16
        %v4195 = vrot.slane %v4193, 5
        %v4196 = vsel %vm322, %v4191, %v4195
        %v4198 = vshrl.u32 %v3855, 16
        %v4200 = vrot.slane %v4198, 4
        %v4201 = vshll.u32 %v3855, 16
        %v4203 = vrot.slane %v4201, 5
        %v4204 = vor.u32 %v4200, %v4203
        %v4205 = vrot.slane %v4204, 4
        %v4207 = vshll.u32 %v3856, 16
        %v4209 = vrot.slane %v4207, 5
        %v4210 = vsel %vm322, %v4205, %v4209
        %v4211 = vshrl.u32 %v3856, 16
        %v4213 = vrot.slane %v4211, 4
        %v4214 = vor.u32 %v4213, %v4209
        %v4215 = vrot.slane %v4214, 4
        %v4217 = vshll.u32 %v3857, 16
        %v4219 = vrot.slane %v4217, 5
        %v4220 = vsel %vm322, %v4215, %v4219
        %v4222 = vshrl.u32 %v3858, 16
        %v4224 = vrot.slane %v4222, 4
        %v4225 = vshll.u32 %v3858, 16
        %v4227 = vrot.slane %v4225, 5
        %v4228 = vor.u32 %v4224, %v4227
        %v4229 = vrot.slane %v4228, 4
        %v4231 = vshll.u32 %v3859, 16
        %v4233 = vrot.slane %v4231, 5
        %v4234 = vsel %vm322, %v4229, %v4233
        %v4235 = vshrl.u32 %v3859, 16
        %v4237 = vrot.slane %v4235, 4
        %v4238 = vor.u32 %v4237, %v4233
        %v4239 = vrot.slane %v4238, 4
        %v4241 = vshll.u32 %v3860, 16
        %v4243 = vrot.slane %v4241, 5
        %v4244 = vsel %vm322, %v4239, %v4243
        %s4245 = scalar_lea.vmem %s1, 448
        %v4246 = vld [vmem:[%s4245] sm:$0xf]
        %v4247 = vld [vmem:[%s4245 + $0x4] sm:$0xf]
        %v4248 = vld [vmem:[%s4245 + $0x8] sm:$0xf]
        %v4249 = vld [vmem:[%s4245 + $0xc] sm:$0xf]
        %v4250 = vld [vmem:[%s4245 + $0x10] sm:$0xf]
        %v4251 = vld [vmem:[%s4245 + $0x14] sm:$0xf]
        %v4252 = vld [vmem:[%s4245 + $0x18] sm:$0xf]
        %v4253 = vld [vmem:[%s4245 + $0x1c] sm:$0xf]
        %v4254 = vld [vmem:[%s4245 + $0x20] sm:$0xf]
        %v4255 = vld [vmem:[%s4245 + $0x24] sm:$0xf]
        %v4256 = vld [vmem:[%s4245 + $0x28] sm:$0xf]
        %v4257 = vld [vmem:[%s4245 + $0x2c] sm:$0xf]
        %v4258 = vld [vmem:[%s4245 + $0x30] sm:$0xf]
        %v4259 = vld [vmem:[%s4245 + $0x34] sm:$0xf]
        %v4260 = vld [vmem:[%s4245 + $0x38] sm:$0xf]
        %v4261 = vld [vmem:[%s4245 + $0x3c] sm:$0xf]
        %v4262 = vunpack.c.l.b16 %v3874
        %v4263 = vunpack.c.l.b16 %v3884
        %v4264 = vunpack.c.l.b16 %v3898
        %v4265 = vunpack.c.l.b16 %v3908
        %v4266 = vunpack.c.l.b16 %v3922
        %v4267 = vunpack.c.l.b16 %v3932
        %v4268 = vunpack.c.l.b16 %v3946
        %v4269 = vunpack.c.l.b16 %v3956
        %v4270 = vunpack.c.l.b16 %v3970
        %v4271 = vunpack.c.l.b16 %v3980
        %v4272 = vunpack.c.l.b16 %v3994
        %v4273 = vunpack.c.l.b16 %v4004
        %v4274 = vunpack.c.l.b16 %v4018
        %v4275 = vunpack.c.l.b16 %v4028
        %v4276 = vunpack.c.l.b16 %v4042
        %v4277 = vunpack.c.l.b16 %v4052
        %v4278 = vunpack.c.l.b16 %v4066
        %v4279 = vunpack.c.l.b16 %v4076
        %v4280 = vunpack.c.l.b16 %v4090
        %v4281 = vunpack.c.l.b16 %v4100
        %v4282 = vunpack.c.l.b16 %v4114
        %v4283 = vunpack.c.l.b16 %v4124
        %v4284 = vunpack.c.l.b16 %v4138
        %v4285 = vunpack.c.l.b16 %v4148
        %v4286 = vunpack.c.l.b16 %v4162
        %v4287 = vunpack.c.l.b16 %v4172
        %v4288 = vunpack.c.l.b16 %v4186
        %v4289 = vunpack.c.l.b16 %v4196
        %v4290 = vunpack.c.l.b16 %v4210
        %v4291 = vunpack.c.l.b16 %v4220
        %v4292 = vunpack.c.l.b16 %v4234
        %v4293 = vunpack.c.l.b16 %v4244
        %v4294 = vpack.c.b16 %v4263, %v4262
        %v4295 = vpack.c.b16 %v4265, %v4264
        %v4296 = vpack.c.b16 %v4267, %v4266
        %v4297 = vpack.c.b16 %v4269, %v4268
        %v4298 = vpack.c.b16 %v4271, %v4270
        %v4299 = vpack.c.b16 %v4273, %v4272
        %v4300 = vpack.c.b16 %v4275, %v4274
        %v4301 = vpack.c.b16 %v4277, %v4276
        %v4302 = vpack.c.b16 %v4279, %v4278
        %v4303 = vpack.c.b16 %v4281, %v4280
        %v4304 = vpack.c.b16 %v4283, %v4282
        %v4305 = vpack.c.b16 %v4285, %v4284
        %v4306 = vpack.c.b16 %v4287, %v4286
        %v4307 = vpack.c.b16 %v4289, %v4288
        %v4308 = vpack.c.b16 %v4291, %v4290
        %v4309 = vpack.c.b16 %v4293, %v4292
        %v4342 = vunpack.c.l.b16 %v4246
        %v4343 = vunpack.c.l.b16 %v4247
        %v4344 = vunpack.c.l.b16 %v4248
        %v4345 = vunpack.c.l.b16 %v4249
        %v4346 = vunpack.c.l.b16 %v4250
        %v4347 = vunpack.c.l.b16 %v4251
        %v4348 = vunpack.c.l.b16 %v4252
        %v4349 = vunpack.c.l.b16 %v4253
        %v4350 = vunpack.c.l.b16 %v4254
        %v4351 = vunpack.c.l.b16 %v4255
        %v4352 = vunpack.c.l.b16 %v4256
        %v4353 = vunpack.c.l.b16 %v4257
        %v4354 = vunpack.c.l.b16 %v4258
        %v4355 = vunpack.c.l.b16 %v4259
        %v4356 = vunpack.c.l.b16 %v4260
        %v4357 = vunpack.c.l.b16 %v4261
        %v4358 = vpack.c.b16 %v4343, %v4342
        %v4359 = vpack.c.b16 %v4345, %v4344
        %v4360 = vpack.c.b16 %v4347, %v4346
        %v4361 = vpack.c.b16 %v4349, %v4348
        %v4362 = vpack.c.b16 %v4351, %v4350
        %v4363 = vpack.c.b16 %v4353, %v4352
        %v4364 = vpack.c.b16 %v4355, %v4354
        %v4365 = vpack.c.b16 %v4357, %v4356
        %4374 = vmatprep.subr.bf16.mxu0 0
        %4375 = vmatpush1.bf16.msra.mxu0 %v4358
        %4376 = vmatprep.subr.bf16.mxu0 0
        %4377 = vmatpush1.bf16.msra.mxu0 %v4359
        %4378 = vmatprep.subr.bf16.mxu0 0
        %4379 = vmatpush1.bf16.msra.mxu0 %v4360
        %4380 = vmatprep.subr.bf16.mxu0 0
        %4381 = vmatpush1.bf16.msra.mxu0 %v4361
        %4382 = vmatprep.subr.bf16.mxu0 0
        %4383 = vmatpush1.bf16.msra.mxu0 %v4362
        %4384 = vmatprep.subr.bf16.mxu0 0
        %4385 = vmatpush1.bf16.msra.mxu0 %v4363
        %4386 = vmatprep.subr.bf16.mxu0 0
        %4387 = vmatpush1.bf16.msra.mxu0 %v4364
        %4388 = vmatprep.subr.bf16.mxu0 0
        %4389 = vmatpush1.bf16.msra.mxu0 %v4365
        %4390 = vmatprep.subr.bf16.mxu0 0
        %4391 = vmatpush1.bf16.msra.mxu0 0
        %4392 = vmatprep.subr.bf16.mxu0 0
        %4393 = vmatpush1.bf16.msra.mxu0 0
        %4394 = vmatprep.subr.bf16.mxu0 0
        %4395 = vmatpush1.bf16.msra.mxu0 0
        %4396 = vmatprep.subr.bf16.mxu0 0
        %4397 = vmatpush1.bf16.msra.mxu0 0
        %4398 = vmatprep.subr.bf16.mxu0 0
        %4399 = vmatpush1.bf16.msra.mxu0 0
        %4400 = vmatprep.subr.bf16.mxu0 0
        %4401 = vmatpush1.bf16.msra.mxu0 0
        %4402 = vmatprep.subr.bf16.mxu0 0
        %4403 = vmatpush1.bf16.msra.mxu0 0
        %4404 = vmatprep.subr.bf16.mxu0 0
        %4405 = vmatpush1.bf16.msra.mxu0 0
        %4406 = vmatprep.mubr.bf16.mxu0 0
        %4407 = vmatmul.mubr.bf16.gmra.mrb[0].mxu0 %v4294
        %v4408 = vpop.f32.mrb[0].mxu0
        %v4409 = vadd.f32 0.0, %v4408
        %v4410 = vpop.f32.mrb[0].mxu0
        %v4411 = vpop.f32.mrb[0].mxu0
        %v4412 = vadd.f32 0.0, %v4411
        %v4413 = vpop.f32.mrb[0].mxu0
        %4414 = vmatprep.mubr.bf16.mxu0 0
        %4415 = vmatmul.mubr.bf16.gmra.mrb[0].mxu0 %v4295
        %v4416 = vpop.f32.mrb[0].mxu0
        %v4417 = vadd.f32 0.0, %v4416
        %v4418 = vpop.f32.mrb[0].mxu0
        %v4419 = vpop.f32.mrb[0].mxu0
        %v4420 = vadd.f32 0.0, %v4419
        %v4421 = vpop.f32.mrb[0].mxu0
        %4422 = vmatprep.mubr.bf16.mxu0 0
        %4423 = vmatmul.mubr.bf16.gmra.mrb[0].mxu0 %v4296
        %v4424 = vpop.f32.mrb[0].mxu0
        %v4425 = vadd.f32 0.0, %v4424
        %v4426 = vpop.f32.mrb[0].mxu0
        %v4427 = vpop.f32.mrb[0].mxu0
        %v4428 = vadd.f32 0.0, %v4427
        %v4429 = vpop.f32.mrb[0].mxu0
        %4430 = vmatprep.mubr.bf16.mxu0 0
        %4431 = vmatmul.mubr.bf16.gmra.mrb[0].mxu0 %v4297
        %v4432 = vpop.f32.mrb[0].mxu0
        %v4433 = vadd.f32 0.0, %v4432
        %v4434 = vpop.f32.mrb[0].mxu0
        %v4435 = vpop.f32.mrb[0].mxu0
        %v4436 = vadd.f32 0.0, %v4435
        %v4437 = vpop.f32.mrb[0].mxu0
        %4438 = vmatprep.mubr.bf16.mxu0 0
        %4439 = vmatmul.mubr.bf16.gmra.mrb[0].mxu0 %v4298
        %v4440 = vpop.f32.mrb[0].mxu0
        %v4441 = vadd.f32 0.0, %v4440
        %v4442 = vpop.f32.mrb[0].mxu0
        %v4443 = vpop.f32.mrb[0].mxu0
        %v4444 = vadd.f32 0.0, %v4443
        %v4445 = vpop.f32.mrb[0].mxu0
        %4446 = vmatprep.mubr.bf16.mxu0 0
        %4447 = vmatmul.mubr.bf16.gmra.mrb[0].mxu0 %v4299
        %v4448 = vpop.f32.mrb[0].mxu0
        %v4449 = vadd.f32 0.0, %v4448
        %v4450 = vpop.f32.mrb[0].mxu0
        %v4451 = vpop.f32.mrb[0].mxu0
        %v4452 = vadd.f32 0.0, %v4451
        %v4453 = vpop.f32.mrb[0].mxu0
        %4454 = vmatprep.mubr.bf16.mxu0 0
        %4455 = vmatmul.mubr.bf16.gmra.mrb[0].mxu0 %v4300
        %v4456 = vpop.f32.mrb[0].mxu0
        %v4457 = vadd.f32 0.0, %v4456
        %v4458 = vpop.f32.mrb[0].mxu0
        %v4459 = vpop.f32.mrb[0].mxu0
        %v4460 = vadd.f32 0.0, %v4459
        %v4461 = vpop.f32.mrb[0].mxu0
        %4462 = vmatprep.mubr.bf16.mxu0 0
        %4463 = vmatmul.mubr.bf16.gmra.mrb[0].mxu0 %v4301
        %v4464 = vpop.f32.mrb[0].mxu0
        %v4465 = vadd.f32 0.0, %v4464
        %v4466 = vpop.f32.mrb[0].mxu0
        %v4467 = vpop.f32.mrb[0].mxu0
        %v4468 = vadd.f32 0.0, %v4467
        %v4469 = vpop.f32.mrb[0].mxu0
        %4470 = vmatprep.mubr.bf16.mxu0 0
        %4471 = vmatmul.mubr.bf16.gmra.mrb[0].mxu0 %v4302
        %v4472 = vpop.f32.mrb[0].mxu0
        %v4473 = vadd.f32 0.0, %v4472
        %v4474 = vpop.f32.mrb[0].mxu0
        %v4475 = vpop.f32.mrb[0].mxu0
        %v4476 = vadd.f32 0.0, %v4475
        %v4477 = vpop.f32.mrb[0].mxu0
        %4478 = vmatprep.mubr.bf16.mxu0 0
        %4479 = vmatmul.mubr.bf16.gmra.mrb[0].mxu0 %v4303
        %v4480 = vpop.f32.mrb[0].mxu0
        %v4481 = vadd.f32 0.0, %v4480
        %v4482 = vpop.f32.mrb[0].mxu0
        %v4483 = vpop.f32.mrb[0].mxu0
        %v4484 = vadd.f32 0.0, %v4483
        %v4485 = vpop.f32.mrb[0].mxu0
        %4486 = vmatprep.mubr.bf16.mxu0 0
        %4487 = vmatmul.mubr.bf16.gmra.mrb[0].mxu0 %v4304
        %v4488 = vpop.f32.mrb[0].mxu0
        %v4489 = vadd.f32 0.0, %v4488
        %v4490 = vpop.f32.mrb[0].mxu0
        %v4491 = vpop.f32.mrb[0].mxu0
        %v4492 = vadd.f32 0.0, %v4491
        %v4493 = vpop.f32.mrb[0].mxu0
        %4494 = vmatprep.mubr.bf16.mxu0 0
        %4495 = vmatmul.mubr.bf16.gmra.mrb[0].mxu0 %v4305
        %v4496 = vpop.f32.mrb[0].mxu0
        %v4497 = vadd.f32 0.0, %v4496
        %v4498 = vpop.f32.mrb[0].mxu0
        %v4499 = vpop.f32.mrb[0].mxu0
        %v4500 = vadd.f32 0.0, %v4499
        %v4501 = vpop.f32.mrb[0].mxu0
        %4502 = vmatprep.mubr.bf16.mxu0 0
        %4503 = vmatmul.mubr.bf16.gmra.mrb[0].mxu0 %v4306
        %v4504 = vpop.f32.mrb[0].mxu0
        %v4505 = vadd.f32 0.0, %v4504
        %v4506 = vpop.f32.mrb[0].mxu0
        %v4507 = vpop.f32.mrb[0].mxu0
        %v4508 = vadd.f32 0.0, %v4507
        %v4509 = vpop.f32.mrb[0].mxu0
        %4510 = vmatprep.mubr.bf16.mxu0 0
        %4511 = vmatmul.mubr.bf16.gmra.mrb[0].mxu0 %v4307
        %v4512 = vpop.f32.mrb[0].mxu0
        %v4513 = vadd.f32 0.0, %v4512
        %v4514 = vpop.f32.mrb[0].mxu0
        %v4515 = vpop.f32.mrb[0].mxu0
        %v4516 = vadd.f32 0.0, %v4515
        %v4517 = vpop.f32.mrb[0].mxu0
        %4518 = vmatprep.mubr.bf16.mxu0 0
        %4519 = vmatmul.mubr.bf16.gmra.mrb[0].mxu0 %v4308
        %v4520 = vpop.f32.mrb[0].mxu0
        %v4521 = vadd.f32 0.0, %v4520
        %v4522 = vpop.f32.mrb[0].mxu0
        %v4523 = vpop.f32.mrb[0].mxu0
        %v4524 = vadd.f32 0.0, %v4523
        %v4525 = vpop.f32.mrb[0].mxu0
        %4526 = vmatprep.mubr.bf16.mxu0 0
        %4527 = vmatmul.mubr.bf16.gmra.mrb[0].mxu0 %v4309
        %v4528 = vpop.f32.mrb[0].mxu0
        %v4529 = vadd.f32 0.0, %v4528
        %v4530 = vpop.f32.mrb[0].mxu0
        %v4531 = vpop.f32.mrb[0].mxu0
        %v4532 = vadd.f32 0.0, %v4531
        %v4533 = vpop.f32.mrb[0].mxu0
        %4534 = vdwg.mxu0
        %v4535 = vadd.f32 %v3781, %v4409
        %v4536 = vadd.f32 %v3782, %v4412
        %v4537 = vadd.f32 %v3783, %v4417
        %v4538 = vadd.f32 %v3784, %v4420
        %v4539 = vadd.f32 %v3785, %v4425
        %v4540 = vadd.f32 %v3786, %v4428
        %v4541 = vadd.f32 %v3787, %v4433
        %v4542 = vadd.f32 %v3788, %v4436
        %v4543 = vadd.f32 %v3789, %v4441
        %v4544 = vadd.f32 %v3790, %v4444
        %v4545 = vadd.f32 %v3791, %v4449
        %v4546 = vadd.f32 %v3792, %v4452
        %v4547 = vadd.f32 %v3793, %v4457
        %v4548 = vadd.f32 %v3794, %v4460
        %v4549 = vadd.f32 %v3795, %v4465
        %v4550 = vadd.f32 %v3796, %v4468
        %v4551 = vadd.f32 %v3797, %v4473
        %v4552 = vadd.f32 %v3798, %v4476
        %v4553 = vadd.f32 %v3799, %v4481
        %v4554 = vadd.f32 %v3800, %v4484
        %v4555 = vadd.f32 %v3801, %v4489
        %v4556 = vadd.f32 %v3802, %v4492
        %v4557 = vadd.f32 %v3803, %v4497
        %v4558 = vadd.f32 %v3804, %v4500
        %v4559 = vadd.f32 %v3805, %v4505
        %v4560 = vadd.f32 %v3806, %v4508
        %v4561 = vadd.f32 %v3807, %v4513
        %v4562 = vadd.f32 %v3808, %v4516
        %v4563 = vadd.f32 %v3809, %v4521
        %v4564 = vadd.f32 %v3810, %v4524
        %v4565 = vadd.f32 %v3811, %v4529
        %v4566 = vadd.f32 %v3812, %v4532
        %v4567 = vld [vmem:[%s3426] sm:$0xe]
        %v4568 = vld [vmem:[%s3426 + $0xc] sm:$0xe]
        %v4569 = vld [vmem:[%s3426 + $0x18] sm:$0xe]
        %v4570 = vld [vmem:[%s3426 + $0x24] sm:$0xe]
        %v4571 = vld [vmem:[%s3426 + $0x30] sm:$0xe]
        %v4572 = vld [vmem:[%s3426 + $0x3c] sm:$0xe]
        %v4573 = vld [vmem:[%s3426 + $0x48] sm:$0xe]
        %v4574 = vld [vmem:[%s3426 + $0x54] sm:$0xe]
        %v4575 = vld [vmem:[%s3426 + $0x60] sm:$0xe]
        %v4576 = vld [vmem:[%s3426 + $0x6c] sm:$0xe]
        %v4577 = vld [vmem:[%s3426 + $0x78] sm:$0xe]
        %v4578 = vld [vmem:[%s3426 + $0x84] sm:$0xe]
        %v4579 = vld [vmem:[%s3426 + $0x90] sm:$0xe]
        %v4580 = vld [vmem:[%s3426 + $0x9c] sm:$0xe]
        %v4581 = vld [vmem:[%s3426 + $0xa8] sm:$0xe]
        %v4582 = vld [vmem:[%s3426 + $0xb4] sm:$0xe]
        %v4631 = vrot.slane %v4567, 5
        %v4632 = vrot.slane %v4631, 4
        %v4633 = vrot.slane %v3814, 5
        %v4634 = vsel %vm1352, %v4632, %v4633
        %v4635 = vrot.slane %v4633, 4
        %v4636 = vrot.slane %v3815, 5
        %v4637 = vsel %vm1352, %v4635, %v4636
        %v4638 = vrot.slane %v4568, 5
        %v4639 = vrot.slane %v4638, 4
        %v4640 = vrot.slane %v3817, 5
        %v4641 = vsel %vm1352, %v4639, %v4640
        %v4642 = vrot.slane %v4640, 4
        %v4643 = vrot.slane %v3818, 5
        %v4644 = vsel %vm1352, %v4642, %v4643
        %v4645 = vrot.slane %v4569, 5
        %v4646 = vrot.slane %v4645, 4
        %v4647 = vrot.slane %v3820, 5
        %v4648 = vsel %vm1352, %v4646, %v4647
        %v4649 = vrot.slane %v4647, 4
        %v4650 = vrot.slane %v3821, 5
        %v4651 = vsel %vm1352, %v4649, %v4650
        %v4652 = vrot.slane %v4570, 5
        %v4653 = vrot.slane %v4652, 4
        %v4654 = vrot.slane %v3823, 5
        %v4655 = vsel %vm1352, %v4653, %v4654
        %v4656 = vrot.slane %v4654, 4
        %v4657 = vrot.slane %v3824, 5
        %v4658 = vsel %vm1352, %v4656, %v4657
        %v4659 = vrot.slane %v4571, 5
        %v4660 = vrot.slane %v4659, 4
        %v4661 = vrot.slane %v3826, 5
        %v4662 = vsel %vm1352, %v4660, %v4661
        %v4663 = vrot.slane %v4661, 4
        %v4664 = vrot.slane %v3827, 5
        %v4665 = vsel %vm1352, %v4663, %v4664
        %v4666 = vrot.slane %v4572, 5
        %v4667 = vrot.slane %v4666, 4
        %v4668 = vrot.slane %v3829, 5
        %v4669 = vsel %vm1352, %v4667, %v4668
        %v4670 = vrot.slane %v4668, 4
        %v4671 = vrot.slane %v3830, 5
        %v4672 = vsel %vm1352, %v4670, %v4671
        %v4673 = vrot.slane %v4573, 5
        %v4674 = vrot.slane %v4673, 4
        %v4675 = vrot.slane %v3832, 5
        %v4676 = vsel %vm1352, %v4674, %v4675
        %v4677 = vrot.slane %v4675, 4
        %v4678 = vrot.slane %v3833, 5
        %v4679 = vsel %vm1352, %v4677, %v4678
        %v4680 = vrot.slane %v4574, 5
        %v4681 = vrot.slane %v4680, 4
        %v4682 = vrot.slane %v3835, 5
        %v4683 = vsel %vm1352, %v4681, %v4682
        %v4684 = vrot.slane %v4682, 4
        %v4685 = vrot.slane %v3836, 5
        %v4686 = vsel %vm1352, %v4684, %v4685
        %v4687 = vrot.slane %v4575, 5
        %v4688 = vrot.slane %v4687, 4
        %v4689 = vrot.slane %v3838, 5
        %v4690 = vsel %vm1352, %v4688, %v4689
        %v4691 = vrot.slane %v4689, 4
        %v4692 = vrot.slane %v3839, 5
        %v4693 = vsel %vm1352, %v4691, %v4692
        %v4694 = vrot.slane %v4576, 5
        %v4695 = vrot.slane %v4694, 4
        %v4696 = vrot.slane %v3841, 5
        %v4697 = vsel %vm1352, %v4695, %v4696
        %v4698 = vrot.slane %v4696, 4
        %v4699 = vrot.slane %v3842, 5
        %v4700 = vsel %vm1352, %v4698, %v4699
        %v4701 = vrot.slane %v4577, 5
        %v4702 = vrot.slane %v4701, 4
        %v4703 = vrot.slane %v3844, 5
        %v4704 = vsel %vm1352, %v4702, %v4703
        %v4705 = vrot.slane %v4703, 4
        %v4706 = vrot.slane %v3845, 5
        %v4707 = vsel %vm1352, %v4705, %v4706
        %v4708 = vrot.slane %v4578, 5
        %v4709 = vrot.slane %v4708, 4
        %v4710 = vrot.slane %v3847, 5
        %v4711 = vsel %vm1352, %v4709, %v4710
        %v4712 = vrot.slane %v4710, 4
        %v4713 = vrot.slane %v3848, 5
        %v4714 = vsel %vm1352, %v4712, %v4713
        %v4715 = vrot.slane %v4579, 5
        %v4716 = vrot.slane %v4715, 4
        %v4717 = vrot.slane %v3850, 5
        %v4718 = vsel %vm1352, %v4716, %v4717
        %v4719 = vrot.slane %v4717, 4
        %v4720 = vrot.slane %v3851, 5
        %v4721 = vsel %vm1352, %v4719, %v4720
        %v4722 = vrot.slane %v4580, 5
        %v4723 = vrot.slane %v4722, 4
        %v4724 = vrot.slane %v3853, 5
        %v4725 = vsel %vm1352, %v4723, %v4724
        %v4726 = vrot.slane %v4724, 4
        %v4727 = vrot.slane %v3854, 5
        %v4728 = vsel %vm1352, %v4726, %v4727
        %v4729 = vrot.slane %v4581, 5
        %v4730 = vrot.slane %v4729, 4
        %v4731 = vrot.slane %v3856, 5
        %v4732 = vsel %vm1352, %v4730, %v4731
        %v4733 = vrot.slane %v4731, 4
        %v4734 = vrot.slane %v3857, 5
        %v4735 = vsel %vm1352, %v4733, %v4734
        %v4736 = vrot.slane %v4582, 5
        %v4737 = vrot.slane %v4736, 4
        %v4738 = vrot.slane %v3859, 5
        %v4739 = vsel %vm1352, %v4737, %v4738
        %v4740 = vrot.slane %v4738, 4
        %v4741 = vrot.slane %v3860, 5
        %v4742 = vsel %vm1352, %v4740, %v4741
        %s4743 = scalar_lea.vmem %s1, 512
        %v4744 = vld [vmem:[%s4743] sm:$0xf]
        %v4745 = vld [vmem:[%s4743 + $0x4] sm:$0xf]
        %v4746 = vld [vmem:[%s4743 + $0x8] sm:$0xf]
        %v4747 = vld [vmem:[%s4743 + $0xc] sm:$0xf]
        %v4748 = vld [vmem:[%s4743 + $0x10] sm:$0xf]
        %v4749 = vld [vmem:[%s4743 + $0x14] sm:$0xf]
        %v4750 = vld [vmem:[%s4743 + $0x18] sm:$0xf]
        %v4751 = vld [vmem:[%s4743 + $0x1c] sm:$0xf]
        %v4752 = vld [vmem:[%s4743 + $0x20] sm:$0xf]
        %v4753 = vld [vmem:[%s4743 + $0x24] sm:$0xf]
        %v4754 = vld [vmem:[%s4743 + $0x28] sm:$0xf]
        %v4755 = vld [vmem:[%s4743 + $0x2c] sm:$0xf]
        %v4756 = vld [vmem:[%s4743 + $0x30] sm:$0xf]
        %v4757 = vld [vmem:[%s4743 + $0x34] sm:$0xf]
        %v4758 = vld [vmem:[%s4743 + $0x38] sm:$0xf]
        %v4759 = vld [vmem:[%s4743 + $0x3c] sm:$0xf]
        %v4760 = vunpack.c.l.b16 %v4634
        %v4761 = vunpack.c.l.b16 %v4637
        %v4762 = vunpack.c.l.b16 %v4641
        %v4763 = vunpack.c.l.b16 %v4644
        %v4764 = vunpack.c.l.b16 %v4648
        %v4765 = vunpack.c.l.b16 %v4651
        %v4766 = vunpack.c.l.b16 %v4655
        %v4767 = vunpack.c.l.b16 %v4658
        %v4768 = vunpack.c.l.b16 %v4662
        %v4769 = vunpack.c.l.b16 %v4665
        %v4770 = vunpack.c.l.b16 %v4669
        %v4771 = vunpack.c.l.b16 %v4672
        %v4772 = vunpack.c.l.b16 %v4676
        %v4773 = vunpack.c.l.b16 %v4679
        %v4774 = vunpack.c.l.b16 %v4683
        %v4775 = vunpack.c.l.b16 %v4686
        %v4776 = vunpack.c.l.b16 %v4690
        %v4777 = vunpack.c.l.b16 %v4693
        %v4778 = vunpack.c.l.b16 %v4697
        %v4779 = vunpack.c.l.b16 %v4700
        %v4780 = vunpack.c.l.b16 %v4704
        %v4781 = vunpack.c.l.b16 %v4707
        %v4782 = vunpack.c.l.b16 %v4711
        %v4783 = vunpack.c.l.b16 %v4714
        %v4784 = vunpack.c.l.b16 %v4718
        %v4785 = vunpack.c.l.b16 %v4721
        %v4786 = vunpack.c.l.b16 %v4725
        %v4787 = vunpack.c.l.b16 %v4728
        %v4788 = vunpack.c.l.b16 %v4732
        %v4789 = vunpack.c.l.b16 %v4735
        %v4790 = vunpack.c.l.b16 %v4739
        %v4791 = vunpack.c.l.b16 %v4742
        %v4792 = vpack.c.b16 %v4761, %v4760
        %v4793 = vpack.c.b16 %v4763, %v4762
        %v4794 = vpack.c.b16 %v4765, %v4764
        %v4795 = vpack.c.b16 %v4767, %v4766
        %v4796 = vpack.c.b16 %v4769, %v4768
        %v4797 = vpack.c.b16 %v4771, %v4770
        %v4798 = vpack.c.b16 %v4773, %v4772
        %v4799 = vpack.c.b16 %v4775, %v4774
        %v4800 = vpack.c.b16 %v4777, %v4776
        %v4801 = vpack.c.b16 %v4779, %v4778
        %v4802 = vpack.c.b16 %v4781, %v4780
        %v4803 = vpack.c.b16 %v4783, %v4782
        %v4804 = vpack.c.b16 %v4785, %v4784
        %v4805 = vpack.c.b16 %v4787, %v4786
        %v4806 = vpack.c.b16 %v4789, %v4788
        %v4807 = vpack.c.b16 %v4791, %v4790
        %v4840 = vunpack.c.l.b16 %v4744
        %v4841 = vunpack.c.l.b16 %v4745
        %v4842 = vunpack.c.l.b16 %v4746
        %v4843 = vunpack.c.l.b16 %v4747
        %v4844 = vunpack.c.l.b16 %v4748
        %v4845 = vunpack.c.l.b16 %v4749
        %v4846 = vunpack.c.l.b16 %v4750
        %v4847 = vunpack.c.l.b16 %v4751
        %v4848 = vunpack.c.l.b16 %v4752
        %v4849 = vunpack.c.l.b16 %v4753
        %v4850 = vunpack.c.l.b16 %v4754
        %v4851 = vunpack.c.l.b16 %v4755
        %v4852 = vunpack.c.l.b16 %v4756
        %v4853 = vunpack.c.l.b16 %v4757
        %v4854 = vunpack.c.l.b16 %v4758
        %v4855 = vunpack.c.l.b16 %v4759
        %v4856 = vpack.c.b16 %v4841, %v4840
        %v4857 = vpack.c.b16 %v4843, %v4842
        %v4858 = vpack.c.b16 %v4845, %v4844
        %v4859 = vpack.c.b16 %v4847, %v4846
        %v4860 = vpack.c.b16 %v4849, %v4848
        %v4861 = vpack.c.b16 %v4851, %v4850
        %v4862 = vpack.c.b16 %v4853, %v4852
        %v4863 = vpack.c.b16 %v4855, %v4854
        %4872 = vmatprep.subr.bf16.mxu0 0
        %4873 = vmatpush1.bf16.msra.mxu0 %v4856
        %4874 = vmatprep.subr.bf16.mxu0 0
        %4875 = vmatpush1.bf16.msra.mxu0 %v4857
        %4876 = vmatprep.subr.bf16.mxu0 0
        %4877 = vmatpush1.bf16.msra.mxu0 %v4858
        %4878 = vmatprep.subr.bf16.mxu0 0
        %4879 = vmatpush1.bf16.msra.mxu0 %v4859
        %4880 = vmatprep.subr.bf16.mxu0 0
        %4881 = vmatpush1.bf16.msra.mxu0 %v4860
        %4882 = vmatprep.subr.bf16.mxu0 0
        %4883 = vmatpush1.bf16.msra.mxu0 %v4861
        %4884 = vmatprep.subr.bf16.mxu0 0
        %4885 = vmatpush1.bf16.msra.mxu0 %v4862
        %4886 = vmatprep.subr.bf16.mxu0 0
        %4887 = vmatpush1.bf16.msra.mxu0 %v4863
        %4888 = vmatprep.subr.bf16.mxu0 0
        %4889 = vmatpush1.bf16.msra.mxu0 0
        %4890 = vmatprep.subr.bf16.mxu0 0
        %4891 = vmatpush1.bf16.msra.mxu0 0
        %4892 = vmatprep.subr.bf16.mxu0 0
        %4893 = vmatpush1.bf16.msra.mxu0 0
        %4894 = vmatprep.subr.bf16.mxu0 0
        %4895 = vmatpush1.bf16.msra.mxu0 0
        %4896 = vmatprep.subr.bf16.mxu0 0
        %4897 = vmatpush1.bf16.msra.mxu0 0
        %4898 = vmatprep.subr.bf16.mxu0 0
        %4899 = vmatpush1.bf16.msra.mxu0 0
        %4900 = vmatprep.subr.bf16.mxu0 0
        %4901 = vmatpush1.bf16.msra.mxu0 0
        %4902 = vmatprep.subr.bf16.mxu0 0
        %4903 = vmatpush1.bf16.msra.mxu0 0
        %4904 = vmatprep.mubr.bf16.mxu0 0
        %4905 = vmatmul.mubr.bf16.gmra.mrb[0].mxu0 %v4792
        %v4906 = vpop.f32.mrb[0].mxu0
        %v4907 = vadd.f32 0.0, %v4906
        %v4908 = vpop.f32.mrb[0].mxu0
        %v4909 = vpop.f32.mrb[0].mxu0
        %v4910 = vadd.f32 0.0, %v4909
        %v4911 = vpop.f32.mrb[0].mxu0
        %4912 = vmatprep.mubr.bf16.mxu0 0
        %4913 = vmatmul.mubr.bf16.gmra.mrb[0].mxu0 %v4793
        %v4914 = vpop.f32.mrb[0].mxu0
        %v4915 = vadd.f32 0.0, %v4914
        %v4916 = vpop.f32.mrb[0].mxu0
        %v4917 = vpop.f32.mrb[0].mxu0
        %v4918 = vadd.f32 0.0, %v4917
        %v4919 = vpop.f32.mrb[0].mxu0
        %4920 = vmatprep.mubr.bf16.mxu0 0
        %4921 = vmatmul.mubr.bf16.gmra.mrb[0].mxu0 %v4794
        %v4922 = vpop.f32.mrb[0].mxu0
        %v4923 = vadd.f32 0.0, %v4922
        %v4924 = vpop.f32.mrb[0].mxu0
        %v4925 = vpop.f32.mrb[0].mxu0
        %v4926 = vadd.f32 0.0, %v4925
        %v4927 = vpop.f32.mrb[0].mxu0
        %4928 = vmatprep.mubr.bf16.mxu0 0
        %4929 = vmatmul.mubr.bf16.gmra.mrb[0].mxu0 %v4795
        %v4930 = vpop.f32.mrb[0].mxu0
        %v4931 = vadd.f32 0.0, %v4930
        %v4932 = vpop.f32.mrb[0].mxu0
        %v4933 = vpop.f32.mrb[0].mxu0
        %v4934 = vadd.f32 0.0, %v4933
        %v4935 = vpop.f32.mrb[0].mxu0
        %4936 = vmatprep.mubr.bf16.mxu0 0
        %4937 = vmatmul.mubr.bf16.gmra.mrb[0].mxu0 %v4796
        %v4938 = vpop.f32.mrb[0].mxu0
        %v4939 = vadd.f32 0.0, %v4938
        %v4940 = vpop.f32.mrb[0].mxu0
        %v4941 = vpop.f32.mrb[0].mxu0
        %v4942 = vadd.f32 0.0, %v4941
        %v4943 = vpop.f32.mrb[0].mxu0
        %4944 = vmatprep.mubr.bf16.mxu0 0
        %4945 = vmatmul.mubr.bf16.gmra.mrb[0].mxu0 %v4797
        %v4946 = vpop.f32.mrb[0].mxu0
        %v4947 = vadd.f32 0.0, %v4946
        %v4948 = vpop.f32.mrb[0].mxu0
        %v4949 = vpop.f32.mrb[0].mxu0
        %v4950 = vadd.f32 0.0, %v4949
        %v4951 = vpop.f32.mrb[0].mxu0
        %4952 = vmatprep.mubr.bf16.mxu0 0
        %4953 = vmatmul.mubr.bf16.gmra.mrb[0].mxu0 %v4798
        %v4954 = vpop.f32.mrb[0].mxu0
        %v4955 = vadd.f32 0.0, %v4954
        %v4956 = vpop.f32.mrb[0].mxu0
        %v4957 = vpop.f32.mrb[0].mxu0
        %v4958 = vadd.f32 0.0, %v4957
        %v4959 = vpop.f32.mrb[0].mxu0
        %4960 = vmatprep.mubr.bf16.mxu0 0
        %4961 = vmatmul.mubr.bf16.gmra.mrb[0].mxu0 %v4799
        %v4962 = vpop.f32.mrb[0].mxu0
        %v4963 = vadd.f32 0.0, %v4962
        %v4964 = vpop.f32.mrb[0].mxu0
        %v4965 = vpop.f32.mrb[0].mxu0
        %v4966 = vadd.f32 0.0, %v4965
        %v4967 = vpop.f32.mrb[0].mxu0
        %4968 = vmatprep.mubr.bf16.mxu0 0
        %4969 = vmatmul.mubr.bf16.gmra.mrb[0].mxu0 %v4800
        %v4970 = vpop.f32.mrb[0].mxu0
        %v4971 = vadd.f32 0.0, %v4970
        %v4972 = vpop.f32.mrb[0].mxu0
        %v4973 = vpop.f32.mrb[0].mxu0
        %v4974 = vadd.f32 0.0, %v4973
        %v4975 = vpop.f32.mrb[0].mxu0
        %4976 = vmatprep.mubr.bf16.mxu0 0
        %4977 = vmatmul.mubr.bf16.gmra.mrb[0].mxu0 %v4801
        %v4978 = vpop.f32.mrb[0].mxu0
        %v4979 = vadd.f32 0.0, %v4978
        %v4980 = vpop.f32.mrb[0].mxu0
        %v4981 = vpop.f32.mrb[0].mxu0
        %v4982 = vadd.f32 0.0, %v4981
        %v4983 = vpop.f32.mrb[0].mxu0
        %4984 = vmatprep.mubr.bf16.mxu0 0
        %4985 = vmatmul.mubr.bf16.gmra.mrb[0].mxu0 %v4802
        %v4986 = vpop.f32.mrb[0].mxu0
        %v4987 = vadd.f32 0.0, %v4986
        %v4988 = vpop.f32.mrb[0].mxu0
        %v4989 = vpop.f32.mrb[0].mxu0
        %v4990 = vadd.f32 0.0, %v4989
        %v4991 = vpop.f32.mrb[0].mxu0
        %4992 = vmatprep.mubr.bf16.mxu0 0
        %4993 = vmatmul.mubr.bf16.gmra.mrb[0].mxu0 %v4803
        %v4994 = vpop.f32.mrb[0].mxu0
        %v4995 = vadd.f32 0.0, %v4994
        %v4996 = vpop.f32.mrb[0].mxu0
        %v4997 = vpop.f32.mrb[0].mxu0
        %v4998 = vadd.f32 0.0, %v4997
        %v4999 = vpop.f32.mrb[0].mxu0
        %5000 = vmatprep.mubr.bf16.mxu0 0
        %5001 = vmatmul.mubr.bf16.gmra.mrb[0].mxu0 %v4804
        %v5002 = vpop.f32.mrb[0].mxu0
        %v5003 = vadd.f32 0.0, %v5002
        %v5004 = vpop.f32.mrb[0].mxu0
        %v5005 = vpop.f32.mrb[0].mxu0
        %v5006 = vadd.f32 0.0, %v5005
        %v5007 = vpop.f32.mrb[0].mxu0
        %5008 = vmatprep.mubr.bf16.mxu0 0
        %5009 = vmatmul.mubr.bf16.gmra.mrb[0].mxu0 %v4805
        %v5010 = vpop.f32.mrb[0].mxu0
        %v5011 = vadd.f32 0.0, %v5010
        %v5012 = vpop.f32.mrb[0].mxu0
        %v5013 = vpop.f32.mrb[0].mxu0
        %v5014 = vadd.f32 0.0, %v5013
        %v5015 = vpop.f32.mrb[0].mxu0
        %5016 = vmatprep.mubr.bf16.mxu0 0
        %5017 = vmatmul.mubr.bf16.gmra.mrb[0].mxu0 %v4806
        %v5018 = vpop.f32.mrb[0].mxu0
        %v5019 = vadd.f32 0.0, %v5018
        %v5020 = vpop.f32.mrb[0].mxu0
        %v5021 = vpop.f32.mrb[0].mxu0
        %v5022 = vadd.f32 0.0, %v5021
        %v5023 = vpop.f32.mrb[0].mxu0
        %5024 = vmatprep.mubr.bf16.mxu0 0
        %5025 = vmatmul.mubr.bf16.gmra.mrb[0].mxu0 %v4807
        %v5026 = vpop.f32.mrb[0].mxu0
        %v5027 = vadd.f32 0.0, %v5026
        %v5028 = vpop.f32.mrb[0].mxu0
        %v5029 = vpop.f32.mrb[0].mxu0
        %v5030 = vadd.f32 0.0, %v5029
        %v5031 = vpop.f32.mrb[0].mxu0
        %5032 = vdwg.mxu0
        %v5033 = vadd.f32 %v4535, %v4907
        %v5034 = vadd.f32 %v4536, %v4910
        %v5035 = vadd.f32 %v4537, %v4915
        %v5036 = vadd.f32 %v4538, %v4918
        %v5037 = vadd.f32 %v4539, %v4923
        %v5038 = vadd.f32 %v4540, %v4926
        %v5039 = vadd.f32 %v4541, %v4931
        %v5040 = vadd.f32 %v4542, %v4934
        %v5041 = vadd.f32 %v4543, %v4939
        %v5042 = vadd.f32 %v4544, %v4942
        %v5043 = vadd.f32 %v4545, %v4947
        %v5044 = vadd.f32 %v4546, %v4950
        %v5045 = vadd.f32 %v4547, %v4955
        %v5046 = vadd.f32 %v4548, %v4958
        %v5047 = vadd.f32 %v4549, %v4963
        %v5048 = vadd.f32 %v4550, %v4966
        %v5049 = vadd.f32 %v4551, %v4971
        %v5050 = vadd.f32 %v4552, %v4974
        %v5051 = vadd.f32 %v4553, %v4979
        %v5052 = vadd.f32 %v4554, %v4982
        %v5053 = vadd.f32 %v4555, %v4987
        %v5054 = vadd.f32 %v4556, %v4990
        %v5055 = vadd.f32 %v4557, %v4995
        %v5056 = vadd.f32 %v4558, %v4998
        %v5057 = vadd.f32 %v4559, %v5003
        %v5058 = vadd.f32 %v4560, %v5006
        %v5059 = vadd.f32 %v4561, %v5011
        %v5060 = vadd.f32 %v4562, %v5014
        %v5061 = vadd.f32 %v4563, %v5019
        %v5062 = vadd.f32 %v4564, %v5022
        %v5063 = vadd.f32 %v4565, %v5027
        %v5064 = vadd.f32 %v4566, %v5030
        %v5065 = vld [vmem:[%s254] sm:$0x1]
        %v5066 = vlaneseq
        %v5067 = vshrl.u32 %v5066, 7
        %v5068 = vsub.s32 0, %v5067
        %v5069 = vrot.slane %v5065, %v5068
        %v5070 = vmul.f32 %v5033, %v5069
        %v5071 = vmul.f32 %v5034, %v5069
        %v5072 = vmul.f32 %v5035, %v5069
        %v5073 = vmul.f32 %v5036, %v5069
        %v5074 = vmul.f32 %v5037, %v5069
        %v5075 = vmul.f32 %v5038, %v5069
        %v5076 = vmul.f32 %v5039, %v5069
        %v5077 = vmul.f32 %v5040, %v5069
        %v5078 = vmul.f32 %v5041, %v5069
        %v5079 = vmul.f32 %v5042, %v5069
        %v5080 = vmul.f32 %v5043, %v5069
        %v5081 = vmul.f32 %v5044, %v5069
        %v5082 = vmul.f32 %v5045, %v5069
        %v5083 = vmul.f32 %v5046, %v5069
        %v5084 = vmul.f32 %v5047, %v5069
        %v5085 = vmul.f32 %v5048, %v5069
        %v5086 = vmul.f32 %v5049, %v5069
        %v5087 = vmul.f32 %v5050, %v5069
        %v5088 = vmul.f32 %v5051, %v5069
        %v5089 = vmul.f32 %v5052, %v5069
        %v5090 = vmul.f32 %v5053, %v5069
        %v5091 = vmul.f32 %v5054, %v5069
        %v5092 = vmul.f32 %v5055, %v5069
        %v5093 = vmul.f32 %v5056, %v5069
        %v5094 = vmul.f32 %v5057, %v5069
        %v5095 = vmul.f32 %v5058, %v5069
        %v5096 = vmul.f32 %v5059, %v5069
        %v5097 = vmul.f32 %v5060, %v5069
        %v5098 = vmul.f32 %v5061, %v5069
        %v5099 = vmul.f32 %v5062, %v5069
        %v5100 = vmul.f32 %v5063, %v5069
        %v5101 = vmul.f32 %v5064, %v5069
        %v5102 = vld [vmem:[%s254 + $0x2] sm:$0x1]
        %v5103 = vlaneseq
        %v5104 = vshrl.u32 %v5103, 7
        %v5105 = vsub.s32 0, %v5104
        %v5106 = vrot.slane %v5102, %v5105
        %v5107 = vadd.f32 %v5070, %v5106
        %v5108 = vadd.f32 %v5071, %v5106
        %v5109 = vadd.f32 %v5072, %v5106
        %v5110 = vadd.f32 %v5073, %v5106
        %v5111 = vadd.f32 %v5074, %v5106
        %v5112 = vadd.f32 %v5075, %v5106
        %v5113 = vadd.f32 %v5076, %v5106
        %v5114 = vadd.f32 %v5077, %v5106
        %v5115 = vadd.f32 %v5078, %v5106
        %v5116 = vadd.f32 %v5079, %v5106
        %v5117 = vadd.f32 %v5080, %v5106
        %v5118 = vadd.f32 %v5081, %v5106
        %v5119 = vadd.f32 %v5082, %v5106
        %v5120 = vadd.f32 %v5083, %v5106
        %v5121 = vadd.f32 %v5084, %v5106
        %v5122 = vadd.f32 %v5085, %v5106
        %v5123 = vadd.f32 %v5086, %v5106
        %v5124 = vadd.f32 %v5087, %v5106
        %v5125 = vadd.f32 %v5088, %v5106
        %v5126 = vadd.f32 %v5089, %v5106
        %v5127 = vadd.f32 %v5090, %v5106
        %v5128 = vadd.f32 %v5091, %v5106
        %v5129 = vadd.f32 %v5092, %v5106
        %v5130 = vadd.f32 %v5093, %v5106
        %v5131 = vadd.f32 %v5094, %v5106
        %v5132 = vadd.f32 %v5095, %v5106
        %v5133 = vadd.f32 %v5096, %v5106
        %v5134 = vadd.f32 %v5097, %v5106
        %v5135 = vadd.f32 %v5098, %v5106
        %v5136 = vadd.f32 %v5099, %v5106
        %v5137 = vadd.f32 %v5100, %v5106
        %v5138 = vadd.f32 %v5101, %v5106
        %v5139 = vmul.f32 %v5107, 0.2
        %v5140 = vmul.f32 %v5108, 0.2
        %v5141 = vmul.f32 %v5109, 0.2
        %v5142 = vmul.f32 %v5110, 0.2
        %v5143 = vmul.f32 %v5111, 0.2
        %v5144 = vmul.f32 %v5112, 0.2
        %v5145 = vmul.f32 %v5113, 0.2
        %v5146 = vmul.f32 %v5114, 0.2
        %v5147 = vmul.f32 %v5115, 0.2
        %v5148 = vmul.f32 %v5116, 0.2
        %v5149 = vmul.f32 %v5117, 0.2
        %v5150 = vmul.f32 %v5118, 0.2
        %v5151 = vmul.f32 %v5119, 0.2
        %v5152 = vmul.f32 %v5120, 0.2
        %v5153 = vmul.f32 %v5121, 0.2
        %v5154 = vmul.f32 %v5122, 0.2
        %v5155 = vmul.f32 %v5123, 0.2
        %v5156 = vmul.f32 %v5124, 0.2
        %v5157 = vmul.f32 %v5125, 0.2
        %v5158 = vmul.f32 %v5126, 0.2
        %v5159 = vmul.f32 %v5127, 0.2
        %v5160 = vmul.f32 %v5128, 0.2
        %v5161 = vmul.f32 %v5129, 0.2
        %v5162 = vmul.f32 %v5130, 0.2
        %v5163 = vmul.f32 %v5131, 0.2
        %v5164 = vmul.f32 %v5132, 0.2
        %v5165 = vmul.f32 %v5133, 0.2
        %v5166 = vmul.f32 %v5134, 0.2
        %v5167 = vmul.f32 %v5135, 0.2
        %v5168 = vmul.f32 %v5136, 0.2
        %v5169 = vmul.f32 %v5137, 0.2
        %v5170 = vmul.f32 %v5138, 0.2
        %v5171 = vmax.f32 %v5107, %v5139
        %v5172 = vmax.f32 %v5108, %v5140
        %v5173 = vmax.f32 %v5109, %v5141
        %v5174 = vmax.f32 %v5110, %v5142
        %v5175 = vmax.f32 %v5111, %v5143
        %v5176 = vmax.f32 %v5112, %v5144
        %v5177 = vmax.f32 %v5113, %v5145
        %v5178 = vmax.f32 %v5114, %v5146
        %v5179 = vmax.f32 %v5115, %v5147
        %v5180 = vmax.f32 %v5116, %v5148
        %v5181 = vmax.f32 %v5117, %v5149
        %v5182 = vmax.f32 %v5118, %v5150
        %v5183 = vmax.f32 %v5119, %v5151
        %v5184 = vmax.f32 %v5120, %v5152
        %v5185 = vmax.f32 %v5121, %v5153
        %v5186 = vmax.f32 %v5122, %v5154
        %v5187 = vmax.f32 %v5123, %v5155
        %v5188 = vmax.f32 %v5124, %v5156
        %v5189 = vmax.f32 %v5125, %v5157
        %v5190 = vmax.f32 %v5126, %v5158
        %v5191 = vmax.f32 %v5127, %v5159
        %v5192 = vmax.f32 %v5128, %v5160
        %v5193 = vmax.f32 %v5129, %v5161
        %v5194 = vmax.f32 %v5130, %v5162
        %v5195 = vmax.f32 %v5131, %v5163
        %v5196 = vmax.f32 %v5132, %v5164
        %v5197 = vmax.f32 %v5133, %v5165
        %v5198 = vmax.f32 %v5134, %v5166
        %v5199 = vmax.f32 %v5135, %v5167
        %v5200 = vmax.f32 %v5136, %v5168
        %v5201 = vmax.f32 %v5137, %v5169
        %v5202 = vmax.f32 %v5138, %v5170
        %5203 = vst [vmem:[#allocation2] sm:$0xf] 0
        %5204 = vst [vmem:[#allocation2 + $0x4] sm:$0xf] 0
        %5205 = vst [vmem:[#allocation2 + $0x8] sm:$0x1] 0
        %5206 = vst [vmem:[#allocation2 + $0xc] sm:$0xf] 0
        %5207 = vst [vmem:[#allocation2 + $0x10] sm:$0xf] 0
        %5208 = vst [vmem:[#allocation2 + $0x14] sm:$0x1] 0
        %5209 = vst [vmem:[#allocation2 + $0x18] sm:$0xf] 0
        %5210 = vst [vmem:[#allocation2 + $0x1c] sm:$0xf] 0
        %5211 = vst [vmem:[#allocation2 + $0x20] sm:$0x1] 0
        %5212 = vst [vmem:[#allocation2 + $0x24] sm:$0xf] 0
        %5213 = vst [vmem:[#allocation2 + $0x28] sm:$0xf] 0
        %5214 = vst [vmem:[#allocation2 + $0x2c] sm:$0x1] 0
        %5215 = vst [vmem:[#allocation2 + $0x30] sm:$0xf] 0
        %5216 = vst [vmem:[#allocation2 + $0x34] sm:$0xf] 0
        %5217 = vst [vmem:[#allocation2 + $0x38] sm:$0x1] 0
        %5218 = vst [vmem:[#allocation2 + $0x3c] sm:$0xf] 0
        %5219 = vst [vmem:[#allocation2 + $0x40] sm:$0xf] 0
        %5220 = vst [vmem:[#allocation2 + $0x44] sm:$0x1] 0
        %5221 = vst [vmem:[#allocation2 + $0x48] sm:$0xf] 0
        %5222 = vst [vmem:[#allocation2 + $0x4c] sm:$0xf] 0
        %5223 = vst [vmem:[#allocation2 + $0x50] sm:$0x1] 0
        %5224 = vst [vmem:[#allocation2 + $0x54] sm:$0xf] 0
        %5225 = vst [vmem:[#allocation2 + $0x58] sm:$0xf] 0
        %5226 = vst [vmem:[#allocation2 + $0x5c] sm:$0x1] 0
        %5227 = vst [vmem:[#allocation2 + $0x60] sm:$0xf] 0
        %5228 = vst [vmem:[#allocation2 + $0x64] sm:$0xf] 0
        %5229 = vst [vmem:[#allocation2 + $0x68] sm:$0x1] 0
        %5230 = vst [vmem:[#allocation2 + $0x6c] sm:$0xf] 0
        %5231 = vst [vmem:[#allocation2 + $0x70] sm:$0xf] 0
        %5232 = vst [vmem:[#allocation2 + $0x74] sm:$0x1] 0
        %5233 = vst [vmem:[#allocation2 + $0x78] sm:$0xf] 0
        %5234 = vst [vmem:[#allocation2 + $0x7c] sm:$0xf] 0
        %5235 = vst [vmem:[#allocation2 + $0x80] sm:$0x1] 0
        %5236 = vst [vmem:[#allocation2 + $0x84] sm:$0xf] 0
        %5237 = vst [vmem:[#allocation2 + $0x88] sm:$0xf] 0
        %5238 = vst [vmem:[#allocation2 + $0x8c] sm:$0x1] 0
        %5239 = vst [vmem:[#allocation2 + $0x90] sm:$0xf] 0
        %5240 = vst [vmem:[#allocation2 + $0x94] sm:$0xf] 0
        %5241 = vst [vmem:[#allocation2 + $0x98] sm:$0x1] 0
        %5242 = vst [vmem:[#allocation2 + $0x9c] sm:$0xf] 0
        %5243 = vst [vmem:[#allocation2 + $0xa0] sm:$0xf] 0
        %5244 = vst [vmem:[#allocation2 + $0xa4] sm:$0x1] 0
        %5245 = vst [vmem:[#allocation2 + $0xa8] sm:$0xf] 0
        %5246 = vst [vmem:[#allocation2 + $0xac] sm:$0xf] 0
        %5247 = vst [vmem:[#allocation2 + $0xb0] sm:$0x1] 0
        %5248 = vst [vmem:[#allocation2 + $0xb4] sm:$0xf] 0
        %5249 = vst [vmem:[#allocation2 + $0xb8] sm:$0xf] 0
        %5250 = vst [vmem:[#allocation2 + $0xbc] sm:$0x1] 0
        %5251 = vst [vmem:[#allocation2 + $0xc0] sm:$0xf] 0
        %5252 = vst [vmem:[#allocation2 + $0xc4] sm:$0xf] 0
        %5253 = vst [vmem:[#allocation2 + $0xc8] sm:$0x1] 0
        %5254 = vst [vmem:[#allocation2 + $0xcc] sm:$0xf] 0
        %5255 = vst [vmem:[#allocation2 + $0xd0] sm:$0xf] 0
        %5256 = vst [vmem:[#allocation2 + $0xd4] sm:$0x1] 0
        %v5257 = vpack.c.bf16 %v5172, %v5171
        %v5258 = vpack.c.bf16 %v5174, %v5173
        %v5259 = vpack.c.bf16 %v5176, %v5175
        %v5260 = vpack.c.bf16 %v5178, %v5177
        %v5261 = vpack.c.bf16 %v5180, %v5179
        %v5262 = vpack.c.bf16 %v5182, %v5181
        %v5263 = vpack.c.bf16 %v5184, %v5183
        %v5264 = vpack.c.bf16 %v5186, %v5185
        %v5265 = vpack.c.bf16 %v5188, %v5187
        %v5266 = vpack.c.bf16 %v5190, %v5189
        %v5267 = vpack.c.bf16 %v5192, %v5191
        %v5268 = vpack.c.bf16 %v5194, %v5193
        %v5269 = vpack.c.bf16 %v5196, %v5195
        %v5270 = vpack.c.bf16 %v5198, %v5197
        %v5271 = vpack.c.bf16 %v5200, %v5199
        %v5272 = vpack.c.bf16 %v5202, %v5201
        %v5289 = vunpack.c.l.b16 %v5257
        %v5290 = vunpack.c.h.b16 %v5257
        %v5291 = vunpack.c.l.b16 %v5258
        %v5292 = vunpack.c.h.b16 %v5258
        %v5293 = vunpack.c.l.b16 %v5259
        %v5294 = vunpack.c.h.b16 %v5259
        %v5295 = vunpack.c.l.b16 %v5260
        %v5296 = vunpack.c.h.b16 %v5260
        %v5297 = vunpack.c.l.b16 %v5261
        %v5298 = vunpack.c.h.b16 %v5261
        %v5299 = vunpack.c.l.b16 %v5262
        %v5300 = vunpack.c.h.b16 %v5262
        %v5301 = vunpack.c.l.b16 %v5263
        %v5302 = vunpack.c.h.b16 %v5263
        %v5303 = vunpack.c.l.b16 %v5264
        %v5304 = vunpack.c.h.b16 %v5264
        %v5305 = vunpack.c.l.b16 %v5265
        %v5306 = vunpack.c.h.b16 %v5265
        %v5307 = vunpack.c.l.b16 %v5266
        %v5308 = vunpack.c.h.b16 %v5266
        %v5309 = vunpack.c.l.b16 %v5267
        %v5310 = vunpack.c.h.b16 %v5267
        %v5311 = vunpack.c.l.b16 %v5268
        %v5312 = vunpack.c.h.b16 %v5268
        %v5313 = vunpack.c.l.b16 %v5269
        %v5314 = vunpack.c.h.b16 %v5269
        %v5315 = vunpack.c.l.b16 %v5270
        %v5316 = vunpack.c.h.b16 %v5270
        %v5317 = vunpack.c.l.b16 %v5271
        %v5318 = vunpack.c.h.b16 %v5271
        %v5319 = vunpack.c.l.b16 %v5272
        %v5320 = vunpack.c.h.b16 %v5272
        %v5321 = vpack.c.b16 %v5289, %v5289
        %v5322 = vpack.c.b16 %v5290, %v5290
        %v5323 = vpack.c.b16 %v5291, %v5291
        %v5324 = vpack.c.b16 %v5292, %v5292
        %v5325 = vpack.c.b16 %v5293, %v5293
        %v5326 = vpack.c.b16 %v5294, %v5294
        %v5327 = vpack.c.b16 %v5295, %v5295
        %v5328 = vpack.c.b16 %v5296, %v5296
        %v5329 = vpack.c.b16 %v5297, %v5297
        %v5330 = vpack.c.b16 %v5298, %v5298
        %v5331 = vpack.c.b16 %v5299, %v5299
        %v5332 = vpack.c.b16 %v5300, %v5300
        %v5333 = vpack.c.b16 %v5301, %v5301
        %v5334 = vpack.c.b16 %v5302, %v5302
        %v5335 = vpack.c.b16 %v5303, %v5303
        %v5336 = vpack.c.b16 %v5304, %v5304
        %v5337 = vpack.c.b16 %v5305, %v5305
        %v5338 = vpack.c.b16 %v5306, %v5306
        %v5339 = vpack.c.b16 %v5307, %v5307
        %v5340 = vpack.c.b16 %v5308, %v5308
        %v5341 = vpack.c.b16 %v5309, %v5309
        %v5342 = vpack.c.b16 %v5310, %v5310
        %v5343 = vpack.c.b16 %v5311, %v5311
        %v5344 = vpack.c.b16 %v5312, %v5312
        %v5345 = vpack.c.b16 %v5313, %v5313
        %v5346 = vpack.c.b16 %v5314, %v5314
        %v5347 = vpack.c.b16 %v5315, %v5315
        %v5348 = vpack.c.b16 %v5316, %v5316
        %v5349 = vpack.c.b16 %v5317, %v5317
        %v5350 = vpack.c.b16 %v5318, %v5318
        %v5351 = vpack.c.b16 %v5319, %v5319
        %v5352 = vpack.c.b16 %v5320, %v5320
        %vm5353 = vsmask.f32 256
        %vm5354 = vsmask.f32 4368
        %vm5355 = vmor %vm5353, %vm5354
        %v5357 = vshrl.u32 %v5321, 16
        %v5359 = vrot.slane %v5357, 7
        %v5360 = vshll.u32 %v5321, 16
        %v5362 = vor.u32 %v5359, %v5360
        %v5363 = vrot.slane %v5359, 4
        %v5365 = vshrl.u32 %v5322, 16
        %v5367 = vrot.slane %v5365, 7
        %v5368 = vshll.u32 %v5322, 16
        %v5370 = vor.u32 %v5367, %v5368
        %v5371 = vsel %vm5355, %v5363, %v5370
        %v5372 = vrot.slane %v5367, 4
        %v5374 = vshrl.u32 %v5323, 16
        %v5376 = vrot.slane %v5374, 7
        %v5377 = vshll.u32 %v5323, 16
        %v5379 = vor.u32 %v5376, %v5377
        %v5380 = vrot.slane %v5376, 4
        %v5382 = vshrl.u32 %v5324, 16
        %v5384 = vrot.slane %v5382, 7
        %v5385 = vshll.u32 %v5324, 16
        %v5387 = vor.u32 %v5384, %v5385
        %v5388 = vsel %vm5355, %v5380, %v5387
        %v5389 = vrot.slane %v5384, 4
        %v5391 = vshrl.u32 %v5325, 16
        %v5393 = vrot.slane %v5391, 7
        %v5394 = vshll.u32 %v5325, 16
        %v5396 = vor.u32 %v5393, %v5394
        %v5397 = vrot.slane %v5393, 4
        %v5399 = vshrl.u32 %v5326, 16
        %v5401 = vrot.slane %v5399, 7
        %v5402 = vshll.u32 %v5326, 16
        %v5404 = vor.u32 %v5401, %v5402
        %v5405 = vsel %vm5355, %v5397, %v5404
        %v5406 = vrot.slane %v5401, 4
        %v5408 = vshrl.u32 %v5327, 16
        %v5410 = vrot.slane %v5408, 7
        %v5411 = vshll.u32 %v5327, 16
        %v5413 = vor.u32 %v5410, %v5411
        %v5414 = vrot.slane %v5410, 4
        %v5416 = vshrl.u32 %v5328, 16
        %v5418 = vrot.slane %v5416, 7
        %v5419 = vshll.u32 %v5328, 16
        %v5421 = vor.u32 %v5418, %v5419
        %v5422 = vsel %vm5355, %v5414, %v5421
        %v5423 = vrot.slane %v5418, 4
        %v5425 = vshrl.u32 %v5329, 16
        %v5427 = vrot.slane %v5425, 7
        %v5428 = vshll.u32 %v5329, 16
        %v5430 = vor.u32 %v5427, %v5428
        %v5431 = vrot.slane %v5427, 4
        %v5433 = vshrl.u32 %v5330, 16
        %v5435 = vrot.slane %v5433, 7
        %v5436 = vshll.u32 %v5330, 16
        %v5438 = vor.u32 %v5435, %v5436
        %v5439 = vsel %vm5355, %v5431, %v5438
        %v5440 = vrot.slane %v5435, 4
        %v5442 = vshrl.u32 %v5331, 16
        %v5444 = vrot.slane %v5442, 7
        %v5445 = vshll.u32 %v5331, 16
        %v5447 = vor.u32 %v5444, %v5445
        %v5448 = vrot.slane %v5444, 4
        %v5450 = vshrl.u32 %v5332, 16
        %v5452 = vrot.slane %v5450, 7
        %v5453 = vshll.u32 %v5332, 16
        %v5455 = vor.u32 %v5452, %v5453
        %v5456 = vsel %vm5355, %v5448, %v5455
        %v5457 = vrot.slane %v5452, 4
        %v5459 = vshrl.u32 %v5333, 16
        %v5461 = vrot.slane %v5459, 7
        %v5462 = vshll.u32 %v5333, 16
        %v5464 = vor.u32 %v5461, %v5462
        %v5465 = vrot.slane %v5461, 4
        %v5467 = vshrl.u32 %v5334, 16
        %v5469 = vrot.slane %v5467, 7
        %v5470 = vshll.u32 %v5334, 16
        %v5472 = vor.u32 %v5469, %v5470
        %v5473 = vsel %vm5355, %v5465, %v5472
        %v5474 = vrot.slane %v5469, 4
        %v5476 = vshrl.u32 %v5335, 16
        %v5478 = vrot.slane %v5476, 7
        %v5479 = vshll.u32 %v5335, 16
        %v5481 = vor.u32 %v5478, %v5479
        %v5482 = vrot.slane %v5478, 4
        %v5484 = vshrl.u32 %v5336, 16
        %v5486 = vrot.slane %v5484, 7
        %v5487 = vshll.u32 %v5336, 16
        %v5489 = vor.u32 %v5486, %v5487
        %v5490 = vsel %vm5355, %v5482, %v5489
        %v5491 = vrot.slane %v5486, 4
        %v5493 = vshrl.u32 %v5337, 16
        %v5495 = vrot.slane %v5493, 7
        %v5496 = vshll.u32 %v5337, 16
        %v5498 = vor.u32 %v5495, %v5496
        %v5499 = vrot.slane %v5495, 4
        %v5501 = vshrl.u32 %v5338, 16
        %v5503 = vrot.slane %v5501, 7
        %v5504 = vshll.u32 %v5338, 16
        %v5506 = vor.u32 %v5503, %v5504
        %v5507 = vsel %vm5355, %v5499, %v5506
        %v5508 = vrot.slane %v5503, 4
        %v5510 = vshrl.u32 %v5339, 16
        %v5512 = vrot.slane %v5510, 7
        %v5513 = vshll.u32 %v5339, 16
        %v5515 = vor.u32 %v5512, %v5513
        %v5516 = vrot.slane %v5512, 4
        %v5518 = vshrl.u32 %v5340, 16
        %v5520 = vrot.slane %v5518, 7
        %v5521 = vshll.u32 %v5340, 16
        %v5523 = vor.u32 %v5520, %v5521
        %v5524 = vsel %vm5355, %v5516, %v5523
        %v5525 = vrot.slane %v5520, 4
        %v5527 = vshrl.u32 %v5341, 16
        %v5529 = vrot.slane %v5527, 7
        %v5530 = vshll.u32 %v5341, 16
        %v5532 = vor.u32 %v5529, %v5530
        %v5533 = vrot.slane %v5529, 4
        %v5535 = vshrl.u32 %v5342, 16
        %v5537 = vrot.slane %v5535, 7
        %v5538 = vshll.u32 %v5342, 16
        %v5540 = vor.u32 %v5537, %v5538
        %v5541 = vsel %vm5355, %v5533, %v5540
        %v5542 = vrot.slane %v5537, 4
        %v5544 = vshrl.u32 %v5343, 16
        %v5546 = vrot.slane %v5544, 7
        %v5547 = vshll.u32 %v5343, 16
        %v5549 = vor.u32 %v5546, %v5547
        %v5550 = vrot.slane %v5546, 4
        %v5552 = vshrl.u32 %v5344, 16
        %v5554 = vrot.slane %v5552, 7
        %v5555 = vshll.u32 %v5344, 16
        %v5557 = vor.u32 %v5554, %v5555
        %v5558 = vsel %vm5355, %v5550, %v5557
        %v5559 = vrot.slane %v5554, 4
        %v5561 = vshrl.u32 %v5345, 16
        %v5563 = vrot.slane %v5561, 7
        %v5564 = vshll.u32 %v5345, 16
        %v5566 = vor.u32 %v5563, %v5564
        %v5567 = vrot.slane %v5563, 4
        %v5569 = vshrl.u32 %v5346, 16
        %v5571 = vrot.slane %v5569, 7
        %v5572 = vshll.u32 %v5346, 16
        %v5574 = vor.u32 %v5571, %v5572
        %v5575 = vsel %vm5355, %v5567, %v5574
        %v5576 = vrot.slane %v5571, 4
        %v5578 = vshrl.u32 %v5347, 16
        %v5580 = vrot.slane %v5578, 7
        %v5581 = vshll.u32 %v5347, 16
        %v5583 = vor.u32 %v5580, %v5581
        %v5584 = vrot.slane %v5580, 4
        %v5586 = vshrl.u32 %v5348, 16
        %v5588 = vrot.slane %v5586, 7
        %v5589 = vshll.u32 %v5348, 16
        %v5591 = vor.u32 %v5588, %v5589
        %v5592 = vsel %vm5355, %v5584, %v5591
        %v5593 = vrot.slane %v5588, 4
        %v5595 = vshrl.u32 %v5349, 16
        %v5597 = vrot.slane %v5595, 7
        %v5598 = vshll.u32 %v5349, 16
        %v5600 = vor.u32 %v5597, %v5598
        %v5601 = vrot.slane %v5597, 4
        %v5603 = vshrl.u32 %v5350, 16
        %v5605 = vrot.slane %v5603, 7
        %v5606 = vshll.u32 %v5350, 16
        %v5608 = vor.u32 %v5605, %v5606
        %v5609 = vsel %vm5355, %v5601, %v5608
        %v5610 = vrot.slane %v5605, 4
        %v5612 = vshrl.u32 %v5351, 16
        %v5614 = vrot.slane %v5612, 7
        %v5615 = vshll.u32 %v5351, 16
        %v5617 = vor.u32 %v5614, %v5615
        %v5618 = vrot.slane %v5614, 4
        %v5620 = vshrl.u32 %v5352, 16
        %v5622 = vrot.slane %v5620, 7
        %v5623 = vshll.u32 %v5352, 16
        %v5625 = vor.u32 %v5622, %v5623
        %v5626 = vsel %vm5355, %v5618, %v5625
        %v5627 = vrot.slane %v5622, 4
        %s5676 = scalar_lea.vmem [#allocation2], 12
        %vm5677 = vcmask 1043456
        %vm5678 = vsmask.f32 7938
        %vm5679 = vmand %vm5677, %vm5678
        %v5680 = vld [vmem:[%s5676] sm:$0xf]
        %v5681 = vsel %vm5679, %v5362, %v5680
        %5682 = vst [vmem:[%s5676] sm:$0xf] %v5681
        %5683 = vst [vmem:[%s5676 + $0x4] sm:$0xf] %v5371
        %vm5684 = vcmask 1040384
        %vm5685 = vmand %vm5684, %vm5353
        %v5686 = vld [vmem:[%s5676 + $0x8] sm:$0x1]
        %v5687 = vsel %vm5685, %v5372, %v5686
        %5688 = vst [vmem:[%s5676 + $0x8] sm:$0x1] %v5687
        %v5689 = vld [vmem:[%s5676 + $0xc] sm:$0xf]
        %v5690 = vsel %vm5679, %v5379, %v5689
        %5691 = vst [vmem:[%s5676 + $0xc] sm:$0xf] %v5690
        %5692 = vst [vmem:[%s5676 + $0x10] sm:$0xf] %v5388
        %v5693 = vld [vmem:[%s5676 + $0x14] sm:$0x1]
        %v5694 = vsel %vm5685, %v5389, %v5693
        %5695 = vst [vmem:[%s5676 + $0x14] sm:$0x1] %v5694
        %v5696 = vld [vmem:[%s5676 + $0x18] sm:$0xf]
        %v5697 = vsel %vm5679, %v5396, %v5696
        %5698 = vst [vmem:[%s5676 + $0x18] sm:$0xf] %v5697
        %5699 = vst [vmem:[%s5676 + $0x1c] sm:$0xf] %v5405
        %v5700 = vld [vmem:[%s5676 + $0x20] sm:$0x1]
        %v5701 = vsel %vm5685, %v5406, %v5700
        %5702 = vst [vmem:[%s5676 + $0x20] sm:$0x1] %v5701
        %v5703 = vld [vmem:[%s5676 + $0x24] sm:$0xf]
        %v5704 = vsel %vm5679, %v5413, %v5703
        %5705 = vst [vmem:[%s5676 + $0x24] sm:$0xf] %v5704
        %5706 = vst [vmem:[%s5676 + $0x28] sm:$0xf] %v5422
        %v5707 = vld [vmem:[%s5676 + $0x2c] sm:$0x1]
        %v5708 = vsel %vm5685, %v5423, %v5707
        %5709 = vst [vmem:[%s5676 + $0x2c] sm:$0x1] %v5708
        %v5710 = vld [vmem:[%s5676 + $0x30] sm:$0xf]
        %v5711 = vsel %vm5679, %v5430, %v5710
        %5712 = vst [vmem:[%s5676 + $0x30] sm:$0xf] %v5711
        %5713 = vst [vmem:[%s5676 + $0x34] sm:$0xf] %v5439
        %v5714 = vld [vmem:[%s5676 + $0x38] sm:$0x1]
        %v5715 = vsel %vm5685, %v5440, %v5714
        %5716 = vst [vmem:[%s5676 + $0x38] sm:$0x1] %v5715
        %v5717 = vld [vmem:[%s5676 + $0x3c] sm:$0xf]
        %v5718 = vsel %vm5679, %v5447, %v5717
        %5719 = vst [vmem:[%s5676 + $0x3c] sm:$0xf] %v5718
        %5720 = vst [vmem:[%s5676 + $0x40] sm:$0xf] %v5456
        %v5721 = vld [vmem:[%s5676 + $0x44] sm:$0x1]
        %v5722 = vsel %vm5685, %v5457, %v5721
        %5723 = vst [vmem:[%s5676 + $0x44] sm:$0x1] %v5722
        %v5724 = vld [vmem:[%s5676 + $0x48] sm:$0xf]
        %v5725 = vsel %vm5679, %v5464, %v5724
        %5726 = vst [vmem:[%s5676 + $0x48] sm:$0xf] %v5725
        %5727 = vst [vmem:[%s5676 + $0x4c] sm:$0xf] %v5473
        %v5728 = vld [vmem:[%s5676 + $0x50] sm:$0x1]
        %v5729 = vsel %vm5685, %v5474, %v5728
        %5730 = vst [vmem:[%s5676 + $0x50] sm:$0x1] %v5729
        %v5731 = vld [vmem:[%s5676 + $0x54] sm:$0xf]
        %v5732 = vsel %vm5679, %v5481, %v5731
        %5733 = vst [vmem:[%s5676 + $0x54] sm:$0xf] %v5732
        %5734 = vst [vmem:[%s5676 + $0x58] sm:$0xf] %v5490
        %v5735 = vld [vmem:[%s5676 + $0x5c] sm:$0x1]
        %v5736 = vsel %vm5685, %v5491, %v5735
        %5737 = vst [vmem:[%s5676 + $0x5c] sm:$0x1] %v5736
        %v5738 = vld [vmem:[%s5676 + $0x60] sm:$0xf]
        %v5739 = vsel %vm5679, %v5498, %v5738
        %5740 = vst [vmem:[%s5676 + $0x60] sm:$0xf] %v5739
        %5741 = vst [vmem:[%s5676 + $0x64] sm:$0xf] %v5507
        %v5742 = vld [vmem:[%s5676 + $0x68] sm:$0x1]
        %v5743 = vsel %vm5685, %v5508, %v5742
        %5744 = vst [vmem:[%s5676 + $0x68] sm:$0x1] %v5743
        %v5745 = vld [vmem:[%s5676 + $0x6c] sm:$0xf]
        %v5746 = vsel %vm5679, %v5515, %v5745
        %5747 = vst [vmem:[%s5676 + $0x6c] sm:$0xf] %v5746
        %5748 = vst [vmem:[%s5676 + $0x70] sm:$0xf] %v5524
        %v5749 = vld [vmem:[%s5676 + $0x74] sm:$0x1]
        %v5750 = vsel %vm5685, %v5525, %v5749
        %5751 = vst [vmem:[%s5676 + $0x74] sm:$0x1] %v5750
        %v5752 = vld [vmem:[%s5676 + $0x78] sm:$0xf]
        %v5753 = vsel %vm5679, %v5532, %v5752
        %5754 = vst [vmem:[%s5676 + $0x78] sm:$0xf] %v5753
        %5755 = vst [vmem:[%s5676 + $0x7c] sm:$0xf] %v5541
        %v5756 = vld [vmem:[%s5676 + $0x80] sm:$0x1]
        %v5757 = vsel %vm5685, %v5542, %v5756
        %5758 = vst [vmem:[%s5676 + $0x80] sm:$0x1] %v5757
        %v5759 = vld [vmem:[%s5676 + $0x84] sm:$0xf]
        %v5760 = vsel %vm5679, %v5549, %v5759
        %5761 = vst [vmem:[%s5676 + $0x84] sm:$0xf] %v5760
        %5762 = vst [vmem:[%s5676 + $0x88] sm:$0xf] %v5558
        %v5763 = vld [vmem:[%s5676 + $0x8c] sm:$0x1]
        %v5764 = vsel %vm5685, %v5559, %v5763
        %5765 = vst [vmem:[%s5676 + $0x8c] sm:$0x1] %v5764
        %v5766 = vld [vmem:[%s5676 + $0x90] sm:$0xf]
        %v5767 = vsel %vm5679, %v5566, %v5766
        %5768 = vst [vmem:[%s5676 + $0x90] sm:$0xf] %v5767
        %5769 = vst [vmem:[%s5676 + $0x94] sm:$0xf] %v5575
        %v5770 = vld [vmem:[%s5676 + $0x98] sm:$0x1]
        %v5771 = vsel %vm5685, %v5576, %v5770
        %5772 = vst [vmem:[%s5676 + $0x98] sm:$0x1] %v5771
        %v5773 = vld [vmem:[%s5676 + $0x9c] sm:$0xf]
        %v5774 = vsel %vm5679, %v5583, %v5773
        %5775 = vst [vmem:[%s5676 + $0x9c] sm:$0xf] %v5774
        %5776 = vst [vmem:[%s5676 + $0xa0] sm:$0xf] %v5592
        %v5777 = vld [vmem:[%s5676 + $0xa4] sm:$0x1]
        %v5778 = vsel %vm5685, %v5593, %v5777
        %5779 = vst [vmem:[%s5676 + $0xa4] sm:$0x1] %v5778
        %v5780 = vld [vmem:[%s5676 + $0xa8] sm:$0xf]
        %v5781 = vsel %vm5679, %v5600, %v5780
        %5782 = vst [vmem:[%s5676 + $0xa8] sm:$0xf] %v5781
        %5783 = vst [vmem:[%s5676 + $0xac] sm:$0xf] %v5609
        %v5784 = vld [vmem:[%s5676 + $0xb0] sm:$0x1]
        %v5785 = vsel %vm5685, %v5610, %v5784
        %5786 = vst [vmem:[%s5676 + $0xb0] sm:$0x1] %v5785
        %v5787 = vld [vmem:[%s5676 + $0xb4] sm:$0xf]
        %v5788 = vsel %vm5679, %v5617, %v5787
        %5789 = vst [vmem:[%s5676 + $0xb4] sm:$0xf] %v5788
        %5790 = vst [vmem:[%s5676 + $0xb8] sm:$0xf] %v5626
        %v5791 = vld [vmem:[%s5676 + $0xbc] sm:$0x1]
        %v5792 = vsel %vm5685, %v5627, %v5791
        %5793 = vst [vmem:[%s5676 + $0xbc] sm:$0x1] %v5792
        %v5794 = vld [vmem:[#allocation2] sm:$0xf]
        %v5795 = vld [vmem:[#allocation2 + $0x4] sm:$0xf]
        %v5796 = vld [vmem:[#allocation2 + $0xc] sm:$0xf]
        %v5797 = vld [vmem:[#allocation2 + $0x10] sm:$0xf]
        %v5798 = vld [vmem:[#allocation2 + $0x18] sm:$0xf]
        %v5799 = vld [vmem:[#allocation2 + $0x1c] sm:$0xf]
        %v5800 = vld [vmem:[#allocation2 + $0x24] sm:$0xf]
        %v5801 = vld [vmem:[#allocation2 + $0x28] sm:$0xf]
        %v5802 = vld [vmem:[#allocation2 + $0x30] sm:$0xf]
        %v5803 = vld [vmem:[#allocation2 + $0x34] sm:$0xf]
        %v5804 = vld [vmem:[#allocation2 + $0x3c] sm:$0xf]
        %v5805 = vld [vmem:[#allocation2 + $0x40] sm:$0xf]
        %v5806 = vld [vmem:[#allocation2 + $0x48] sm:$0xf]
        %v5807 = vld [vmem:[#allocation2 + $0x4c] sm:$0xf]
        %v5808 = vld [vmem:[#allocation2 + $0x54] sm:$0xf]
        %v5809 = vld [vmem:[#allocation2 + $0x58] sm:$0xf]
        %v5810 = vld [vmem:[#allocation2 + $0x60] sm:$0xf]
        %v5811 = vld [vmem:[#allocation2 + $0x64] sm:$0xf]
        %v5812 = vld [vmem:[#allocation2 + $0x6c] sm:$0xf]
        %v5813 = vld [vmem:[#allocation2 + $0x70] sm:$0xf]
        %v5814 = vld [vmem:[#allocation2 + $0x78] sm:$0xf]
        %v5815 = vld [vmem:[#allocation2 + $0x7c] sm:$0xf]
        %v5816 = vld [vmem:[#allocation2 + $0x84] sm:$0xf]
        %v5817 = vld [vmem:[#allocation2 + $0x88] sm:$0xf]
        %v5818 = vld [vmem:[#allocation2 + $0x90] sm:$0xf]
        %v5819 = vld [vmem:[#allocation2 + $0x94] sm:$0xf]
        %v5820 = vld [vmem:[#allocation2 + $0x9c] sm:$0xf]
        %v5821 = vld [vmem:[#allocation2 + $0xa0] sm:$0xf]
        %v5822 = vld [vmem:[#allocation2 + $0xa8] sm:$0xf]
        %v5823 = vld [vmem:[#allocation2 + $0xac] sm:$0xf]
        %v5824 = vld [vmem:[#allocation2 + $0xb4] sm:$0xf]
        %v5825 = vld [vmem:[#allocation2 + $0xb8] sm:$0xf]
        %v5826 = vld [vmem:[#allocation3] sm:$0xf]
        %v5827 = vld [vmem:[#allocation3 + $0x4] sm:$0xf]
        %v5828 = vld [vmem:[#allocation3 + $0x8] sm:$0xf]
        %v5829 = vld [vmem:[#allocation3 + $0xc] sm:$0xf]
        %v5830 = vld [vmem:[#allocation3 + $0x10] sm:$0xf]
        %v5831 = vld [vmem:[#allocation3 + $0x14] sm:$0xf]
        %v5832 = vld [vmem:[#allocation3 + $0x18] sm:$0xf]
        %v5833 = vld [vmem:[#allocation3 + $0x1c] sm:$0xf]
        %v5834 = vld [vmem:[#allocation3 + $0x20] sm:$0xf]
        %v5835 = vld [vmem:[#allocation3 + $0x24] sm:$0xf]
        %v5836 = vld [vmem:[#allocation3 + $0x28] sm:$0xf]
        %v5837 = vld [vmem:[#allocation3 + $0x2c] sm:$0xf]
        %v5838 = vld [vmem:[#allocation3 + $0x30] sm:$0xf]
        %v5839 = vld [vmem:[#allocation3 + $0x34] sm:$0xf]
        %v5840 = vld [vmem:[#allocation3 + $0x38] sm:$0xf]
        %v5841 = vld [vmem:[#allocation3 + $0x3c] sm:$0xf]
        %v5842 = vld [vmem:[#allocation2 + $0x8] sm:$0x1]
        %v5843 = vld [vmem:[#allocation2 + $0x14] sm:$0x1]
        %v5844 = vld [vmem:[#allocation2 + $0x20] sm:$0x1]
        %v5845 = vld [vmem:[#allocation2 + $0x2c] sm:$0x1]
        %v5846 = vld [vmem:[#allocation2 + $0x38] sm:$0x1]
        %v5847 = vld [vmem:[#allocation2 + $0x44] sm:$0x1]
        %v5848 = vld [vmem:[#allocation2 + $0x50] sm:$0x1]
        %v5849 = vld [vmem:[#allocation2 + $0x5c] sm:$0x1]
        %v5850 = vld [vmem:[#allocation2 + $0x68] sm:$0x1]
        %v5851 = vld [vmem:[#allocation2 + $0x74] sm:$0x1]
        %v5852 = vld [vmem:[#allocation2 + $0x80] sm:$0x1]
        %v5853 = vld [vmem:[#allocation2 + $0x8c] sm:$0x1]
        %v5854 = vld [vmem:[#allocation2 + $0x98] sm:$0x1]
        %v5855 = vld [vmem:[#allocation2 + $0xa4] sm:$0x1]
        %v5856 = vld [vmem:[#allocation2 + $0xb0] sm:$0x1]
        %v5857 = vld [vmem:[#allocation2 + $0xbc] sm:$0x1]
        %v5859 = vshrl.u32 %v5794, 16
        %v5861 = vrot.slane %v5859, 4
        %v5862 = vshll.u32 %v5794, 16
        %v5864 = vrot.slane %v5862, 5
        %v5865 = vor.u32 %v5861, %v5864
        %v5866 = vrot.slane %v5865, 4
        %v5868 = vshll.u32 %v5795, 16
        %v5870 = vrot.slane %v5868, 5
        %v5871 = vsel %vm322, %v5866, %v5870
        %v5872 = vshrl.u32 %v5795, 16
        %v5874 = vrot.slane %v5872, 4
        %v5875 = vor.u32 %v5874, %v5870
        %v5876 = vrot.slane %v5875, 4
        %v5878 = vshll.u32 %v5842, 16
        %v5880 = vrot.slane %v5878, 5
        %v5881 = vsel %vm322, %v5876, %v5880
        %v5883 = vshrl.u32 %v5796, 16
        %v5885 = vrot.slane %v5883, 4
        %v5886 = vshll.u32 %v5796, 16
        %v5888 = vrot.slane %v5886, 5
        %v5889 = vor.u32 %v5885, %v5888
        %v5890 = vrot.slane %v5889, 4
        %v5892 = vshll.u32 %v5797, 16
        %v5894 = vrot.slane %v5892, 5
        %v5895 = vsel %vm322, %v5890, %v5894
        %v5896 = vshrl.u32 %v5797, 16
        %v5898 = vrot.slane %v5896, 4
        %v5899 = vor.u32 %v5898, %v5894
        %v5900 = vrot.slane %v5899, 4
        %v5902 = vshll.u32 %v5843, 16
        %v5904 = vrot.slane %v5902, 5
        %v5905 = vsel %vm322, %v5900, %v5904
        %v5907 = vshrl.u32 %v5798, 16
        %v5909 = vrot.slane %v5907, 4
        %v5910 = vshll.u32 %v5798, 16
        %v5912 = vrot.slane %v5910, 5
        %v5913 = vor.u32 %v5909, %v5912
        %v5914 = vrot.slane %v5913, 4
        %v5916 = vshll.u32 %v5799, 16
        %v5918 = vrot.slane %v5916, 5
        %v5919 = vsel %vm322, %v5914, %v5918
        %v5920 = vshrl.u32 %v5799, 16
        %v5922 = vrot.slane %v5920, 4
        %v5923 = vor.u32 %v5922, %v5918
        %v5924 = vrot.slane %v5923, 4
        %v5926 = vshll.u32 %v5844, 16
        %v5928 = vrot.slane %v5926, 5
        %v5929 = vsel %vm322, %v5924, %v5928
        %v5931 = vshrl.u32 %v5800, 16
        %v5933 = vrot.slane %v5931, 4
        %v5934 = vshll.u32 %v5800, 16
        %v5936 = vrot.slane %v5934, 5
        %v5937 = vor.u32 %v5933, %v5936
        %v5938 = vrot.slane %v5937, 4
        %v5940 = vshll.u32 %v5801, 16
        %v5942 = vrot.slane %v5940, 5
        %v5943 = vsel %vm322, %v5938, %v5942
        %v5944 = vshrl.u32 %v5801, 16
        %v5946 = vrot.slane %v5944, 4
        %v5947 = vor.u32 %v5946, %v5942
        %v5948 = vrot.slane %v5947, 4
        %v5950 = vshll.u32 %v5845, 16
        %v5952 = vrot.slane %v5950, 5
        %v5953 = vsel %vm322, %v5948, %v5952
        %v5955 = vshrl.u32 %v5802, 16
        %v5957 = vrot.slane %v5955, 4
        %v5958 = vshll.u32 %v5802, 16
        %v5960 = vrot.slane %v5958, 5
        %v5961 = vor.u32 %v5957, %v5960
        %v5962 = vrot.slane %v5961, 4
        %v5964 = vshll.u32 %v5803, 16
        %v5966 = vrot.slane %v5964, 5
        %v5967 = vsel %vm322, %v5962, %v5966
        %v5968 = vshrl.u32 %v5803, 16
        %v5970 = vrot.slane %v5968, 4
        %v5971 = vor.u32 %v5970, %v5966
        %v5972 = vrot.slane %v5971, 4
        %v5974 = vshll.u32 %v5846, 16
        %v5976 = vrot.slane %v5974, 5
        %v5977 = vsel %vm322, %v5972, %v5976
        %v5979 = vshrl.u32 %v5804, 16
        %v5981 = vrot.slane %v5979, 4
        %v5982 = vshll.u32 %v5804, 16
        %v5984 = vrot.slane %v5982, 5
        %v5985 = vor.u32 %v5981, %v5984
        %v5986 = vrot.slane %v5985, 4
        %v5988 = vshll.u32 %v5805, 16
        %v5990 = vrot.slane %v5988, 5
        %v5991 = vsel %vm322, %v5986, %v5990
        %v5992 = vshrl.u32 %v5805, 16
        %v5994 = vrot.slane %v5992, 4
        %v5995 = vor.u32 %v5994, %v5990
        %v5996 = vrot.slane %v5995, 4
        %v5998 = vshll.u32 %v5847, 16
        %v6000 = vrot.slane %v5998, 5
        %v6001 = vsel %vm322, %v5996, %v6000
        %v6003 = vshrl.u32 %v5806, 16
        %v6005 = vrot.slane %v6003, 4
        %v6006 = vshll.u32 %v5806, 16
        %v6008 = vrot.slane %v6006, 5
        %v6009 = vor.u32 %v6005, %v6008
        %v6010 = vrot.slane %v6009, 4
        %v6012 = vshll.u32 %v5807, 16
        %v6014 = vrot.slane %v6012, 5
        %v6015 = vsel %vm322, %v6010, %v6014
        %v6016 = vshrl.u32 %v5807, 16
        %v6018 = vrot.slane %v6016, 4
        %v6019 = vor.u32 %v6018, %v6014
        %v6020 = vrot.slane %v6019, 4
        %v6022 = vshll.u32 %v5848, 16
        %v6024 = vrot.slane %v6022, 5
        %v6025 = vsel %vm322, %v6020, %v6024
        %v6027 = vshrl.u32 %v5808, 16
        %v6029 = vrot.slane %v6027, 4
        %v6030 = vshll.u32 %v5808, 16
        %v6032 = vrot.slane %v6030, 5
        %v6033 = vor.u32 %v6029, %v6032
        %v6034 = vrot.slane %v6033, 4
        %v6036 = vshll.u32 %v5809, 16
        %v6038 = vrot.slane %v6036, 5
        %v6039 = vsel %vm322, %v6034, %v6038
        %v6040 = vshrl.u32 %v5809, 16
        %v6042 = vrot.slane %v6040, 4
        %v6043 = vor.u32 %v6042, %v6038
        %v6044 = vrot.slane %v6043, 4
        %v6046 = vshll.u32 %v5849, 16
        %v6048 = vrot.slane %v6046, 5
        %v6049 = vsel %vm322, %v6044, %v6048
        %v6051 = vshrl.u32 %v5810, 16
        %v6053 = vrot.slane %v6051, 4
        %v6054 = vshll.u32 %v5810, 16
        %v6056 = vrot.slane %v6054, 5
        %v6057 = vor.u32 %v6053, %v6056
        %v6058 = vrot.slane %v6057, 4
        %v6060 = vshll.u32 %v5811, 16
        %v6062 = vrot.slane %v6060, 5
        %v6063 = vsel %vm322, %v6058, %v6062
        %v6064 = vshrl.u32 %v5811, 16
        %v6066 = vrot.slane %v6064, 4
        %v6067 = vor.u32 %v6066, %v6062
        %v6068 = vrot.slane %v6067, 4
        %v6070 = vshll.u32 %v5850, 16
        %v6072 = vrot.slane %v6070, 5
        %v6073 = vsel %vm322, %v6068, %v6072
        %v6075 = vshrl.u32 %v5812, 16
        %v6077 = vrot.slane %v6075, 4
        %v6078 = vshll.u32 %v5812, 16
        %v6080 = vrot.slane %v6078, 5
        %v6081 = vor.u32 %v6077, %v6080
        %v6082 = vrot.slane %v6081, 4
        %v6084 = vshll.u32 %v5813, 16
        %v6086 = vrot.slane %v6084, 5
        %v6087 = vsel %vm322, %v6082, %v6086
        %v6088 = vshrl.u32 %v5813, 16
        %v6090 = vrot.slane %v6088, 4
        %v6091 = vor.u32 %v6090, %v6086
        %v6092 = vrot.slane %v6091, 4
        %v6094 = vshll.u32 %v5851, 16
        %v6096 = vrot.slane %v6094, 5
        %v6097 = vsel %vm322, %v6092, %v6096
        %v6099 = vshrl.u32 %v5814, 16
        %v6101 = vrot.slane %v6099, 4
        %v6102 = vshll.u32 %v5814, 16
        %v6104 = vrot.slane %v6102, 5
        %v6105 = vor.u32 %v6101, %v6104
        %v6106 = vrot.slane %v6105, 4
        %v6108 = vshll.u32 %v5815, 16
        %v6110 = vrot.slane %v6108, 5
        %v6111 = vsel %vm322, %v6106, %v6110
        %v6112 = vshrl.u32 %v5815, 16
        %v6114 = vrot.slane %v6112, 4
        %v6115 = vor.u32 %v6114, %v6110
        %v6116 = vrot.slane %v6115, 4
        %v6118 = vshll.u32 %v5852, 16
        %v6120 = vrot.slane %v6118, 5
        %v6121 = vsel %vm322, %v6116, %v6120
        %v6123 = vshrl.u32 %v5816, 16
        %v6125 = vrot.slane %v6123, 4
        %v6126 = vshll.u32 %v5816, 16
        %v6128 = vrot.slane %v6126, 5
        %v6129 = vor.u32 %v6125, %v6128
        %v6130 = vrot.slane %v6129, 4
        %v6132 = vshll.u32 %v5817, 16
        %v6134 = vrot.slane %v6132, 5
        %v6135 = vsel %vm322, %v6130, %v6134
        %v6136 = vshrl.u32 %v5817, 16
        %v6138 = vrot.slane %v6136, 4
        %v6139 = vor.u32 %v6138, %v6134
        %v6140 = vrot.slane %v6139, 4
        %v6142 = vshll.u32 %v5853, 16
        %v6144 = vrot.slane %v6142, 5
        %v6145 = vsel %vm322, %v6140, %v6144
        %v6147 = vshrl.u32 %v5818, 16
        %v6149 = vrot.slane %v6147, 4
        %v6150 = vshll.u32 %v5818, 16
        %v6152 = vrot.slane %v6150, 5
        %v6153 = vor.u32 %v6149, %v6152
        %v6154 = vrot.slane %v6153, 4
        %v6156 = vshll.u32 %v5819, 16
        %v6158 = vrot.slane %v6156, 5
        %v6159 = vsel %vm322, %v6154, %v6158
        %v6160 = vshrl.u32 %v5819, 16
        %v6162 = vrot.slane %v6160, 4
        %v6163 = vor.u32 %v6162, %v6158
        %v6164 = vrot.slane %v6163, 4
        %v6166 = vshll.u32 %v5854, 16
        %v6168 = vrot.slane %v6166, 5
        %v6169 = vsel %vm322, %v6164, %v6168
        %v6171 = vshrl.u32 %v5820, 16
        %v6173 = vrot.slane %v6171, 4
        %v6174 = vshll.u32 %v5820, 16
        %v6176 = vrot.slane %v6174, 5
        %v6177 = vor.u32 %v6173, %v6176
        %v6178 = vrot.slane %v6177, 4
        %v6180 = vshll.u32 %v5821, 16
        %v6182 = vrot.slane %v6180, 5
        %v6183 = vsel %vm322, %v6178, %v6182
        %v6184 = vshrl.u32 %v5821, 16
        %v6186 = vrot.slane %v6184, 4
        %v6187 = vor.u32 %v6186, %v6182
        %v6188 = vrot.slane %v6187, 4
        %v6190 = vshll.u32 %v5855, 16
        %v6192 = vrot.slane %v6190, 5
        %v6193 = vsel %vm322, %v6188, %v6192
        %v6195 = vshrl.u32 %v5822, 16
        %v6197 = vrot.slane %v6195, 4
        %v6198 = vshll.u32 %v5822, 16
        %v6200 = vrot.slane %v6198, 5
        %v6201 = vor.u32 %v6197, %v6200
        %v6202 = vrot.slane %v6201, 4
        %v6204 = vshll.u32 %v5823, 16
        %v6206 = vrot.slane %v6204, 5
        %v6207 = vsel %vm322, %v6202, %v6206
        %v6208 = vshrl.u32 %v5823, 16
        %v6210 = vrot.slane %v6208, 4
        %v6211 = vor.u32 %v6210, %v6206
        %v6212 = vrot.slane %v6211, 4
        %v6214 = vshll.u32 %v5856, 16
        %v6216 = vrot.slane %v6214, 5
        %v6217 = vsel %vm322, %v6212, %v6216
        %v6219 = vshrl.u32 %v5824, 16
        %v6221 = vrot.slane %v6219, 4
        %v6222 = vshll.u32 %v5824, 16
        %v6224 = vrot.slane %v6222, 5
        %v6225 = vor.u32 %v6221, %v6224
        %v6226 = vrot.slane %v6225, 4
        %v6228 = vshll.u32 %v5825, 16
        %v6230 = vrot.slane %v6228, 5
        %v6231 = vsel %vm322, %v6226, %v6230
        %v6232 = vshrl.u32 %v5825, 16
        %v6234 = vrot.slane %v6232, 4
        %v6235 = vor.u32 %v6234, %v6230
        %v6236 = vrot.slane %v6235, 4
        %v6238 = vshll.u32 %v5857, 16
        %v6240 = vrot.slane %v6238, 5
        %v6241 = vsel %vm322, %v6236, %v6240
        %s6242 = scalar_lea.vmem [#allocation3], 64
        %v6243 = vld [vmem:[%s6242] sm:$0xf]
        %v6244 = vld [vmem:[%s6242 + $0x4] sm:$0xf]
        %v6245 = vld [vmem:[%s6242 + $0x8] sm:$0xf]
        %v6246 = vld [vmem:[%s6242 + $0xc] sm:$0xf]
        %v6247 = vld [vmem:[%s6242 + $0x10] sm:$0xf]
        %v6248 = vld [vmem:[%s6242 + $0x14] sm:$0xf]
        %v6249 = vld [vmem:[%s6242 + $0x18] sm:$0xf]
        %v6250 = vld [vmem:[%s6242 + $0x1c] sm:$0xf]
        %v6251 = vld [vmem:[%s6242 + $0x20] sm:$0xf]
        %v6252 = vld [vmem:[%s6242 + $0x24] sm:$0xf]
        %v6253 = vld [vmem:[%s6242 + $0x28] sm:$0xf]
        %v6254 = vld [vmem:[%s6242 + $0x2c] sm:$0xf]
        %v6255 = vld [vmem:[%s6242 + $0x30] sm:$0xf]
        %v6256 = vld [vmem:[%s6242 + $0x34] sm:$0xf]
        %v6257 = vld [vmem:[%s6242 + $0x38] sm:$0xf]
        %v6258 = vld [vmem:[%s6242 + $0x3c] sm:$0xf]
        %v6259 = vunpack.c.l.b16 %v5871
        %v6260 = vunpack.c.l.b16 %v5881
        %v6261 = vunpack.c.l.b16 %v5895
        %v6262 = vunpack.c.l.b16 %v5905
        %v6263 = vunpack.c.l.b16 %v5919
        %v6264 = vunpack.c.l.b16 %v5929
        %v6265 = vunpack.c.l.b16 %v5943
        %v6266 = vunpack.c.l.b16 %v5953
        %v6267 = vunpack.c.l.b16 %v5967
        %v6268 = vunpack.c.l.b16 %v5977
        %v6269 = vunpack.c.l.b16 %v5991
        %v6270 = vunpack.c.l.b16 %v6001
        %v6271 = vunpack.c.l.b16 %v6015
        %v6272 = vunpack.c.l.b16 %v6025
        %v6273 = vunpack.c.l.b16 %v6039
        %v6274 = vunpack.c.l.b16 %v6049
        %v6275 = vunpack.c.l.b16 %v6063
        %v6276 = vunpack.c.l.b16 %v6073
        %v6277 = vunpack.c.l.b16 %v6087
        %v6278 = vunpack.c.l.b16 %v6097
        %v6279 = vunpack.c.l.b16 %v6111
        %v6280 = vunpack.c.l.b16 %v6121
        %v6281 = vunpack.c.l.b16 %v6135
        %v6282 = vunpack.c.l.b16 %v6145
        %v6283 = vunpack.c.l.b16 %v6159
        %v6284 = vunpack.c.l.b16 %v6169
        %v6285 = vunpack.c.l.b16 %v6183
        %v6286 = vunpack.c.l.b16 %v6193
        %v6287 = vunpack.c.l.b16 %v6207
        %v6288 = vunpack.c.l.b16 %v6217
        %v6289 = vunpack.c.l.b16 %v6231
        %v6290 = vunpack.c.l.b16 %v6241
        %v6291 = vpack.c.b16 %v6260, %v6259
        %v6292 = vpack.c.b16 %v6262, %v6261
        %v6293 = vpack.c.b16 %v6264, %v6263
        %v6294 = vpack.c.b16 %v6266, %v6265
        %v6295 = vpack.c.b16 %v6268, %v6267
        %v6296 = vpack.c.b16 %v6270, %v6269
        %v6297 = vpack.c.b16 %v6272, %v6271
        %v6298 = vpack.c.b16 %v6274, %v6273
        %v6299 = vpack.c.b16 %v6276, %v6275
        %v6300 = vpack.c.b16 %v6278, %v6277
        %v6301 = vpack.c.b16 %v6280, %v6279
        %v6302 = vpack.c.b16 %v6282, %v6281
        %v6303 = vpack.c.b16 %v6284, %v6283
        %v6304 = vpack.c.b16 %v6286, %v6285
        %v6305 = vpack.c.b16 %v6288, %v6287
        %v6306 = vpack.c.b16 %v6290, %v6289
        %v6339 = vunpack.c.l.b16 %v6243
        %v6340 = vunpack.c.l.b16 %v6244
        %v6341 = vunpack.c.l.b16 %v6245
        %v6342 = vunpack.c.l.b16 %v6246
        %v6343 = vunpack.c.l.b16 %v6247
        %v6344 = vunpack.c.l.b16 %v6248
        %v6345 = vunpack.c.l.b16 %v6249
        %v6346 = vunpack.c.l.b16 %v6250
        %v6347 = vunpack.c.l.b16 %v6251
        %v6348 = vunpack.c.l.b16 %v6252
        %v6349 = vunpack.c.l.b16 %v6253
        %v6350 = vunpack.c.l.b16 %v6254
        %v6351 = vunpack.c.l.b16 %v6255
        %v6352 = vunpack.c.l.b16 %v6256
        %v6353 = vunpack.c.l.b16 %v6257
        %v6354 = vunpack.c.l.b16 %v6258
        %v6355 = vpack.c.b16 %v6340, %v6339
        %v6356 = vpack.c.b16 %v6342, %v6341
        %v6357 = vpack.c.b16 %v6344, %v6343
        %v6358 = vpack.c.b16 %v6346, %v6345
        %v6359 = vpack.c.b16 %v6348, %v6347
        %v6360 = vpack.c.b16 %v6350, %v6349
        %v6361 = vpack.c.b16 %v6352, %v6351
        %v6362 = vpack.c.b16 %v6354, %v6353
        %6371 = vmatprep.subr.bf16.mxu0 0
        %6372 = vmatpush1.bf16.msra.mxu0 %v6355
        %6373 = vmatprep.subr.bf16.mxu0 0
        %6374 = vmatpush1.bf16.msra.mxu0 %v6356
        %6375 = vmatprep.subr.bf16.mxu0 0
        %6376 = vmatpush1.bf16.msra.mxu0 %v6357
        %6377 = vmatprep.subr.bf16.mxu0 0
        %6378 = vmatpush1.bf16.msra.mxu0 %v6358
        %6379 = vmatprep.subr.bf16.mxu0 0
        %6380 = vmatpush1.bf16.msra.mxu0 %v6359
        %6381 = vmatprep.subr.bf16.mxu0 0
        %6382 = vmatpush1.bf16.msra.mxu0 %v6360
        %6383 = vmatprep.subr.bf16.mxu0 0
        %6384 = vmatpush1.bf16.msra.mxu0 %v6361
        %6385 = vmatprep.subr.bf16.mxu0 0
        %6386 = vmatpush1.bf16.msra.mxu0 %v6362
        %6387 = vmatprep.subr.bf16.mxu0 0
        %6388 = vmatpush1.bf16.msra.mxu0 0
        %6389 = vmatprep.subr.bf16.mxu0 0
        %6390 = vmatpush1.bf16.msra.mxu0 0
        %6391 = vmatprep.subr.bf16.mxu0 0
        %6392 = vmatpush1.bf16.msra.mxu0 0
        %6393 = vmatprep.subr.bf16.mxu0 0
        %6394 = vmatpush1.bf16.msra.mxu0 0
        %6395 = vmatprep.subr.bf16.mxu0 0
        %6396 = vmatpush1.bf16.msra.mxu0 0
        %6397 = vmatprep.subr.bf16.mxu0 0
        %6398 = vmatpush1.bf16.msra.mxu0 0
        %6399 = vmatprep.subr.bf16.mxu0 0
        %6400 = vmatpush1.bf16.msra.mxu0 0
        %6401 = vmatprep.subr.bf16.mxu0 0
        %6402 = vmatpush1.bf16.msra.mxu0 0
        %6403 = vmatprep.mubr.bf16.mxu0 0
        %6404 = vmatmul.mubr.bf16.gmra.mrb[0].mxu0 %v6291
        %v6405 = vpop.f32.mrb[0].mxu0
        %v6406 = vadd.f32 0.0, %v6405
        %v6407 = vpop.f32.mrb[0].mxu0
        %v6408 = vpop.f32.mrb[0].mxu0
        %v6409 = vadd.f32 0.0, %v6408
        %v6410 = vpop.f32.mrb[0].mxu0
        %6411 = vmatprep.mubr.bf16.mxu0 0
        %6412 = vmatmul.mubr.bf16.gmra.mrb[0].mxu0 %v6292
        %v6413 = vpop.f32.mrb[0].mxu0
        %v6414 = vadd.f32 0.0, %v6413
        %v6415 = vpop.f32.mrb[0].mxu0
        %v6416 = vpop.f32.mrb[0].mxu0
        %v6417 = vadd.f32 0.0, %v6416
        %v6418 = vpop.f32.mrb[0].mxu0
        %6419 = vmatprep.mubr.bf16.mxu0 0
        %6420 = vmatmul.mubr.bf16.gmra.mrb[0].mxu0 %v6293
        %v6421 = vpop.f32.mrb[0].mxu0
        %v6422 = vadd.f32 0.0, %v6421
        %v6423 = vpop.f32.mrb[0].mxu0
        %v6424 = vpop.f32.mrb[0].mxu0
        %v6425 = vadd.f32 0.0, %v6424
        %v6426 = vpop.f32.mrb[0].mxu0
        %6427 = vmatprep.mubr.bf16.mxu0 0
        %6428 = vmatmul.mubr.bf16.gmra.mrb[0].mxu0 %v6294
        %v6429 = vpop.f32.mrb[0].mxu0
        %v6430 = vadd.f32 0.0, %v6429
        %v6431 = vpop.f32.mrb[0].mxu0
        %v6432 = vpop.f32.mrb[0].mxu0
        %v6433 = vadd.f32 0.0, %v6432
        %v6434 = vpop.f32.mrb[0].mxu0
        %6435 = vmatprep.mubr.bf16.mxu0 0
        %6436 = vmatmul.mubr.bf16.gmra.mrb[0].mxu0 %v6295
        %v6437 = vpop.f32.mrb[0].mxu0
        %v6438 = vadd.f32 0.0, %v6437
        %v6439 = vpop.f32.mrb[0].mxu0
        %v6440 = vpop.f32.mrb[0].mxu0
        %v6441 = vadd.f32 0.0, %v6440
        %v6442 = vpop.f32.mrb[0].mxu0
        %6443 = vmatprep.mubr.bf16.mxu0 0
        %6444 = vmatmul.mubr.bf16.gmra.mrb[0].mxu0 %v6296
        %v6445 = vpop.f32.mrb[0].mxu0
        %v6446 = vadd.f32 0.0, %v6445
        %v6447 = vpop.f32.mrb[0].mxu0
        %v6448 = vpop.f32.mrb[0].mxu0
        %v6449 = vadd.f32 0.0, %v6448
        %v6450 = vpop.f32.mrb[0].mxu0
        %6451 = vmatprep.mubr.bf16.mxu0 0
        %6452 = vmatmul.mubr.bf16.gmra.mrb[0].mxu0 %v6297
        %v6453 = vpop.f32.mrb[0].mxu0
        %v6454 = vadd.f32 0.0, %v6453
        %v6455 = vpop.f32.mrb[0].mxu0
        %v6456 = vpop.f32.mrb[0].mxu0
        %v6457 = vadd.f32 0.0, %v6456
        %v6458 = vpop.f32.mrb[0].mxu0
        %6459 = vmatprep.mubr.bf16.mxu0 0
        %6460 = vmatmul.mubr.bf16.gmra.mrb[0].mxu0 %v6298
        %v6461 = vpop.f32.mrb[0].mxu0
        %v6462 = vadd.f32 0.0, %v6461
        %v6463 = vpop.f32.mrb[0].mxu0
        %v6464 = vpop.f32.mrb[0].mxu0
        %v6465 = vadd.f32 0.0, %v6464
        %v6466 = vpop.f32.mrb[0].mxu0
        %6467 = vmatprep.mubr.bf16.mxu0 0
        %6468 = vmatmul.mubr.bf16.gmra.mrb[0].mxu0 %v6299
        %v6469 = vpop.f32.mrb[0].mxu0
        %v6470 = vadd.f32 0.0, %v6469
        %v6471 = vpop.f32.mrb[0].mxu0
        %v6472 = vpop.f32.mrb[0].mxu0
        %v6473 = vadd.f32 0.0, %v6472
        %v6474 = vpop.f32.mrb[0].mxu0
        %6475 = vmatprep.mubr.bf16.mxu0 0
        %6476 = vmatmul.mubr.bf16.gmra.mrb[0].mxu0 %v6300
        %v6477 = vpop.f32.mrb[0].mxu0
        %v6478 = vadd.f32 0.0, %v6477
        %v6479 = vpop.f32.mrb[0].mxu0
        %v6480 = vpop.f32.mrb[0].mxu0
        %v6481 = vadd.f32 0.0, %v6480
        %v6482 = vpop.f32.mrb[0].mxu0
        %6483 = vmatprep.mubr.bf16.mxu0 0
        %6484 = vmatmul.mubr.bf16.gmra.mrb[0].mxu0 %v6301
        %v6485 = vpop.f32.mrb[0].mxu0
        %v6486 = vadd.f32 0.0, %v6485
        %v6487 = vpop.f32.mrb[0].mxu0
        %v6488 = vpop.f32.mrb[0].mxu0
        %v6489 = vadd.f32 0.0, %v6488
        %v6490 = vpop.f32.mrb[0].mxu0
        %6491 = vmatprep.mubr.bf16.mxu0 0
        %6492 = vmatmul.mubr.bf16.gmra.mrb[0].mxu0 %v6302
        %v6493 = vpop.f32.mrb[0].mxu0
        %v6494 = vadd.f32 0.0, %v6493
        %v6495 = vpop.f32.mrb[0].mxu0
        %v6496 = vpop.f32.mrb[0].mxu0
        %v6497 = vadd.f32 0.0, %v6496
        %v6498 = vpop.f32.mrb[0].mxu0
        %6499 = vmatprep.mubr.bf16.mxu0 0
        %6500 = vmatmul.mubr.bf16.gmra.mrb[0].mxu0 %v6303
        %v6501 = vpop.f32.mrb[0].mxu0
        %v6502 = vadd.f32 0.0, %v6501
        %v6503 = vpop.f32.mrb[0].mxu0
        %v6504 = vpop.f32.mrb[0].mxu0
        %v6505 = vadd.f32 0.0, %v6504
        %v6506 = vpop.f32.mrb[0].mxu0
        %6507 = vmatprep.mubr.bf16.mxu0 0
        %6508 = vmatmul.mubr.bf16.gmra.mrb[0].mxu0 %v6304
        %v6509 = vpop.f32.mrb[0].mxu0
        %v6510 = vadd.f32 0.0, %v6509
        %v6511 = vpop.f32.mrb[0].mxu0
        %v6512 = vpop.f32.mrb[0].mxu0
        %v6513 = vadd.f32 0.0, %v6512
        %v6514 = vpop.f32.mrb[0].mxu0
        %6515 = vmatprep.mubr.bf16.mxu0 0
        %6516 = vmatmul.mubr.bf16.gmra.mrb[0].mxu0 %v6305
        %v6517 = vpop.f32.mrb[0].mxu0
        %v6518 = vadd.f32 0.0, %v6517
        %v6519 = vpop.f32.mrb[0].mxu0
        %v6520 = vpop.f32.mrb[0].mxu0
        %v6521 = vadd.f32 0.0, %v6520
        %v6522 = vpop.f32.mrb[0].mxu0
        %6523 = vmatprep.mubr.bf16.mxu0 0
        %6524 = vmatmul.mubr.bf16.gmra.mrb[0].mxu0 %v6306
        %v6525 = vpop.f32.mrb[0].mxu0
        %v6526 = vadd.f32 0.0, %v6525
        %v6527 = vpop.f32.mrb[0].mxu0
        %v6528 = vpop.f32.mrb[0].mxu0
        %v6529 = vadd.f32 0.0, %v6528
        %v6530 = vpop.f32.mrb[0].mxu0
        %6531 = vdwg.mxu0
        %v6564 = vunpack.c.l.b16 %v5794
        %v6565 = vunpack.c.l.b16 %v5795
        %v6566 = vunpack.c.l.b16 %v5796
        %v6567 = vunpack.c.l.b16 %v5797
        %v6568 = vunpack.c.l.b16 %v5798
        %v6569 = vunpack.c.l.b16 %v5799
        %v6570 = vunpack.c.l.b16 %v5800
        %v6571 = vunpack.c.l.b16 %v5801
        %v6572 = vunpack.c.l.b16 %v5802
        %v6573 = vunpack.c.l.b16 %v5803
        %v6574 = vunpack.c.l.b16 %v5804
        %v6575 = vunpack.c.l.b16 %v5805
        %v6576 = vunpack.c.l.b16 %v5806
        %v6577 = vunpack.c.l.b16 %v5807
        %v6578 = vunpack.c.l.b16 %v5808
        %v6579 = vunpack.c.l.b16 %v5809
        %v6580 = vunpack.c.l.b16 %v5810
        %v6581 = vunpack.c.l.b16 %v5811
        %v6582 = vunpack.c.l.b16 %v5812
        %v6583 = vunpack.c.l.b16 %v5813
        %v6584 = vunpack.c.l.b16 %v5814
        %v6585 = vunpack.c.l.b16 %v5815
        %v6586 = vunpack.c.l.b16 %v5816
        %v6587 = vunpack.c.l.b16 %v5817
        %v6588 = vunpack.c.l.b16 %v5818
        %v6589 = vunpack.c.l.b16 %v5819
        %v6590 = vunpack.c.l.b16 %v5820
        %v6591 = vunpack.c.l.b16 %v5821
        %v6592 = vunpack.c.l.b16 %v5822
        %v6593 = vunpack.c.l.b16 %v5823
        %v6594 = vunpack.c.l.b16 %v5824
        %v6595 = vunpack.c.l.b16 %v5825
        %v6596 = vpack.c.b16 %v6565, %v6564
        %v6597 = vpack.c.b16 %v6567, %v6566
        %v6598 = vpack.c.b16 %v6569, %v6568
        %v6599 = vpack.c.b16 %v6571, %v6570
        %v6600 = vpack.c.b16 %v6573, %v6572
        %v6601 = vpack.c.b16 %v6575, %v6574
        %v6602 = vpack.c.b16 %v6577, %v6576
        %v6603 = vpack.c.b16 %v6579, %v6578
        %v6604 = vpack.c.b16 %v6581, %v6580
        %v6605 = vpack.c.b16 %v6583, %v6582
        %v6606 = vpack.c.b16 %v6585, %v6584
        %v6607 = vpack.c.b16 %v6587, %v6586
        %v6608 = vpack.c.b16 %v6589, %v6588
        %v6609 = vpack.c.b16 %v6591, %v6590
        %v6610 = vpack.c.b16 %v6593, %v6592
        %v6611 = vpack.c.b16 %v6595, %v6594
        %v6644 = vunpack.c.l.b16 %v5826
        %v6645 = vunpack.c.l.b16 %v5827
        %v6646 = vunpack.c.l.b16 %v5828
        %v6647 = vunpack.c.l.b16 %v5829
        %v6648 = vunpack.c.l.b16 %v5830
        %v6649 = vunpack.c.l.b16 %v5831
        %v6650 = vunpack.c.l.b16 %v5832
        %v6651 = vunpack.c.l.b16 %v5833
        %v6652 = vunpack.c.l.b16 %v5834
        %v6653 = vunpack.c.l.b16 %v5835
        %v6654 = vunpack.c.l.b16 %v5836
        %v6655 = vunpack.c.l.b16 %v5837
        %v6656 = vunpack.c.l.b16 %v5838
        %v6657 = vunpack.c.l.b16 %v5839
        %v6658 = vunpack.c.l.b16 %v5840
        %v6659 = vunpack.c.l.b16 %v5841
        %v6660 = vpack.c.b16 %v6645, %v6644
        %v6661 = vpack.c.b16 %v6647, %v6646
        %v6662 = vpack.c.b16 %v6649, %v6648
        %v6663 = vpack.c.b16 %v6651, %v6650
        %v6664 = vpack.c.b16 %v6653, %v6652
        %v6665 = vpack.c.b16 %v6655, %v6654
        %v6666 = vpack.c.b16 %v6657, %v6656
        %v6667 = vpack.c.b16 %v6659, %v6658
        %6676 = vmatprep.subr.bf16.mxu0 0
        %6677 = vmatpush1.bf16.msra.mxu0 %v6660
        %6678 = vmatprep.subr.bf16.mxu0 0
        %6679 = vmatpush1.bf16.msra.mxu0 %v6661
        %6680 = vmatprep.subr.bf16.mxu0 0
        %6681 = vmatpush1.bf16.msra.mxu0 %v6662
        %6682 = vmatprep.subr.bf16.mxu0 0
        %6683 = vmatpush1.bf16.msra.mxu0 %v6663
        %6684 = vmatprep.subr.bf16.mxu0 0
        %6685 = vmatpush1.bf16.msra.mxu0 %v6664
        %6686 = vmatprep.subr.bf16.mxu0 0
        %6687 = vmatpush1.bf16.msra.mxu0 %v6665
        %6688 = vmatprep.subr.bf16.mxu0 0
        %6689 = vmatpush1.bf16.msra.mxu0 %v6666
        %6690 = vmatprep.subr.bf16.mxu0 0
        %6691 = vmatpush1.bf16.msra.mxu0 %v6667
        %6692 = vmatprep.subr.bf16.mxu0 0
        %6693 = vmatpush1.bf16.msra.mxu0 0
        %6694 = vmatprep.subr.bf16.mxu0 0
        %6695 = vmatpush1.bf16.msra.mxu0 0
        %6696 = vmatprep.subr.bf16.mxu0 0
        %6697 = vmatpush1.bf16.msra.mxu0 0
        %6698 = vmatprep.subr.bf16.mxu0 0
        %6699 = vmatpush1.bf16.msra.mxu0 0
        %6700 = vmatprep.subr.bf16.mxu0 0
        %6701 = vmatpush1.bf16.msra.mxu0 0
        %6702 = vmatprep.subr.bf16.mxu0 0
        %6703 = vmatpush1.bf16.msra.mxu0 0
        %6704 = vmatprep.subr.bf16.mxu0 0
        %6705 = vmatpush1.bf16.msra.mxu0 0
        %6706 = vmatprep.subr.bf16.mxu0 0
        %6707 = vmatpush1.bf16.msra.mxu0 0
        %6708 = vmatprep.mubr.bf16.mxu0 0
        %6709 = vmatmul.mubr.bf16.gmra.mrb[0].mxu0 %v6596
        %v6710 = vpop.f32.mrb[0].mxu0
        %v6711 = vadd.f32 %v6406, %v6710
        %v6712 = vpop.f32.mrb[0].mxu0
        %v6713 = vpop.f32.mrb[0].mxu0
        %v6714 = vadd.f32 %v6409, %v6713
        %v6715 = vpop.f32.mrb[0].mxu0
        %6716 = vmatprep.mubr.bf16.mxu0 0
        %6717 = vmatmul.mubr.bf16.gmra.mrb[0].mxu0 %v6597
        %v6718 = vpop.f32.mrb[0].mxu0
        %v6719 = vadd.f32 %v6414, %v6718
        %v6720 = vpop.f32.mrb[0].mxu0
        %v6721 = vpop.f32.mrb[0].mxu0
        %v6722 = vadd.f32 %v6417, %v6721
        %v6723 = vpop.f32.mrb[0].mxu0
        %6724 = vmatprep.mubr.bf16.mxu0 0
        %6725 = vmatmul.mubr.bf16.gmra.mrb[0].mxu0 %v6598
        %v6726 = vpop.f32.mrb[0].mxu0
        %v6727 = vadd.f32 %v6422, %v6726
        %v6728 = vpop.f32.mrb[0].mxu0
        %v6729 = vpop.f32.mrb[0].mxu0
        %v6730 = vadd.f32 %v6425, %v6729
        %v6731 = vpop.f32.mrb[0].mxu0
        %6732 = vmatprep.mubr.bf16.mxu0 0
        %6733 = vmatmul.mubr.bf16.gmra.mrb[0].mxu0 %v6599
        %v6734 = vpop.f32.mrb[0].mxu0
        %v6735 = vadd.f32 %v6430, %v6734
        %v6736 = vpop.f32.mrb[0].mxu0
        %v6737 = vpop.f32.mrb[0].mxu0
        %v6738 = vadd.f32 %v6433, %v6737
        %v6739 = vpop.f32.mrb[0].mxu0
        %6740 = vmatprep.mubr.bf16.mxu0 0
        %6741 = vmatmul.mubr.bf16.gmra.mrb[0].mxu0 %v6600
        %v6742 = vpop.f32.mrb[0].mxu0
        %v6743 = vadd.f32 %v6438, %v6742
        %v6744 = vpop.f32.mrb[0].mxu0
        %v6745 = vpop.f32.mrb[0].mxu0
        %v6746 = vadd.f32 %v6441, %v6745
        %v6747 = vpop.f32.mrb[0].mxu0
        %6748 = vmatprep.mubr.bf16.mxu0 0
        %6749 = vmatmul.mubr.bf16.gmra.mrb[0].mxu0 %v6601
        %v6750 = vpop.f32.mrb[0].mxu0
        %v6751 = vadd.f32 %v6446, %v6750
        %v6752 = vpop.f32.mrb[0].mxu0
        %v6753 = vpop.f32.mrb[0].mxu0
        %v6754 = vadd.f32 %v6449, %v6753
        %v6755 = vpop.f32.mrb[0].mxu0
        %6756 = vmatprep.mubr.bf16.mxu0 0
        %6757 = vmatmul.mubr.bf16.gmra.mrb[0].mxu0 %v6602
        %v6758 = vpop.f32.mrb[0].mxu0
        %v6759 = vadd.f32 %v6454, %v6758
        %v6760 = vpop.f32.mrb[0].mxu0
        %v6761 = vpop.f32.mrb[0].mxu0
        %v6762 = vadd.f32 %v6457, %v6761
        %v6763 = vpop.f32.mrb[0].mxu0
        %6764 = vmatprep.mubr.bf16.mxu0 0
        %6765 = vmatmul.mubr.bf16.gmra.mrb[0].mxu0 %v6603
        %v6766 = vpop.f32.mrb[0].mxu0
        %v6767 = vadd.f32 %v6462, %v6766
        %v6768 = vpop.f32.mrb[0].mxu0
        %v6769 = vpop.f32.mrb[0].mxu0
        %v6770 = vadd.f32 %v6465, %v6769
        %v6771 = vpop.f32.mrb[0].mxu0
        %6772 = vmatprep.mubr.bf16.mxu0 0
        %6773 = vmatmul.mubr.bf16.gmra.mrb[0].mxu0 %v6604
        %v6774 = vpop.f32.mrb[0].mxu0
        %v6775 = vadd.f32 %v6470, %v6774
        %v6776 = vpop.f32.mrb[0].mxu0
        %v6777 = vpop.f32.mrb[0].mxu0
        %v6778 = vadd.f32 %v6473, %v6777
        %v6779 = vpop.f32.mrb[0].mxu0
        %6780 = vmatprep.mubr.bf16.mxu0 0
        %6781 = vmatmul.mubr.bf16.gmra.mrb[0].mxu0 %v6605
        %v6782 = vpop.f32.mrb[0].mxu0
        %v6783 = vadd.f32 %v6478, %v6782
        %v6784 = vpop.f32.mrb[0].mxu0
        %v6785 = vpop.f32.mrb[0].mxu0
        %v6786 = vadd.f32 %v6481, %v6785
        %v6787 = vpop.f32.mrb[0].mxu0
        %6788 = vmatprep.mubr.bf16.mxu0 0
        %6789 = vmatmul.mubr.bf16.gmra.mrb[0].mxu0 %v6606
        %v6790 = vpop.f32.mrb[0].mxu0
        %v6791 = vadd.f32 %v6486, %v6790
        %v6792 = vpop.f32.mrb[0].mxu0
        %v6793 = vpop.f32.mrb[0].mxu0
        %v6794 = vadd.f32 %v6489, %v6793
        %v6795 = vpop.f32.mrb[0].mxu0
        %6796 = vmatprep.mubr.bf16.mxu0 0
        %6797 = vmatmul.mubr.bf16.gmra.mrb[0].mxu0 %v6607
        %v6798 = vpop.f32.mrb[0].mxu0
        %v6799 = vadd.f32 %v6494, %v6798
        %v6800 = vpop.f32.mrb[0].mxu0
        %v6801 = vpop.f32.mrb[0].mxu0
        %v6802 = vadd.f32 %v6497, %v6801
        %v6803 = vpop.f32.mrb[0].mxu0
        %6804 = vmatprep.mubr.bf16.mxu0 0
        %6805 = vmatmul.mubr.bf16.gmra.mrb[0].mxu0 %v6608
        %v6806 = vpop.f32.mrb[0].mxu0
        %v6807 = vadd.f32 %v6502, %v6806
        %v6808 = vpop.f32.mrb[0].mxu0
        %v6809 = vpop.f32.mrb[0].mxu0
        %v6810 = vadd.f32 %v6505, %v6809
        %v6811 = vpop.f32.mrb[0].mxu0
        %6812 = vmatprep.mubr.bf16.mxu0 0
        %6813 = vmatmul.mubr.bf16.gmra.mrb[0].mxu0 %v6609
        %v6814 = vpop.f32.mrb[0].mxu0
        %v6815 = vadd.f32 %v6510, %v6814
        %v6816 = vpop.f32.mrb[0].mxu0
        %v6817 = vpop.f32.mrb[0].mxu0
        %v6818 = vadd.f32 %v6513, %v6817
        %v6819 = vpop.f32.mrb[0].mxu0
        %6820 = vmatprep.mubr.bf16.mxu0 0
        %6821 = vmatmul.mubr.bf16.gmra.mrb[0].mxu0 %v6610
        %v6822 = vpop.f32.mrb[0].mxu0
        %v6823 = vadd.f32 %v6518, %v6822
        %v6824 = vpop.f32.mrb[0].mxu0
        %v6825 = vpop.f32.mrb[0].mxu0
        %v6826 = vadd.f32 %v6521, %v6825
        %v6827 = vpop.f32.mrb[0].mxu0
        %6828 = vmatprep.mubr.bf16.mxu0 0
        %6829 = vmatmul.mubr.bf16.gmra.mrb[0].mxu0 %v6611
        %v6830 = vpop.f32.mrb[0].mxu0
        %v6831 = vadd.f32 %v6526, %v6830
        %v6832 = vpop.f32.mrb[0].mxu0
        %v6833 = vpop.f32.mrb[0].mxu0
        %v6834 = vadd.f32 %v6529, %v6833
        %v6835 = vpop.f32.mrb[0].mxu0
        %6836 = vdwg.mxu0
        %v6837 = vld [vmem:[#allocation2] sm:$0xe]
        %v6838 = vld [vmem:[#allocation2 + $0xc] sm:$0xe]
        %v6839 = vld [vmem:[#allocation2 + $0x18] sm:$0xe]
        %v6840 = vld [vmem:[#allocation2 + $0x24] sm:$0xe]
        %v6841 = vld [vmem:[#allocation2 + $0x30] sm:$0xe]
        %v6842 = vld [vmem:[#allocation2 + $0x3c] sm:$0xe]
        %v6843 = vld [vmem:[#allocation2 + $0x48] sm:$0xe]
        %v6844 = vld [vmem:[#allocation2 + $0x54] sm:$0xe]
        %v6845 = vld [vmem:[#allocation2 + $0x60] sm:$0xe]
        %v6846 = vld [vmem:[#allocation2 + $0x6c] sm:$0xe]
        %v6847 = vld [vmem:[#allocation2 + $0x78] sm:$0xe]
        %v6848 = vld [vmem:[#allocation2 + $0x84] sm:$0xe]
        %v6849 = vld [vmem:[#allocation2 + $0x90] sm:$0xe]
        %v6850 = vld [vmem:[#allocation2 + $0x9c] sm:$0xe]
        %v6851 = vld [vmem:[#allocation2 + $0xa8] sm:$0xe]
        %v6852 = vld [vmem:[#allocation2 + $0xb4] sm:$0xe]
        %v6885 = vrot.slane %v6837, 5
        %v6886 = vrot.slane %v6885, 4
        %v6887 = vrot.slane %v5795, 5
        %v6888 = vsel %vm1352, %v6886, %v6887
        %v6889 = vrot.slane %v6887, 4
        %v6890 = vrot.slane %v5842, 5
        %v6891 = vsel %vm1352, %v6889, %v6890
        %v6892 = vrot.slane %v6838, 5
        %v6893 = vrot.slane %v6892, 4
        %v6894 = vrot.slane %v5797, 5
        %v6895 = vsel %vm1352, %v6893, %v6894
        %v6896 = vrot.slane %v6894, 4
        %v6897 = vrot.slane %v5843, 5
        %v6898 = vsel %vm1352, %v6896, %v6897
        %v6899 = vrot.slane %v6839, 5
        %v6900 = vrot.slane %v6899, 4
        %v6901 = vrot.slane %v5799, 5
        %v6902 = vsel %vm1352, %v6900, %v6901
        %v6903 = vrot.slane %v6901, 4
        %v6904 = vrot.slane %v5844, 5
        %v6905 = vsel %vm1352, %v6903, %v6904
        %v6906 = vrot.slane %v6840, 5
        %v6907 = vrot.slane %v6906, 4
        %v6908 = vrot.slane %v5801, 5
        %v6909 = vsel %vm1352, %v6907, %v6908
        %v6910 = vrot.slane %v6908, 4
        %v6911 = vrot.slane %v5845, 5
        %v6912 = vsel %vm1352, %v6910, %v6911
        %v6913 = vrot.slane %v6841, 5
        %v6914 = vrot.slane %v6913, 4
        %v6915 = vrot.slane %v5803, 5
        %v6916 = vsel %vm1352, %v6914, %v6915
        %v6917 = vrot.slane %v6915, 4
        %v6918 = vrot.slane %v5846, 5
        %v6919 = vsel %vm1352, %v6917, %v6918
        %v6920 = vrot.slane %v6842, 5
        %v6921 = vrot.slane %v6920, 4
        %v6922 = vrot.slane %v5805, 5
        %v6923 = vsel %vm1352, %v6921, %v6922
        %v6924 = vrot.slane %v6922, 4
        %v6925 = vrot.slane %v5847, 5
        %v6926 = vsel %vm1352, %v6924, %v6925
        %v6927 = vrot.slane %v6843, 5
        %v6928 = vrot.slane %v6927, 4
        %v6929 = vrot.slane %v5807, 5
        %v6930 = vsel %vm1352, %v6928, %v6929
        %v6931 = vrot.slane %v6929, 4
        %v6932 = vrot.slane %v5848, 5
        %v6933 = vsel %vm1352, %v6931, %v6932
        %v6934 = vrot.slane %v6844, 5
        %v6935 = vrot.slane %v6934, 4
        %v6936 = vrot.slane %v5809, 5
        %v6937 = vsel %vm1352, %v6935, %v6936
        %v6938 = vrot.slane %v6936, 4
        %v6939 = vrot.slane %v5849, 5
        %v6940 = vsel %vm1352, %v6938, %v6939
        %v6941 = vrot.slane %v6845, 5
        %v6942 = vrot.slane %v6941, 4
        %v6943 = vrot.slane %v5811, 5
        %v6944 = vsel %vm1352, %v6942, %v6943
        %v6945 = vrot.slane %v6943, 4
        %v6946 = vrot.slane %v5850, 5
        %v6947 = vsel %vm1352, %v6945, %v6946
        %v6948 = vrot.slane %v6846, 5
        %v6949 = vrot.slane %v6948, 4
        %v6950 = vrot.slane %v5813, 5
        %v6951 = vsel %vm1352, %v6949, %v6950
        %v6952 = vrot.slane %v6950, 4
        %v6953 = vrot.slane %v5851, 5
        %v6954 = vsel %vm1352, %v6952, %v6953
        %v6955 = vrot.slane %v6847, 5
        %v6956 = vrot.slane %v6955, 4
        %v6957 = vrot.slane %v5815, 5
        %v6958 = vsel %vm1352, %v6956, %v6957
        %v6959 = vrot.slane %v6957, 4
        %v6960 = vrot.slane %v5852, 5
        %v6961 = vsel %vm1352, %v6959, %v6960
        %v6962 = vrot.slane %v6848, 5
        %v6963 = vrot.slane %v6962, 4
        %v6964 = vrot.slane %v5817, 5
        %v6965 = vsel %vm1352, %v6963, %v6964
        %v6966 = vrot.slane %v6964, 4
        %v6967 = vrot.slane %v5853, 5
        %v6968 = vsel %vm1352, %v6966, %v6967
        %v6969 = vrot.slane %v6849, 5
        %v6970 = vrot.slane %v6969, 4
        %v6971 = vrot.slane %v5819, 5
        %v6972 = vsel %vm1352, %v6970, %v6971
        %v6973 = vrot.slane %v6971, 4
        %v6974 = vrot.slane %v5854, 5
        %v6975 = vsel %vm1352, %v6973, %v6974
        %v6976 = vrot.slane %v6850, 5
        %v6977 = vrot.slane %v6976, 4
        %v6978 = vrot.slane %v5821, 5
        %v6979 = vsel %vm1352, %v6977, %v6978
        %v6980 = vrot.slane %v6978, 4
        %v6981 = vrot.slane %v5855, 5
        %v6982 = vsel %vm1352, %v6980, %v6981
        %v6983 = vrot.slane %v6851, 5
        %v6984 = vrot.slane %v6983, 4
        %v6985 = vrot.slane %v5823, 5
        %v6986 = vsel %vm1352, %v6984, %v6985
        %v6987 = vrot.slane %v6985, 4
        %v6988 = vrot.slane %v5856, 5
        %v6989 = vsel %vm1352, %v6987, %v6988
        %v6990 = vrot.slane %v6852, 5
        %v6991 = vrot.slane %v6990, 4
        %v6992 = vrot.slane %v5825, 5
        %v6993 = vsel %vm1352, %v6991, %v6992
        %v6994 = vrot.slane %v6992, 4
        %v6995 = vrot.slane %v5857, 5
        %v6996 = vsel %vm1352, %v6994, %v6995
        %s6997 = scalar_lea.vmem [#allocation3], 128
        %v6998 = vld [vmem:[%s6997] sm:$0xf]
        %v6999 = vld [vmem:[%s6997 + $0x4] sm:$0xf]
        %v7000 = vld [vmem:[%s6997 + $0x8] sm:$0xf]
        %v7001 = vld [vmem:[%s6997 + $0xc] sm:$0xf]
        %v7002 = vld [vmem:[%s6997 + $0x10] sm:$0xf]
        %v7003 = vld [vmem:[%s6997 + $0x14] sm:$0xf]
        %v7004 = vld [vmem:[%s6997 + $0x18] sm:$0xf]
        %v7005 = vld [vmem:[%s6997 + $0x1c] sm:$0xf]
        %v7006 = vld [vmem:[%s6997 + $0x20] sm:$0xf]
        %v7007 = vld [vmem:[%s6997 + $0x24] sm:$0xf]
        %v7008 = vld [vmem:[%s6997 + $0x28] sm:$0xf]
        %v7009 = vld [vmem:[%s6997 + $0x2c] sm:$0xf]
        %v7010 = vld [vmem:[%s6997 + $0x30] sm:$0xf]
        %v7011 = vld [vmem:[%s6997 + $0x34] sm:$0xf]
        %v7012 = vld [vmem:[%s6997 + $0x38] sm:$0xf]
        %v7013 = vld [vmem:[%s6997 + $0x3c] sm:$0xf]
        %v7014 = vunpack.c.l.b16 %v6888
        %v7015 = vunpack.c.l.b16 %v6891
        %v7016 = vunpack.c.l.b16 %v6895
        %v7017 = vunpack.c.l.b16 %v6898
        %v7018 = vunpack.c.l.b16 %v6902
        %v7019 = vunpack.c.l.b16 %v6905
        %v7020 = vunpack.c.l.b16 %v6909
        %v7021 = vunpack.c.l.b16 %v6912
        %v7022 = vunpack.c.l.b16 %v6916
        %v7023 = vunpack.c.l.b16 %v6919
        %v7024 = vunpack.c.l.b16 %v6923
        %v7025 = vunpack.c.l.b16 %v6926
        %v7026 = vunpack.c.l.b16 %v6930
        %v7027 = vunpack.c.l.b16 %v6933
        %v7028 = vunpack.c.l.b16 %v6937
        %v7029 = vunpack.c.l.b16 %v6940
        %v7030 = vunpack.c.l.b16 %v6944
        %v7031 = vunpack.c.l.b16 %v6947
        %v7032 = vunpack.c.l.b16 %v6951
        %v7033 = vunpack.c.l.b16 %v6954
        %v7034 = vunpack.c.l.b16 %v6958
        %v7035 = vunpack.c.l.b16 %v6961
        %v7036 = vunpack.c.l.b16 %v6965
        %v7037 = vunpack.c.l.b16 %v6968
        %v7038 = vunpack.c.l.b16 %v6972
        %v7039 = vunpack.c.l.b16 %v6975
        %v7040 = vunpack.c.l.b16 %v6979
        %v7041 = vunpack.c.l.b16 %v6982
        %v7042 = vunpack.c.l.b16 %v6986
        %v7043 = vunpack.c.l.b16 %v6989
        %v7044 = vunpack.c.l.b16 %v6993
        %v7045 = vunpack.c.l.b16 %v6996
        %v7046 = vpack.c.b16 %v7015, %v7014
        %v7047 = vpack.c.b16 %v7017, %v7016
        %v7048 = vpack.c.b16 %v7019, %v7018
        %v7049 = vpack.c.b16 %v7021, %v7020
        %v7050 = vpack.c.b16 %v7023, %v7022
        %v7051 = vpack.c.b16 %v7025, %v7024
        %v7052 = vpack.c.b16 %v7027, %v7026
        %v7053 = vpack.c.b16 %v7029, %v7028
        %v7054 = vpack.c.b16 %v7031, %v7030
        %v7055 = vpack.c.b16 %v7033, %v7032
        %v7056 = vpack.c.b16 %v7035, %v7034
        %v7057 = vpack.c.b16 %v7037, %v7036
        %v7058 = vpack.c.b16 %v7039, %v7038
        %v7059 = vpack.c.b16 %v7041, %v7040
        %v7060 = vpack.c.b16 %v7043, %v7042
        %v7061 = vpack.c.b16 %v7045, %v7044
        %v7094 = vunpack.c.l.b16 %v6998
        %v7095 = vunpack.c.l.b16 %v6999
        %v7096 = vunpack.c.l.b16 %v7000
        %v7097 = vunpack.c.l.b16 %v7001
        %v7098 = vunpack.c.l.b16 %v7002
        %v7099 = vunpack.c.l.b16 %v7003
        %v7100 = vunpack.c.l.b16 %v7004
        %v7101 = vunpack.c.l.b16 %v7005
        %v7102 = vunpack.c.l.b16 %v7006
        %v7103 = vunpack.c.l.b16 %v7007
        %v7104 = vunpack.c.l.b16 %v7008
        %v7105 = vunpack.c.l.b16 %v7009
        %v7106 = vunpack.c.l.b16 %v7010
        %v7107 = vunpack.c.l.b16 %v7011
        %v7108 = vunpack.c.l.b16 %v7012
        %v7109 = vunpack.c.l.b16 %v7013
        %v7110 = vpack.c.b16 %v7095, %v7094
        %v7111 = vpack.c.b16 %v7097, %v7096
        %v7112 = vpack.c.b16 %v7099, %v7098
        %v7113 = vpack.c.b16 %v7101, %v7100
        %v7114 = vpack.c.b16 %v7103, %v7102
        %v7115 = vpack.c.b16 %v7105, %v7104
        %v7116 = vpack.c.b16 %v7107, %v7106
        %v7117 = vpack.c.b16 %v7109, %v7108
        %7126 = vmatprep.subr.bf16.mxu0 0
        %7127 = vmatpush1.bf16.msra.mxu0 %v7110
        %7128 = vmatprep.subr.bf16.mxu0 0
        %7129 = vmatpush1.bf16.msra.mxu0 %v7111
        %7130 = vmatprep.subr.bf16.mxu0 0
        %7131 = vmatpush1.bf16.msra.mxu0 %v7112
        %7132 = vmatprep.subr.bf16.mxu0 0
        %7133 = vmatpush1.bf16.msra.mxu0 %v7113
        %7134 = vmatprep.subr.bf16.mxu0 0
        %7135 = vmatpush1.bf16.msra.mxu0 %v7114
        %7136 = vmatprep.subr.bf16.mxu0 0
        %7137 = vmatpush1.bf16.msra.mxu0 %v7115
        %7138 = vmatprep.subr.bf16.mxu0 0
        %7139 = vmatpush1.bf16.msra.mxu0 %v7116
        %7140 = vmatprep.subr.bf16.mxu0 0
        %7141 = vmatpush1.bf16.msra.mxu0 %v7117
        %7142 = vmatprep.subr.bf16.mxu0 0
        %7143 = vmatpush1.bf16.msra.mxu0 0
        %7144 = vmatprep.subr.bf16.mxu0 0
        %7145 = vmatpush1.bf16.msra.mxu0 0
        %7146 = vmatprep.subr.bf16.mxu0 0
        %7147 = vmatpush1.bf16.msra.mxu0 0
        %7148 = vmatprep.subr.bf16.mxu0 0
        %7149 = vmatpush1.bf16.msra.mxu0 0
        %7150 = vmatprep.subr.bf16.mxu0 0
        %7151 = vmatpush1.bf16.msra.mxu0 0
        %7152 = vmatprep.subr.bf16.mxu0 0
        %7153 = vmatpush1.bf16.msra.mxu0 0
        %7154 = vmatprep.subr.bf16.mxu0 0
        %7155 = vmatpush1.bf16.msra.mxu0 0
        %7156 = vmatprep.subr.bf16.mxu0 0
        %7157 = vmatpush1.bf16.msra.mxu0 0
        %7158 = vmatprep.mubr.bf16.mxu0 0
        %7159 = vmatmul.mubr.bf16.gmra.mrb[0].mxu0 %v7046
        %v7160 = vpop.f32.mrb[0].mxu0
        %v7161 = vadd.f32 0.0, %v7160
        %v7162 = vpop.f32.mrb[0].mxu0
        %v7163 = vpop.f32.mrb[0].mxu0
        %v7164 = vadd.f32 0.0, %v7163
        %v7165 = vpop.f32.mrb[0].mxu0
        %7166 = vmatprep.mubr.bf16.mxu0 0
        %7167 = vmatmul.mubr.bf16.gmra.mrb[0].mxu0 %v7047
        %v7168 = vpop.f32.mrb[0].mxu0
        %v7169 = vadd.f32 0.0, %v7168
        %v7170 = vpop.f32.mrb[0].mxu0
        %v7171 = vpop.f32.mrb[0].mxu0
        %v7172 = vadd.f32 0.0, %v7171
        %v7173 = vpop.f32.mrb[0].mxu0
        %7174 = vmatprep.mubr.bf16.mxu0 0
        %7175 = vmatmul.mubr.bf16.gmra.mrb[0].mxu0 %v7048
        %v7176 = vpop.f32.mrb[0].mxu0
        %v7177 = vadd.f32 0.0, %v7176
        %v7178 = vpop.f32.mrb[0].mxu0
        %v7179 = vpop.f32.mrb[0].mxu0
        %v7180 = vadd.f32 0.0, %v7179
        %v7181 = vpop.f32.mrb[0].mxu0
        %7182 = vmatprep.mubr.bf16.mxu0 0
        %7183 = vmatmul.mubr.bf16.gmra.mrb[0].mxu0 %v7049
        %v7184 = vpop.f32.mrb[0].mxu0
        %v7185 = vadd.f32 0.0, %v7184
        %v7186 = vpop.f32.mrb[0].mxu0
        %v7187 = vpop.f32.mrb[0].mxu0
        %v7188 = vadd.f32 0.0, %v7187
        %v7189 = vpop.f32.mrb[0].mxu0
        %7190 = vmatprep.mubr.bf16.mxu0 0
        %7191 = vmatmul.mubr.bf16.gmra.mrb[0].mxu0 %v7050
        %v7192 = vpop.f32.mrb[0].mxu0
        %v7193 = vadd.f32 0.0, %v7192
        %v7194 = vpop.f32.mrb[0].mxu0
        %v7195 = vpop.f32.mrb[0].mxu0
        %v7196 = vadd.f32 0.0, %v7195
        %v7197 = vpop.f32.mrb[0].mxu0
        %7198 = vmatprep.mubr.bf16.mxu0 0
        %7199 = vmatmul.mubr.bf16.gmra.mrb[0].mxu0 %v7051
        %v7200 = vpop.f32.mrb[0].mxu0
        %v7201 = vadd.f32 0.0, %v7200
        %v7202 = vpop.f32.mrb[0].mxu0
        %v7203 = vpop.f32.mrb[0].mxu0
        %v7204 = vadd.f32 0.0, %v7203
        %v7205 = vpop.f32.mrb[0].mxu0
        %7206 = vmatprep.mubr.bf16.mxu0 0
        %7207 = vmatmul.mubr.bf16.gmra.mrb[0].mxu0 %v7052
        %v7208 = vpop.f32.mrb[0].mxu0
        %v7209 = vadd.f32 0.0, %v7208
        %v7210 = vpop.f32.mrb[0].mxu0
        %v7211 = vpop.f32.mrb[0].mxu0
        %v7212 = vadd.f32 0.0, %v7211
        %v7213 = vpop.f32.mrb[0].mxu0
        %7214 = vmatprep.mubr.bf16.mxu0 0
        %7215 = vmatmul.mubr.bf16.gmra.mrb[0].mxu0 %v7053
        %v7216 = vpop.f32.mrb[0].mxu0
        %v7217 = vadd.f32 0.0, %v7216
        %v7218 = vpop.f32.mrb[0].mxu0
        %v7219 = vpop.f32.mrb[0].mxu0
        %v7220 = vadd.f32 0.0, %v7219
        %v7221 = vpop.f32.mrb[0].mxu0
        %7222 = vmatprep.mubr.bf16.mxu0 0
        %7223 = vmatmul.mubr.bf16.gmra.mrb[0].mxu0 %v7054
        %v7224 = vpop.f32.mrb[0].mxu0
        %v7225 = vadd.f32 0.0, %v7224
        %v7226 = vpop.f32.mrb[0].mxu0
        %v7227 = vpop.f32.mrb[0].mxu0
        %v7228 = vadd.f32 0.0, %v7227
        %v7229 = vpop.f32.mrb[0].mxu0
        %7230 = vmatprep.mubr.bf16.mxu0 0
        %7231 = vmatmul.mubr.bf16.gmra.mrb[0].mxu0 %v7055
        %v7232 = vpop.f32.mrb[0].mxu0
        %v7233 = vadd.f32 0.0, %v7232
        %v7234 = vpop.f32.mrb[0].mxu0
        %v7235 = vpop.f32.mrb[0].mxu0
        %v7236 = vadd.f32 0.0, %v7235
        %v7237 = vpop.f32.mrb[0].mxu0
        %7238 = vmatprep.mubr.bf16.mxu0 0
        %7239 = vmatmul.mubr.bf16.gmra.mrb[0].mxu0 %v7056
        %v7240 = vpop.f32.mrb[0].mxu0
        %v7241 = vadd.f32 0.0, %v7240
        %v7242 = vpop.f32.mrb[0].mxu0
        %v7243 = vpop.f32.mrb[0].mxu0
        %v7244 = vadd.f32 0.0, %v7243
        %v7245 = vpop.f32.mrb[0].mxu0
        %7246 = vmatprep.mubr.bf16.mxu0 0
        %7247 = vmatmul.mubr.bf16.gmra.mrb[0].mxu0 %v7057
        %v7248 = vpop.f32.mrb[0].mxu0
        %v7249 = vadd.f32 0.0, %v7248
        %v7250 = vpop.f32.mrb[0].mxu0
        %v7251 = vpop.f32.mrb[0].mxu0
        %v7252 = vadd.f32 0.0, %v7251
        %v7253 = vpop.f32.mrb[0].mxu0
        %7254 = vmatprep.mubr.bf16.mxu0 0
        %7255 = vmatmul.mubr.bf16.gmra.mrb[0].mxu0 %v7058
        %v7256 = vpop.f32.mrb[0].mxu0
        %v7257 = vadd.f32 0.0, %v7256
        %v7258 = vpop.f32.mrb[0].mxu0
        %v7259 = vpop.f32.mrb[0].mxu0
        %v7260 = vadd.f32 0.0, %v7259
        %v7261 = vpop.f32.mrb[0].mxu0
        %7262 = vmatprep.mubr.bf16.mxu0 0
        %7263 = vmatmul.mubr.bf16.gmra.mrb[0].mxu0 %v7059
        %v7264 = vpop.f32.mrb[0].mxu0
        %v7265 = vadd.f32 0.0, %v7264
        %v7266 = vpop.f32.mrb[0].mxu0
        %v7267 = vpop.f32.mrb[0].mxu0
        %v7268 = vadd.f32 0.0, %v7267
        %v7269 = vpop.f32.mrb[0].mxu0
        %7270 = vmatprep.mubr.bf16.mxu0 0
        %7271 = vmatmul.mubr.bf16.gmra.mrb[0].mxu0 %v7060
        %v7272 = vpop.f32.mrb[0].mxu0
        %v7273 = vadd.f32 0.0, %v7272
        %v7274 = vpop.f32.mrb[0].mxu0
        %v7275 = vpop.f32.mrb[0].mxu0
        %v7276 = vadd.f32 0.0, %v7275
        %v7277 = vpop.f32.mrb[0].mxu0
        %7278 = vmatprep.mubr.bf16.mxu0 0
        %7279 = vmatmul.mubr.bf16.gmra.mrb[0].mxu0 %v7061
        %v7280 = vpop.f32.mrb[0].mxu0
        %v7281 = vadd.f32 0.0, %v7280
        %v7282 = vpop.f32.mrb[0].mxu0
        %v7283 = vpop.f32.mrb[0].mxu0
        %v7284 = vadd.f32 0.0, %v7283
        %v7285 = vpop.f32.mrb[0].mxu0
        %7286 = vdwg.mxu0
        %v7287 = vadd.f32 %v6711, %v7161
        %v7288 = vadd.f32 %v6714, %v7164
        %v7289 = vadd.f32 %v6719, %v7169
        %v7290 = vadd.f32 %v6722, %v7172
        %v7291 = vadd.f32 %v6727, %v7177
        %v7292 = vadd.f32 %v6730, %v7180
        %v7293 = vadd.f32 %v6735, %v7185
        %v7294 = vadd.f32 %v6738, %v7188
        %v7295 = vadd.f32 %v6743, %v7193
        %v7296 = vadd.f32 %v6746, %v7196
        %v7297 = vadd.f32 %v6751, %v7201
        %v7298 = vadd.f32 %v6754, %v7204
        %v7299 = vadd.f32 %v6759, %v7209
        %v7300 = vadd.f32 %v6762, %v7212
        %v7301 = vadd.f32 %v6767, %v7217
        %v7302 = vadd.f32 %v6770, %v7220
        %v7303 = vadd.f32 %v6775, %v7225
        %v7304 = vadd.f32 %v6778, %v7228
        %v7305 = vadd.f32 %v6783, %v7233
        %v7306 = vadd.f32 %v6786, %v7236
        %v7307 = vadd.f32 %v6791, %v7241
        %v7308 = vadd.f32 %v6794, %v7244
        %v7309 = vadd.f32 %v6799, %v7249
        %v7310 = vadd.f32 %v6802, %v7252
        %v7311 = vadd.f32 %v6807, %v7257
        %v7312 = vadd.f32 %v6810, %v7260
        %v7313 = vadd.f32 %v6815, %v7265
        %v7314 = vadd.f32 %v6818, %v7268
        %v7315 = vadd.f32 %v6823, %v7273
        %v7316 = vadd.f32 %v6826, %v7276
        %v7317 = vadd.f32 %v6831, %v7281
        %v7318 = vadd.f32 %v6834, %v7284
        %v7319 = vld [vmem:[%s5676] sm:$0xf]
        %v7320 = vld [vmem:[%s5676 + $0x4] sm:$0xf]
        %v7321 = vld [vmem:[%s5676 + $0xc] sm:$0xf]
        %v7322 = vld [vmem:[%s5676 + $0x10] sm:$0xf]
        %v7323 = vld [vmem:[%s5676 + $0x18] sm:$0xf]
        %v7324 = vld [vmem:[%s5676 + $0x1c] sm:$0xf]
        %v7325 = vld [vmem:[%s5676 + $0x24] sm:$0xf]
        %v7326 = vld [vmem:[%s5676 + $0x28] sm:$0xf]
        %v7327 = vld [vmem:[%s5676 + $0x30] sm:$0xf]
        %v7328 = vld [vmem:[%s5676 + $0x34] sm:$0xf]
        %v7329 = vld [vmem:[%s5676 + $0x3c] sm:$0xf]
        %v7330 = vld [vmem:[%s5676 + $0x40] sm:$0xf]
        %v7331 = vld [vmem:[%s5676 + $0x48] sm:$0xf]
        %v7332 = vld [vmem:[%s5676 + $0x4c] sm:$0xf]
        %v7333 = vld [vmem:[%s5676 + $0x54] sm:$0xf]
        %v7334 = vld [vmem:[%s5676 + $0x58] sm:$0xf]
        %v7335 = vld [vmem:[%s5676 + $0x60] sm:$0xf]
        %v7336 = vld [vmem:[%s5676 + $0x64] sm:$0xf]
        %v7337 = vld [vmem:[%s5676 + $0x6c] sm:$0xf]
        %v7338 = vld [vmem:[%s5676 + $0x70] sm:$0xf]
        %v7339 = vld [vmem:[%s5676 + $0x78] sm:$0xf]
        %v7340 = vld [vmem:[%s5676 + $0x7c] sm:$0xf]
        %v7341 = vld [vmem:[%s5676 + $0x84] sm:$0xf]
        %v7342 = vld [vmem:[%s5676 + $0x88] sm:$0xf]
        %v7343 = vld [vmem:[%s5676 + $0x90] sm:$0xf]
        %v7344 = vld [vmem:[%s5676 + $0x94] sm:$0xf]
        %v7345 = vld [vmem:[%s5676 + $0x9c] sm:$0xf]
        %v7346 = vld [vmem:[%s5676 + $0xa0] sm:$0xf]
        %v7347 = vld [vmem:[%s5676 + $0xa8] sm:$0xf]
        %v7348 = vld [vmem:[%s5676 + $0xac] sm:$0xf]
        %v7349 = vld [vmem:[%s5676 + $0xb4] sm:$0xf]
        %v7350 = vld [vmem:[%s5676 + $0xb8] sm:$0xf]
        %s7351 = scalar_lea.vmem [#allocation3], 192
        %v7352 = vld [vmem:[%s7351] sm:$0xf]
        %v7353 = vld [vmem:[%s7351 + $0x4] sm:$0xf]
        %v7354 = vld [vmem:[%s7351 + $0x8] sm:$0xf]
        %v7355 = vld [vmem:[%s7351 + $0xc] sm:$0xf]
        %v7356 = vld [vmem:[%s7351 + $0x10] sm:$0xf]
        %v7357 = vld [vmem:[%s7351 + $0x14] sm:$0xf]
        %v7358 = vld [vmem:[%s7351 + $0x18] sm:$0xf]
        %v7359 = vld [vmem:[%s7351 + $0x1c] sm:$0xf]
        %v7360 = vld [vmem:[%s7351 + $0x20] sm:$0xf]
        %v7361 = vld [vmem:[%s7351 + $0x24] sm:$0xf]
        %v7362 = vld [vmem:[%s7351 + $0x28] sm:$0xf]
        %v7363 = vld [vmem:[%s7351 + $0x2c] sm:$0xf]
        %v7364 = vld [vmem:[%s7351 + $0x30] sm:$0xf]
        %v7365 = vld [vmem:[%s7351 + $0x34] sm:$0xf]
        %v7366 = vld [vmem:[%s7351 + $0x38] sm:$0xf]
        %v7367 = vld [vmem:[%s7351 + $0x3c] sm:$0xf]
        %v7400 = vunpack.c.l.b16 %v7319
        %v7401 = vunpack.c.l.b16 %v7320
        %v7402 = vunpack.c.l.b16 %v7321
        %v7403 = vunpack.c.l.b16 %v7322
        %v7404 = vunpack.c.l.b16 %v7323
        %v7405 = vunpack.c.l.b16 %v7324
        %v7406 = vunpack.c.l.b16 %v7325
        %v7407 = vunpack.c.l.b16 %v7326
        %v7408 = vunpack.c.l.b16 %v7327
        %v7409 = vunpack.c.l.b16 %v7328
        %v7410 = vunpack.c.l.b16 %v7329
        %v7411 = vunpack.c.l.b16 %v7330
        %v7412 = vunpack.c.l.b16 %v7331
        %v7413 = vunpack.c.l.b16 %v7332
        %v7414 = vunpack.c.l.b16 %v7333
        %v7415 = vunpack.c.l.b16 %v7334
        %v7416 = vunpack.c.l.b16 %v7335
        %v7417 = vunpack.c.l.b16 %v7336
        %v7418 = vunpack.c.l.b16 %v7337
        %v7419 = vunpack.c.l.b16 %v7338
        %v7420 = vunpack.c.l.b16 %v7339
        %v7421 = vunpack.c.l.b16 %v7340
        %v7422 = vunpack.c.l.b16 %v7341
        %v7423 = vunpack.c.l.b16 %v7342
        %v7424 = vunpack.c.l.b16 %v7343
        %v7425 = vunpack.c.l.b16 %v7344
        %v7426 = vunpack.c.l.b16 %v7345
        %v7427 = vunpack.c.l.b16 %v7346
        %v7428 = vunpack.c.l.b16 %v7347
        %v7429 = vunpack.c.l.b16 %v7348
        %v7430 = vunpack.c.l.b16 %v7349
        %v7431 = vunpack.c.l.b16 %v7350
        %v7432 = vpack.c.b16 %v7401, %v7400
        %v7433 = vpack.c.b16 %v7403, %v7402
        %v7434 = vpack.c.b16 %v7405, %v7404
        %v7435 = vpack.c.b16 %v7407, %v7406
        %v7436 = vpack.c.b16 %v7409, %v7408
        %v7437 = vpack.c.b16 %v7411, %v7410
        %v7438 = vpack.c.b16 %v7413, %v7412
        %v7439 = vpack.c.b16 %v7415, %v7414
        %v7440 = vpack.c.b16 %v7417, %v7416
        %v7441 = vpack.c.b16 %v7419, %v7418
        %v7442 = vpack.c.b16 %v7421, %v7420
        %v7443 = vpack.c.b16 %v7423, %v7422
        %v7444 = vpack.c.b16 %v7425, %v7424
        %v7445 = vpack.c.b16 %v7427, %v7426
        %v7446 = vpack.c.b16 %v7429, %v7428
        %v7447 = vpack.c.b16 %v7431, %v7430
        %v7480 = vunpack.c.l.b16 %v7352
        %v7481 = vunpack.c.l.b16 %v7353
        %v7482 = vunpack.c.l.b16 %v7354
        %v7483 = vunpack.c.l.b16 %v7355
        %v7484 = vunpack.c.l.b16 %v7356
        %v7485 = vunpack.c.l.b16 %v7357
        %v7486 = vunpack.c.l.b16 %v7358
        %v7487 = vunpack.c.l.b16 %v7359
        %v7488 = vunpack.c.l.b16 %v7360
        %v7489 = vunpack.c.l.b16 %v7361
        %v7490 = vunpack.c.l.b16 %v7362
        %v7491 = vunpack.c.l.b16 %v7363
        %v7492 = vunpack.c.l.b16 %v7364
        %v7493 = vunpack.c.l.b16 %v7365
        %v7494 = vunpack.c.l.b16 %v7366
        %v7495 = vunpack.c.l.b16 %v7367
        %v7496 = vpack.c.b16 %v7481, %v7480
        %v7497 = vpack.c.b16 %v7483, %v7482
        %v7498 = vpack.c.b16 %v7485, %v7484
        %v7499 = vpack.c.b16 %v7487, %v7486
        %v7500 = vpack.c.b16 %v7489, %v7488
        %v7501 = vpack.c.b16 %v7491, %v7490
        %v7502 = vpack.c.b16 %v7493, %v7492
        %v7503 = vpack.c.b16 %v7495, %v7494
        %7512 = vmatprep.subr.bf16.mxu0 0
        %7513 = vmatpush1.bf16.msra.mxu0 %v7496
        %7514 = vmatprep.subr.bf16.mxu0 0
        %7515 = vmatpush1.bf16.msra.mxu0 %v7497
        %7516 = vmatprep.subr.bf16.mxu0 0
        %7517 = vmatpush1.bf16.msra.mxu0 %v7498
        %7518 = vmatprep.subr.bf16.mxu0 0
        %7519 = vmatpush1.bf16.msra.mxu0 %v7499
        %7520 = vmatprep.subr.bf16.mxu0 0
        %7521 = vmatpush1.bf16.msra.mxu0 %v7500
        %7522 = vmatprep.subr.bf16.mxu0 0
        %7523 = vmatpush1.bf16.msra.mxu0 %v7501
        %7524 = vmatprep.subr.bf16.mxu0 0
        %7525 = vmatpush1.bf16.msra.mxu0 %v7502
        %7526 = vmatprep.subr.bf16.mxu0 0
        %7527 = vmatpush1.bf16.msra.mxu0 %v7503
        %7528 = vmatprep.subr.bf16.mxu0 0
        %7529 = vmatpush1.bf16.msra.mxu0 0
        %7530 = vmatprep.subr.bf16.mxu0 0
        %7531 = vmatpush1.bf16.msra.mxu0 0
        %7532 = vmatprep.subr.bf16.mxu0 0
        %7533 = vmatpush1.bf16.msra.mxu0 0
        %7534 = vmatprep.subr.bf16.mxu0 0
        %7535 = vmatpush1.bf16.msra.mxu0 0
        %7536 = vmatprep.subr.bf16.mxu0 0
        %7537 = vmatpush1.bf16.msra.mxu0 0
        %7538 = vmatprep.subr.bf16.mxu0 0
        %7539 = vmatpush1.bf16.msra.mxu0 0
        %7540 = vmatprep.subr.bf16.mxu0 0
        %7541 = vmatpush1.bf16.msra.mxu0 0
        %7542 = vmatprep.subr.bf16.mxu0 0
        %7543 = vmatpush1.bf16.msra.mxu0 0
        %7544 = vmatprep.mubr.bf16.mxu0 0
        %7545 = vmatmul.mubr.bf16.gmra.mrb[0].mxu0 %v7432
        %v7546 = vpop.f32.mrb[0].mxu0
        %v7547 = vadd.f32 0.0, %v7546
        %v7548 = vpop.f32.mrb[0].mxu0
        %v7549 = vpop.f32.mrb[0].mxu0
        %v7550 = vadd.f32 0.0, %v7549
        %v7551 = vpop.f32.mrb[0].mxu0
        %7552 = vmatprep.mubr.bf16.mxu0 0
        %7553 = vmatmul.mubr.bf16.gmra.mrb[0].mxu0 %v7433
        %v7554 = vpop.f32.mrb[0].mxu0
        %v7555 = vadd.f32 0.0, %v7554
        %v7556 = vpop.f32.mrb[0].mxu0
        %v7557 = vpop.f32.mrb[0].mxu0
        %v7558 = vadd.f32 0.0, %v7557
        %v7559 = vpop.f32.mrb[0].mxu0
        %7560 = vmatprep.mubr.bf16.mxu0 0
        %7561 = vmatmul.mubr.bf16.gmra.mrb[0].mxu0 %v7434
        %v7562 = vpop.f32.mrb[0].mxu0
        %v7563 = vadd.f32 0.0, %v7562
        %v7564 = vpop.f32.mrb[0].mxu0
        %v7565 = vpop.f32.mrb[0].mxu0
        %v7566 = vadd.f32 0.0, %v7565
        %v7567 = vpop.f32.mrb[0].mxu0
        %7568 = vmatprep.mubr.bf16.mxu0 0
        %7569 = vmatmul.mubr.bf16.gmra.mrb[0].mxu0 %v7435
        %v7570 = vpop.f32.mrb[0].mxu0
        %v7571 = vadd.f32 0.0, %v7570
        %v7572 = vpop.f32.mrb[0].mxu0
        %v7573 = vpop.f32.mrb[0].mxu0
        %v7574 = vadd.f32 0.0, %v7573
        %v7575 = vpop.f32.mrb[0].mxu0
        %7576 = vmatprep.mubr.bf16.mxu0 0
        %7577 = vmatmul.mubr.bf16.gmra.mrb[0].mxu0 %v7436
        %v7578 = vpop.f32.mrb[0].mxu0
        %v7579 = vadd.f32 0.0, %v7578
        %v7580 = vpop.f32.mrb[0].mxu0
        %v7581 = vpop.f32.mrb[0].mxu0
        %v7582 = vadd.f32 0.0, %v7581
        %v7583 = vpop.f32.mrb[0].mxu0
        %7584 = vmatprep.mubr.bf16.mxu0 0
        %7585 = vmatmul.mubr.bf16.gmra.mrb[0].mxu0 %v7437
        %v7586 = vpop.f32.mrb[0].mxu0
        %v7587 = vadd.f32 0.0, %v7586
        %v7588 = vpop.f32.mrb[0].mxu0
        %v7589 = vpop.f32.mrb[0].mxu0
        %v7590 = vadd.f32 0.0, %v7589
        %v7591 = vpop.f32.mrb[0].mxu0
        %7592 = vmatprep.mubr.bf16.mxu0 0
        %7593 = vmatmul.mubr.bf16.gmra.mrb[0].mxu0 %v7438
        %v7594 = vpop.f32.mrb[0].mxu0
        %v7595 = vadd.f32 0.0, %v7594
        %v7596 = vpop.f32.mrb[0].mxu0
        %v7597 = vpop.f32.mrb[0].mxu0
        %v7598 = vadd.f32 0.0, %v7597
        %v7599 = vpop.f32.mrb[0].mxu0
        %7600 = vmatprep.mubr.bf16.mxu0 0
        %7601 = vmatmul.mubr.bf16.gmra.mrb[0].mxu0 %v7439
        %v7602 = vpop.f32.mrb[0].mxu0
        %v7603 = vadd.f32 0.0, %v7602
        %v7604 = vpop.f32.mrb[0].mxu0
        %v7605 = vpop.f32.mrb[0].mxu0
        %v7606 = vadd.f32 0.0, %v7605
        %v7607 = vpop.f32.mrb[0].mxu0
        %7608 = vmatprep.mubr.bf16.mxu0 0
        %7609 = vmatmul.mubr.bf16.gmra.mrb[0].mxu0 %v7440
        %v7610 = vpop.f32.mrb[0].mxu0
        %v7611 = vadd.f32 0.0, %v7610
        %v7612 = vpop.f32.mrb[0].mxu0
        %v7613 = vpop.f32.mrb[0].mxu0
        %v7614 = vadd.f32 0.0, %v7613
        %v7615 = vpop.f32.mrb[0].mxu0
        %7616 = vmatprep.mubr.bf16.mxu0 0
        %7617 = vmatmul.mubr.bf16.gmra.mrb[0].mxu0 %v7441
        %v7618 = vpop.f32.mrb[0].mxu0
        %v7619 = vadd.f32 0.0, %v7618
        %v7620 = vpop.f32.mrb[0].mxu0
        %v7621 = vpop.f32.mrb[0].mxu0
        %v7622 = vadd.f32 0.0, %v7621
        %v7623 = vpop.f32.mrb[0].mxu0
        %7624 = vmatprep.mubr.bf16.mxu0 0
        %7625 = vmatmul.mubr.bf16.gmra.mrb[0].mxu0 %v7442
        %v7626 = vpop.f32.mrb[0].mxu0
        %v7627 = vadd.f32 0.0, %v7626
        %v7628 = vpop.f32.mrb[0].mxu0
        %v7629 = vpop.f32.mrb[0].mxu0
        %v7630 = vadd.f32 0.0, %v7629
        %v7631 = vpop.f32.mrb[0].mxu0
        %7632 = vmatprep.mubr.bf16.mxu0 0
        %7633 = vmatmul.mubr.bf16.gmra.mrb[0].mxu0 %v7443
        %v7634 = vpop.f32.mrb[0].mxu0
        %v7635 = vadd.f32 0.0, %v7634
        %v7636 = vpop.f32.mrb[0].mxu0
        %v7637 = vpop.f32.mrb[0].mxu0
        %v7638 = vadd.f32 0.0, %v7637
        %v7639 = vpop.f32.mrb[0].mxu0
        %7640 = vmatprep.mubr.bf16.mxu0 0
        %7641 = vmatmul.mubr.bf16.gmra.mrb[0].mxu0 %v7444
        %v7642 = vpop.f32.mrb[0].mxu0
        %v7643 = vadd.f32 0.0, %v7642
        %v7644 = vpop.f32.mrb[0].mxu0
        %v7645 = vpop.f32.mrb[0].mxu0
        %v7646 = vadd.f32 0.0, %v7645
        %v7647 = vpop.f32.mrb[0].mxu0
        %7648 = vmatprep.mubr.bf16.mxu0 0
        %7649 = vmatmul.mubr.bf16.gmra.mrb[0].mxu0 %v7445
        %v7650 = vpop.f32.mrb[0].mxu0
        %v7651 = vadd.f32 0.0, %v7650
        %v7652 = vpop.f32.mrb[0].mxu0
        %v7653 = vpop.f32.mrb[0].mxu0
        %v7654 = vadd.f32 0.0, %v7653
        %v7655 = vpop.f32.mrb[0].mxu0
        %7656 = vmatprep.mubr.bf16.mxu0 0
        %7657 = vmatmul.mubr.bf16.gmra.mrb[0].mxu0 %v7446
        %v7658 = vpop.f32.mrb[0].mxu0
        %v7659 = vadd.f32 0.0, %v7658
        %v7660 = vpop.f32.mrb[0].mxu0
        %v7661 = vpop.f32.mrb[0].mxu0
        %v7662 = vadd.f32 0.0, %v7661
        %v7663 = vpop.f32.mrb[0].mxu0
        %7664 = vmatprep.mubr.bf16.mxu0 0
        %7665 = vmatmul.mubr.bf16.gmra.mrb[0].mxu0 %v7447
        %v7666 = vpop.f32.mrb[0].mxu0
        %v7667 = vadd.f32 0.0, %v7666
        %v7668 = vpop.f32.mrb[0].mxu0
        %v7669 = vpop.f32.mrb[0].mxu0
        %v7670 = vadd.f32 0.0, %v7669
        %v7671 = vpop.f32.mrb[0].mxu0
        %7672 = vdwg.mxu0
        %v7673 = vadd.f32 %v7287, %v7547
        %v7674 = vadd.f32 %v7288, %v7550
        %v7675 = vadd.f32 %v7289, %v7555
        %v7676 = vadd.f32 %v7290, %v7558
        %v7677 = vadd.f32 %v7291, %v7563
        %v7678 = vadd.f32 %v7292, %v7566
        %v7679 = vadd.f32 %v7293, %v7571
        %v7680 = vadd.f32 %v7294, %v7574
        %v7681 = vadd.f32 %v7295, %v7579
        %v7682 = vadd.f32 %v7296, %v7582
        %v7683 = vadd.f32 %v7297, %v7587
        %v7684 = vadd.f32 %v7298, %v7590
        %v7685 = vadd.f32 %v7299, %v7595
        %v7686 = vadd.f32 %v7300, %v7598
        %v7687 = vadd.f32 %v7301, %v7603
        %v7688 = vadd.f32 %v7302, %v7606
        %v7689 = vadd.f32 %v7303, %v7611
        %v7690 = vadd.f32 %v7304, %v7614
        %v7691 = vadd.f32 %v7305, %v7619
        %v7692 = vadd.f32 %v7306, %v7622
        %v7693 = vadd.f32 %v7307, %v7627
        %v7694 = vadd.f32 %v7308, %v7630
        %v7695 = vadd.f32 %v7309, %v7635
        %v7696 = vadd.f32 %v7310, %v7638
        %v7697 = vadd.f32 %v7311, %v7643
        %v7698 = vadd.f32 %v7312, %v7646
        %v7699 = vadd.f32 %v7313, %v7651
        %v7700 = vadd.f32 %v7314, %v7654
        %v7701 = vadd.f32 %v7315, %v7659
        %v7702 = vadd.f32 %v7316, %v7662
        %v7703 = vadd.f32 %v7317, %v7667
        %v7704 = vadd.f32 %v7318, %v7670
        %v7705 = vld [vmem:[%s5676] sm:$0xf]
        %v7706 = vld [vmem:[%s5676 + $0x4] sm:$0xf]
        %v7707 = vld [vmem:[%s5676 + $0x8] sm:$0x1]
        %v7708 = vld [vmem:[%s5676 + $0xc] sm:$0xf]
        %v7709 = vld [vmem:[%s5676 + $0x10] sm:$0xf]
        %v7710 = vld [vmem:[%s5676 + $0x14] sm:$0x1]
        %v7711 = vld [vmem:[%s5676 + $0x18] sm:$0xf]
        %v7712 = vld [vmem:[%s5676 + $0x1c] sm:$0xf]
        %v7713 = vld [vmem:[%s5676 + $0x20] sm:$0x1]
        %v7714 = vld [vmem:[%s5676 + $0x24] sm:$0xf]
        %v7715 = vld [vmem:[%s5676 + $0x28] sm:$0xf]
        %v7716 = vld [vmem:[%s5676 + $0x2c] sm:$0x1]
        %v7717 = vld [vmem:[%s5676 + $0x30] sm:$0xf]
        %v7718 = vld [vmem:[%s5676 + $0x34] sm:$0xf]
        %v7719 = vld [vmem:[%s5676 + $0x38] sm:$0x1]
        %v7720 = vld [vmem:[%s5676 + $0x3c] sm:$0xf]
        %v7721 = vld [vmem:[%s5676 + $0x40] sm:$0xf]
        %v7722 = vld [vmem:[%s5676 + $0x44] sm:$0x1]
        %v7723 = vld [vmem:[%s5676 + $0x48] sm:$0xf]
        %v7724 = vld [vmem:[%s5676 + $0x4c] sm:$0xf]
        %v7725 = vld [vmem:[%s5676 + $0x50] sm:$0x1]
        %v7726 = vld [vmem:[%s5676 + $0x54] sm:$0xf]
        %v7727 = vld [vmem:[%s5676 + $0x58] sm:$0xf]
        %v7728 = vld [vmem:[%s5676 + $0x5c] sm:$0x1]
        %v7729 = vld [vmem:[%s5676 + $0x60] sm:$0xf]
        %v7730 = vld [vmem:[%s5676 + $0x64] sm:$0xf]
        %v7731 = vld [vmem:[%s5676 + $0x68] sm:$0x1]
        %v7732 = vld [vmem:[%s5676 + $0x6c] sm:$0xf]
        %v7733 = vld [vmem:[%s5676 + $0x70] sm:$0xf]
        %v7734 = vld [vmem:[%s5676 + $0x74] sm:$0x1]
        %v7735 = vld [vmem:[%s5676 + $0x78] sm:$0xf]
        %v7736 = vld [vmem:[%s5676 + $0x7c] sm:$0xf]
        %v7737 = vld [vmem:[%s5676 + $0x80] sm:$0x1]
        %v7738 = vld [vmem:[%s5676 + $0x84] sm:$0xf]
        %v7739 = vld [vmem:[%s5676 + $0x88] sm:$0xf]
        %v7740 = vld [vmem:[%s5676 + $0x8c] sm:$0x1]
        %v7741 = vld [vmem:[%s5676 + $0x90] sm:$0xf]
        %v7742 = vld [vmem:[%s5676 + $0x94] sm:$0xf]
        %v7743 = vld [vmem:[%s5676 + $0x98] sm:$0x1]
        %v7744 = vld [vmem:[%s5676 + $0x9c] sm:$0xf]
        %v7745 = vld [vmem:[%s5676 + $0xa0] sm:$0xf]
        %v7746 = vld [vmem:[%s5676 + $0xa4] sm:$0x1]
        %v7747 = vld [vmem:[%s5676 + $0xa8] sm:$0xf]
        %v7748 = vld [vmem:[%s5676 + $0xac] sm:$0xf]
        %v7749 = vld [vmem:[%s5676 + $0xb0] sm:$0x1]
        %v7750 = vld [vmem:[%s5676 + $0xb4] sm:$0xf]
        %v7751 = vld [vmem:[%s5676 + $0xb8] sm:$0xf]
        %v7752 = vld [vmem:[%s5676 + $0xbc] sm:$0x1]
        %v7754 = vshrl.u32 %v7705, 16
        %v7756 = vrot.slane %v7754, 4
        %v7757 = vshll.u32 %v7705, 16
        %v7759 = vrot.slane %v7757, 5
        %v7760 = vor.u32 %v7756, %v7759
        %v7761 = vrot.slane %v7760, 4
        %v7763 = vshll.u32 %v7706, 16
        %v7765 = vrot.slane %v7763, 5
        %v7766 = vsel %vm322, %v7761, %v7765
        %v7767 = vshrl.u32 %v7706, 16
        %v7769 = vrot.slane %v7767, 4
        %v7770 = vor.u32 %v7769, %v7765
        %v7771 = vrot.slane %v7770, 4
        %v7773 = vshll.u32 %v7707, 16
        %v7775 = vrot.slane %v7773, 5
        %v7776 = vsel %vm322, %v7771, %v7775
        %v7778 = vshrl.u32 %v7708, 16
        %v7780 = vrot.slane %v7778, 4
        %v7781 = vshll.u32 %v7708, 16
        %v7783 = vrot.slane %v7781, 5
        %v7784 = vor.u32 %v7780, %v7783
        %v7785 = vrot.slane %v7784, 4
        %v7787 = vshll.u32 %v7709, 16
        %v7789 = vrot.slane %v7787, 5
        %v7790 = vsel %vm322, %v7785, %v7789
        %v7791 = vshrl.u32 %v7709, 16
        %v7793 = vrot.slane %v7791, 4
        %v7794 = vor.u32 %v7793, %v7789
        %v7795 = vrot.slane %v7794, 4
        %v7797 = vshll.u32 %v7710, 16
        %v7799 = vrot.slane %v7797, 5
        %v7800 = vsel %vm322, %v7795, %v7799
        %v7802 = vshrl.u32 %v7711, 16
        %v7804 = vrot.slane %v7802, 4
        %v7805 = vshll.u32 %v7711, 16
        %v7807 = vrot.slane %v7805, 5
        %v7808 = vor.u32 %v7804, %v7807
        %v7809 = vrot.slane %v7808, 4
        %v7811 = vshll.u32 %v7712, 16
        %v7813 = vrot.slane %v7811, 5
        %v7814 = vsel %vm322, %v7809, %v7813
        %v7815 = vshrl.u32 %v7712, 16
        %v7817 = vrot.slane %v7815, 4
        %v7818 = vor.u32 %v7817, %v7813
        %v7819 = vrot.slane %v7818, 4
        %v7821 = vshll.u32 %v7713, 16
        %v7823 = vrot.slane %v7821, 5
        %v7824 = vsel %vm322, %v7819, %v7823
        %v7826 = vshrl.u32 %v7714, 16
        %v7828 = vrot.slane %v7826, 4
        %v7829 = vshll.u32 %v7714, 16
        %v7831 = vrot.slane %v7829, 5
        %v7832 = vor.u32 %v7828, %v7831
        %v7833 = vrot.slane %v7832, 4
        %v7835 = vshll.u32 %v7715, 16
        %v7837 = vrot.slane %v7835, 5
        %v7838 = vsel %vm322, %v7833, %v7837
        %v7839 = vshrl.u32 %v7715, 16
        %v7841 = vrot.slane %v7839, 4
        %v7842 = vor.u32 %v7841, %v7837
        %v7843 = vrot.slane %v7842, 4
        %v7845 = vshll.u32 %v7716, 16
        %v7847 = vrot.slane %v7845, 5
        %v7848 = vsel %vm322, %v7843, %v7847
        %v7850 = vshrl.u32 %v7717, 16
        %v7852 = vrot.slane %v7850, 4
        %v7853 = vshll.u32 %v7717, 16
        %v7855 = vrot.slane %v7853, 5
        %v7856 = vor.u32 %v7852, %v7855
        %v7857 = vrot.slane %v7856, 4
        %v7859 = vshll.u32 %v7718, 16
        %v7861 = vrot.slane %v7859, 5
        %v7862 = vsel %vm322, %v7857, %v7861
        %v7863 = vshrl.u32 %v7718, 16
        %v7865 = vrot.slane %v7863, 4
        %v7866 = vor.u32 %v7865, %v7861
        %v7867 = vrot.slane %v7866, 4
        %v7869 = vshll.u32 %v7719, 16
        %v7871 = vrot.slane %v7869, 5
        %v7872 = vsel %vm322, %v7867, %v7871
        %v7874 = vshrl.u32 %v7720, 16
        %v7876 = vrot.slane %v7874, 4
        %v7877 = vshll.u32 %v7720, 16
        %v7879 = vrot.slane %v7877, 5
        %v7880 = vor.u32 %v7876, %v7879
        %v7881 = vrot.slane %v7880, 4
        %v7883 = vshll.u32 %v7721, 16
        %v7885 = vrot.slane %v7883, 5
        %v7886 = vsel %vm322, %v7881, %v7885
        %v7887 = vshrl.u32 %v7721, 16
        %v7889 = vrot.slane %v7887, 4
        %v7890 = vor.u32 %v7889, %v7885
        %v7891 = vrot.slane %v7890, 4
        %v7893 = vshll.u32 %v7722, 16
        %v7895 = vrot.slane %v7893, 5
        %v7896 = vsel %vm322, %v7891, %v7895
        %v7898 = vshrl.u32 %v7723, 16
        %v7900 = vrot.slane %v7898, 4
        %v7901 = vshll.u32 %v7723, 16
        %v7903 = vrot.slane %v7901, 5
        %v7904 = vor.u32 %v7900, %v7903
        %v7905 = vrot.slane %v7904, 4
        %v7907 = vshll.u32 %v7724, 16
        %v7909 = vrot.slane %v7907, 5
        %v7910 = vsel %vm322, %v7905, %v7909
        %v7911 = vshrl.u32 %v7724, 16
        %v7913 = vrot.slane %v7911, 4
        %v7914 = vor.u32 %v7913, %v7909
        %v7915 = vrot.slane %v7914, 4
        %v7917 = vshll.u32 %v7725, 16
        %v7919 = vrot.slane %v7917, 5
        %v7920 = vsel %vm322, %v7915, %v7919
        %v7922 = vshrl.u32 %v7726, 16
        %v7924 = vrot.slane %v7922, 4
        %v7925 = vshll.u32 %v7726, 16
        %v7927 = vrot.slane %v7925, 5
        %v7928 = vor.u32 %v7924, %v7927
        %v7929 = vrot.slane %v7928, 4
        %v7931 = vshll.u32 %v7727, 16
        %v7933 = vrot.slane %v7931, 5
        %v7934 = vsel %vm322, %v7929, %v7933
        %v7935 = vshrl.u32 %v7727, 16
        %v7937 = vrot.slane %v7935, 4
        %v7938 = vor.u32 %v7937, %v7933
        %v7939 = vrot.slane %v7938, 4
        %v7941 = vshll.u32 %v7728, 16
        %v7943 = vrot.slane %v7941, 5
        %v7944 = vsel %vm322, %v7939, %v7943
        %v7946 = vshrl.u32 %v7729, 16
        %v7948 = vrot.slane %v7946, 4
        %v7949 = vshll.u32 %v7729, 16
        %v7951 = vrot.slane %v7949, 5
        %v7952 = vor.u32 %v7948, %v7951
        %v7953 = vrot.slane %v7952, 4
        %v7955 = vshll.u32 %v7730, 16
        %v7957 = vrot.slane %v7955, 5
        %v7958 = vsel %vm322, %v7953, %v7957
        %v7959 = vshrl.u32 %v7730, 16
        %v7961 = vrot.slane %v7959, 4
        %v7962 = vor.u32 %v7961, %v7957
        %v7963 = vrot.slane %v7962, 4
        %v7965 = vshll.u32 %v7731, 16
        %v7967 = vrot.slane %v7965, 5
        %v7968 = vsel %vm322, %v7963, %v7967
        %v7970 = vshrl.u32 %v7732, 16
        %v7972 = vrot.slane %v7970, 4
        %v7973 = vshll.u32 %v7732, 16
        %v7975 = vrot.slane %v7973, 5
        %v7976 = vor.u32 %v7972, %v7975
        %v7977 = vrot.slane %v7976, 4
        %v7979 = vshll.u32 %v7733, 16
        %v7981 = vrot.slane %v7979, 5
        %v7982 = vsel %vm322, %v7977, %v7981
        %v7983 = vshrl.u32 %v7733, 16
        %v7985 = vrot.slane %v7983, 4
        %v7986 = vor.u32 %v7985, %v7981
        %v7987 = vrot.slane %v7986, 4
        %v7989 = vshll.u32 %v7734, 16
        %v7991 = vrot.slane %v7989, 5
        %v7992 = vsel %vm322, %v7987, %v7991
        %v7994 = vshrl.u32 %v7735, 16
        %v7996 = vrot.slane %v7994, 4
        %v7997 = vshll.u32 %v7735, 16
        %v7999 = vrot.slane %v7997, 5
        %v8000 = vor.u32 %v7996, %v7999
        %v8001 = vrot.slane %v8000, 4
        %v8003 = vshll.u32 %v7736, 16
        %v8005 = vrot.slane %v8003, 5
        %v8006 = vsel %vm322, %v8001, %v8005
        %v8007 = vshrl.u32 %v7736, 16
        %v8009 = vrot.slane %v8007, 4
        %v8010 = vor.u32 %v8009, %v8005
        %v8011 = vrot.slane %v8010, 4
        %v8013 = vshll.u32 %v7737, 16
        %v8015 = vrot.slane %v8013, 5
        %v8016 = vsel %vm322, %v8011, %v8015
        %v8018 = vshrl.u32 %v7738, 16
        %v8020 = vrot.slane %v8018, 4
        %v8021 = vshll.u32 %v7738, 16
        %v8023 = vrot.slane %v8021, 5
        %v8024 = vor.u32 %v8020, %v8023
        %v8025 = vrot.slane %v8024, 4
        %v8027 = vshll.u32 %v7739, 16
        %v8029 = vrot.slane %v8027, 5
        %v8030 = vsel %vm322, %v8025, %v8029
        %v8031 = vshrl.u32 %v7739, 16
        %v8033 = vrot.slane %v8031, 4
        %v8034 = vor.u32 %v8033, %v8029
        %v8035 = vrot.slane %v8034, 4
        %v8037 = vshll.u32 %v7740, 16
        %v8039 = vrot.slane %v8037, 5
        %v8040 = vsel %vm322, %v8035, %v8039
        %v8042 = vshrl.u32 %v7741, 16
        %v8044 = vrot.slane %v8042, 4
        %v8045 = vshll.u32 %v7741, 16
        %v8047 = vrot.slane %v8045, 5
        %v8048 = vor.u32 %v8044, %v8047
        %v8049 = vrot.slane %v8048, 4
        %v8051 = vshll.u32 %v7742, 16
        %v8053 = vrot.slane %v8051, 5
        %v8054 = vsel %vm322, %v8049, %v8053
        %v8055 = vshrl.u32 %v7742, 16
        %v8057 = vrot.slane %v8055, 4
        %v8058 = vor.u32 %v8057, %v8053
        %v8059 = vrot.slane %v8058, 4
        %v8061 = vshll.u32 %v7743, 16
        %v8063 = vrot.slane %v8061, 5
        %v8064 = vsel %vm322, %v8059, %v8063
        %v8066 = vshrl.u32 %v7744, 16
        %v8068 = vrot.slane %v8066, 4
        %v8069 = vshll.u32 %v7744, 16
        %v8071 = vrot.slane %v8069, 5
        %v8072 = vor.u32 %v8068, %v8071
        %v8073 = vrot.slane %v8072, 4
        %v8075 = vshll.u32 %v7745, 16
        %v8077 = vrot.slane %v8075, 5
        %v8078 = vsel %vm322, %v8073, %v8077
        %v8079 = vshrl.u32 %v7745, 16
        %v8081 = vrot.slane %v8079, 4
        %v8082 = vor.u32 %v8081, %v8077
        %v8083 = vrot.slane %v8082, 4
        %v8085 = vshll.u32 %v7746, 16
        %v8087 = vrot.slane %v8085, 5
        %v8088 = vsel %vm322, %v8083, %v8087
        %v8090 = vshrl.u32 %v7747, 16
        %v8092 = vrot.slane %v8090, 4
        %v8093 = vshll.u32 %v7747, 16
        %v8095 = vrot.slane %v8093, 5
        %v8096 = vor.u32 %v8092, %v8095
        %v8097 = vrot.slane %v8096, 4
        %v8099 = vshll.u32 %v7748, 16
        %v8101 = vrot.slane %v8099, 5
        %v8102 = vsel %vm322, %v8097, %v8101
        %v8103 = vshrl.u32 %v7748, 16
        %v8105 = vrot.slane %v8103, 4
        %v8106 = vor.u32 %v8105, %v8101
        %v8107 = vrot.slane %v8106, 4
        %v8109 = vshll.u32 %v7749, 16
        %v8111 = vrot.slane %v8109, 5
        %v8112 = vsel %vm322, %v8107, %v8111
        %v8114 = vshrl.u32 %v7750, 16
        %v8116 = vrot.slane %v8114, 4
        %v8117 = vshll.u32 %v7750, 16
        %v8119 = vrot.slane %v8117, 5
        %v8120 = vor.u32 %v8116, %v8119
        %v8121 = vrot.slane %v8120, 4
        %v8123 = vshll.u32 %v7751, 16
        %v8125 = vrot.slane %v8123, 5
        %v8126 = vsel %vm322, %v8121, %v8125
        %v8127 = vshrl.u32 %v7751, 16
        %v8129 = vrot.slane %v8127, 4
        %v8130 = vor.u32 %v8129, %v8125
        %v8131 = vrot.slane %v8130, 4
        %v8133 = vshll.u32 %v7752, 16
        %v8135 = vrot.slane %v8133, 5
        %v8136 = vsel %vm322, %v8131, %v8135
        %s8137 = scalar_lea.vmem [#allocation3], 256
        %v8138 = vld [vmem:[%s8137] sm:$0xf]
        %v8139 = vld [vmem:[%s8137 + $0x4] sm:$0xf]
        %v8140 = vld [vmem:[%s8137 + $0x8] sm:$0xf]
        %v8141 = vld [vmem:[%s8137 + $0xc] sm:$0xf]
        %v8142 = vld [vmem:[%s8137 + $0x10] sm:$0xf]
        %v8143 = vld [vmem:[%s8137 + $0x14] sm:$0xf]
        %v8144 = vld [vmem:[%s8137 + $0x18] sm:$0xf]
        %v8145 = vld [vmem:[%s8137 + $0x1c] sm:$0xf]
        %v8146 = vld [vmem:[%s8137 + $0x20] sm:$0xf]
        %v8147 = vld [vmem:[%s8137 + $0x24] sm:$0xf]
        %v8148 = vld [vmem:[%s8137 + $0x28] sm:$0xf]
        %v8149 = vld [vmem:[%s8137 + $0x2c] sm:$0xf]
        %v8150 = vld [vmem:[%s8137 + $0x30] sm:$0xf]
        %v8151 = vld [vmem:[%s8137 + $0x34] sm:$0xf]
        %v8152 = vld [vmem:[%s8137 + $0x38] sm:$0xf]
        %v8153 = vld [vmem:[%s8137 + $0x3c] sm:$0xf]
        %v8154 = vunpack.c.l.b16 %v7766
        %v8155 = vunpack.c.l.b16 %v7776
        %v8156 = vunpack.c.l.b16 %v7790
        %v8157 = vunpack.c.l.b16 %v7800
        %v8158 = vunpack.c.l.b16 %v7814
        %v8159 = vunpack.c.l.b16 %v7824
        %v8160 = vunpack.c.l.b16 %v7838
        %v8161 = vunpack.c.l.b16 %v7848
        %v8162 = vunpack.c.l.b16 %v7862
        %v8163 = vunpack.c.l.b16 %v7872
        %v8164 = vunpack.c.l.b16 %v7886
        %v8165 = vunpack.c.l.b16 %v7896
        %v8166 = vunpack.c.l.b16 %v7910
        %v8167 = vunpack.c.l.b16 %v7920
        %v8168 = vunpack.c.l.b16 %v7934
        %v8169 = vunpack.c.l.b16 %v7944
        %v8170 = vunpack.c.l.b16 %v7958
        %v8171 = vunpack.c.l.b16 %v7968
        %v8172 = vunpack.c.l.b16 %v7982
        %v8173 = vunpack.c.l.b16 %v7992
        %v8174 = vunpack.c.l.b16 %v8006
        %v8175 = vunpack.c.l.b16 %v8016
        %v8176 = vunpack.c.l.b16 %v8030
        %v8177 = vunpack.c.l.b16 %v8040
        %v8178 = vunpack.c.l.b16 %v8054
        %v8179 = vunpack.c.l.b16 %v8064
        %v8180 = vunpack.c.l.b16 %v8078
        %v8181 = vunpack.c.l.b16 %v8088
        %v8182 = vunpack.c.l.b16 %v8102
        %v8183 = vunpack.c.l.b16 %v8112
        %v8184 = vunpack.c.l.b16 %v8126
        %v8185 = vunpack.c.l.b16 %v8136
        %v8186 = vpack.c.b16 %v8155, %v8154
        %v8187 = vpack.c.b16 %v8157, %v8156
        %v8188 = vpack.c.b16 %v8159, %v8158
        %v8189 = vpack.c.b16 %v8161, %v8160
        %v8190 = vpack.c.b16 %v8163, %v8162
        %v8191 = vpack.c.b16 %v8165, %v8164
        %v8192 = vpack.c.b16 %v8167, %v8166
        %v8193 = vpack.c.b16 %v8169, %v8168
        %v8194 = vpack.c.b16 %v8171, %v8170
        %v8195 = vpack.c.b16 %v8173, %v8172
        %v8196 = vpack.c.b16 %v8175, %v8174
        %v8197 = vpack.c.b16 %v8177, %v8176
        %v8198 = vpack.c.b16 %v8179, %v8178
        %v8199 = vpack.c.b16 %v8181, %v8180
        %v8200 = vpack.c.b16 %v8183, %v8182
        %v8201 = vpack.c.b16 %v8185, %v8184
        %v8234 = vunpack.c.l.b16 %v8138
        %v8235 = vunpack.c.l.b16 %v8139
        %v8236 = vunpack.c.l.b16 %v8140
        %v8237 = vunpack.c.l.b16 %v8141
        %v8238 = vunpack.c.l.b16 %v8142
        %v8239 = vunpack.c.l.b16 %v8143
        %v8240 = vunpack.c.l.b16 %v8144
        %v8241 = vunpack.c.l.b16 %v8145
        %v8242 = vunpack.c.l.b16 %v8146
        %v8243 = vunpack.c.l.b16 %v8147
        %v8244 = vunpack.c.l.b16 %v8148
        %v8245 = vunpack.c.l.b16 %v8149
        %v8246 = vunpack.c.l.b16 %v8150
        %v8247 = vunpack.c.l.b16 %v8151
        %v8248 = vunpack.c.l.b16 %v8152
        %v8249 = vunpack.c.l.b16 %v8153
        %v8250 = vpack.c.b16 %v8235, %v8234
        %v8251 = vpack.c.b16 %v8237, %v8236
        %v8252 = vpack.c.b16 %v8239, %v8238
        %v8253 = vpack.c.b16 %v8241, %v8240
        %v8254 = vpack.c.b16 %v8243, %v8242
        %v8255 = vpack.c.b16 %v8245, %v8244
        %v8256 = vpack.c.b16 %v8247, %v8246
        %v8257 = vpack.c.b16 %v8249, %v8248
        %8266 = vmatprep.subr.bf16.mxu0 0
        %8267 = vmatpush1.bf16.msra.mxu0 %v8250
        %8268 = vmatprep.subr.bf16.mxu0 0
        %8269 = vmatpush1.bf16.msra.mxu0 %v8251
        %8270 = vmatprep.subr.bf16.mxu0 0
        %8271 = vmatpush1.bf16.msra.mxu0 %v8252
        %8272 = vmatprep.subr.bf16.mxu0 0
        %8273 = vmatpush1.bf16.msra.mxu0 %v8253
        %8274 = vmatprep.subr.bf16.mxu0 0
        %8275 = vmatpush1.bf16.msra.mxu0 %v8254
        %8276 = vmatprep.subr.bf16.mxu0 0
        %8277 = vmatpush1.bf16.msra.mxu0 %v8255
        %8278 = vmatprep.subr.bf16.mxu0 0
        %8279 = vmatpush1.bf16.msra.mxu0 %v8256
        %8280 = vmatprep.subr.bf16.mxu0 0
        %8281 = vmatpush1.bf16.msra.mxu0 %v8257
        %8282 = vmatprep.subr.bf16.mxu0 0
        %8283 = vmatpush1.bf16.msra.mxu0 0
        %8284 = vmatprep.subr.bf16.mxu0 0
        %8285 = vmatpush1.bf16.msra.mxu0 0
        %8286 = vmatprep.subr.bf16.mxu0 0
        %8287 = vmatpush1.bf16.msra.mxu0 0
        %8288 = vmatprep.subr.bf16.mxu0 0
        %8289 = vmatpush1.bf16.msra.mxu0 0
        %8290 = vmatprep.subr.bf16.mxu0 0
        %8291 = vmatpush1.bf16.msra.mxu0 0
        %8292 = vmatprep.subr.bf16.mxu0 0
        %8293 = vmatpush1.bf16.msra.mxu0 0
        %8294 = vmatprep.subr.bf16.mxu0 0
        %8295 = vmatpush1.bf16.msra.mxu0 0
        %8296 = vmatprep.subr.bf16.mxu0 0
        %8297 = vmatpush1.bf16.msra.mxu0 0
        %8298 = vmatprep.mubr.bf16.mxu0 0
        %8299 = vmatmul.mubr.bf16.gmra.mrb[0].mxu0 %v8186
        %v8300 = vpop.f32.mrb[0].mxu0
        %v8301 = vadd.f32 0.0, %v8300
        %v8302 = vpop.f32.mrb[0].mxu0
        %v8303 = vpop.f32.mrb[0].mxu0
        %v8304 = vadd.f32 0.0, %v8303
        %v8305 = vpop.f32.mrb[0].mxu0
        %8306 = vmatprep.mubr.bf16.mxu0 0
        %8307 = vmatmul.mubr.bf16.gmra.mrb[0].mxu0 %v8187
        %v8308 = vpop.f32.mrb[0].mxu0
        %v8309 = vadd.f32 0.0, %v8308
        %v8310 = vpop.f32.mrb[0].mxu0
        %v8311 = vpop.f32.mrb[0].mxu0
        %v8312 = vadd.f32 0.0, %v8311
        %v8313 = vpop.f32.mrb[0].mxu0
        %8314 = vmatprep.mubr.bf16.mxu0 0
        %8315 = vmatmul.mubr.bf16.gmra.mrb[0].mxu0 %v8188
        %v8316 = vpop.f32.mrb[0].mxu0
        %v8317 = vadd.f32 0.0, %v8316
        %v8318 = vpop.f32.mrb[0].mxu0
        %v8319 = vpop.f32.mrb[0].mxu0
        %v8320 = vadd.f32 0.0, %v8319
        %v8321 = vpop.f32.mrb[0].mxu0
        %8322 = vmatprep.mubr.bf16.mxu0 0
        %8323 = vmatmul.mubr.bf16.gmra.mrb[0].mxu0 %v8189
        %v8324 = vpop.f32.mrb[0].mxu0
        %v8325 = vadd.f32 0.0, %v8324
        %v8326 = vpop.f32.mrb[0].mxu0
        %v8327 = vpop.f32.mrb[0].mxu0
        %v8328 = vadd.f32 0.0, %v8327
        %v8329 = vpop.f32.mrb[0].mxu0
        %8330 = vmatprep.mubr.bf16.mxu0 0
        %8331 = vmatmul.mubr.bf16.gmra.mrb[0].mxu0 %v8190
        %v8332 = vpop.f32.mrb[0].mxu0
        %v8333 = vadd.f32 0.0, %v8332
        %v8334 = vpop.f32.mrb[0].mxu0
        %v8335 = vpop.f32.mrb[0].mxu0
        %v8336 = vadd.f32 0.0, %v8335
        %v8337 = vpop.f32.mrb[0].mxu0
        %8338 = vmatprep.mubr.bf16.mxu0 0
        %8339 = vmatmul.mubr.bf16.gmra.mrb[0].mxu0 %v8191
        %v8340 = vpop.f32.mrb[0].mxu0
        %v8341 = vadd.f32 0.0, %v8340
        %v8342 = vpop.f32.mrb[0].mxu0
        %v8343 = vpop.f32.mrb[0].mxu0
        %v8344 = vadd.f32 0.0, %v8343
        %v8345 = vpop.f32.mrb[0].mxu0
        %8346 = vmatprep.mubr.bf16.mxu0 0
        %8347 = vmatmul.mubr.bf16.gmra.mrb[0].mxu0 %v8192
        %v8348 = vpop.f32.mrb[0].mxu0
        %v8349 = vadd.f32 0.0, %v8348
        %v8350 = vpop.f32.mrb[0].mxu0
        %v8351 = vpop.f32.mrb[0].mxu0
        %v8352 = vadd.f32 0.0, %v8351
        %v8353 = vpop.f32.mrb[0].mxu0
        %8354 = vmatprep.mubr.bf16.mxu0 0
        %8355 = vmatmul.mubr.bf16.gmra.mrb[0].mxu0 %v8193
        %v8356 = vpop.f32.mrb[0].mxu0
        %v8357 = vadd.f32 0.0, %v8356
        %v8358 = vpop.f32.mrb[0].mxu0
        %v8359 = vpop.f32.mrb[0].mxu0
        %v8360 = vadd.f32 0.0, %v8359
        %v8361 = vpop.f32.mrb[0].mxu0
        %8362 = vmatprep.mubr.bf16.mxu0 0
        %8363 = vmatmul.mubr.bf16.gmra.mrb[0].mxu0 %v8194
        %v8364 = vpop.f32.mrb[0].mxu0
        %v8365 = vadd.f32 0.0, %v8364
        %v8366 = vpop.f32.mrb[0].mxu0
        %v8367 = vpop.f32.mrb[0].mxu0
        %v8368 = vadd.f32 0.0, %v8367
        %v8369 = vpop.f32.mrb[0].mxu0
        %8370 = vmatprep.mubr.bf16.mxu0 0
        %8371 = vmatmul.mubr.bf16.gmra.mrb[0].mxu0 %v8195
        %v8372 = vpop.f32.mrb[0].mxu0
        %v8373 = vadd.f32 0.0, %v8372
        %v8374 = vpop.f32.mrb[0].mxu0
        %v8375 = vpop.f32.mrb[0].mxu0
        %v8376 = vadd.f32 0.0, %v8375
        %v8377 = vpop.f32.mrb[0].mxu0
        %8378 = vmatprep.mubr.bf16.mxu0 0
        %8379 = vmatmul.mubr.bf16.gmra.mrb[0].mxu0 %v8196
        %v8380 = vpop.f32.mrb[0].mxu0
        %v8381 = vadd.f32 0.0, %v8380
        %v8382 = vpop.f32.mrb[0].mxu0
        %v8383 = vpop.f32.mrb[0].mxu0
        %v8384 = vadd.f32 0.0, %v8383
        %v8385 = vpop.f32.mrb[0].mxu0
        %8386 = vmatprep.mubr.bf16.mxu0 0
        %8387 = vmatmul.mubr.bf16.gmra.mrb[0].mxu0 %v8197
        %v8388 = vpop.f32.mrb[0].mxu0
        %v8389 = vadd.f32 0.0, %v8388
        %v8390 = vpop.f32.mrb[0].mxu0
        %v8391 = vpop.f32.mrb[0].mxu0
        %v8392 = vadd.f32 0.0, %v8391
        %v8393 = vpop.f32.mrb[0].mxu0
        %8394 = vmatprep.mubr.bf16.mxu0 0
        %8395 = vmatmul.mubr.bf16.gmra.mrb[0].mxu0 %v8198
        %v8396 = vpop.f32.mrb[0].mxu0
        %v8397 = vadd.f32 0.0, %v8396
        %v8398 = vpop.f32.mrb[0].mxu0
        %v8399 = vpop.f32.mrb[0].mxu0
        %v8400 = vadd.f32 0.0, %v8399
        %v8401 = vpop.f32.mrb[0].mxu0
        %8402 = vmatprep.mubr.bf16.mxu0 0
        %8403 = vmatmul.mubr.bf16.gmra.mrb[0].mxu0 %v8199
        %v8404 = vpop.f32.mrb[0].mxu0
        %v8405 = vadd.f32 0.0, %v8404
        %v8406 = vpop.f32.mrb[0].mxu0
        %v8407 = vpop.f32.mrb[0].mxu0
        %v8408 = vadd.f32 0.0, %v8407
        %v8409 = vpop.f32.mrb[0].mxu0
        %8410 = vmatprep.mubr.bf16.mxu0 0
        %8411 = vmatmul.mubr.bf16.gmra.mrb[0].mxu0 %v8200
        %v8412 = vpop.f32.mrb[0].mxu0
        %v8413 = vadd.f32 0.0, %v8412
        %v8414 = vpop.f32.mrb[0].mxu0
        %v8415 = vpop.f32.mrb[0].mxu0
        %v8416 = vadd.f32 0.0, %v8415
        %v8417 = vpop.f32.mrb[0].mxu0
        %8418 = vmatprep.mubr.bf16.mxu0 0
        %8419 = vmatmul.mubr.bf16.gmra.mrb[0].mxu0 %v8201
        %v8420 = vpop.f32.mrb[0].mxu0
        %v8421 = vadd.f32 0.0, %v8420
        %v8422 = vpop.f32.mrb[0].mxu0
        %v8423 = vpop.f32.mrb[0].mxu0
        %v8424 = vadd.f32 0.0, %v8423
        %v8425 = vpop.f32.mrb[0].mxu0
        %8426 = vdwg.mxu0
        %v8427 = vadd.f32 %v7673, %v8301
        %v8428 = vadd.f32 %v7674, %v8304
        %v8429 = vadd.f32 %v7675, %v8309
        %v8430 = vadd.f32 %v7676, %v8312
        %v8431 = vadd.f32 %v7677, %v8317
        %v8432 = vadd.f32 %v7678, %v8320
        %v8433 = vadd.f32 %v7679, %v8325
        %v8434 = vadd.f32 %v7680, %v8328
        %v8435 = vadd.f32 %v7681, %v8333
        %v8436 = vadd.f32 %v7682, %v8336
        %v8437 = vadd.f32 %v7683, %v8341
        %v8438 = vadd.f32 %v7684, %v8344
        %v8439 = vadd.f32 %v7685, %v8349
        %v8440 = vadd.f32 %v7686, %v8352
        %v8441 = vadd.f32 %v7687, %v8357
        %v8442 = vadd.f32 %v7688, %v8360
        %v8443 = vadd.f32 %v7689, %v8365
        %v8444 = vadd.f32 %v7690, %v8368
        %v8445 = vadd.f32 %v7691, %v8373
        %v8446 = vadd.f32 %v7692, %v8376
        %v8447 = vadd.f32 %v7693, %v8381
        %v8448 = vadd.f32 %v7694, %v8384
        %v8449 = vadd.f32 %v7695, %v8389
        %v8450 = vadd.f32 %v7696, %v8392
        %v8451 = vadd.f32 %v7697, %v8397
        %v8452 = vadd.f32 %v7698, %v8400
        %v8453 = vadd.f32 %v7699, %v8405
        %v8454 = vadd.f32 %v7700, %v8408
        %v8455 = vadd.f32 %v7701, %v8413
        %v8456 = vadd.f32 %v7702, %v8416
        %v8457 = vadd.f32 %v7703, %v8421
        %v8458 = vadd.f32 %v7704, %v8424
        %v8459 = vld [vmem:[%s5676] sm:$0xe]
        %v8460 = vld [vmem:[%s5676 + $0xc] sm:$0xe]
        %v8461 = vld [vmem:[%s5676 + $0x18] sm:$0xe]
        %v8462 = vld [vmem:[%s5676 + $0x24] sm:$0xe]
        %v8463 = vld [vmem:[%s5676 + $0x30] sm:$0xe]
        %v8464 = vld [vmem:[%s5676 + $0x3c] sm:$0xe]
        %v8465 = vld [vmem:[%s5676 + $0x48] sm:$0xe]
        %v8466 = vld [vmem:[%s5676 + $0x54] sm:$0xe]
        %v8467 = vld [vmem:[%s5676 + $0x60] sm:$0xe]
        %v8468 = vld [vmem:[%s5676 + $0x6c] sm:$0xe]
        %v8469 = vld [vmem:[%s5676 + $0x78] sm:$0xe]
        %v8470 = vld [vmem:[%s5676 + $0x84] sm:$0xe]
        %v8471 = vld [vmem:[%s5676 + $0x90] sm:$0xe]
        %v8472 = vld [vmem:[%s5676 + $0x9c] sm:$0xe]
        %v8473 = vld [vmem:[%s5676 + $0xa8] sm:$0xe]
        %v8474 = vld [vmem:[%s5676 + $0xb4] sm:$0xe]
        %v8523 = vrot.slane %v8459, 5
        %v8524 = vrot.slane %v8523, 4
        %v8525 = vrot.slane %v7706, 5
        %v8526 = vsel %vm1352, %v8524, %v8525
        %v8527 = vrot.slane %v8525, 4
        %v8528 = vrot.slane %v7707, 5
        %v8529 = vsel %vm1352, %v8527, %v8528
        %v8530 = vrot.slane %v8460, 5
        %v8531 = vrot.slane %v8530, 4
        %v8532 = vrot.slane %v7709, 5
        %v8533 = vsel %vm1352, %v8531, %v8532
        %v8534 = vrot.slane %v8532, 4
        %v8535 = vrot.slane %v7710, 5
        %v8536 = vsel %vm1352, %v8534, %v8535
        %v8537 = vrot.slane %v8461, 5
        %v8538 = vrot.slane %v8537, 4
        %v8539 = vrot.slane %v7712, 5
        %v8540 = vsel %vm1352, %v8538, %v8539
        %v8541 = vrot.slane %v8539, 4
        %v8542 = vrot.slane %v7713, 5
        %v8543 = vsel %vm1352, %v8541, %v8542
        %v8544 = vrot.slane %v8462, 5
        %v8545 = vrot.slane %v8544, 4
        %v8546 = vrot.slane %v7715, 5
        %v8547 = vsel %vm1352, %v8545, %v8546
        %v8548 = vrot.slane %v8546, 4
        %v8549 = vrot.slane %v7716, 5
        %v8550 = vsel %vm1352, %v8548, %v8549
        %v8551 = vrot.slane %v8463, 5
        %v8552 = vrot.slane %v8551, 4
        %v8553 = vrot.slane %v7718, 5
        %v8554 = vsel %vm1352, %v8552, %v8553
        %v8555 = vrot.slane %v8553, 4
        %v8556 = vrot.slane %v7719, 5
        %v8557 = vsel %vm1352, %v8555, %v8556
        %v8558 = vrot.slane %v8464, 5
        %v8559 = vrot.slane %v8558, 4
        %v8560 = vrot.slane %v7721, 5
        %v8561 = vsel %vm1352, %v8559, %v8560
        %v8562 = vrot.slane %v8560, 4
        %v8563 = vrot.slane %v7722, 5
        %v8564 = vsel %vm1352, %v8562, %v8563
        %v8565 = vrot.slane %v8465, 5
        %v8566 = vrot.slane %v8565, 4
        %v8567 = vrot.slane %v7724, 5
        %v8568 = vsel %vm1352, %v8566, %v8567
        %v8569 = vrot.slane %v8567, 4
        %v8570 = vrot.slane %v7725, 5
        %v8571 = vsel %vm1352, %v8569, %v8570
        %v8572 = vrot.slane %v8466, 5
        %v8573 = vrot.slane %v8572, 4
        %v8574 = vrot.slane %v7727, 5
        %v8575 = vsel %vm1352, %v8573, %v8574
        %v8576 = vrot.slane %v8574, 4
        %v8577 = vrot.slane %v7728, 5
        %v8578 = vsel %vm1352, %v8576, %v8577
        %v8579 = vrot.slane %v8467, 5
        %v8580 = vrot.slane %v8579, 4
        %v8581 = vrot.slane %v7730, 5
        %v8582 = vsel %vm1352, %v8580, %v8581
        %v8583 = vrot.slane %v8581, 4
        %v8584 = vrot.slane %v7731, 5
        %v8585 = vsel %vm1352, %v8583, %v8584
        %v8586 = vrot.slane %v8468, 5
        %v8587 = vrot.slane %v8586, 4
        %v8588 = vrot.slane %v7733, 5
        %v8589 = vsel %vm1352, %v8587, %v8588
        %v8590 = vrot.slane %v8588, 4
        %v8591 = vrot.slane %v7734, 5
        %v8592 = vsel %vm1352, %v8590, %v8591
        %v8593 = vrot.slane %v8469, 5
        %v8594 = vrot.slane %v8593, 4
        %v8595 = vrot.slane %v7736, 5
        %v8596 = vsel %vm1352, %v8594, %v8595
        %v8597 = vrot.slane %v8595, 4
        %v8598 = vrot.slane %v7737, 5
        %v8599 = vsel %vm1352, %v8597, %v8598
        %v8600 = vrot.slane %v8470, 5
        %v8601 = vrot.slane %v8600, 4
        %v8602 = vrot.slane %v7739, 5
        %v8603 = vsel %vm1352, %v8601, %v8602
        %v8604 = vrot.slane %v8602, 4
        %v8605 = vrot.slane %v7740, 5
        %v8606 = vsel %vm1352, %v8604, %v8605
        %v8607 = vrot.slane %v8471, 5
        %v8608 = vrot.slane %v8607, 4
        %v8609 = vrot.slane %v7742, 5
        %v8610 = vsel %vm1352, %v8608, %v8609
        %v8611 = vrot.slane %v8609, 4
        %v8612 = vrot.slane %v7743, 5
        %v8613 = vsel %vm1352, %v8611, %v8612
        %v8614 = vrot.slane %v8472, 5
        %v8615 = vrot.slane %v8614, 4
        %v8616 = vrot.slane %v7745, 5
        %v8617 = vsel %vm1352, %v8615, %v8616
        %v8618 = vrot.slane %v8616, 4
        %v8619 = vrot.slane %v7746, 5
        %v8620 = vsel %vm1352, %v8618, %v8619
        %v8621 = vrot.slane %v8473, 5
        %v8622 = vrot.slane %v8621, 4
        %v8623 = vrot.slane %v7748, 5
        %v8624 = vsel %vm1352, %v8622, %v8623
        %v8625 = vrot.slane %v8623, 4
        %v8626 = vrot.slane %v7749, 5
        %v8627 = vsel %vm1352, %v8625, %v8626
        %v8628 = vrot.slane %v8474, 5
        %v8629 = vrot.slane %v8628, 4
        %v8630 = vrot.slane %v7751, 5
        %v8631 = vsel %vm1352, %v8629, %v8630
        %v8632 = vrot.slane %v8630, 4
        %v8633 = vrot.slane %v7752, 5
        %v8634 = vsel %vm1352, %v8632, %v8633
        %s8635 = scalar_lea.vmem [#allocation3], 320
        %v8636 = vld [vmem:[%s8635] sm:$0xf]
        %v8637 = vld [vmem:[%s8635 + $0x4] sm:$0xf]
        %v8638 = vld [vmem:[%s8635 + $0x8] sm:$0xf]
        %v8639 = vld [vmem:[%s8635 + $0xc] sm:$0xf]
        %v8640 = vld [vmem:[%s8635 + $0x10] sm:$0xf]
        %v8641 = vld [vmem:[%s8635 + $0x14] sm:$0xf]
        %v8642 = vld [vmem:[%s8635 + $0x18] sm:$0xf]
        %v8643 = vld [vmem:[%s8635 + $0x1c] sm:$0xf]
        %v8644 = vld [vmem:[%s8635 + $0x20] sm:$0xf]
        %v8645 = vld [vmem:[%s8635 + $0x24] sm:$0xf]
        %v8646 = vld [vmem:[%s8635 + $0x28] sm:$0xf]
        %v8647 = vld [vmem:[%s8635 + $0x2c] sm:$0xf]
        %v8648 = vld [vmem:[%s8635 + $0x30] sm:$0xf]
        %v8649 = vld [vmem:[%s8635 + $0x34] sm:$0xf]
        %v8650 = vld [vmem:[%s8635 + $0x38] sm:$0xf]
        %v8651 = vld [vmem:[%s8635 + $0x3c] sm:$0xf]
        %v8652 = vunpack.c.l.b16 %v8526
        %v8653 = vunpack.c.l.b16 %v8529
        %v8654 = vunpack.c.l.b16 %v8533
        %v8655 = vunpack.c.l.b16 %v8536
        %v8656 = vunpack.c.l.b16 %v8540
        %v8657 = vunpack.c.l.b16 %v8543
        %v8658 = vunpack.c.l.b16 %v8547
        %v8659 = vunpack.c.l.b16 %v8550
        %v8660 = vunpack.c.l.b16 %v8554
        %v8661 = vunpack.c.l.b16 %v8557
        %v8662 = vunpack.c.l.b16 %v8561
        %v8663 = vunpack.c.l.b16 %v8564
        %v8664 = vunpack.c.l.b16 %v8568
        %v8665 = vunpack.c.l.b16 %v8571
        %v8666 = vunpack.c.l.b16 %v8575
        %v8667 = vunpack.c.l.b16 %v8578
        %v8668 = vunpack.c.l.b16 %v8582
        %v8669 = vunpack.c.l.b16 %v8585
        %v8670 = vunpack.c.l.b16 %v8589
        %v8671 = vunpack.c.l.b16 %v8592
        %v8672 = vunpack.c.l.b16 %v8596
        %v8673 = vunpack.c.l.b16 %v8599
        %v8674 = vunpack.c.l.b16 %v8603
        %v8675 = vunpack.c.l.b16 %v8606
        %v8676 = vunpack.c.l.b16 %v8610
        %v8677 = vunpack.c.l.b16 %v8613
        %v8678 = vunpack.c.l.b16 %v8617
        %v8679 = vunpack.c.l.b16 %v8620
        %v8680 = vunpack.c.l.b16 %v8624
        %v8681 = vunpack.c.l.b16 %v8627
        %v8682 = vunpack.c.l.b16 %v8631
        %v8683 = vunpack.c.l.b16 %v8634
        %v8684 = vpack.c.b16 %v8653, %v8652
        %v8685 = vpack.c.b16 %v8655, %v8654
        %v8686 = vpack.c.b16 %v8657, %v8656
        %v8687 = vpack.c.b16 %v8659, %v8658
        %v8688 = vpack.c.b16 %v8661, %v8660
        %v8689 = vpack.c.b16 %v8663, %v8662
        %v8690 = vpack.c.b16 %v8665, %v8664
        %v8691 = vpack.c.b16 %v8667, %v8666
        %v8692 = vpack.c.b16 %v8669, %v8668
        %v8693 = vpack.c.b16 %v8671, %v8670
        %v8694 = vpack.c.b16 %v8673, %v8672
        %v8695 = vpack.c.b16 %v8675, %v8674
        %v8696 = vpack.c.b16 %v8677, %v8676
        %v8697 = vpack.c.b16 %v8679, %v8678
        %v8698 = vpack.c.b16 %v8681, %v8680
        %v8699 = vpack.c.b16 %v8683, %v8682
        %v8732 = vunpack.c.l.b16 %v8636
        %v8733 = vunpack.c.l.b16 %v8637
        %v8734 = vunpack.c.l.b16 %v8638
        %v8735 = vunpack.c.l.b16 %v8639
        %v8736 = vunpack.c.l.b16 %v8640
        %v8737 = vunpack.c.l.b16 %v8641
        %v8738 = vunpack.c.l.b16 %v8642
        %v8739 = vunpack.c.l.b16 %v8643
        %v8740 = vunpack.c.l.b16 %v8644
        %v8741 = vunpack.c.l.b16 %v8645
        %v8742 = vunpack.c.l.b16 %v8646
        %v8743 = vunpack.c.l.b16 %v8647
        %v8744 = vunpack.c.l.b16 %v8648
        %v8745 = vunpack.c.l.b16 %v8649
        %v8746 = vunpack.c.l.b16 %v8650
        %v8747 = vunpack.c.l.b16 %v8651
        %v8748 = vpack.c.b16 %v8733, %v8732
        %v8749 = vpack.c.b16 %v8735, %v8734
        %v8750 = vpack.c.b16 %v8737, %v8736
        %v8751 = vpack.c.b16 %v8739, %v8738
        %v8752 = vpack.c.b16 %v8741, %v8740
        %v8753 = vpack.c.b16 %v8743, %v8742
        %v8754 = vpack.c.b16 %v8745, %v8744
        %v8755 = vpack.c.b16 %v8747, %v8746
        %8764 = vmatprep.subr.bf16.mxu0 0
        %8765 = vmatpush1.bf16.msra.mxu0 %v8748
        %8766 = vmatprep.subr.bf16.mxu0 0
        %8767 = vmatpush1.bf16.msra.mxu0 %v8749
        %8768 = vmatprep.subr.bf16.mxu0 0
        %8769 = vmatpush1.bf16.msra.mxu0 %v8750
        %8770 = vmatprep.subr.bf16.mxu0 0
        %8771 = vmatpush1.bf16.msra.mxu0 %v8751
        %8772 = vmatprep.subr.bf16.mxu0 0
        %8773 = vmatpush1.bf16.msra.mxu0 %v8752
        %8774 = vmatprep.subr.bf16.mxu0 0
        %8775 = vmatpush1.bf16.msra.mxu0 %v8753
        %8776 = vmatprep.subr.bf16.mxu0 0
        %8777 = vmatpush1.bf16.msra.mxu0 %v8754
        %8778 = vmatprep.subr.bf16.mxu0 0
        %8779 = vmatpush1.bf16.msra.mxu0 %v8755
        %8780 = vmatprep.subr.bf16.mxu0 0
        %8781 = vmatpush1.bf16.msra.mxu0 0
        %8782 = vmatprep.subr.bf16.mxu0 0
        %8783 = vmatpush1.bf16.msra.mxu0 0
        %8784 = vmatprep.subr.bf16.mxu0 0
        %8785 = vmatpush1.bf16.msra.mxu0 0
        %8786 = vmatprep.subr.bf16.mxu0 0
        %8787 = vmatpush1.bf16.msra.mxu0 0
        %8788 = vmatprep.subr.bf16.mxu0 0
        %8789 = vmatpush1.bf16.msra.mxu0 0
        %8790 = vmatprep.subr.bf16.mxu0 0
        %8791 = vmatpush1.bf16.msra.mxu0 0
        %8792 = vmatprep.subr.bf16.mxu0 0
        %8793 = vmatpush1.bf16.msra.mxu0 0
        %8794 = vmatprep.subr.bf16.mxu0 0
        %8795 = vmatpush1.bf16.msra.mxu0 0
        %8796 = vmatprep.mubr.bf16.mxu0 0
        %8797 = vmatmul.mubr.bf16.gmra.mrb[0].mxu0 %v8684
        %v8798 = vpop.f32.mrb[0].mxu0
        %v8799 = vadd.f32 0.0, %v8798
        %v8800 = vpop.f32.mrb[0].mxu0
        %v8801 = vpop.f32.mrb[0].mxu0
        %v8802 = vadd.f32 0.0, %v8801
        %v8803 = vpop.f32.mrb[0].mxu0
        %8804 = vmatprep.mubr.bf16.mxu0 0
        %8805 = vmatmul.mubr.bf16.gmra.mrb[0].mxu0 %v8685
        %v8806 = vpop.f32.mrb[0].mxu0
        %v8807 = vadd.f32 0.0, %v8806
        %v8808 = vpop.f32.mrb[0].mxu0
        %v8809 = vpop.f32.mrb[0].mxu0
        %v8810 = vadd.f32 0.0, %v8809
        %v8811 = vpop.f32.mrb[0].mxu0
        %8812 = vmatprep.mubr.bf16.mxu0 0
        %8813 = vmatmul.mubr.bf16.gmra.mrb[0].mxu0 %v8686
        %v8814 = vpop.f32.mrb[0].mxu0
        %v8815 = vadd.f32 0.0, %v8814
        %v8816 = vpop.f32.mrb[0].mxu0
        %v8817 = vpop.f32.mrb[0].mxu0
        %v8818 = vadd.f32 0.0, %v8817
        %v8819 = vpop.f32.mrb[0].mxu0
        %8820 = vmatprep.mubr.bf16.mxu0 0
        %8821 = vmatmul.mubr.bf16.gmra.mrb[0].mxu0 %v8687
        %v8822 = vpop.f32.mrb[0].mxu0
        %v8823 = vadd.f32 0.0, %v8822
        %v8824 = vpop.f32.mrb[0].mxu0
        %v8825 = vpop.f32.mrb[0].mxu0
        %v8826 = vadd.f32 0.0, %v8825
        %v8827 = vpop.f32.mrb[0].mxu0
        %8828 = vmatprep.mubr.bf16.mxu0 0
        %8829 = vmatmul.mubr.bf16.gmra.mrb[0].mxu0 %v8688
        %v8830 = vpop.f32.mrb[0].mxu0
        %v8831 = vadd.f32 0.0, %v8830
        %v8832 = vpop.f32.mrb[0].mxu0
        %v8833 = vpop.f32.mrb[0].mxu0
        %v8834 = vadd.f32 0.0, %v8833
        %v8835 = vpop.f32.mrb[0].mxu0
        %8836 = vmatprep.mubr.bf16.mxu0 0
        %8837 = vmatmul.mubr.bf16.gmra.mrb[0].mxu0 %v8689
        %v8838 = vpop.f32.mrb[0].mxu0
        %v8839 = vadd.f32 0.0, %v8838
        %v8840 = vpop.f32.mrb[0].mxu0
        %v8841 = vpop.f32.mrb[0].mxu0
        %v8842 = vadd.f32 0.0, %v8841
        %v8843 = vpop.f32.mrb[0].mxu0
        %8844 = vmatprep.mubr.bf16.mxu0 0
        %8845 = vmatmul.mubr.bf16.gmra.mrb[0].mxu0 %v8690
        %v8846 = vpop.f32.mrb[0].mxu0
        %v8847 = vadd.f32 0.0, %v8846
        %v8848 = vpop.f32.mrb[0].mxu0
        %v8849 = vpop.f32.mrb[0].mxu0
        %v8850 = vadd.f32 0.0, %v8849
        %v8851 = vpop.f32.mrb[0].mxu0
        %8852 = vmatprep.mubr.bf16.mxu0 0
        %8853 = vmatmul.mubr.bf16.gmra.mrb[0].mxu0 %v8691
        %v8854 = vpop.f32.mrb[0].mxu0
        %v8855 = vadd.f32 0.0, %v8854
        %v8856 = vpop.f32.mrb[0].mxu0
        %v8857 = vpop.f32.mrb[0].mxu0
        %v8858 = vadd.f32 0.0, %v8857
        %v8859 = vpop.f32.mrb[0].mxu0
        %8860 = vmatprep.mubr.bf16.mxu0 0
        %8861 = vmatmul.mubr.bf16.gmra.mrb[0].mxu0 %v8692
        %v8862 = vpop.f32.mrb[0].mxu0
        %v8863 = vadd.f32 0.0, %v8862
        %v8864 = vpop.f32.mrb[0].mxu0
        %v8865 = vpop.f32.mrb[0].mxu0
        %v8866 = vadd.f32 0.0, %v8865
        %v8867 = vpop.f32.mrb[0].mxu0
        %8868 = vmatprep.mubr.bf16.mxu0 0
        %8869 = vmatmul.mubr.bf16.gmra.mrb[0].mxu0 %v8693
        %v8870 = vpop.f32.mrb[0].mxu0
        %v8871 = vadd.f32 0.0, %v8870
        %v8872 = vpop.f32.mrb[0].mxu0
        %v8873 = vpop.f32.mrb[0].mxu0
        %v8874 = vadd.f32 0.0, %v8873
        %v8875 = vpop.f32.mrb[0].mxu0
        %8876 = vmatprep.mubr.bf16.mxu0 0
        %8877 = vmatmul.mubr.bf16.gmra.mrb[0].mxu0 %v8694
        %v8878 = vpop.f32.mrb[0].mxu0
        %v8879 = vadd.f32 0.0, %v8878
        %v8880 = vpop.f32.mrb[0].mxu0
        %v8881 = vpop.f32.mrb[0].mxu0
        %v8882 = vadd.f32 0.0, %v8881
        %v8883 = vpop.f32.mrb[0].mxu0
        %8884 = vmatprep.mubr.bf16.mxu0 0
        %8885 = vmatmul.mubr.bf16.gmra.mrb[0].mxu0 %v8695
        %v8886 = vpop.f32.mrb[0].mxu0
        %v8887 = vadd.f32 0.0, %v8886
        %v8888 = vpop.f32.mrb[0].mxu0
        %v8889 = vpop.f32.mrb[0].mxu0
        %v8890 = vadd.f32 0.0, %v8889
        %v8891 = vpop.f32.mrb[0].mxu0
        %8892 = vmatprep.mubr.bf16.mxu0 0
        %8893 = vmatmul.mubr.bf16.gmra.mrb[0].mxu0 %v8696
        %v8894 = vpop.f32.mrb[0].mxu0
        %v8895 = vadd.f32 0.0, %v8894
        %v8896 = vpop.f32.mrb[0].mxu0
        %v8897 = vpop.f32.mrb[0].mxu0
        %v8898 = vadd.f32 0.0, %v8897
        %v8899 = vpop.f32.mrb[0].mxu0
        %8900 = vmatprep.mubr.bf16.mxu0 0
        %8901 = vmatmul.mubr.bf16.gmra.mrb[0].mxu0 %v8697
        %v8902 = vpop.f32.mrb[0].mxu0
        %v8903 = vadd.f32 0.0, %v8902
        %v8904 = vpop.f32.mrb[0].mxu0
        %v8905 = vpop.f32.mrb[0].mxu0
        %v8906 = vadd.f32 0.0, %v8905
        %v8907 = vpop.f32.mrb[0].mxu0
        %8908 = vmatprep.mubr.bf16.mxu0 0
        %8909 = vmatmul.mubr.bf16.gmra.mrb[0].mxu0 %v8698
        %v8910 = vpop.f32.mrb[0].mxu0
        %v8911 = vadd.f32 0.0, %v8910
        %v8912 = vpop.f32.mrb[0].mxu0
        %v8913 = vpop.f32.mrb[0].mxu0
        %v8914 = vadd.f32 0.0, %v8913
        %v8915 = vpop.f32.mrb[0].mxu0
        %8916 = vmatprep.mubr.bf16.mxu0 0
        %8917 = vmatmul.mubr.bf16.gmra.mrb[0].mxu0 %v8699
        %v8918 = vpop.f32.mrb[0].mxu0
        %v8919 = vadd.f32 0.0, %v8918
        %v8920 = vpop.f32.mrb[0].mxu0
        %v8921 = vpop.f32.mrb[0].mxu0
        %v8922 = vadd.f32 0.0, %v8921
        %v8923 = vpop.f32.mrb[0].mxu0
        %8924 = vdwg.mxu0
        %v8925 = vadd.f32 %v8427, %v8799
        %v8926 = vadd.f32 %v8428, %v8802
        %v8927 = vadd.f32 %v8429, %v8807
        %v8928 = vadd.f32 %v8430, %v8810
        %v8929 = vadd.f32 %v8431, %v8815
        %v8930 = vadd.f32 %v8432, %v8818
        %v8931 = vadd.f32 %v8433, %v8823
        %v8932 = vadd.f32 %v8434, %v8826
        %v8933 = vadd.f32 %v8435, %v8831
        %v8934 = vadd.f32 %v8436, %v8834
        %v8935 = vadd.f32 %v8437, %v8839
        %v8936 = vadd.f32 %v8438, %v8842
        %v8937 = vadd.f32 %v8439, %v8847
        %v8938 = vadd.f32 %v8440, %v8850
        %v8939 = vadd.f32 %v8441, %v8855
        %v8940 = vadd.f32 %v8442, %v8858
        %v8941 = vadd.f32 %v8443, %v8863
        %v8942 = vadd.f32 %v8444, %v8866
        %v8943 = vadd.f32 %v8445, %v8871
        %v8944 = vadd.f32 %v8446, %v8874
        %v8945 = vadd.f32 %v8447, %v8879
        %v8946 = vadd.f32 %v8448, %v8882
        %v8947 = vadd.f32 %v8449, %v8887
        %v8948 = vadd.f32 %v8450, %v8890
        %v8949 = vadd.f32 %v8451, %v8895
        %v8950 = vadd.f32 %v8452, %v8898
        %v8951 = vadd.f32 %v8453, %v8903
        %v8952 = vadd.f32 %v8454, %v8906
        %v8953 = vadd.f32 %v8455, %v8911
        %v8954 = vadd.f32 %v8456, %v8914
        %v8955 = vadd.f32 %v8457, %v8919
        %v8956 = vadd.f32 %v8458, %v8922
        %s8957 = scalar_lea.vmem [#allocation2], 24
        %v8958 = vld [vmem:[%s8957] sm:$0xf]
        %v8959 = vld [vmem:[%s8957 + $0x4] sm:$0xf]
        %v8960 = vld [vmem:[%s8957 + $0xc] sm:$0xf]
        %v8961 = vld [vmem:[%s8957 + $0x10] sm:$0xf]
        %v8962 = vld [vmem:[%s8957 + $0x18] sm:$0xf]
        %v8963 = vld [vmem:[%s8957 + $0x1c] sm:$0xf]
        %v8964 = vld [vmem:[%s8957 + $0x24] sm:$0xf]
        %v8965 = vld [vmem:[%s8957 + $0x28] sm:$0xf]
        %v8966 = vld [vmem:[%s8957 + $0x30] sm:$0xf]
        %v8967 = vld [vmem:[%s8957 + $0x34] sm:$0xf]
        %v8968 = vld [vmem:[%s8957 + $0x3c] sm:$0xf]
        %v8969 = vld [vmem:[%s8957 + $0x40] sm:$0xf]
        %v8970 = vld [vmem:[%s8957 + $0x48] sm:$0xf]
        %v8971 = vld [vmem:[%s8957 + $0x4c] sm:$0xf]
        %v8972 = vld [vmem:[%s8957 + $0x54] sm:$0xf]
        %v8973 = vld [vmem:[%s8957 + $0x58] sm:$0xf]
        %v8974 = vld [vmem:[%s8957 + $0x60] sm:$0xf]
        %v8975 = vld [vmem:[%s8957 + $0x64] sm:$0xf]
        %v8976 = vld [vmem:[%s8957 + $0x6c] sm:$0xf]
        %v8977 = vld [vmem:[%s8957 + $0x70] sm:$0xf]
        %v8978 = vld [vmem:[%s8957 + $0x78] sm:$0xf]
        %v8979 = vld [vmem:[%s8957 + $0x7c] sm:$0xf]
        %v8980 = vld [vmem:[%s8957 + $0x84] sm:$0xf]
        %v8981 = vld [vmem:[%s8957 + $0x88] sm:$0xf]
        %v8982 = vld [vmem:[%s8957 + $0x90] sm:$0xf]
        %v8983 = vld [vmem:[%s8957 + $0x94] sm:$0xf]
        %v8984 = vld [vmem:[%s8957 + $0x9c] sm:$0xf]
        %v8985 = vld [vmem:[%s8957 + $0xa0] sm:$0xf]
        %v8986 = vld [vmem:[%s8957 + $0xa8] sm:$0xf]
        %v8987 = vld [vmem:[%s8957 + $0xac] sm:$0xf]
        %v8988 = vld [vmem:[%s8957 + $0xb4] sm:$0xf]
        %v8989 = vld [vmem:[%s8957 + $0xb8] sm:$0xf]
        %s8990 = scalar_lea.vmem [#allocation3], 384
        %v8991 = vld [vmem:[%s8990] sm:$0xf]
        %v8992 = vld [vmem:[%s8990 + $0x4] sm:$0xf]
        %v8993 = vld [vmem:[%s8990 + $0x8] sm:$0xf]
        %v8994 = vld [vmem:[%s8990 + $0xc] sm:$0xf]
        %v8995 = vld [vmem:[%s8990 + $0x10] sm:$0xf]
        %v8996 = vld [vmem:[%s8990 + $0x14] sm:$0xf]
        %v8997 = vld [vmem:[%s8990 + $0x18] sm:$0xf]
        %v8998 = vld [vmem:[%s8990 + $0x1c] sm:$0xf]
        %v8999 = vld [vmem:[%s8990 + $0x20] sm:$0xf]
        %v9000 = vld [vmem:[%s8990 + $0x24] sm:$0xf]
        %v9001 = vld [vmem:[%s8990 + $0x28] sm:$0xf]
        %v9002 = vld [vmem:[%s8990 + $0x2c] sm:$0xf]
        %v9003 = vld [vmem:[%s8990 + $0x30] sm:$0xf]
        %v9004 = vld [vmem:[%s8990 + $0x34] sm:$0xf]
        %v9005 = vld [vmem:[%s8990 + $0x38] sm:$0xf]
        %v9006 = vld [vmem:[%s8990 + $0x3c] sm:$0xf]
        %v9039 = vunpack.c.l.b16 %v8958
        %v9040 = vunpack.c.l.b16 %v8959
        %v9041 = vunpack.c.l.b16 %v8960
        %v9042 = vunpack.c.l.b16 %v8961
        %v9043 = vunpack.c.l.b16 %v8962
        %v9044 = vunpack.c.l.b16 %v8963
        %v9045 = vunpack.c.l.b16 %v8964
        %v9046 = vunpack.c.l.b16 %v8965
        %v9047 = vunpack.c.l.b16 %v8966
        %v9048 = vunpack.c.l.b16 %v8967
        %v9049 = vunpack.c.l.b16 %v8968
        %v9050 = vunpack.c.l.b16 %v8969
        %v9051 = vunpack.c.l.b16 %v8970
        %v9052 = vunpack.c.l.b16 %v8971
        %v9053 = vunpack.c.l.b16 %v8972
        %v9054 = vunpack.c.l.b16 %v8973
        %v9055 = vunpack.c.l.b16 %v8974
        %v9056 = vunpack.c.l.b16 %v8975
        %v9057 = vunpack.c.l.b16 %v8976
        %v9058 = vunpack.c.l.b16 %v8977
        %v9059 = vunpack.c.l.b16 %v8978
        %v9060 = vunpack.c.l.b16 %v8979
        %v9061 = vunpack.c.l.b16 %v8980
        %v9062 = vunpack.c.l.b16 %v8981
        %v9063 = vunpack.c.l.b16 %v8982
        %v9064 = vunpack.c.l.b16 %v8983
        %v9065 = vunpack.c.l.b16 %v8984
        %v9066 = vunpack.c.l.b16 %v8985
        %v9067 = vunpack.c.l.b16 %v8986
        %v9068 = vunpack.c.l.b16 %v8987
        %v9069 = vunpack.c.l.b16 %v8988
        %v9070 = vunpack.c.l.b16 %v8989
        %v9071 = vpack.c.b16 %v9040, %v9039
        %v9072 = vpack.c.b16 %v9042, %v9041
        %v9073 = vpack.c.b16 %v9044, %v9043
        %v9074 = vpack.c.b16 %v9046, %v9045
        %v9075 = vpack.c.b16 %v9048, %v9047
        %v9076 = vpack.c.b16 %v9050, %v9049
        %v9077 = vpack.c.b16 %v9052, %v9051
        %v9078 = vpack.c.b16 %v9054, %v9053
        %v9079 = vpack.c.b16 %v9056, %v9055
        %v9080 = vpack.c.b16 %v9058, %v9057
        %v9081 = vpack.c.b16 %v9060, %v9059
        %v9082 = vpack.c.b16 %v9062, %v9061
        %v9083 = vpack.c.b16 %v9064, %v9063
        %v9084 = vpack.c.b16 %v9066, %v9065
        %v9085 = vpack.c.b16 %v9068, %v9067
        %v9086 = vpack.c.b16 %v9070, %v9069
        %v9119 = vunpack.c.l.b16 %v8991
        %v9120 = vunpack.c.l.b16 %v8992
        %v9121 = vunpack.c.l.b16 %v8993
        %v9122 = vunpack.c.l.b16 %v8994
        %v9123 = vunpack.c.l.b16 %v8995
        %v9124 = vunpack.c.l.b16 %v8996
        %v9125 = vunpack.c.l.b16 %v8997
        %v9126 = vunpack.c.l.b16 %v8998
        %v9127 = vunpack.c.l.b16 %v8999
        %v9128 = vunpack.c.l.b16 %v9000
        %v9129 = vunpack.c.l.b16 %v9001
        %v9130 = vunpack.c.l.b16 %v9002
        %v9131 = vunpack.c.l.b16 %v9003
        %v9132 = vunpack.c.l.b16 %v9004
        %v9133 = vunpack.c.l.b16 %v9005
        %v9134 = vunpack.c.l.b16 %v9006
        %v9135 = vpack.c.b16 %v9120, %v9119
        %v9136 = vpack.c.b16 %v9122, %v9121
        %v9137 = vpack.c.b16 %v9124, %v9123
        %v9138 = vpack.c.b16 %v9126, %v9125
        %v9139 = vpack.c.b16 %v9128, %v9127
        %v9140 = vpack.c.b16 %v9130, %v9129
        %v9141 = vpack.c.b16 %v9132, %v9131
        %v9142 = vpack.c.b16 %v9134, %v9133
        %9151 = vmatprep.subr.bf16.mxu0 0
        %9152 = vmatpush1.bf16.msra.mxu0 %v9135
        %9153 = vmatprep.subr.bf16.mxu0 0
        %9154 = vmatpush1.bf16.msra.mxu0 %v9136
        %9155 = vmatprep.subr.bf16.mxu0 0
        %9156 = vmatpush1.bf16.msra.mxu0 %v9137
        %9157 = vmatprep.subr.bf16.mxu0 0
        %9158 = vmatpush1.bf16.msra.mxu0 %v9138
        %9159 = vmatprep.subr.bf16.mxu0 0
        %9160 = vmatpush1.bf16.msra.mxu0 %v9139
        %9161 = vmatprep.subr.bf16.mxu0 0
        %9162 = vmatpush1.bf16.msra.mxu0 %v9140
        %9163 = vmatprep.subr.bf16.mxu0 0
        %9164 = vmatpush1.bf16.msra.mxu0 %v9141
        %9165 = vmatprep.subr.bf16.mxu0 0
        %9166 = vmatpush1.bf16.msra.mxu0 %v9142
        %9167 = vmatprep.subr.bf16.mxu0 0
        %9168 = vmatpush1.bf16.msra.mxu0 0
        %9169 = vmatprep.subr.bf16.mxu0 0
        %9170 = vmatpush1.bf16.msra.mxu0 0
        %9171 = vmatprep.subr.bf16.mxu0 0
        %9172 = vmatpush1.bf16.msra.mxu0 0
        %9173 = vmatprep.subr.bf16.mxu0 0
        %9174 = vmatpush1.bf16.msra.mxu0 0
        %9175 = vmatprep.subr.bf16.mxu0 0
        %9176 = vmatpush1.bf16.msra.mxu0 0
        %9177 = vmatprep.subr.bf16.mxu0 0
        %9178 = vmatpush1.bf16.msra.mxu0 0
        %9179 = vmatprep.subr.bf16.mxu0 0
        %9180 = vmatpush1.bf16.msra.mxu0 0
        %9181 = vmatprep.subr.bf16.mxu0 0
        %9182 = vmatpush1.bf16.msra.mxu0 0
        %9183 = vmatprep.mubr.bf16.mxu0 0
        %9184 = vmatmul.mubr.bf16.gmra.mrb[0].mxu0 %v9071
        %v9185 = vpop.f32.mrb[0].mxu0
        %v9186 = vadd.f32 0.0, %v9185
        %v9187 = vpop.f32.mrb[0].mxu0
        %v9188 = vpop.f32.mrb[0].mxu0
        %v9189 = vadd.f32 0.0, %v9188
        %v9190 = vpop.f32.mrb[0].mxu0
        %9191 = vmatprep.mubr.bf16.mxu0 0
        %9192 = vmatmul.mubr.bf16.gmra.mrb[0].mxu0 %v9072
        %v9193 = vpop.f32.mrb[0].mxu0
        %v9194 = vadd.f32 0.0, %v9193
        %v9195 = vpop.f32.mrb[0].mxu0
        %v9196 = vpop.f32.mrb[0].mxu0
        %v9197 = vadd.f32 0.0, %v9196
        %v9198 = vpop.f32.mrb[0].mxu0
        %9199 = vmatprep.mubr.bf16.mxu0 0
        %9200 = vmatmul.mubr.bf16.gmra.mrb[0].mxu0 %v9073
        %v9201 = vpop.f32.mrb[0].mxu0
        %v9202 = vadd.f32 0.0, %v9201
        %v9203 = vpop.f32.mrb[0].mxu0
        %v9204 = vpop.f32.mrb[0].mxu0
        %v9205 = vadd.f32 0.0, %v9204
        %v9206 = vpop.f32.mrb[0].mxu0
        %9207 = vmatprep.mubr.bf16.mxu0 0
        %9208 = vmatmul.mubr.bf16.gmra.mrb[0].mxu0 %v9074
        %v9209 = vpop.f32.mrb[0].mxu0
        %v9210 = vadd.f32 0.0, %v9209
        %v9211 = vpop.f32.mrb[0].mxu0
        %v9212 = vpop.f32.mrb[0].mxu0
        %v9213 = vadd.f32 0.0, %v9212
        %v9214 = vpop.f32.mrb[0].mxu0
        %9215 = vmatprep.mubr.bf16.mxu0 0
        %9216 = vmatmul.mubr.bf16.gmra.mrb[0].mxu0 %v9075
        %v9217 = vpop.f32.mrb[0].mxu0
        %v9218 = vadd.f32 0.0, %v9217
        %v9219 = vpop.f32.mrb[0].mxu0
        %v9220 = vpop.f32.mrb[0].mxu0
        %v9221 = vadd.f32 0.0, %v9220
        %v9222 = vpop.f32.mrb[0].mxu0
        %9223 = vmatprep.mubr.bf16.mxu0 0
        %9224 = vmatmul.mubr.bf16.gmra.mrb[0].mxu0 %v9076
        %v9225 = vpop.f32.mrb[0].mxu0
        %v9226 = vadd.f32 0.0, %v9225
        %v9227 = vpop.f32.mrb[0].mxu0
        %v9228 = vpop.f32.mrb[0].mxu0
        %v9229 = vadd.f32 0.0, %v9228
        %v9230 = vpop.f32.mrb[0].mxu0
        %9231 = vmatprep.mubr.bf16.mxu0 0
        %9232 = vmatmul.mubr.bf16.gmra.mrb[0].mxu0 %v9077
        %v9233 = vpop.f32.mrb[0].mxu0
        %v9234 = vadd.f32 0.0, %v9233
        %v9235 = vpop.f32.mrb[0].mxu0
        %v9236 = vpop.f32.mrb[0].mxu0
        %v9237 = vadd.f32 0.0, %v9236
        %v9238 = vpop.f32.mrb[0].mxu0
        %9239 = vmatprep.mubr.bf16.mxu0 0
        %9240 = vmatmul.mubr.bf16.gmra.mrb[0].mxu0 %v9078
        %v9241 = vpop.f32.mrb[0].mxu0
        %v9242 = vadd.f32 0.0, %v9241
        %v9243 = vpop.f32.mrb[0].mxu0
        %v9244 = vpop.f32.mrb[0].mxu0
        %v9245 = vadd.f32 0.0, %v9244
        %v9246 = vpop.f32.mrb[0].mxu0
        %9247 = vmatprep.mubr.bf16.mxu0 0
        %9248 = vmatmul.mubr.bf16.gmra.mrb[0].mxu0 %v9079
        %v9249 = vpop.f32.mrb[0].mxu0
        %v9250 = vadd.f32 0.0, %v9249
        %v9251 = vpop.f32.mrb[0].mxu0
        %v9252 = vpop.f32.mrb[0].mxu0
        %v9253 = vadd.f32 0.0, %v9252
        %v9254 = vpop.f32.mrb[0].mxu0
        %9255 = vmatprep.mubr.bf16.mxu0 0
        %9256 = vmatmul.mubr.bf16.gmra.mrb[0].mxu0 %v9080
        %v9257 = vpop.f32.mrb[0].mxu0
        %v9258 = vadd.f32 0.0, %v9257
        %v9259 = vpop.f32.mrb[0].mxu0
        %v9260 = vpop.f32.mrb[0].mxu0
        %v9261 = vadd.f32 0.0, %v9260
        %v9262 = vpop.f32.mrb[0].mxu0
        %9263 = vmatprep.mubr.bf16.mxu0 0
        %9264 = vmatmul.mubr.bf16.gmra.mrb[0].mxu0 %v9081
        %v9265 = vpop.f32.mrb[0].mxu0
        %v9266 = vadd.f32 0.0, %v9265
        %v9267 = vpop.f32.mrb[0].mxu0
        %v9268 = vpop.f32.mrb[0].mxu0
        %v9269 = vadd.f32 0.0, %v9268
        %v9270 = vpop.f32.mrb[0].mxu0
        %9271 = vmatprep.mubr.bf16.mxu0 0
        %9272 = vmatmul.mubr.bf16.gmra.mrb[0].mxu0 %v9082
        %v9273 = vpop.f32.mrb[0].mxu0
        %v9274 = vadd.f32 0.0, %v9273
        %v9275 = vpop.f32.mrb[0].mxu0
        %v9276 = vpop.f32.mrb[0].mxu0
        %v9277 = vadd.f32 0.0, %v9276
        %v9278 = vpop.f32.mrb[0].mxu0
        %9279 = vmatprep.mubr.bf16.mxu0 0
        %9280 = vmatmul.mubr.bf16.gmra.mrb[0].mxu0 %v9083
        %v9281 = vpop.f32.mrb[0].mxu0
        %v9282 = vadd.f32 0.0, %v9281
        %v9283 = vpop.f32.mrb[0].mxu0
        %v9284 = vpop.f32.mrb[0].mxu0
        %v9285 = vadd.f32 0.0, %v9284
        %v9286 = vpop.f32.mrb[0].mxu0
        %9287 = vmatprep.mubr.bf16.mxu0 0
        %9288 = vmatmul.mubr.bf16.gmra.mrb[0].mxu0 %v9084
        %v9289 = vpop.f32.mrb[0].mxu0
        %v9290 = vadd.f32 0.0, %v9289
        %v9291 = vpop.f32.mrb[0].mxu0
        %v9292 = vpop.f32.mrb[0].mxu0
        %v9293 = vadd.f32 0.0, %v9292
        %v9294 = vpop.f32.mrb[0].mxu0
        %9295 = vmatprep.mubr.bf16.mxu0 0
        %9296 = vmatmul.mubr.bf16.gmra.mrb[0].mxu0 %v9085
        %v9297 = vpop.f32.mrb[0].mxu0
        %v9298 = vadd.f32 0.0, %v9297
        %v9299 = vpop.f32.mrb[0].mxu0
        %v9300 = vpop.f32.mrb[0].mxu0
        %v9301 = vadd.f32 0.0, %v9300
        %v9302 = vpop.f32.mrb[0].mxu0
        %9303 = vmatprep.mubr.bf16.mxu0 0
        %9304 = vmatmul.mubr.bf16.gmra.mrb[0].mxu0 %v9086
        %v9305 = vpop.f32.mrb[0].mxu0
        %v9306 = vadd.f32 0.0, %v9305
        %v9307 = vpop.f32.mrb[0].mxu0
        %v9308 = vpop.f32.mrb[0].mxu0
        %v9309 = vadd.f32 0.0, %v9308
        %v9310 = vpop.f32.mrb[0].mxu0
        %9311 = vdwg.mxu0
        %v9312 = vadd.f32 %v8925, %v9186
        %v9313 = vadd.f32 %v8926, %v9189
        %v9314 = vadd.f32 %v8927, %v9194
        %v9315 = vadd.f32 %v8928, %v9197
        %v9316 = vadd.f32 %v8929, %v9202
        %v9317 = vadd.f32 %v8930, %v9205
        %v9318 = vadd.f32 %v8931, %v9210
        %v9319 = vadd.f32 %v8932, %v9213
        %v9320 = vadd.f32 %v8933, %v9218
        %v9321 = vadd.f32 %v8934, %v9221
        %v9322 = vadd.f32 %v8935, %v9226
        %v9323 = vadd.f32 %v8936, %v9229
        %v9324 = vadd.f32 %v8937, %v9234
        %v9325 = vadd.f32 %v8938, %v9237
        %v9326 = vadd.f32 %v8939, %v9242
        %v9327 = vadd.f32 %v8940, %v9245
        %v9328 = vadd.f32 %v8941, %v9250
        %v9329 = vadd.f32 %v8942, %v9253
        %v9330 = vadd.f32 %v8943, %v9258
        %v9331 = vadd.f32 %v8944, %v9261
        %v9332 = vadd.f32 %v8945, %v9266
        %v9333 = vadd.f32 %v8946, %v9269
        %v9334 = vadd.f32 %v8947, %v9274
        %v9335 = vadd.f32 %v8948, %v9277
        %v9336 = vadd.f32 %v8949, %v9282
        %v9337 = vadd.f32 %v8950, %v9285
        %v9338 = vadd.f32 %v8951, %v9290
        %v9339 = vadd.f32 %v8952, %v9293
        %v9340 = vadd.f32 %v8953, %v9298
        %v9341 = vadd.f32 %v8954, %v9301
        %v9342 = vadd.f32 %v8955, %v9306
        %v9343 = vadd.f32 %v8956, %v9309
        %v9344 = vld [vmem:[%s8957] sm:$0xf]
        %v9345 = vld [vmem:[%s8957 + $0x4] sm:$0xf]
        %v9346 = vld [vmem:[%s8957 + $0x8] sm:$0x1]
        %v9347 = vld [vmem:[%s8957 + $0xc] sm:$0xf]
        %v9348 = vld [vmem:[%s8957 + $0x10] sm:$0xf]
        %v9349 = vld [vmem:[%s8957 + $0x14] sm:$0x1]
        %v9350 = vld [vmem:[%s8957 + $0x18] sm:$0xf]
        %v9351 = vld [vmem:[%s8957 + $0x1c] sm:$0xf]
        %v9352 = vld [vmem:[%s8957 + $0x20] sm:$0x1]
        %v9353 = vld [vmem:[%s8957 + $0x24] sm:$0xf]
        %v9354 = vld [vmem:[%s8957 + $0x28] sm:$0xf]
        %v9355 = vld [vmem:[%s8957 + $0x2c] sm:$0x1]
        %v9356 = vld [vmem:[%s8957 + $0x30] sm:$0xf]
        %v9357 = vld [vmem:[%s8957 + $0x34] sm:$0xf]
        %v9358 = vld [vmem:[%s8957 + $0x38] sm:$0x1]
        %v9359 = vld [vmem:[%s8957 + $0x3c] sm:$0xf]
        %v9360 = vld [vmem:[%s8957 + $0x40] sm:$0xf]
        %v9361 = vld [vmem:[%s8957 + $0x44] sm:$0x1]
        %v9362 = vld [vmem:[%s8957 + $0x48] sm:$0xf]
        %v9363 = vld [vmem:[%s8957 + $0x4c] sm:$0xf]
        %v9364 = vld [vmem:[%s8957 + $0x50] sm:$0x1]
        %v9365 = vld [vmem:[%s8957 + $0x54] sm:$0xf]
        %v9366 = vld [vmem:[%s8957 + $0x58] sm:$0xf]
        %v9367 = vld [vmem:[%s8957 + $0x5c] sm:$0x1]
        %v9368 = vld [vmem:[%s8957 + $0x60] sm:$0xf]
        %v9369 = vld [vmem:[%s8957 + $0x64] sm:$0xf]
        %v9370 = vld [vmem:[%s8957 + $0x68] sm:$0x1]
        %v9371 = vld [vmem:[%s8957 + $0x6c] sm:$0xf]
        %v9372 = vld [vmem:[%s8957 + $0x70] sm:$0xf]
        %v9373 = vld [vmem:[%s8957 + $0x74] sm:$0x1]
        %v9374 = vld [vmem:[%s8957 + $0x78] sm:$0xf]
        %v9375 = vld [vmem:[%s8957 + $0x7c] sm:$0xf]
        %v9376 = vld [vmem:[%s8957 + $0x80] sm:$0x1]
        %v9377 = vld [vmem:[%s8957 + $0x84] sm:$0xf]
        %v9378 = vld [vmem:[%s8957 + $0x88] sm:$0xf]
        %v9379 = vld [vmem:[%s8957 + $0x8c] sm:$0x1]
        %v9380 = vld [vmem:[%s8957 + $0x90] sm:$0xf]
        %v9381 = vld [vmem:[%s8957 + $0x94] sm:$0xf]
        %v9382 = vld [vmem:[%s8957 + $0x98] sm:$0x1]
        %v9383 = vld [vmem:[%s8957 + $0x9c] sm:$0xf]
        %v9384 = vld [vmem:[%s8957 + $0xa0] sm:$0xf]
        %v9385 = vld [vmem:[%s8957 + $0xa4] sm:$0x1]
        %v9386 = vld [vmem:[%s8957 + $0xa8] sm:$0xf]
        %v9387 = vld [vmem:[%s8957 + $0xac] sm:$0xf]
        %v9388 = vld [vmem:[%s8957 + $0xb0] sm:$0x1]
        %v9389 = vld [vmem:[%s8957 + $0xb4] sm:$0xf]
        %v9390 = vld [vmem:[%s8957 + $0xb8] sm:$0xf]
        %v9391 = vld [vmem:[%s8957 + $0xbc] sm:$0x1]
        %v9393 = vshrl.u32 %v9344, 16
        %v9395 = vrot.slane %v9393, 4
        %v9396 = vshll.u32 %v9344, 16
        %v9398 = vrot.slane %v9396, 5
        %v9399 = vor.u32 %v9395, %v9398
        %v9400 = vrot.slane %v9399, 4
        %v9402 = vshll.u32 %v9345, 16
        %v9404 = vrot.slane %v9402, 5
        %v9405 = vsel %vm322, %v9400, %v9404
        %v9406 = vshrl.u32 %v9345, 16
        %v9408 = vrot.slane %v9406, 4
        %v9409 = vor.u32 %v9408, %v9404
        %v9410 = vrot.slane %v9409, 4
        %v9412 = vshll.u32 %v9346, 16
        %v9414 = vrot.slane %v9412, 5
        %v9415 = vsel %vm322, %v9410, %v9414
        %v9417 = vshrl.u32 %v9347, 16
        %v9419 = vrot.slane %v9417, 4
        %v9420 = vshll.u32 %v9347, 16
        %v9422 = vrot.slane %v9420, 5
        %v9423 = vor.u32 %v9419, %v9422
        %v9424 = vrot.slane %v9423, 4
        %v9426 = vshll.u32 %v9348, 16
        %v9428 = vrot.slane %v9426, 5
        %v9429 = vsel %vm322, %v9424, %v9428
        %v9430 = vshrl.u32 %v9348, 16
        %v9432 = vrot.slane %v9430, 4
        %v9433 = vor.u32 %v9432, %v9428
        %v9434 = vrot.slane %v9433, 4
        %v9436 = vshll.u32 %v9349, 16
        %v9438 = vrot.slane %v9436, 5
        %v9439 = vsel %vm322, %v9434, %v9438
        %v9441 = vshrl.u32 %v9350, 16
        %v9443 = vrot.slane %v9441, 4
        %v9444 = vshll.u32 %v9350, 16
        %v9446 = vrot.slane %v9444, 5
        %v9447 = vor.u32 %v9443, %v9446
        %v9448 = vrot.slane %v9447, 4
        %v9450 = vshll.u32 %v9351, 16
        %v9452 = vrot.slane %v9450, 5
        %v9453 = vsel %vm322, %v9448, %v9452
        %v9454 = vshrl.u32 %v9351, 16
        %v9456 = vrot.slane %v9454, 4
        %v9457 = vor.u32 %v9456, %v9452
        %v9458 = vrot.slane %v9457, 4
        %v9460 = vshll.u32 %v9352, 16
        %v9462 = vrot.slane %v9460, 5
        %v9463 = vsel %vm322, %v9458, %v9462
        %v9465 = vshrl.u32 %v9353, 16
        %v9467 = vrot.slane %v9465, 4
        %v9468 = vshll.u32 %v9353, 16
        %v9470 = vrot.slane %v9468, 5
        %v9471 = vor.u32 %v9467, %v9470
        %v9472 = vrot.slane %v9471, 4
        %v9474 = vshll.u32 %v9354, 16
        %v9476 = vrot.slane %v9474, 5
        %v9477 = vsel %vm322, %v9472, %v9476
        %v9478 = vshrl.u32 %v9354, 16
        %v9480 = vrot.slane %v9478, 4
        %v9481 = vor.u32 %v9480, %v9476
        %v9482 = vrot.slane %v9481, 4
        %v9484 = vshll.u32 %v9355, 16
        %v9486 = vrot.slane %v9484, 5
        %v9487 = vsel %vm322, %v9482, %v9486
        %v9489 = vshrl.u32 %v9356, 16
        %v9491 = vrot.slane %v9489, 4
        %v9492 = vshll.u32 %v9356, 16
        %v9494 = vrot.slane %v9492, 5
        %v9495 = vor.u32 %v9491, %v9494
        %v9496 = vrot.slane %v9495, 4
        %v9498 = vshll.u32 %v9357, 16
        %v9500 = vrot.slane %v9498, 5
        %v9501 = vsel %vm322, %v9496, %v9500
        %v9502 = vshrl.u32 %v9357, 16
        %v9504 = vrot.slane %v9502, 4
        %v9505 = vor.u32 %v9504, %v9500
        %v9506 = vrot.slane %v9505, 4
        %v9508 = vshll.u32 %v9358, 16
        %v9510 = vrot.slane %v9508, 5
        %v9511 = vsel %vm322, %v9506, %v9510
        %v9513 = vshrl.u32 %v9359, 16
        %v9515 = vrot.slane %v9513, 4
        %v9516 = vshll.u32 %v9359, 16
        %v9518 = vrot.slane %v9516, 5
        %v9519 = vor.u32 %v9515, %v9518
        %v9520 = vrot.slane %v9519, 4
        %v9522 = vshll.u32 %v9360, 16
        %v9524 = vrot.slane %v9522, 5
        %v9525 = vsel %vm322, %v9520, %v9524
        %v9526 = vshrl.u32 %v9360, 16
        %v9528 = vrot.slane %v9526, 4
        %v9529 = vor.u32 %v9528, %v9524
        %v9530 = vrot.slane %v9529, 4
        %v9532 = vshll.u32 %v9361, 16
        %v9534 = vrot.slane %v9532, 5
        %v9535 = vsel %vm322, %v9530, %v9534
        %v9537 = vshrl.u32 %v9362, 16
        %v9539 = vrot.slane %v9537, 4
        %v9540 = vshll.u32 %v9362, 16
        %v9542 = vrot.slane %v9540, 5
        %v9543 = vor.u32 %v9539, %v9542
        %v9544 = vrot.slane %v9543, 4
        %v9546 = vshll.u32 %v9363, 16
        %v9548 = vrot.slane %v9546, 5
        %v9549 = vsel %vm322, %v9544, %v9548
        %v9550 = vshrl.u32 %v9363, 16
        %v9552 = vrot.slane %v9550, 4
        %v9553 = vor.u32 %v9552, %v9548
        %v9554 = vrot.slane %v9553, 4
        %v9556 = vshll.u32 %v9364, 16
        %v9558 = vrot.slane %v9556, 5
        %v9559 = vsel %vm322, %v9554, %v9558
        %v9561 = vshrl.u32 %v9365, 16
        %v9563 = vrot.slane %v9561, 4
        %v9564 = vshll.u32 %v9365, 16
        %v9566 = vrot.slane %v9564, 5
        %v9567 = vor.u32 %v9563, %v9566
        %v9568 = vrot.slane %v9567, 4
        %v9570 = vshll.u32 %v9366, 16
        %v9572 = vrot.slane %v9570, 5
        %v9573 = vsel %vm322, %v9568, %v9572
        %v9574 = vshrl.u32 %v9366, 16
        %v9576 = vrot.slane %v9574, 4
        %v9577 = vor.u32 %v9576, %v9572
        %v9578 = vrot.slane %v9577, 4
        %v9580 = vshll.u32 %v9367, 16
        %v9582 = vrot.slane %v9580, 5
        %v9583 = vsel %vm322, %v9578, %v9582
        %v9585 = vshrl.u32 %v9368, 16
        %v9587 = vrot.slane %v9585, 4
        %v9588 = vshll.u32 %v9368, 16
        %v9590 = vrot.slane %v9588, 5
        %v9591 = vor.u32 %v9587, %v9590
        %v9592 = vrot.slane %v9591, 4
        %v9594 = vshll.u32 %v9369, 16
        %v9596 = vrot.slane %v9594, 5
        %v9597 = vsel %vm322, %v9592, %v9596
        %v9598 = vshrl.u32 %v9369, 16
        %v9600 = vrot.slane %v9598, 4
        %v9601 = vor.u32 %v9600, %v9596
        %v9602 = vrot.slane %v9601, 4
        %v9604 = vshll.u32 %v9370, 16
        %v9606 = vrot.slane %v9604, 5
        %v9607 = vsel %vm322, %v9602, %v9606
        %v9609 = vshrl.u32 %v9371, 16
        %v9611 = vrot.slane %v9609, 4
        %v9612 = vshll.u32 %v9371, 16
        %v9614 = vrot.slane %v9612, 5
        %v9615 = vor.u32 %v9611, %v9614
        %v9616 = vrot.slane %v9615, 4
        %v9618 = vshll.u32 %v9372, 16
        %v9620 = vrot.slane %v9618, 5
        %v9621 = vsel %vm322, %v9616, %v9620
        %v9622 = vshrl.u32 %v9372, 16
        %v9624 = vrot.slane %v9622, 4
        %v9625 = vor.u32 %v9624, %v9620
        %v9626 = vrot.slane %v9625, 4
        %v9628 = vshll.u32 %v9373, 16
        %v9630 = vrot.slane %v9628, 5
        %v9631 = vsel %vm322, %v9626, %v9630
        %v9633 = vshrl.u32 %v9374, 16
        %v9635 = vrot.slane %v9633, 4
        %v9636 = vshll.u32 %v9374, 16
        %v9638 = vrot.slane %v9636, 5
        %v9639 = vor.u32 %v9635, %v9638
        %v9640 = vrot.slane %v9639, 4
        %v9642 = vshll.u32 %v9375, 16
        %v9644 = vrot.slane %v9642, 5
        %v9645 = vsel %vm322, %v9640, %v9644
        %v9646 = vshrl.u32 %v9375, 16
        %v9648 = vrot.slane %v9646, 4
        %v9649 = vor.u32 %v9648, %v9644
        %v9650 = vrot.slane %v9649, 4
        %v9652 = vshll.u32 %v9376, 16
        %v9654 = vrot.slane %v9652, 5
        %v9655 = vsel %vm322, %v9650, %v9654
        %v9657 = vshrl.u32 %v9377, 16
        %v9659 = vrot.slane %v9657, 4
        %v9660 = vshll.u32 %v9377, 16
        %v9662 = vrot.slane %v9660, 5
        %v9663 = vor.u32 %v9659, %v9662
        %v9664 = vrot.slane %v9663, 4
        %v9666 = vshll.u32 %v9378, 16
        %v9668 = vrot.slane %v9666, 5
        %v9669 = vsel %vm322, %v9664, %v9668
        %v9670 = vshrl.u32 %v9378, 16
        %v9672 = vrot.slane %v9670, 4
        %v9673 = vor.u32 %v9672, %v9668
        %v9674 = vrot.slane %v9673, 4
        %v9676 = vshll.u32 %v9379, 16
        %v9678 = vrot.slane %v9676, 5
        %v9679 = vsel %vm322, %v9674, %v9678
        %v9681 = vshrl.u32 %v9380, 16
        %v9683 = vrot.slane %v9681, 4
        %v9684 = vshll.u32 %v9380, 16
        %v9686 = vrot.slane %v9684, 5
        %v9687 = vor.u32 %v9683, %v9686
        %v9688 = vrot.slane %v9687, 4
        %v9690 = vshll.u32 %v9381, 16
        %v9692 = vrot.slane %v9690, 5
        %v9693 = vsel %vm322, %v9688, %v9692
        %v9694 = vshrl.u32 %v9381, 16
        %v9696 = vrot.slane %v9694, 4
        %v9697 = vor.u32 %v9696, %v9692
        %v9698 = vrot.slane %v9697, 4
        %v9700 = vshll.u32 %v9382, 16
        %v9702 = vrot.slane %v9700, 5
        %v9703 = vsel %vm322, %v9698, %v9702
        %v9705 = vshrl.u32 %v9383, 16
        %v9707 = vrot.slane %v9705, 4
        %v9708 = vshll.u32 %v9383, 16
        %v9710 = vrot.slane %v9708, 5
        %v9711 = vor.u32 %v9707, %v9710
        %v9712 = vrot.slane %v9711, 4
        %v9714 = vshll.u32 %v9384, 16
        %v9716 = vrot.slane %v9714, 5
        %v9717 = vsel %vm322, %v9712, %v9716
        %v9718 = vshrl.u32 %v9384, 16
        %v9720 = vrot.slane %v9718, 4
        %v9721 = vor.u32 %v9720, %v9716
        %v9722 = vrot.slane %v9721, 4
        %v9724 = vshll.u32 %v9385, 16
        %v9726 = vrot.slane %v9724, 5
        %v9727 = vsel %vm322, %v9722, %v9726
        %v9729 = vshrl.u32 %v9386, 16
        %v9731 = vrot.slane %v9729, 4
        %v9732 = vshll.u32 %v9386, 16
        %v9734 = vrot.slane %v9732, 5
        %v9735 = vor.u32 %v9731, %v9734
        %v9736 = vrot.slane %v9735, 4
        %v9738 = vshll.u32 %v9387, 16
        %v9740 = vrot.slane %v9738, 5
        %v9741 = vsel %vm322, %v9736, %v9740
        %v9742 = vshrl.u32 %v9387, 16
        %v9744 = vrot.slane %v9742, 4
        %v9745 = vor.u32 %v9744, %v9740
        %v9746 = vrot.slane %v9745, 4
        %v9748 = vshll.u32 %v9388, 16
        %v9750 = vrot.slane %v9748, 5
        %v9751 = vsel %vm322, %v9746, %v9750
        %v9753 = vshrl.u32 %v9389, 16
        %v9755 = vrot.slane %v9753, 4
        %v9756 = vshll.u32 %v9389, 16
        %v9758 = vrot.slane %v9756, 5
        %v9759 = vor.u32 %v9755, %v9758
        %v9760 = vrot.slane %v9759, 4
        %v9762 = vshll.u32 %v9390, 16
        %v9764 = vrot.slane %v9762, 5
        %v9765 = vsel %vm322, %v9760, %v9764
        %v9766 = vshrl.u32 %v9390, 16
        %v9768 = vrot.slane %v9766, 4
        %v9769 = vor.u32 %v9768, %v9764
        %v9770 = vrot.slane %v9769, 4
        %v9772 = vshll.u32 %v9391, 16
        %v9774 = vrot.slane %v9772, 5
        %v9775 = vsel %vm322, %v9770, %v9774
        %s9776 = scalar_lea.vmem [#allocation3], 448
        %v9777 = vld [vmem:[%s9776] sm:$0xf]
        %v9778 = vld [vmem:[%s9776 + $0x4] sm:$0xf]
        %v9779 = vld [vmem:[%s9776 + $0x8] sm:$0xf]
        %v9780 = vld [vmem:[%s9776 + $0xc] sm:$0xf]
        %v9781 = vld [vmem:[%s9776 + $0x10] sm:$0xf]
        %v9782 = vld [vmem:[%s9776 + $0x14] sm:$0xf]
        %v9783 = vld [vmem:[%s9776 + $0x18] sm:$0xf]
        %v9784 = vld [vmem:[%s9776 + $0x1c] sm:$0xf]
        %v9785 = vld [vmem:[%s9776 + $0x20] sm:$0xf]
        %v9786 = vld [vmem:[%s9776 + $0x24] sm:$0xf]
        %v9787 = vld [vmem:[%s9776 + $0x28] sm:$0xf]
        %v9788 = vld [vmem:[%s9776 + $0x2c] sm:$0xf]
        %v9789 = vld [vmem:[%s9776 + $0x30] sm:$0xf]
        %v9790 = vld [vmem:[%s9776 + $0x34] sm:$0xf]
        %v9791 = vld [vmem:[%s9776 + $0x38] sm:$0xf]
        %v9792 = vld [vmem:[%s9776 + $0x3c] sm:$0xf]
        %v9793 = vunpack.c.l.b16 %v9405
        %v9794 = vunpack.c.l.b16 %v9415
        %v9795 = vunpack.c.l.b16 %v9429
        %v9796 = vunpack.c.l.b16 %v9439
        %v9797 = vunpack.c.l.b16 %v9453
        %v9798 = vunpack.c.l.b16 %v9463
        %v9799 = vunpack.c.l.b16 %v9477
        %v9800 = vunpack.c.l.b16 %v9487
        %v9801 = vunpack.c.l.b16 %v9501
        %v9802 = vunpack.c.l.b16 %v9511
        %v9803 = vunpack.c.l.b16 %v9525
        %v9804 = vunpack.c.l.b16 %v9535
        %v9805 = vunpack.c.l.b16 %v9549
        %v9806 = vunpack.c.l.b16 %v9559
        %v9807 = vunpack.c.l.b16 %v9573
        %v9808 = vunpack.c.l.b16 %v9583
        %v9809 = vunpack.c.l.b16 %v9597
        %v9810 = vunpack.c.l.b16 %v9607
        %v9811 = vunpack.c.l.b16 %v9621
        %v9812 = vunpack.c.l.b16 %v9631
        %v9813 = vunpack.c.l.b16 %v9645
        %v9814 = vunpack.c.l.b16 %v9655
        %v9815 = vunpack.c.l.b16 %v9669
        %v9816 = vunpack.c.l.b16 %v9679
        %v9817 = vunpack.c.l.b16 %v9693
        %v9818 = vunpack.c.l.b16 %v9703
        %v9819 = vunpack.c.l.b16 %v9717
        %v9820 = vunpack.c.l.b16 %v9727
        %v9821 = vunpack.c.l.b16 %v9741
        %v9822 = vunpack.c.l.b16 %v9751
        %v9823 = vunpack.c.l.b16 %v9765
        %v9824 = vunpack.c.l.b16 %v9775
        %v9825 = vpack.c.b16 %v9794, %v9793
        %v9826 = vpack.c.b16 %v9796, %v9795
        %v9827 = vpack.c.b16 %v9798, %v9797
        %v9828 = vpack.c.b16 %v9800, %v9799
        %v9829 = vpack.c.b16 %v9802, %v9801
        %v9830 = vpack.c.b16 %v9804, %v9803
        %v9831 = vpack.c.b16 %v9806, %v9805
        %v9832 = vpack.c.b16 %v9808, %v9807
        %v9833 = vpack.c.b16 %v9810, %v9809
        %v9834 = vpack.c.b16 %v9812, %v9811
        %v9835 = vpack.c.b16 %v9814, %v9813
        %v9836 = vpack.c.b16 %v9816, %v9815
        %v9837 = vpack.c.b16 %v9818, %v9817
        %v9838 = vpack.c.b16 %v9820, %v9819
        %v9839 = vpack.c.b16 %v9822, %v9821
        %v9840 = vpack.c.b16 %v9824, %v9823
        %v9873 = vunpack.c.l.b16 %v9777
        %v9874 = vunpack.c.l.b16 %v9778
        %v9875 = vunpack.c.l.b16 %v9779
        %v9876 = vunpack.c.l.b16 %v9780
        %v9877 = vunpack.c.l.b16 %v9781
        %v9878 = vunpack.c.l.b16 %v9782
        %v9879 = vunpack.c.l.b16 %v9783
        %v9880 = vunpack.c.l.b16 %v9784
        %v9881 = vunpack.c.l.b16 %v9785
        %v9882 = vunpack.c.l.b16 %v9786
        %v9883 = vunpack.c.l.b16 %v9787
        %v9884 = vunpack.c.l.b16 %v9788
        %v9885 = vunpack.c.l.b16 %v9789
        %v9886 = vunpack.c.l.b16 %v9790
        %v9887 = vunpack.c.l.b16 %v9791
        %v9888 = vunpack.c.l.b16 %v9792
        %v9889 = vpack.c.b16 %v9874, %v9873
        %v9890 = vpack.c.b16 %v9876, %v9875
        %v9891 = vpack.c.b16 %v9878, %v9877
        %v9892 = vpack.c.b16 %v9880, %v9879
        %v9893 = vpack.c.b16 %v9882, %v9881
        %v9894 = vpack.c.b16 %v9884, %v9883
        %v9895 = vpack.c.b16 %v9886, %v9885
        %v9896 = vpack.c.b16 %v9888, %v9887
        %9905 = vmatprep.subr.bf16.mxu0 0
        %9906 = vmatpush1.bf16.msra.mxu0 %v9889
        %9907 = vmatprep.subr.bf16.mxu0 0
        %9908 = vmatpush1.bf16.msra.mxu0 %v9890
        %9909 = vmatprep.subr.bf16.mxu0 0
        %9910 = vmatpush1.bf16.msra.mxu0 %v9891
        %9911 = vmatprep.subr.bf16.mxu0 0
        %9912 = vmatpush1.bf16.msra.mxu0 %v9892
        %9913 = vmatprep.subr.bf16.mxu0 0
        %9914 = vmatpush1.bf16.msra.mxu0 %v9893
        %9915 = vmatprep.subr.bf16.mxu0 0
        %9916 = vmatpush1.bf16.msra.mxu0 %v9894
        %9917 = vmatprep.subr.bf16.mxu0 0
        %9918 = vmatpush1.bf16.msra.mxu0 %v9895
        %9919 = vmatprep.subr.bf16.mxu0 0
        %9920 = vmatpush1.bf16.msra.mxu0 %v9896
        %9921 = vmatprep.subr.bf16.mxu0 0
        %9922 = vmatpush1.bf16.msra.mxu0 0
        %9923 = vmatprep.subr.bf16.mxu0 0
        %9924 = vmatpush1.bf16.msra.mxu0 0
        %9925 = vmatprep.subr.bf16.mxu0 0
        %9926 = vmatpush1.bf16.msra.mxu0 0
        %9927 = vmatprep.subr.bf16.mxu0 0
        %9928 = vmatpush1.bf16.msra.mxu0 0
        %9929 = vmatprep.subr.bf16.mxu0 0
        %9930 = vmatpush1.bf16.msra.mxu0 0
        %9931 = vmatprep.subr.bf16.mxu0 0
        %9932 = vmatpush1.bf16.msra.mxu0 0
        %9933 = vmatprep.subr.bf16.mxu0 0
        %9934 = vmatpush1.bf16.msra.mxu0 0
        %9935 = vmatprep.subr.bf16.mxu0 0
        %9936 = vmatpush1.bf16.msra.mxu0 0
        %9937 = vmatprep.mubr.bf16.mxu0 0
        %9938 = vmatmul.mubr.bf16.gmra.mrb[0].mxu0 %v9825
        %v9939 = vpop.f32.mrb[0].mxu0
        %v9940 = vadd.f32 0.0, %v9939
        %v9941 = vpop.f32.mrb[0].mxu0
        %v9942 = vpop.f32.mrb[0].mxu0
        %v9943 = vadd.f32 0.0, %v9942
        %v9944 = vpop.f32.mrb[0].mxu0
        %9945 = vmatprep.mubr.bf16.mxu0 0
        %9946 = vmatmul.mubr.bf16.gmra.mrb[0].mxu0 %v9826
        %v9947 = vpop.f32.mrb[0].mxu0
        %v9948 = vadd.f32 0.0, %v9947
        %v9949 = vpop.f32.mrb[0].mxu0
        %v9950 = vpop.f32.mrb[0].mxu0
        %v9951 = vadd.f32 0.0, %v9950
        %v9952 = vpop.f32.mrb[0].mxu0
        %9953 = vmatprep.mubr.bf16.mxu0 0
        %9954 = vmatmul.mubr.bf16.gmra.mrb[0].mxu0 %v9827
        %v9955 = vpop.f32.mrb[0].mxu0
        %v9956 = vadd.f32 0.0, %v9955
        %v9957 = vpop.f32.mrb[0].mxu0
        %v9958 = vpop.f32.mrb[0].mxu0
        %v9959 = vadd.f32 0.0, %v9958
        %v9960 = vpop.f32.mrb[0].mxu0
        %9961 = vmatprep.mubr.bf16.mxu0 0
        %9962 = vmatmul.mubr.bf16.gmra.mrb[0].mxu0 %v9828
        %v9963 = vpop.f32.mrb[0].mxu0
        %v9964 = vadd.f32 0.0, %v9963
        %v9965 = vpop.f32.mrb[0].mxu0
        %v9966 = vpop.f32.mrb[0].mxu0
        %v9967 = vadd.f32 0.0, %v9966
        %v9968 = vpop.f32.mrb[0].mxu0
        %9969 = vmatprep.mubr.bf16.mxu0 0
        %9970 = vmatmul.mubr.bf16.gmra.mrb[0].mxu0 %v9829
        %v9971 = vpop.f32.mrb[0].mxu0
        %v9972 = vadd.f32 0.0, %v9971
        %v9973 = vpop.f32.mrb[0].mxu0
        %v9974 = vpop.f32.mrb[0].mxu0
        %v9975 = vadd.f32 0.0, %v9974
        %v9976 = vpop.f32.mrb[0].mxu0
        %9977 = vmatprep.mubr.bf16.mxu0 0
        %9978 = vmatmul.mubr.bf16.gmra.mrb[0].mxu0 %v9830
        %v9979 = vpop.f32.mrb[0].mxu0
        %v9980 = vadd.f32 0.0, %v9979
        %v9981 = vpop.f32.mrb[0].mxu0
        %v9982 = vpop.f32.mrb[0].mxu0
        %v9983 = vadd.f32 0.0, %v9982
        %v9984 = vpop.f32.mrb[0].mxu0
        %9985 = vmatprep.mubr.bf16.mxu0 0
        %9986 = vmatmul.mubr.bf16.gmra.mrb[0].mxu0 %v9831
        %v9987 = vpop.f32.mrb[0].mxu0
        %v9988 = vadd.f32 0.0, %v9987
        %v9989 = vpop.f32.mrb[0].mxu0
        %v9990 = vpop.f32.mrb[0].mxu0
        %v9991 = vadd.f32 0.0, %v9990
        %v9992 = vpop.f32.mrb[0].mxu0
        %9993 = vmatprep.mubr.bf16.mxu0 0
        %9994 = vmatmul.mubr.bf16.gmra.mrb[0].mxu0 %v9832
        %v9995 = vpop.f32.mrb[0].mxu0
        %v9996 = vadd.f32 0.0, %v9995
        %v9997 = vpop.f32.mrb[0].mxu0
        %v9998 = vpop.f32.mrb[0].mxu0
        %v9999 = vadd.f32 0.0, %v9998
        %v10000 = vpop.f32.mrb[0].mxu0
        %10001 = vmatprep.mubr.bf16.mxu0 0
        %10002 = vmatmul.mubr.bf16.gmra.mrb[0].mxu0 %v9833
        %v10003 = vpop.f32.mrb[0].mxu0
        %v10004 = vadd.f32 0.0, %v10003
        %v10005 = vpop.f32.mrb[0].mxu0
        %v10006 = vpop.f32.mrb[0].mxu0
        %v10007 = vadd.f32 0.0, %v10006
        %v10008 = vpop.f32.mrb[0].mxu0
        %10009 = vmatprep.mubr.bf16.mxu0 0
        %10010 = vmatmul.mubr.bf16.gmra.mrb[0].mxu0 %v9834
        %v10011 = vpop.f32.mrb[0].mxu0
        %v10012 = vadd.f32 0.0, %v10011
        %v10013 = vpop.f32.mrb[0].mxu0
        %v10014 = vpop.f32.mrb[0].mxu0
        %v10015 = vadd.f32 0.0, %v10014
        %v10016 = vpop.f32.mrb[0].mxu0
        %10017 = vmatprep.mubr.bf16.mxu0 0
        %10018 = vmatmul.mubr.bf16.gmra.mrb[0].mxu0 %v9835
        %v10019 = vpop.f32.mrb[0].mxu0
        %v10020 = vadd.f32 0.0, %v10019
        %v10021 = vpop.f32.mrb[0].mxu0
        %v10022 = vpop.f32.mrb[0].mxu0
        %v10023 = vadd.f32 0.0, %v10022
        %v10024 = vpop.f32.mrb[0].mxu0
        %10025 = vmatprep.mubr.bf16.mxu0 0
        %10026 = vmatmul.mubr.bf16.gmra.mrb[0].mxu0 %v9836
        %v10027 = vpop.f32.mrb[0].mxu0
        %v10028 = vadd.f32 0.0, %v10027
        %v10029 = vpop.f32.mrb[0].mxu0
        %v10030 = vpop.f32.mrb[0].mxu0
        %v10031 = vadd.f32 0.0, %v10030
        %v10032 = vpop.f32.mrb[0].mxu0
        %10033 = vmatprep.mubr.bf16.mxu0 0
        %10034 = vmatmul.mubr.bf16.gmra.mrb[0].mxu0 %v9837
        %v10035 = vpop.f32.mrb[0].mxu0
        %v10036 = vadd.f32 0.0, %v10035
        %v10037 = vpop.f32.mrb[0].mxu0
        %v10038 = vpop.f32.mrb[0].mxu0
        %v10039 = vadd.f32 0.0, %v10038
        %v10040 = vpop.f32.mrb[0].mxu0
        %10041 = vmatprep.mubr.bf16.mxu0 0
        %10042 = vmatmul.mubr.bf16.gmra.mrb[0].mxu0 %v9838
        %v10043 = vpop.f32.mrb[0].mxu0
        %v10044 = vadd.f32 0.0, %v10043
        %v10045 = vpop.f32.mrb[0].mxu0
        %v10046 = vpop.f32.mrb[0].mxu0
        %v10047 = vadd.f32 0.0, %v10046
        %v10048 = vpop.f32.mrb[0].mxu0
        %10049 = vmatprep.mubr.bf16.mxu0 0
        %10050 = vmatmul.mubr.bf16.gmra.mrb[0].mxu0 %v9839
        %v10051 = vpop.f32.mrb[0].mxu0
        %v10052 = vadd.f32 0.0, %v10051
        %v10053 = vpop.f32.mrb[0].mxu0
        %v10054 = vpop.f32.mrb[0].mxu0
        %v10055 = vadd.f32 0.0, %v10054
        %v10056 = vpop.f32.mrb[0].mxu0
        %10057 = vmatprep.mubr.bf16.mxu0 0
        %10058 = vmatmul.mubr.bf16.gmra.mrb[0].mxu0 %v9840
        %v10059 = vpop.f32.mrb[0].mxu0
        %v10060 = vadd.f32 0.0, %v10059
        %v10061 = vpop.f32.mrb[0].mxu0
        %v10062 = vpop.f32.mrb[0].mxu0
        %v10063 = vadd.f32 0.0, %v10062
        %v10064 = vpop.f32.mrb[0].mxu0
        %10065 = vdwg.mxu0
        %v10066 = vadd.f32 %v9312, %v9940
        %v10067 = vadd.f32 %v9313, %v9943
        %v10068 = vadd.f32 %v9314, %v9948
        %v10069 = vadd.f32 %v9315, %v9951
        %v10070 = vadd.f32 %v9316, %v9956
        %v10071 = vadd.f32 %v9317, %v9959
        %v10072 = vadd.f32 %v9318, %v9964
        %v10073 = vadd.f32 %v9319, %v9967
        %v10074 = vadd.f32 %v9320, %v9972
        %v10075 = vadd.f32 %v9321, %v9975
        %v10076 = vadd.f32 %v9322, %v9980
        %v10077 = vadd.f32 %v9323, %v9983
        %v10078 = vadd.f32 %v9324, %v9988
        %v10079 = vadd.f32 %v9325, %v9991
        %v10080 = vadd.f32 %v9326, %v9996
        %v10081 = vadd.f32 %v9327, %v9999
        %v10082 = vadd.f32 %v9328, %v10004
        %v10083 = vadd.f32 %v9329, %v10007
        %v10084 = vadd.f32 %v9330, %v10012
        %v10085 = vadd.f32 %v9331, %v10015
        %v10086 = vadd.f32 %v9332, %v10020
        %v10087 = vadd.f32 %v9333, %v10023
        %v10088 = vadd.f32 %v9334, %v10028
        %v10089 = vadd.f32 %v9335, %v10031
        %v10090 = vadd.f32 %v9336, %v10036
        %v10091 = vadd.f32 %v9337, %v10039
        %v10092 = vadd.f32 %v9338, %v10044
        %v10093 = vadd.f32 %v9339, %v10047
        %v10094 = vadd.f32 %v9340, %v10052
        %v10095 = vadd.f32 %v9341, %v10055
        %v10096 = vadd.f32 %v9342, %v10060
        %v10097 = vadd.f32 %v9343, %v10063
        %v10098 = vld [vmem:[%s8957] sm:$0xe]
        %v10099 = vld [vmem:[%s8957 + $0xc] sm:$0xe]
        %v10100 = vld [vmem:[%s8957 + $0x18] sm:$0xe]
        %v10101 = vld [vmem:[%s8957 + $0x24] sm:$0xe]
        %v10102 = vld [vmem:[%s8957 + $0x30] sm:$0xe]
        %v10103 = vld [vmem:[%s8957 + $0x3c] sm:$0xe]
        %v10104 = vld [vmem:[%s8957 + $0x48] sm:$0xe]
        %v10105 = vld [vmem:[%s8957 + $0x54] sm:$0xe]
        %v10106 = vld [vmem:[%s8957 + $0x60] sm:$0xe]
        %v10107 = vld [vmem:[%s8957 + $0x6c] sm:$0xe]
        %v10108 = vld [vmem:[%s8957 + $0x78] sm:$0xe]
        %v10109 = vld [vmem:[%s8957 + $0x84] sm:$0xe]
        %v10110 = vld [vmem:[%s8957 + $0x90] sm:$0xe]
        %v10111 = vld [vmem:[%s8957 + $0x9c] sm:$0xe]
        %v10112 = vld [vmem:[%s8957 + $0xa8] sm:$0xe]
        %v10113 = vld [vmem:[%s8957 + $0xb4] sm:$0xe]
        %v10162 = vrot.slane %v10098, 5
        %v10163 = vrot.slane %v10162, 4
        %v10164 = vrot.slane %v9345, 5
        %v10165 = vsel %vm1352, %v10163, %v10164
        %v10166 = vrot.slane %v10164, 4
        %v10167 = vrot.slane %v9346, 5
        %v10168 = vsel %vm1352, %v10166, %v10167
        %v10169 = vrot.slane %v10099, 5
        %v10170 = vrot.slane %v10169, 4
        %v10171 = vrot.slane %v9348, 5
        %v10172 = vsel %vm1352, %v10170, %v10171
        %v10173 = vrot.slane %v10171, 4
        %v10174 = vrot.slane %v9349, 5
        %v10175 = vsel %vm1352, %v10173, %v10174
        %v10176 = vrot.slane %v10100, 5
        %v10177 = vrot.slane %v10176, 4
        %v10178 = vrot.slane %v9351, 5
        %v10179 = vsel %vm1352, %v10177, %v10178
        %v10180 = vrot.slane %v10178, 4
        %v10181 = vrot.slane %v9352, 5
        %v10182 = vsel %vm1352, %v10180, %v10181
        %v10183 = vrot.slane %v10101, 5
        %v10184 = vrot.slane %v10183, 4
        %v10185 = vrot.slane %v9354, 5
        %v10186 = vsel %vm1352, %v10184, %v10185
        %v10187 = vrot.slane %v10185, 4
        %v10188 = vrot.slane %v9355, 5
        %v10189 = vsel %vm1352, %v10187, %v10188
        %v10190 = vrot.slane %v10102, 5
        %v10191 = vrot.slane %v10190, 4
        %v10192 = vrot.slane %v9357, 5
        %v10193 = vsel %vm1352, %v10191, %v10192
        %v10194 = vrot.slane %v10192, 4
        %v10195 = vrot.slane %v9358, 5
        %v10196 = vsel %vm1352, %v10194, %v10195
        %v10197 = vrot.slane %v10103, 5
        %v10198 = vrot.slane %v10197, 4
        %v10199 = vrot.slane %v9360, 5
        %v10200 = vsel %vm1352, %v10198, %v10199
        %v10201 = vrot.slane %v10199, 4
        %v10202 = vrot.slane %v9361, 5
        %v10203 = vsel %vm1352, %v10201, %v10202
        %v10204 = vrot.slane %v10104, 5
        %v10205 = vrot.slane %v10204, 4
        %v10206 = vrot.slane %v9363, 5
        %v10207 = vsel %vm1352, %v10205, %v10206
        %v10208 = vrot.slane %v10206, 4
        %v10209 = vrot.slane %v9364, 5
        %v10210 = vsel %vm1352, %v10208, %v10209
        %v10211 = vrot.slane %v10105, 5
        %v10212 = vrot.slane %v10211, 4
        %v10213 = vrot.slane %v9366, 5
        %v10214 = vsel %vm1352, %v10212, %v10213
        %v10215 = vrot.slane %v10213, 4
        %v10216 = vrot.slane %v9367, 5
        %v10217 = vsel %vm1352, %v10215, %v10216
        %v10218 = vrot.slane %v10106, 5
        %v10219 = vrot.slane %v10218, 4
        %v10220 = vrot.slane %v9369, 5
        %v10221 = vsel %vm1352, %v10219, %v10220
        %v10222 = vrot.slane %v10220, 4
        %v10223 = vrot.slane %v9370, 5
        %v10224 = vsel %vm1352, %v10222, %v10223
        %v10225 = vrot.slane %v10107, 5
        %v10226 = vrot.slane %v10225, 4
        %v10227 = vrot.slane %v9372, 5
        %v10228 = vsel %vm1352, %v10226, %v10227
        %v10229 = vrot.slane %v10227, 4
        %v10230 = vrot.slane %v9373, 5
        %v10231 = vsel %vm1352, %v10229, %v10230
        %v10232 = vrot.slane %v10108, 5
        %v10233 = vrot.slane %v10232, 4
        %v10234 = vrot.slane %v9375, 5
        %v10235 = vsel %vm1352, %v10233, %v10234
        %v10236 = vrot.slane %v10234, 4
        %v10237 = vrot.slane %v9376, 5
        %v10238 = vsel %vm1352, %v10236, %v10237
        %v10239 = vrot.slane %v10109, 5
        %v10240 = vrot.slane %v10239, 4
        %v10241 = vrot.slane %v9378, 5
        %v10242 = vsel %vm1352, %v10240, %v10241
        %v10243 = vrot.slane %v10241, 4
        %v10244 = vrot.slane %v9379, 5
        %v10245 = vsel %vm1352, %v10243, %v10244
        %v10246 = vrot.slane %v10110, 5
        %v10247 = vrot.slane %v10246, 4
        %v10248 = vrot.slane %v9381, 5
        %v10249 = vsel %vm1352, %v10247, %v10248
        %v10250 = vrot.slane %v10248, 4
        %v10251 = vrot.slane %v9382, 5
        %v10252 = vsel %vm1352, %v10250, %v10251
        %v10253 = vrot.slane %v10111, 5
        %v10254 = vrot.slane %v10253, 4
        %v10255 = vrot.slane %v9384, 5
        %v10256 = vsel %vm1352, %v10254, %v10255
        %v10257 = vrot.slane %v10255, 4
        %v10258 = vrot.slane %v9385, 5
        %v10259 = vsel %vm1352, %v10257, %v10258
        %v10260 = vrot.slane %v10112, 5
        %v10261 = vrot.slane %v10260, 4
        %v10262 = vrot.slane %v9387, 5
        %v10263 = vsel %vm1352, %v10261, %v10262
        %v10264 = vrot.slane %v10262, 4
        %v10265 = vrot.slane %v9388, 5
        %v10266 = vsel %vm1352, %v10264, %v10265
        %v10267 = vrot.slane %v10113, 5
        %v10268 = vrot.slane %v10267, 4
        %v10269 = vrot.slane %v9390, 5
        %v10270 = vsel %vm1352, %v10268, %v10269
        %v10271 = vrot.slane %v10269, 4
        %v10272 = vrot.slane %v9391, 5
        %v10273 = vsel %vm1352, %v10271, %v10272
        %s10274 = scalar_lea.vmem [#allocation3], 512
        %v10275 = vld [vmem:[%s10274] sm:$0xf]
        %v10276 = vld [vmem:[%s10274 + $0x4] sm:$0xf]
        %v10277 = vld [vmem:[%s10274 + $0x8] sm:$0xf]
        %v10278 = vld [vmem:[%s10274 + $0xc] sm:$0xf]
        %v10279 = vld [vmem:[%s10274 + $0x10] sm:$0xf]
        %v10280 = vld [vmem:[%s10274 + $0x14] sm:$0xf]
        %v10281 = vld [vmem:[%s10274 + $0x18] sm:$0xf]
        %v10282 = vld [vmem:[%s10274 + $0x1c] sm:$0xf]
        %v10283 = vld [vmem:[%s10274 + $0x20] sm:$0xf]
        %v10284 = vld [vmem:[%s10274 + $0x24] sm:$0xf]
        %v10285 = vld [vmem:[%s10274 + $0x28] sm:$0xf]
        %v10286 = vld [vmem:[%s10274 + $0x2c] sm:$0xf]
        %v10287 = vld [vmem:[%s10274 + $0x30] sm:$0xf]
        %v10288 = vld [vmem:[%s10274 + $0x34] sm:$0xf]
        %v10289 = vld [vmem:[%s10274 + $0x38] sm:$0xf]
        %v10290 = vld [vmem:[%s10274 + $0x3c] sm:$0xf]
        %v10291 = vunpack.c.l.b16 %v10165
        %v10292 = vunpack.c.l.b16 %v10168
        %v10293 = vunpack.c.l.b16 %v10172
        %v10294 = vunpack.c.l.b16 %v10175
        %v10295 = vunpack.c.l.b16 %v10179
        %v10296 = vunpack.c.l.b16 %v10182
        %v10297 = vunpack.c.l.b16 %v10186
        %v10298 = vunpack.c.l.b16 %v10189
        %v10299 = vunpack.c.l.b16 %v10193
        %v10300 = vunpack.c.l.b16 %v10196
        %v10301 = vunpack.c.l.b16 %v10200
        %v10302 = vunpack.c.l.b16 %v10203
        %v10303 = vunpack.c.l.b16 %v10207
        %v10304 = vunpack.c.l.b16 %v10210
        %v10305 = vunpack.c.l.b16 %v10214
        %v10306 = vunpack.c.l.b16 %v10217
        %v10307 = vunpack.c.l.b16 %v10221
        %v10308 = vunpack.c.l.b16 %v10224
        %v10309 = vunpack.c.l.b16 %v10228
        %v10310 = vunpack.c.l.b16 %v10231
        %v10311 = vunpack.c.l.b16 %v10235
        %v10312 = vunpack.c.l.b16 %v10238
        %v10313 = vunpack.c.l.b16 %v10242
        %v10314 = vunpack.c.l.b16 %v10245
        %v10315 = vunpack.c.l.b16 %v10249
        %v10316 = vunpack.c.l.b16 %v10252
        %v10317 = vunpack.c.l.b16 %v10256
        %v10318 = vunpack.c.l.b16 %v10259
        %v10319 = vunpack.c.l.b16 %v10263
        %v10320 = vunpack.c.l.b16 %v10266
        %v10321 = vunpack.c.l.b16 %v10270
        %v10322 = vunpack.c.l.b16 %v10273
        %v10323 = vpack.c.b16 %v10292, %v10291
        %v10324 = vpack.c.b16 %v10294, %v10293
        %v10325 = vpack.c.b16 %v10296, %v10295
        %v10326 = vpack.c.b16 %v10298, %v10297
        %v10327 = vpack.c.b16 %v10300, %v10299
        %v10328 = vpack.c.b16 %v10302, %v10301
        %v10329 = vpack.c.b16 %v10304, %v10303
        %v10330 = vpack.c.b16 %v10306, %v10305
        %v10331 = vpack.c.b16 %v10308, %v10307
        %v10332 = vpack.c.b16 %v10310, %v10309
        %v10333 = vpack.c.b16 %v10312, %v10311
        %v10334 = vpack.c.b16 %v10314, %v10313
        %v10335 = vpack.c.b16 %v10316, %v10315
        %v10336 = vpack.c.b16 %v10318, %v10317
        %v10337 = vpack.c.b16 %v10320, %v10319
        %v10338 = vpack.c.b16 %v10322, %v10321
        %v10371 = vunpack.c.l.b16 %v10275
        %v10372 = vunpack.c.l.b16 %v10276
        %v10373 = vunpack.c.l.b16 %v10277
        %v10374 = vunpack.c.l.b16 %v10278
        %v10375 = vunpack.c.l.b16 %v10279
        %v10376 = vunpack.c.l.b16 %v10280
        %v10377 = vunpack.c.l.b16 %v10281
        %v10378 = vunpack.c.l.b16 %v10282
        %v10379 = vunpack.c.l.b16 %v10283
        %v10380 = vunpack.c.l.b16 %v10284
        %v10381 = vunpack.c.l.b16 %v10285
        %v10382 = vunpack.c.l.b16 %v10286
        %v10383 = vunpack.c.l.b16 %v10287
        %v10384 = vunpack.c.l.b16 %v10288
        %v10385 = vunpack.c.l.b16 %v10289
        %v10386 = vunpack.c.l.b16 %v10290
        %v10387 = vpack.c.b16 %v10372, %v10371
        %v10388 = vpack.c.b16 %v10374, %v10373
        %v10389 = vpack.c.b16 %v10376, %v10375
        %v10390 = vpack.c.b16 %v10378, %v10377
        %v10391 = vpack.c.b16 %v10380, %v10379
        %v10392 = vpack.c.b16 %v10382, %v10381
        %v10393 = vpack.c.b16 %v10384, %v10383
        %v10394 = vpack.c.b16 %v10386, %v10385
        %10403 = vmatprep.subr.bf16.mxu0 0
        %10404 = vmatpush1.bf16.msra.mxu0 %v10387
        %10405 = vmatprep.subr.bf16.mxu0 0
        %10406 = vmatpush1.bf16.msra.mxu0 %v10388
        %10407 = vmatprep.subr.bf16.mxu0 0
        %10408 = vmatpush1.bf16.msra.mxu0 %v10389
        %10409 = vmatprep.subr.bf16.mxu0 0
        %10410 = vmatpush1.bf16.msra.mxu0 %v10390
        %10411 = vmatprep.subr.bf16.mxu0 0
        %10412 = vmatpush1.bf16.msra.mxu0 %v10391
        %10413 = vmatprep.subr.bf16.mxu0 0
        %10414 = vmatpush1.bf16.msra.mxu0 %v10392
        %10415 = vmatprep.subr.bf16.mxu0 0
        %10416 = vmatpush1.bf16.msra.mxu0 %v10393
        %10417 = vmatprep.subr.bf16.mxu0 0
        %10418 = vmatpush1.bf16.msra.mxu0 %v10394
        %10419 = vmatprep.subr.bf16.mxu0 0
        %10420 = vmatpush1.bf16.msra.mxu0 0
        %10421 = vmatprep.subr.bf16.mxu0 0
        %10422 = vmatpush1.bf16.msra.mxu0 0
        %10423 = vmatprep.subr.bf16.mxu0 0
        %10424 = vmatpush1.bf16.msra.mxu0 0
        %10425 = vmatprep.subr.bf16.mxu0 0
        %10426 = vmatpush1.bf16.msra.mxu0 0
        %10427 = vmatprep.subr.bf16.mxu0 0
        %10428 = vmatpush1.bf16.msra.mxu0 0
        %10429 = vmatprep.subr.bf16.mxu0 0
        %10430 = vmatpush1.bf16.msra.mxu0 0
        %10431 = vmatprep.subr.bf16.mxu0 0
        %10432 = vmatpush1.bf16.msra.mxu0 0
        %10433 = vmatprep.subr.bf16.mxu0 0
        %10434 = vmatpush1.bf16.msra.mxu0 0
        %10435 = vmatprep.mubr.bf16.mxu0 0
        %10436 = vmatmul.mubr.bf16.gmra.mrb[0].mxu0 %v10323
        %v10437 = vpop.f32.mrb[0].mxu0
        %v10438 = vadd.f32 0.0, %v10437
        %v10439 = vpop.f32.mrb[0].mxu0
        %v10440 = vpop.f32.mrb[0].mxu0
        %v10441 = vadd.f32 0.0, %v10440
        %v10442 = vpop.f32.mrb[0].mxu0
        %10443 = vmatprep.mubr.bf16.mxu0 0
        %10444 = vmatmul.mubr.bf16.gmra.mrb[0].mxu0 %v10324
        %v10445 = vpop.f32.mrb[0].mxu0
        %v10446 = vadd.f32 0.0, %v10445
        %v10447 = vpop.f32.mrb[0].mxu0
        %v10448 = vpop.f32.mrb[0].mxu0
        %v10449 = vadd.f32 0.0, %v10448
        %v10450 = vpop.f32.mrb[0].mxu0
        %10451 = vmatprep.mubr.bf16.mxu0 0
        %10452 = vmatmul.mubr.bf16.gmra.mrb[0].mxu0 %v10325
        %v10453 = vpop.f32.mrb[0].mxu0
        %v10454 = vadd.f32 0.0, %v10453
        %v10455 = vpop.f32.mrb[0].mxu0
        %v10456 = vpop.f32.mrb[0].mxu0
        %v10457 = vadd.f32 0.0, %v10456
        %v10458 = vpop.f32.mrb[0].mxu0
        %10459 = vmatprep.mubr.bf16.mxu0 0
        %10460 = vmatmul.mubr.bf16.gmra.mrb[0].mxu0 %v10326
        %v10461 = vpop.f32.mrb[0].mxu0
        %v10462 = vadd.f32 0.0, %v10461
        %v10463 = vpop.f32.mrb[0].mxu0
        %v10464 = vpop.f32.mrb[0].mxu0
        %v10465 = vadd.f32 0.0, %v10464
        %v10466 = vpop.f32.mrb[0].mxu0
        %10467 = vmatprep.mubr.bf16.mxu0 0
        %10468 = vmatmul.mubr.bf16.gmra.mrb[0].mxu0 %v10327
        %v10469 = vpop.f32.mrb[0].mxu0
        %v10470 = vadd.f32 0.0, %v10469
        %v10471 = vpop.f32.mrb[0].mxu0
        %v10472 = vpop.f32.mrb[0].mxu0
        %v10473 = vadd.f32 0.0, %v10472
        %v10474 = vpop.f32.mrb[0].mxu0
        %10475 = vmatprep.mubr.bf16.mxu0 0
        %10476 = vmatmul.mubr.bf16.gmra.mrb[0].mxu0 %v10328
        %v10477 = vpop.f32.mrb[0].mxu0
        %v10478 = vadd.f32 0.0, %v10477
        %v10479 = vpop.f32.mrb[0].mxu0
        %v10480 = vpop.f32.mrb[0].mxu0
        %v10481 = vadd.f32 0.0, %v10480
        %v10482 = vpop.f32.mrb[0].mxu0
        %10483 = vmatprep.mubr.bf16.mxu0 0
        %10484 = vmatmul.mubr.bf16.gmra.mrb[0].mxu0 %v10329
        %v10485 = vpop.f32.mrb[0].mxu0
        %v10486 = vadd.f32 0.0, %v10485
        %v10487 = vpop.f32.mrb[0].mxu0
        %v10488 = vpop.f32.mrb[0].mxu0
        %v10489 = vadd.f32 0.0, %v10488
        %v10490 = vpop.f32.mrb[0].mxu0
        %10491 = vmatprep.mubr.bf16.mxu0 0
        %10492 = vmatmul.mubr.bf16.gmra.mrb[0].mxu0 %v10330
        %v10493 = vpop.f32.mrb[0].mxu0
        %v10494 = vadd.f32 0.0, %v10493
        %v10495 = vpop.f32.mrb[0].mxu0
        %v10496 = vpop.f32.mrb[0].mxu0
        %v10497 = vadd.f32 0.0, %v10496
        %v10498 = vpop.f32.mrb[0].mxu0
        %10499 = vmatprep.mubr.bf16.mxu0 0
        %10500 = vmatmul.mubr.bf16.gmra.mrb[0].mxu0 %v10331
        %v10501 = vpop.f32.mrb[0].mxu0
        %v10502 = vadd.f32 0.0, %v10501
        %v10503 = vpop.f32.mrb[0].mxu0
        %v10504 = vpop.f32.mrb[0].mxu0
        %v10505 = vadd.f32 0.0, %v10504
        %v10506 = vpop.f32.mrb[0].mxu0
        %10507 = vmatprep.mubr.bf16.mxu0 0
        %10508 = vmatmul.mubr.bf16.gmra.mrb[0].mxu0 %v10332
        %v10509 = vpop.f32.mrb[0].mxu0
        %v10510 = vadd.f32 0.0, %v10509
        %v10511 = vpop.f32.mrb[0].mxu0
        %v10512 = vpop.f32.mrb[0].mxu0
        %v10513 = vadd.f32 0.0, %v10512
        %v10514 = vpop.f32.mrb[0].mxu0
        %10515 = vmatprep.mubr.bf16.mxu0 0
        %10516 = vmatmul.mubr.bf16.gmra.mrb[0].mxu0 %v10333
        %v10517 = vpop.f32.mrb[0].mxu0
        %v10518 = vadd.f32 0.0, %v10517
        %v10519 = vpop.f32.mrb[0].mxu0
        %v10520 = vpop.f32.mrb[0].mxu0
        %v10521 = vadd.f32 0.0, %v10520
        %v10522 = vpop.f32.mrb[0].mxu0
        %10523 = vmatprep.mubr.bf16.mxu0 0
        %10524 = vmatmul.mubr.bf16.gmra.mrb[0].mxu0 %v10334
        %v10525 = vpop.f32.mrb[0].mxu0
        %v10526 = vadd.f32 0.0, %v10525
        %v10527 = vpop.f32.mrb[0].mxu0
        %v10528 = vpop.f32.mrb[0].mxu0
        %v10529 = vadd.f32 0.0, %v10528
        %v10530 = vpop.f32.mrb[0].mxu0
        %10531 = vmatprep.mubr.bf16.mxu0 0
        %10532 = vmatmul.mubr.bf16.gmra.mrb[0].mxu0 %v10335
        %v10533 = vpop.f32.mrb[0].mxu0
        %v10534 = vadd.f32 0.0, %v10533
        %v10535 = vpop.f32.mrb[0].mxu0
        %v10536 = vpop.f32.mrb[0].mxu0
        %v10537 = vadd.f32 0.0, %v10536
        %v10538 = vpop.f32.mrb[0].mxu0
        %10539 = vmatprep.mubr.bf16.mxu0 0
        %10540 = vmatmul.mubr.bf16.gmra.mrb[0].mxu0 %v10336
        %v10541 = vpop.f32.mrb[0].mxu0
        %v10542 = vadd.f32 0.0, %v10541
        %v10543 = vpop.f32.mrb[0].mxu0
        %v10544 = vpop.f32.mrb[0].mxu0
        %v10545 = vadd.f32 0.0, %v10544
        %v10546 = vpop.f32.mrb[0].mxu0
        %10547 = vmatprep.mubr.bf16.mxu0 0
        %10548 = vmatmul.mubr.bf16.gmra.mrb[0].mxu0 %v10337
        %v10549 = vpop.f32.mrb[0].mxu0
        %v10550 = vadd.f32 0.0, %v10549
        %v10551 = vpop.f32.mrb[0].mxu0
        %v10552 = vpop.f32.mrb[0].mxu0
        %v10553 = vadd.f32 0.0, %v10552
        %v10554 = vpop.f32.mrb[0].mxu0
        %10555 = vmatprep.mubr.bf16.mxu0 0
        %10556 = vmatmul.mubr.bf16.gmra.mrb[0].mxu0 %v10338
        %v10557 = vpop.f32.mrb[0].mxu0
        %v10558 = vadd.f32 0.0, %v10557
        %v10559 = vpop.f32.mrb[0].mxu0
        %v10560 = vpop.f32.mrb[0].mxu0
        %v10561 = vadd.f32 0.0, %v10560
        %v10562 = vpop.f32.mrb[0].mxu0
        %10563 = vdwg.mxu0
        %v10564 = vadd.f32 %v10066, %v10438
        %v10565 = vadd.f32 %v10067, %v10441
        %v10566 = vadd.f32 %v10068, %v10446
        %v10567 = vadd.f32 %v10069, %v10449
        %v10568 = vadd.f32 %v10070, %v10454
        %v10569 = vadd.f32 %v10071, %v10457
        %v10570 = vadd.f32 %v10072, %v10462
        %v10571 = vadd.f32 %v10073, %v10465
        %v10572 = vadd.f32 %v10074, %v10470
        %v10573 = vadd.f32 %v10075, %v10473
        %v10574 = vadd.f32 %v10076, %v10478
        %v10575 = vadd.f32 %v10077, %v10481
        %v10576 = vadd.f32 %v10078, %v10486
        %v10577 = vadd.f32 %v10079, %v10489
        %v10578 = vadd.f32 %v10080, %v10494
        %v10579 = vadd.f32 %v10081, %v10497
        %v10580 = vadd.f32 %v10082, %v10502
        %v10581 = vadd.f32 %v10083, %v10505
        %v10582 = vadd.f32 %v10084, %v10510
        %v10583 = vadd.f32 %v10085, %v10513
        %v10584 = vadd.f32 %v10086, %v10518
        %v10585 = vadd.f32 %v10087, %v10521
        %v10586 = vadd.f32 %v10088, %v10526
        %v10587 = vadd.f32 %v10089, %v10529
        %v10588 = vadd.f32 %v10090, %v10534
        %v10589 = vadd.f32 %v10091, %v10537
        %v10590 = vadd.f32 %v10092, %v10542
        %v10591 = vadd.f32 %v10093, %v10545
        %v10592 = vadd.f32 %v10094, %v10550
        %v10593 = vadd.f32 %v10095, %v10553
        %v10594 = vadd.f32 %v10096, %v10558
        %v10595 = vadd.f32 %v10097, %v10561
        %v10597 = vunpack.c.l.s4 1966171168
        %v10598 = vunpack.c.0.s8 %v10597
        %v10599 = vlaneseq
        %v10600 = vshrl.u32 %v10599, 7
        %v10601 = vsub.s32 %v10598, %v10600
        %v10602 = vrot.slane %v10564, %v10601
        %v10604 = vunpack.c.l.s4 1966171168
        %v10605 = vunpack.c.0.s8 %v10604
        %v10606 = vlaneseq
        %v10607 = vshrl.u32 %v10606, 7
        %v10608 = vsub.s32 %v10605, %v10607
        %v10609 = vrot.slane %v10565, %v10608
        %v10611 = vunpack.c.l.s4 1966171168
        %v10612 = vunpack.c.0.s8 %v10611
        %v10613 = vlaneseq
        %v10614 = vshrl.u32 %v10613, 7
        %v10615 = vsub.s32 %v10612, %v10614
        %v10616 = vrot.slane %v10566, %v10615
        %v10618 = vunpack.c.l.s4 1966171168
        %v10619 = vunpack.c.0.s8 %v10618
        %v10620 = vlaneseq
        %v10621 = vshrl.u32 %v10620, 7
        %v10622 = vsub.s32 %v10619, %v10621
        %v10623 = vrot.slane %v10567, %v10622
        %v10625 = vunpack.c.l.s4 1966171168
        %v10626 = vunpack.c.0.s8 %v10625
        %v10627 = vlaneseq
        %v10628 = vshrl.u32 %v10627, 7
        %v10629 = vsub.s32 %v10626, %v10628
        %v10630 = vrot.slane %v10568, %v10629
        %v10632 = vunpack.c.l.s4 1966171168
        %v10633 = vunpack.c.0.s8 %v10632
        %v10634 = vlaneseq
        %v10635 = vshrl.u32 %v10634, 7
        %v10636 = vsub.s32 %v10633, %v10635
        %v10637 = vrot.slane %v10569, %v10636
        %v10639 = vunpack.c.l.s4 1966171168
        %v10640 = vunpack.c.0.s8 %v10639
        %v10641 = vlaneseq
        %v10642 = vshrl.u32 %v10641, 7
        %v10643 = vsub.s32 %v10640, %v10642
        %v10644 = vrot.slane %v10570, %v10643
        %v10646 = vunpack.c.l.s4 1966171168
        %v10647 = vunpack.c.0.s8 %v10646
        %v10648 = vlaneseq
        %v10649 = vshrl.u32 %v10648, 7
        %v10650 = vsub.s32 %v10647, %v10649
        %v10651 = vrot.slane %v10571, %v10650
        %v10653 = vunpack.c.l.s4 1966171168
        %v10654 = vunpack.c.0.s8 %v10653
        %v10655 = vlaneseq
        %v10656 = vshrl.u32 %v10655, 7
        %v10657 = vsub.s32 %v10654, %v10656
        %v10658 = vrot.slane %v10572, %v10657
        %v10660 = vunpack.c.l.s4 1966171168
        %v10661 = vunpack.c.0.s8 %v10660
        %v10662 = vlaneseq
        %v10663 = vshrl.u32 %v10662, 7
        %v10664 = vsub.s32 %v10661, %v10663
        %v10665 = vrot.slane %v10573, %v10664
        %v10667 = vunpack.c.l.s4 1966171168
        %v10668 = vunpack.c.0.s8 %v10667
        %v10669 = vlaneseq
        %v10670 = vshrl.u32 %v10669, 7
        %v10671 = vsub.s32 %v10668, %v10670
        %v10672 = vrot.slane %v10574, %v10671
        %v10674 = vunpack.c.l.s4 1966171168
        %v10675 = vunpack.c.0.s8 %v10674
        %v10676 = vlaneseq
        %v10677 = vshrl.u32 %v10676, 7
        %v10678 = vsub.s32 %v10675, %v10677
        %v10679 = vrot.slane %v10575, %v10678
        %v10681 = vunpack.c.l.s4 1966171168
        %v10682 = vunpack.c.0.s8 %v10681
        %v10683 = vlaneseq
        %v10684 = vshrl.u32 %v10683, 7
        %v10685 = vsub.s32 %v10682, %v10684
        %v10686 = vrot.slane %v10576, %v10685
        %v10688 = vunpack.c.l.s4 1966171168
        %v10689 = vunpack.c.0.s8 %v10688
        %v10690 = vlaneseq
        %v10691 = vshrl.u32 %v10690, 7
        %v10692 = vsub.s32 %v10689, %v10691
        %v10693 = vrot.slane %v10577, %v10692
        %v10695 = vunpack.c.l.s4 1966171168
        %v10696 = vunpack.c.0.s8 %v10695
        %v10697 = vlaneseq
        %v10698 = vshrl.u32 %v10697, 7
        %v10699 = vsub.s32 %v10696, %v10698
        %v10700 = vrot.slane %v10578, %v10699
        %v10702 = vunpack.c.l.s4 1966171168
        %v10703 = vunpack.c.0.s8 %v10702
        %v10704 = vlaneseq
        %v10705 = vshrl.u32 %v10704, 7
        %v10706 = vsub.s32 %v10703, %v10705
        %v10707 = vrot.slane %v10579, %v10706
        %v10709 = vunpack.c.l.s4 1966171168
        %v10710 = vunpack.c.0.s8 %v10709
        %v10711 = vlaneseq
        %v10712 = vshrl.u32 %v10711, 7
        %v10713 = vsub.s32 %v10710, %v10712
        %v10714 = vrot.slane %v10580, %v10713
        %v10716 = vunpack.c.l.s4 1966171168
        %v10717 = vunpack.c.0.s8 %v10716
        %v10718 = vlaneseq
        %v10719 = vshrl.u32 %v10718, 7
        %v10720 = vsub.s32 %v10717, %v10719
        %v10721 = vrot.slane %v10581, %v10720
        %v10723 = vunpack.c.l.s4 1966171168
        %v10724 = vunpack.c.0.s8 %v10723
        %v10725 = vlaneseq
        %v10726 = vshrl.u32 %v10725, 7
        %v10727 = vsub.s32 %v10724, %v10726
        %v10728 = vrot.slane %v10582, %v10727
        %v10730 = vunpack.c.l.s4 1966171168
        %v10731 = vunpack.c.0.s8 %v10730
        %v10732 = vlaneseq
        %v10733 = vshrl.u32 %v10732, 7
        %v10734 = vsub.s32 %v10731, %v10733
        %v10735 = vrot.slane %v10583, %v10734
        %v10737 = vunpack.c.l.s4 1966171168
        %v10738 = vunpack.c.0.s8 %v10737
        %v10739 = vlaneseq
        %v10740 = vshrl.u32 %v10739, 7
        %v10741 = vsub.s32 %v10738, %v10740
        %v10742 = vrot.slane %v10584, %v10741
        %v10744 = vunpack.c.l.s4 1966171168
        %v10745 = vunpack.c.0.s8 %v10744
        %v10746 = vlaneseq
        %v10747 = vshrl.u32 %v10746, 7
        %v10748 = vsub.s32 %v10745, %v10747
        %v10749 = vrot.slane %v10585, %v10748
        %v10751 = vunpack.c.l.s4 1966171168
        %v10752 = vunpack.c.0.s8 %v10751
        %v10753 = vlaneseq
        %v10754 = vshrl.u32 %v10753, 7
        %v10755 = vsub.s32 %v10752, %v10754
        %v10756 = vrot.slane %v10586, %v10755
        %v10758 = vunpack.c.l.s4 1966171168
        %v10759 = vunpack.c.0.s8 %v10758
        %v10760 = vlaneseq
        %v10761 = vshrl.u32 %v10760, 7
        %v10762 = vsub.s32 %v10759, %v10761
        %v10763 = vrot.slane %v10587, %v10762
        %v10765 = vunpack.c.l.s4 1966171168
        %v10766 = vunpack.c.0.s8 %v10765
        %v10767 = vlaneseq
        %v10768 = vshrl.u32 %v10767, 7
        %v10769 = vsub.s32 %v10766, %v10768
        %v10770 = vrot.slane %v10588, %v10769
        %v10772 = vunpack.c.l.s4 1966171168
        %v10773 = vunpack.c.0.s8 %v10772
        %v10774 = vlaneseq
        %v10775 = vshrl.u32 %v10774, 7
        %v10776 = vsub.s32 %v10773, %v10775
        %v10777 = vrot.slane %v10589, %v10776
        %v10779 = vunpack.c.l.s4 1966171168
        %v10780 = vunpack.c.0.s8 %v10779
        %v10781 = vlaneseq
        %v10782 = vshrl.u32 %v10781, 7
        %v10783 = vsub.s32 %v10780, %v10782
        %v10784 = vrot.slane %v10590, %v10783
        %v10786 = vunpack.c.l.s4 1966171168
        %v10787 = vunpack.c.0.s8 %v10786
        %v10788 = vlaneseq
        %v10789 = vshrl.u32 %v10788, 7
        %v10790 = vsub.s32 %v10787, %v10789
        %v10791 = vrot.slane %v10591, %v10790
        %v10793 = vunpack.c.l.s4 1966171168
        %v10794 = vunpack.c.0.s8 %v10793
        %v10795 = vlaneseq
        %v10796 = vshrl.u32 %v10795, 7
        %v10797 = vsub.s32 %v10794, %v10796
        %v10798 = vrot.slane %v10592, %v10797
        %v10800 = vunpack.c.l.s4 1966171168
        %v10801 = vunpack.c.0.s8 %v10800
        %v10802 = vlaneseq
        %v10803 = vshrl.u32 %v10802, 7
        %v10804 = vsub.s32 %v10801, %v10803
        %v10805 = vrot.slane %v10593, %v10804
        %v10807 = vunpack.c.l.s4 1966171168
        %v10808 = vunpack.c.0.s8 %v10807
        %v10809 = vlaneseq
        %v10810 = vshrl.u32 %v10809, 7
        %v10811 = vsub.s32 %v10808, %v10810
        %v10812 = vrot.slane %v10594, %v10811
        %v10814 = vunpack.c.l.s4 1966171168
        %v10815 = vunpack.c.0.s8 %v10814
        %v10816 = vlaneseq
        %v10817 = vshrl.u32 %v10816, 7
        %v10818 = vsub.s32 %v10815, %v10817
        %v10819 = vrot.slane %v10595, %v10818
        %v10852 = vrot.slane %v10602, 4
        %v10853 = vrot.slane %v10609, 4
        %v10854 = vrot.slane %v10616, 4
        %v10855 = vrot.slane %v10623, 4
        %v10856 = vrot.slane %v10630, 4
        %v10857 = vrot.slane %v10637, 4
        %v10858 = vrot.slane %v10644, 4
        %v10859 = vrot.slane %v10651, 4
        %v10860 = vrot.slane %v10658, 4
        %v10861 = vrot.slane %v10665, 4
        %v10862 = vrot.slane %v10672, 4
        %v10863 = vrot.slane %v10679, 4
        %v10864 = vrot.slane %v10686, 4
        %v10865 = vrot.slane %v10693, 4
        %v10866 = vrot.slane %v10700, 4
        %v10867 = vrot.slane %v10707, 4
        %v10868 = vrot.slane %v10714, 4
        %v10869 = vrot.slane %v10721, 4
        %v10870 = vrot.slane %v10728, 4
        %v10871 = vrot.slane %v10735, 4
        %v10872 = vrot.slane %v10742, 4
        %v10873 = vrot.slane %v10749, 4
        %v10874 = vrot.slane %v10756, 4
        %v10875 = vrot.slane %v10763, 4
        %v10876 = vrot.slane %v10770, 4
        %v10877 = vrot.slane %v10777, 4
        %v10878 = vrot.slane %v10784, 4
        %v10879 = vrot.slane %v10791, 4
        %v10880 = vrot.slane %v10798, 4
        %v10881 = vrot.slane %v10805, 4
        %v10882 = vrot.slane %v10812, 4
        %v10883 = vrot.slane %v10819, 4
        %v10916 = vadd.f32 %v10602, %v10852
        %v10917 = vadd.f32 %v10609, %v10853
        %v10918 = vadd.f32 %v10616, %v10854
        %v10919 = vadd.f32 %v10623, %v10855
        %v10920 = vadd.f32 %v10630, %v10856
        %v10921 = vadd.f32 %v10637, %v10857
        %v10922 = vadd.f32 %v10644, %v10858
        %v10923 = vadd.f32 %v10651, %v10859
        %v10924 = vadd.f32 %v10658, %v10860
        %v10925 = vadd.f32 %v10665, %v10861
        %v10926 = vadd.f32 %v10672, %v10862
        %v10927 = vadd.f32 %v10679, %v10863
        %v10928 = vadd.f32 %v10686, %v10864
        %v10929 = vadd.f32 %v10693, %v10865
        %v10930 = vadd.f32 %v10700, %v10866
        %v10931 = vadd.f32 %v10707, %v10867
        %v10932 = vadd.f32 %v10714, %v10868
        %v10933 = vadd.f32 %v10721, %v10869
        %v10934 = vadd.f32 %v10728, %v10870
        %v10935 = vadd.f32 %v10735, %v10871
        %v10936 = vadd.f32 %v10742, %v10872
        %v10937 = vadd.f32 %v10749, %v10873
        %v10938 = vadd.f32 %v10756, %v10874
        %v10939 = vadd.f32 %v10763, %v10875
        %v10940 = vadd.f32 %v10770, %v10876
        %v10941 = vadd.f32 %v10777, %v10877
        %v10942 = vadd.f32 %v10784, %v10878
        %v10943 = vadd.f32 %v10791, %v10879
        %v10944 = vadd.f32 %v10798, %v10880
        %v10945 = vadd.f32 %v10805, %v10881
        %v10946 = vadd.f32 %v10812, %v10882
        %v10947 = vadd.f32 %v10819, %v10883
        %v10948 = vadd.f32 %v10916, %v10918
        %v10949 = vadd.f32 %v10917, %v10919
        %v10950 = vadd.f32 %v10920, %v10922
        %v10951 = vadd.f32 %v10921, %v10923
        %v10952 = vadd.f32 %v10924, %v10926
        %v10953 = vadd.f32 %v10925, %v10927
        %v10954 = vadd.f32 %v10928, %v10930
        %v10955 = vadd.f32 %v10929, %v10931
        %v10956 = vadd.f32 %v10932, %v10934
        %v10957 = vadd.f32 %v10933, %v10935
        %v10958 = vadd.f32 %v10936, %v10938
        %v10959 = vadd.f32 %v10937, %v10939
        %v10960 = vadd.f32 %v10940, %v10942
        %v10961 = vadd.f32 %v10941, %v10943
        %v10962 = vadd.f32 %v10944, %v10946
        %v10963 = vadd.f32 %v10945, %v10947
        %v10964 = vmul.f32 %v10948, 0.25
        %v10965 = vmul.f32 %v10949, 0.25
        %v10966 = vmul.f32 %v10950, 0.25
        %v10967 = vmul.f32 %v10951, 0.25
        %v10968 = vmul.f32 %v10952, 0.25
        %v10969 = vmul.f32 %v10953, 0.25
        %v10970 = vmul.f32 %v10954, 0.25
        %v10971 = vmul.f32 %v10955, 0.25
        %v10972 = vmul.f32 %v10956, 0.25
        %v10973 = vmul.f32 %v10957, 0.25
        %v10974 = vmul.f32 %v10958, 0.25
        %v10975 = vmul.f32 %v10959, 0.25
        %v10976 = vmul.f32 %v10960, 0.25
        %v10977 = vmul.f32 %v10961, 0.25
        %v10978 = vmul.f32 %v10962, 0.25
        %v10979 = vmul.f32 %v10963, 0.25
        %v10980 = vld [vmem:[%s1787] sm:$0xf]
        %v10981 = vld [vmem:[%s1787 + $0x4] sm:$0xf]
        %v10982 = vld [vmem:[%s1787 + $0x8] sm:$0x1]
        %v10983 = vld [vmem:[%s1787 + $0xc] sm:$0xf]
        %v10984 = vld [vmem:[%s1787 + $0x10] sm:$0xf]
        %v10985 = vld [vmem:[%s1787 + $0x14] sm:$0x1]
        %v10986 = vld [vmem:[%s1787 + $0x18] sm:$0xf]
        %v10987 = vld [vmem:[%s1787 + $0x1c] sm:$0xf]
        %v10988 = vld [vmem:[%s1787 + $0x20] sm:$0x1]
        %v10989 = vld [vmem:[%s1787 + $0x24] sm:$0xf]
        %v10990 = vld [vmem:[%s1787 + $0x28] sm:$0xf]
        %v10991 = vld [vmem:[%s1787 + $0x2c] sm:$0x1]
        %v10992 = vld [vmem:[%s1787 + $0x30] sm:$0xf]
        %v10993 = vld [vmem:[%s1787 + $0x34] sm:$0xf]
        %v10994 = vld [vmem:[%s1787 + $0x38] sm:$0x1]
        %v10995 = vld [vmem:[%s1787 + $0x3c] sm:$0xf]
        %v10996 = vld [vmem:[%s1787 + $0x40] sm:$0xf]
        %v10997 = vld [vmem:[%s1787 + $0x44] sm:$0x1]
        %v10998 = vld [vmem:[%s1787 + $0x48] sm:$0xf]
        %v10999 = vld [vmem:[%s1787 + $0x4c] sm:$0xf]
        %v11000 = vld [vmem:[%s1787 + $0x50] sm:$0x1]
        %v11001 = vld [vmem:[%s1787 + $0x54] sm:$0xf]
        %v11002 = vld [vmem:[%s1787 + $0x58] sm:$0xf]
        %v11003 = vld [vmem:[%s1787 + $0x5c] sm:$0x1]
        %v11004 = vld [vmem:[%s1787 + $0x60] sm:$0xf]
        %v11005 = vld [vmem:[%s1787 + $0x64] sm:$0xf]
        %v11006 = vld [vmem:[%s1787 + $0x68] sm:$0x1]
        %v11007 = vld [vmem:[%s1787 + $0x6c] sm:$0xf]
        %v11008 = vld [vmem:[%s1787 + $0x70] sm:$0xf]
        %v11009 = vld [vmem:[%s1787 + $0x74] sm:$0x1]
        %v11010 = vld [vmem:[%s1787 + $0x78] sm:$0xf]
        %v11011 = vld [vmem:[%s1787 + $0x7c] sm:$0xf]
        %v11012 = vld [vmem:[%s1787 + $0x80] sm:$0x1]
        %v11013 = vld [vmem:[%s1787 + $0x84] sm:$0xf]
        %v11014 = vld [vmem:[%s1787 + $0x88] sm:$0xf]
        %v11015 = vld [vmem:[%s1787 + $0x8c] sm:$0x1]
        %v11016 = vld [vmem:[%s1787 + $0x90] sm:$0xf]
        %v11017 = vld [vmem:[%s1787 + $0x94] sm:$0xf]
        %v11018 = vld [vmem:[%s1787 + $0x98] sm:$0x1]
        %v11019 = vld [vmem:[%s1787 + $0x9c] sm:$0xf]
        %v11020 = vld [vmem:[%s1787 + $0xa0] sm:$0xf]
        %v11021 = vld [vmem:[%s1787 + $0xa4] sm:$0x1]
        %v11022 = vld [vmem:[%s1787 + $0xa8] sm:$0xf]
        %v11023 = vld [vmem:[%s1787 + $0xac] sm:$0xf]
        %v11024 = vld [vmem:[%s1787 + $0xb0] sm:$0x1]
        %v11025 = vld [vmem:[%s1787 + $0xb4] sm:$0xf]
        %v11026 = vld [vmem:[%s1787 + $0xb8] sm:$0xf]
        %v11027 = vld [vmem:[%s1787 + $0xbc] sm:$0x1]
        %v11028 = vunpack.c.l.bf16 %v10980
        %v11029 = vunpack.c.l.bf16 %v10981
        %v11030 = vunpack.c.l.bf16 %v10982
        %v11031 = vunpack.c.l.bf16 %v10983
        %v11032 = vunpack.c.l.bf16 %v10984
        %v11033 = vunpack.c.l.bf16 %v10985
        %v11034 = vunpack.c.l.bf16 %v10986
        %v11035 = vunpack.c.l.bf16 %v10987
        %v11036 = vunpack.c.l.bf16 %v10988
        %v11037 = vunpack.c.l.bf16 %v10989
        %v11038 = vunpack.c.l.bf16 %v10990
        %v11039 = vunpack.c.l.bf16 %v10991
        %v11040 = vunpack.c.l.bf16 %v10992
        %v11041 = vunpack.c.l.bf16 %v10993
        %v11042 = vunpack.c.l.bf16 %v10994
        %v11043 = vunpack.c.l.bf16 %v10995
        %v11044 = vunpack.c.l.bf16 %v10996
        %v11045 = vunpack.c.l.bf16 %v10997
        %v11046 = vunpack.c.l.bf16 %v10998
        %v11047 = vunpack.c.l.bf16 %v10999
        %v11048 = vunpack.c.l.bf16 %v11000
        %v11049 = vunpack.c.l.bf16 %v11001
        %v11050 = vunpack.c.l.bf16 %v11002
        %v11051 = vunpack.c.l.bf16 %v11003
        %v11052 = vunpack.c.l.bf16 %v11004
        %v11053 = vunpack.c.l.bf16 %v11005
        %v11054 = vunpack.c.l.bf16 %v11006
        %v11055 = vunpack.c.l.bf16 %v11007
        %v11056 = vunpack.c.l.bf16 %v11008
        %v11057 = vunpack.c.l.bf16 %v11009
        %v11058 = vunpack.c.l.bf16 %v11010
        %v11059 = vunpack.c.l.bf16 %v11011
        %v11060 = vunpack.c.l.bf16 %v11012
        %v11061 = vunpack.c.l.bf16 %v11013
        %v11062 = vunpack.c.l.bf16 %v11014
        %v11063 = vunpack.c.l.bf16 %v11015
        %v11064 = vunpack.c.l.bf16 %v11016
        %v11065 = vunpack.c.l.bf16 %v11017
        %v11066 = vunpack.c.l.bf16 %v11018
        %v11067 = vunpack.c.l.bf16 %v11019
        %v11068 = vunpack.c.l.bf16 %v11020
        %v11069 = vunpack.c.l.bf16 %v11021
        %v11070 = vunpack.c.l.bf16 %v11022
        %v11071 = vunpack.c.l.bf16 %v11023
        %v11072 = vunpack.c.l.bf16 %v11024
        %v11073 = vunpack.c.l.bf16 %v11025
        %v11074 = vunpack.c.l.bf16 %v11026
        %v11075 = vunpack.c.l.bf16 %v11027
        %vm11124 = vcmask 1046528
        %v11125 = vrot.slane %v11028, 1
        %v11126 = vrot.slane %v11029, 1
        %v11127 = vsel %vm11124, %v11125, %v11126
        %v11128 = vrot.slane %v11030, 1
        %v11129 = vsel %vm11124, %v11126, %v11128
        %v11130 = vrot.slane %v11031, 1
        %v11131 = vrot.slane %v11032, 1
        %v11132 = vsel %vm11124, %v11130, %v11131
        %v11133 = vrot.slane %v11033, 1
        %v11134 = vsel %vm11124, %v11131, %v11133
        %v11135 = vrot.slane %v11034, 1
        %v11136 = vrot.slane %v11035, 1
        %v11137 = vsel %vm11124, %v11135, %v11136
        %v11138 = vrot.slane %v11036, 1
        %v11139 = vsel %vm11124, %v11136, %v11138
        %v11140 = vrot.slane %v11037, 1
        %v11141 = vrot.slane %v11038, 1
        %v11142 = vsel %vm11124, %v11140, %v11141
        %v11143 = vrot.slane %v11039, 1
        %v11144 = vsel %vm11124, %v11141, %v11143
        %v11145 = vrot.slane %v11040, 1
        %v11146 = vrot.slane %v11041, 1
        %v11147 = vsel %vm11124, %v11145, %v11146
        %v11148 = vrot.slane %v11042, 1
        %v11149 = vsel %vm11124, %v11146, %v11148
        %v11150 = vrot.slane %v11043, 1
        %v11151 = vrot.slane %v11044, 1
        %v11152 = vsel %vm11124, %v11150, %v11151
        %v11153 = vrot.slane %v11045, 1
        %v11154 = vsel %vm11124, %v11151, %v11153
        %v11155 = vrot.slane %v11046, 1
        %v11156 = vrot.slane %v11047, 1
        %v11157 = vsel %vm11124, %v11155, %v11156
        %v11158 = vrot.slane %v11048, 1
        %v11159 = vsel %vm11124, %v11156, %v11158
        %v11160 = vrot.slane %v11049, 1
        %v11161 = vrot.slane %v11050, 1
        %v11162 = vsel %vm11124, %v11160, %v11161
        %v11163 = vrot.slane %v11051, 1
        %v11164 = vsel %vm11124, %v11161, %v11163
        %v11165 = vrot.slane %v11052, 1
        %v11166 = vrot.slane %v11053, 1
        %v11167 = vsel %vm11124, %v11165, %v11166
        %v11168 = vrot.slane %v11054, 1
        %v11169 = vsel %vm11124, %v11166, %v11168
        %v11170 = vrot.slane %v11055, 1
        %v11171 = vrot.slane %v11056, 1
        %v11172 = vsel %vm11124, %v11170, %v11171
        %v11173 = vrot.slane %v11057, 1
        %v11174 = vsel %vm11124, %v11171, %v11173
        %v11175 = vrot.slane %v11058, 1
        %v11176 = vrot.slane %v11059, 1
        %v11177 = vsel %vm11124, %v11175, %v11176
        %v11178 = vrot.slane %v11060, 1
        %v11179 = vsel %vm11124, %v11176, %v11178
        %v11180 = vrot.slane %v11061, 1
        %v11181 = vrot.slane %v11062, 1
        %v11182 = vsel %vm11124, %v11180, %v11181
        %v11183 = vrot.slane %v11063, 1
        %v11184 = vsel %vm11124, %v11181, %v11183
        %v11185 = vrot.slane %v11064, 1
        %v11186 = vrot.slane %v11065, 1
        %v11187 = vsel %vm11124, %v11185, %v11186
        %v11188 = vrot.slane %v11066, 1
        %v11189 = vsel %vm11124, %v11186, %v11188
        %v11190 = vrot.slane %v11067, 1
        %v11191 = vrot.slane %v11068, 1
        %v11192 = vsel %vm11124, %v11190, %v11191
        %v11193 = vrot.slane %v11069, 1
        %v11194 = vsel %vm11124, %v11191, %v11193
        %v11195 = vrot.slane %v11070, 1
        %v11196 = vrot.slane %v11071, 1
        %v11197 = vsel %vm11124, %v11195, %v11196
        %v11198 = vrot.slane %v11072, 1
        %v11199 = vsel %vm11124, %v11196, %v11198
        %v11200 = vrot.slane %v11073, 1
        %v11201 = vrot.slane %v11074, 1
        %v11202 = vsel %vm11124, %v11200, %v11201
        %v11203 = vrot.slane %v11075, 1
        %v11204 = vsel %vm11124, %v11201, %v11203
        %v11238 = vunpack.c.l.s4 1966171168
        %v11239 = vunpack.c.0.s8 %v11238
        %v11240 = vlaneseq
        %v11241 = vshrl.u32 %v11240, 7
        %v11242 = vsub.s32 %v11239, %v11241
        %v11243 = vrot.slane %v11127, %v11242
        %v11245 = vunpack.c.l.s4 1966171168
        %v11246 = vunpack.c.0.s8 %v11245
        %v11247 = vlaneseq
        %v11248 = vshrl.u32 %v11247, 7
        %v11249 = vsub.s32 %v11246, %v11248
        %v11250 = vrot.slane %v11129, %v11249
        %v11252 = vunpack.c.l.s4 1966171168
        %v11253 = vunpack.c.0.s8 %v11252
        %v11254 = vlaneseq
        %v11255 = vshrl.u32 %v11254, 7
        %v11256 = vsub.s32 %v11253, %v11255
        %v11257 = vrot.slane %v11132, %v11256
        %v11259 = vunpack.c.l.s4 1966171168
        %v11260 = vunpack.c.0.s8 %v11259
        %v11261 = vlaneseq
        %v11262 = vshrl.u32 %v11261, 7
        %v11263 = vsub.s32 %v11260, %v11262
        %v11264 = vrot.slane %v11134, %v11263
        %v11266 = vunpack.c.l.s4 1966171168
        %v11267 = vunpack.c.0.s8 %v11266
        %v11268 = vlaneseq
        %v11269 = vshrl.u32 %v11268, 7
        %v11270 = vsub.s32 %v11267, %v11269
        %v11271 = vrot.slane %v11137, %v11270
        %v11273 = vunpack.c.l.s4 1966171168
        %v11274 = vunpack.c.0.s8 %v11273
        %v11275 = vlaneseq
        %v11276 = vshrl.u32 %v11275, 7
        %v11277 = vsub.s32 %v11274, %v11276
        %v11278 = vrot.slane %v11139, %v11277
        %v11280 = vunpack.c.l.s4 1966171168
        %v11281 = vunpack.c.0.s8 %v11280
        %v11282 = vlaneseq
        %v11283 = vshrl.u32 %v11282, 7
        %v11284 = vsub.s32 %v11281, %v11283
        %v11285 = vrot.slane %v11142, %v11284
        %v11287 = vunpack.c.l.s4 1966171168
        %v11288 = vunpack.c.0.s8 %v11287
        %v11289 = vlaneseq
        %v11290 = vshrl.u32 %v11289, 7
        %v11291 = vsub.s32 %v11288, %v11290
        %v11292 = vrot.slane %v11144, %v11291
        %v11294 = vunpack.c.l.s4 1966171168
        %v11295 = vunpack.c.0.s8 %v11294
        %v11296 = vlaneseq
        %v11297 = vshrl.u32 %v11296, 7
        %v11298 = vsub.s32 %v11295, %v11297
        %v11299 = vrot.slane %v11147, %v11298
        %v11301 = vunpack.c.l.s4 1966171168
        %v11302 = vunpack.c.0.s8 %v11301
        %v11303 = vlaneseq
        %v11304 = vshrl.u32 %v11303, 7
        %v11305 = vsub.s32 %v11302, %v11304
        %v11306 = vrot.slane %v11149, %v11305
        %v11308 = vunpack.c.l.s4 1966171168
        %v11309 = vunpack.c.0.s8 %v11308
        %v11310 = vlaneseq
        %v11311 = vshrl.u32 %v11310, 7
        %v11312 = vsub.s32 %v11309, %v11311
        %v11313 = vrot.slane %v11152, %v11312
        %v11315 = vunpack.c.l.s4 1966171168
        %v11316 = vunpack.c.0.s8 %v11315
        %v11317 = vlaneseq
        %v11318 = vshrl.u32 %v11317, 7
        %v11319 = vsub.s32 %v11316, %v11318
        %v11320 = vrot.slane %v11154, %v11319
        %v11322 = vunpack.c.l.s4 1966171168
        %v11323 = vunpack.c.0.s8 %v11322
        %v11324 = vlaneseq
        %v11325 = vshrl.u32 %v11324, 7
        %v11326 = vsub.s32 %v11323, %v11325
        %v11327 = vrot.slane %v11157, %v11326
        %v11329 = vunpack.c.l.s4 1966171168
        %v11330 = vunpack.c.0.s8 %v11329
        %v11331 = vlaneseq
        %v11332 = vshrl.u32 %v11331, 7
        %v11333 = vsub.s32 %v11330, %v11332
        %v11334 = vrot.slane %v11159, %v11333
        %v11336 = vunpack.c.l.s4 1966171168
        %v11337 = vunpack.c.0.s8 %v11336
        %v11338 = vlaneseq
        %v11339 = vshrl.u32 %v11338, 7
        %v11340 = vsub.s32 %v11337, %v11339
        %v11341 = vrot.slane %v11162, %v11340
        %v11343 = vunpack.c.l.s4 1966171168
        %v11344 = vunpack.c.0.s8 %v11343
        %v11345 = vlaneseq
        %v11346 = vshrl.u32 %v11345, 7
        %v11347 = vsub.s32 %v11344, %v11346
        %v11348 = vrot.slane %v11164, %v11347
        %v11350 = vunpack.c.l.s4 1966171168
        %v11351 = vunpack.c.0.s8 %v11350
        %v11352 = vlaneseq
        %v11353 = vshrl.u32 %v11352, 7
        %v11354 = vsub.s32 %v11351, %v11353
        %v11355 = vrot.slane %v11167, %v11354
        %v11357 = vunpack.c.l.s4 1966171168
        %v11358 = vunpack.c.0.s8 %v11357
        %v11359 = vlaneseq
        %v11360 = vshrl.u32 %v11359, 7
        %v11361 = vsub.s32 %v11358, %v11360
        %v11362 = vrot.slane %v11169, %v11361
        %v11364 = vunpack.c.l.s4 1966171168
        %v11365 = vunpack.c.0.s8 %v11364
        %v11366 = vlaneseq
        %v11367 = vshrl.u32 %v11366, 7
        %v11368 = vsub.s32 %v11365, %v11367
        %v11369 = vrot.slane %v11172, %v11368
        %v11371 = vunpack.c.l.s4 1966171168
        %v11372 = vunpack.c.0.s8 %v11371
        %v11373 = vlaneseq
        %v11374 = vshrl.u32 %v11373, 7
        %v11375 = vsub.s32 %v11372, %v11374
        %v11376 = vrot.slane %v11174, %v11375
        %v11378 = vunpack.c.l.s4 1966171168
        %v11379 = vunpack.c.0.s8 %v11378
        %v11380 = vlaneseq
        %v11381 = vshrl.u32 %v11380, 7
        %v11382 = vsub.s32 %v11379, %v11381
        %v11383 = vrot.slane %v11177, %v11382
        %v11385 = vunpack.c.l.s4 1966171168
        %v11386 = vunpack.c.0.s8 %v11385
        %v11387 = vlaneseq
        %v11388 = vshrl.u32 %v11387, 7
        %v11389 = vsub.s32 %v11386, %v11388
        %v11390 = vrot.slane %v11179, %v11389
        %v11392 = vunpack.c.l.s4 1966171168
        %v11393 = vunpack.c.0.s8 %v11392
        %v11394 = vlaneseq
        %v11395 = vshrl.u32 %v11394, 7
        %v11396 = vsub.s32 %v11393, %v11395
        %v11397 = vrot.slane %v11182, %v11396
        %v11399 = vunpack.c.l.s4 1966171168
        %v11400 = vunpack.c.0.s8 %v11399
        %v11401 = vlaneseq
        %v11402 = vshrl.u32 %v11401, 7
        %v11403 = vsub.s32 %v11400, %v11402
        %v11404 = vrot.slane %v11184, %v11403
        %v11406 = vunpack.c.l.s4 1966171168
        %v11407 = vunpack.c.0.s8 %v11406
        %v11408 = vlaneseq
        %v11409 = vshrl.u32 %v11408, 7
        %v11410 = vsub.s32 %v11407, %v11409
        %v11411 = vrot.slane %v11187, %v11410
        %v11413 = vunpack.c.l.s4 1966171168
        %v11414 = vunpack.c.0.s8 %v11413
        %v11415 = vlaneseq
        %v11416 = vshrl.u32 %v11415, 7
        %v11417 = vsub.s32 %v11414, %v11416
        %v11418 = vrot.slane %v11189, %v11417
        %v11420 = vunpack.c.l.s4 1966171168
        %v11421 = vunpack.c.0.s8 %v11420
        %v11422 = vlaneseq
        %v11423 = vshrl.u32 %v11422, 7
        %v11424 = vsub.s32 %v11421, %v11423
        %v11425 = vrot.slane %v11192, %v11424
        %v11427 = vunpack.c.l.s4 1966171168
        %v11428 = vunpack.c.0.s8 %v11427
        %v11429 = vlaneseq
        %v11430 = vshrl.u32 %v11429, 7
        %v11431 = vsub.s32 %v11428, %v11430
        %v11432 = vrot.slane %v11194, %v11431
        %v11434 = vunpack.c.l.s4 1966171168
        %v11435 = vunpack.c.0.s8 %v11434
        %v11436 = vlaneseq
        %v11437 = vshrl.u32 %v11436, 7
        %v11438 = vsub.s32 %v11435, %v11437
        %v11439 = vrot.slane %v11197, %v11438
        %v11441 = vunpack.c.l.s4 1966171168
        %v11442 = vunpack.c.0.s8 %v11441
        %v11443 = vlaneseq
        %v11444 = vshrl.u32 %v11443, 7
        %v11445 = vsub.s32 %v11442, %v11444
        %v11446 = vrot.slane %v11199, %v11445
        %v11448 = vunpack.c.l.s4 1966171168
        %v11449 = vunpack.c.0.s8 %v11448
        %v11450 = vlaneseq
        %v11451 = vshrl.u32 %v11450, 7
        %v11452 = vsub.s32 %v11449, %v11451
        %v11453 = vrot.slane %v11202, %v11452
        %v11455 = vunpack.c.l.s4 1966171168
        %v11456 = vunpack.c.0.s8 %v11455
        %v11457 = vlaneseq
        %v11458 = vshrl.u32 %v11457, 7
        %v11459 = vsub.s32 %v11456, %v11458
        %v11460 = vrot.slane %v11204, %v11459
        %v11493 = vrot.slane %v11243, 4
        %v11494 = vrot.slane %v11250, 4
        %v11495 = vrot.slane %v11257, 4
        %v11496 = vrot.slane %v11264, 4
        %v11497 = vrot.slane %v11271, 4
        %v11498 = vrot.slane %v11278, 4
        %v11499 = vrot.slane %v11285, 4
        %v11500 = vrot.slane %v11292, 4
        %v11501 = vrot.slane %v11299, 4
        %v11502 = vrot.slane %v11306, 4
        %v11503 = vrot.slane %v11313, 4
        %v11504 = vrot.slane %v11320, 4
        %v11505 = vrot.slane %v11327, 4
        %v11506 = vrot.slane %v11334, 4
        %v11507 = vrot.slane %v11341, 4
        %v11508 = vrot.slane %v11348, 4
        %v11509 = vrot.slane %v11355, 4
        %v11510 = vrot.slane %v11362, 4
        %v11511 = vrot.slane %v11369, 4
        %v11512 = vrot.slane %v11376, 4
        %v11513 = vrot.slane %v11383, 4
        %v11514 = vrot.slane %v11390, 4
        %v11515 = vrot.slane %v11397, 4
        %v11516 = vrot.slane %v11404, 4
        %v11517 = vrot.slane %v11411, 4
        %v11518 = vrot.slane %v11418, 4
        %v11519 = vrot.slane %v11425, 4
        %v11520 = vrot.slane %v11432, 4
        %v11521 = vrot.slane %v11439, 4
        %v11522 = vrot.slane %v11446, 4
        %v11523 = vrot.slane %v11453, 4
        %v11524 = vrot.slane %v11460, 4
        %v11557 = vadd.f32 %v11243, %v11493
        %v11558 = vadd.f32 %v11250, %v11494
        %v11559 = vadd.f32 %v11257, %v11495
        %v11560 = vadd.f32 %v11264, %v11496
        %v11561 = vadd.f32 %v11271, %v11497
        %v11562 = vadd.f32 %v11278, %v11498
        %v11563 = vadd.f32 %v11285, %v11499
        %v11564 = vadd.f32 %v11292, %v11500
        %v11565 = vadd.f32 %v11299, %v11501
        %v11566 = vadd.f32 %v11306, %v11502
        %v11567 = vadd.f32 %v11313, %v11503
        %v11568 = vadd.f32 %v11320, %v11504
        %v11569 = vadd.f32 %v11327, %v11505
        %v11570 = vadd.f32 %v11334, %v11506
        %v11571 = vadd.f32 %v11341, %v11507
        %v11572 = vadd.f32 %v11348, %v11508
        %v11573 = vadd.f32 %v11355, %v11509
        %v11574 = vadd.f32 %v11362, %v11510
        %v11575 = vadd.f32 %v11369, %v11511
        %v11576 = vadd.f32 %v11376, %v11512
        %v11577 = vadd.f32 %v11383, %v11513
        %v11578 = vadd.f32 %v11390, %v11514
        %v11579 = vadd.f32 %v11397, %v11515
        %v11580 = vadd.f32 %v11404, %v11516
        %v11581 = vadd.f32 %v11411, %v11517
        %v11582 = vadd.f32 %v11418, %v11518
        %v11583 = vadd.f32 %v11425, %v11519
        %v11584 = vadd.f32 %v11432, %v11520
        %v11585 = vadd.f32 %v11439, %v11521
        %v11586 = vadd.f32 %v11446, %v11522
        %v11587 = vadd.f32 %v11453, %v11523
        %v11588 = vadd.f32 %v11460, %v11524
        %v11589 = vadd.f32 %v11557, %v11559
        %v11590 = vadd.f32 %v11558, %v11560
        %v11591 = vadd.f32 %v11561, %v11563
        %v11592 = vadd.f32 %v11562, %v11564
        %v11593 = vadd.f32 %v11565, %v11567
        %v11594 = vadd.f32 %v11566, %v11568
        %v11595 = vadd.f32 %v11569, %v11571
        %v11596 = vadd.f32 %v11570, %v11572
        %v11597 = vadd.f32 %v11573, %v11575
        %v11598 = vadd.f32 %v11574, %v11576
        %v11599 = vadd.f32 %v11577, %v11579
        %v11600 = vadd.f32 %v11578, %v11580
        %v11601 = vadd.f32 %v11581, %v11583
        %v11602 = vadd.f32 %v11582, %v11584
        %v11603 = vadd.f32 %v11585, %v11587
        %v11604 = vadd.f32 %v11586, %v11588
        %v11605 = vmul.f32 %v11589, 0.25
        %v11606 = vmul.f32 %v11590, 0.25
        %v11607 = vmul.f32 %v11591, 0.25
        %v11608 = vmul.f32 %v11592, 0.25
        %v11609 = vmul.f32 %v11593, 0.25
        %v11610 = vmul.f32 %v11594, 0.25
        %v11611 = vmul.f32 %v11595, 0.25
        %v11612 = vmul.f32 %v11596, 0.25
        %v11613 = vmul.f32 %v11597, 0.25
        %v11614 = vmul.f32 %v11598, 0.25
        %v11615 = vmul.f32 %v11599, 0.25
        %v11616 = vmul.f32 %v11600, 0.25
        %v11617 = vmul.f32 %v11601, 0.25
        %v11618 = vmul.f32 %v11602, 0.25
        %v11619 = vmul.f32 %v11603, 0.25
        %v11620 = vmul.f32 %v11604, 0.25
        %v11637 = vcombine.low %v11605, %v11606
        %v11638 = vcombine.low %v11607, %v11608
        %v11639 = vcombine.low %v11609, %v11610
        %v11640 = vcombine.low %v11611, %v11612
        %v11641 = vcombine.low %v11613, %v11614
        %v11642 = vcombine.low %v11615, %v11616
        %v11643 = vcombine.low %v11617, %v11618
        %v11644 = vcombine.low %v11619, %v11620
        %v11653 = vpack.c.bf16 %v11638, %v11637
        %v11654 = vpack.c.bf16 %v11640, %v11639
        %v11655 = vpack.c.bf16 %v11642, %v11641
        %v11656 = vpack.c.bf16 %v11644, %v11643
        %v11657 = vld [vmem:[%s3] sm:$0xf]
        %v11658 = vld [vmem:[%s3 + $0x4] sm:$0xf]
        %v11659 = vld [vmem:[%s3 + $0x8] sm:$0xf]
        %v11660 = vld [vmem:[%s3 + $0xc] sm:$0xf]
        %v11661 = vld [vmem:[%s3 + $0x10] sm:$0xf]
        %v11662 = vld [vmem:[%s3 + $0x14] sm:$0xf]
        %v11663 = vld [vmem:[%s3 + $0x18] sm:$0xf]
        %v11664 = vld [vmem:[%s3 + $0x1c] sm:$0xf]
        %v11665 = vld [vmem:[%s3 + $0x20] sm:$0xf]
        %v11666 = vld [vmem:[%s3 + $0x24] sm:$0xf]
        %v11667 = vld [vmem:[%s3 + $0x28] sm:$0xf]
        %v11668 = vld [vmem:[%s3 + $0x2c] sm:$0xf]
        %v11669 = vld [vmem:[%s3 + $0x30] sm:$0xf]
        %v11670 = vld [vmem:[%s3 + $0x34] sm:$0xf]
        %v11671 = vld [vmem:[%s3 + $0x38] sm:$0xf]
        %v11672 = vld [vmem:[%s3 + $0x3c] sm:$0xf]
        %v11689 = vunpack.c.l.b16 %v11657
        %v11690 = vunpack.c.l.b16 %v11658
        %v11691 = vunpack.c.l.b16 %v11659
        %v11692 = vunpack.c.l.b16 %v11660
        %v11693 = vunpack.c.l.b16 %v11661
        %v11694 = vunpack.c.l.b16 %v11662
        %v11695 = vunpack.c.l.b16 %v11663
        %v11696 = vunpack.c.l.b16 %v11664
        %v11697 = vunpack.c.l.b16 %v11665
        %v11698 = vunpack.c.l.b16 %v11666
        %v11699 = vunpack.c.l.b16 %v11667
        %v11700 = vunpack.c.l.b16 %v11668
        %v11701 = vunpack.c.l.b16 %v11669
        %v11702 = vunpack.c.l.b16 %v11670
        %v11703 = vunpack.c.l.b16 %v11671
        %v11704 = vunpack.c.l.b16 %v11672
        %v11705 = vpack.c.b16 %v11690, %v11689
        %v11706 = vpack.c.b16 %v11692, %v11691
        %v11707 = vpack.c.b16 %v11694, %v11693
        %v11708 = vpack.c.b16 %v11696, %v11695
        %v11709 = vpack.c.b16 %v11698, %v11697
        %v11710 = vpack.c.b16 %v11700, %v11699
        %v11711 = vpack.c.b16 %v11702, %v11701
        %v11712 = vpack.c.b16 %v11704, %v11703
        %11721 = vmatprep.subr.bf16.mxu0 0
        %11722 = vmatpush1.bf16.msra.mxu0 %v11705
        %11723 = vmatprep.subr.bf16.mxu0 0
        %11724 = vmatpush1.bf16.msra.mxu0 %v11706
        %11725 = vmatprep.subr.bf16.mxu0 0
        %11726 = vmatpush1.bf16.msra.mxu0 %v11707
        %11727 = vmatprep.subr.bf16.mxu0 0
        %11728 = vmatpush1.bf16.msra.mxu0 %v11708
        %11729 = vmatprep.subr.bf16.mxu0 0
        %11730 = vmatpush1.bf16.msra.mxu0 %v11709
        %11731 = vmatprep.subr.bf16.mxu0 0
        %11732 = vmatpush1.bf16.msra.mxu0 %v11710
        %11733 = vmatprep.subr.bf16.mxu0 0
        %11734 = vmatpush1.bf16.msra.mxu0 %v11711
        %11735 = vmatprep.subr.bf16.mxu0 0
        %11736 = vmatpush1.bf16.msra.mxu0 %v11712
        %11737 = vmatprep.subr.bf16.mxu0 0
        %11738 = vmatpush1.bf16.msra.mxu0 0
        %11739 = vmatprep.subr.bf16.mxu0 0
        %11740 = vmatpush1.bf16.msra.mxu0 0
        %11741 = vmatprep.subr.bf16.mxu0 0
        %11742 = vmatpush1.bf16.msra.mxu0 0
        %11743 = vmatprep.subr.bf16.mxu0 0
        %11744 = vmatpush1.bf16.msra.mxu0 0
        %11745 = vmatprep.subr.bf16.mxu0 0
        %11746 = vmatpush1.bf16.msra.mxu0 0
        %11747 = vmatprep.subr.bf16.mxu0 0
        %11748 = vmatpush1.bf16.msra.mxu0 0
        %11749 = vmatprep.subr.bf16.mxu0 0
        %11750 = vmatpush1.bf16.msra.mxu0 0
        %11751 = vmatprep.subr.bf16.mxu0 0
        %11752 = vmatpush1.bf16.msra.mxu0 0
        %11753 = vmatprep.mubr.bf16.mxu0 0
        %11754 = vmatmul.mubr.bf16.gmra.mrb[0].mxu0 %v11653
        %v11755 = vpop.f32.mrb[0].mxu0
        %v11756 = vadd.f32 0.0, %v11755
        %v11757 = vpop.f32.mrb[0].mxu0
        %v11758 = vpop.f32.mrb[0].mxu0
        %v11759 = vadd.f32 0.0, %v11758
        %v11760 = vpop.f32.mrb[0].mxu0
        %11761 = vmatprep.mubr.bf16.mxu0 0
        %11762 = vmatmul.mubr.bf16.gmra.mrb[0].mxu0 %v11654
        %v11763 = vpop.f32.mrb[0].mxu0
        %v11764 = vadd.f32 0.0, %v11763
        %v11765 = vpop.f32.mrb[0].mxu0
        %v11766 = vpop.f32.mrb[0].mxu0
        %v11767 = vadd.f32 0.0, %v11766
        %v11768 = vpop.f32.mrb[0].mxu0
        %11769 = vmatprep.mubr.bf16.mxu0 0
        %11770 = vmatmul.mubr.bf16.gmra.mrb[0].mxu0 %v11655
        %v11771 = vpop.f32.mrb[0].mxu0
        %v11772 = vadd.f32 0.0, %v11771
        %v11773 = vpop.f32.mrb[0].mxu0
        %v11774 = vpop.f32.mrb[0].mxu0
        %v11775 = vadd.f32 0.0, %v11774
        %v11776 = vpop.f32.mrb[0].mxu0
        %11777 = vmatprep.mubr.bf16.mxu0 0
        %11778 = vmatmul.mubr.bf16.gmra.mrb[0].mxu0 %v11656
        %v11779 = vpop.f32.mrb[0].mxu0
        %v11780 = vadd.f32 0.0, %v11779
        %v11781 = vpop.f32.mrb[0].mxu0
        %v11782 = vpop.f32.mrb[0].mxu0
        %v11783 = vadd.f32 0.0, %v11782
        %v11784 = vpop.f32.mrb[0].mxu0
        %11785 = vdwg.mxu0
        %v11786 = vld [vmem:[%s254 + $0x1] sm:$0x1]
        %v11787 = vlaneseq
        %v11788 = vshrl.u32 %v11787, 7
        %v11789 = vsub.s32 0, %v11788
        %v11790 = vrot.slane %v11786, %v11789
        %v11792 = vcombine.high %v11790, %v11790
        %v11794 = vmul.f32 %v10964, %v11790
        %v11795 = vmul.f32 %v10965, %v11792
        %v11796 = vmul.f32 %v10966, %v11790
        %v11797 = vmul.f32 %v10967, %v11792
        %v11798 = vmul.f32 %v10968, %v11790
        %v11799 = vmul.f32 %v10969, %v11792
        %v11800 = vmul.f32 %v10970, %v11790
        %v11801 = vmul.f32 %v10971, %v11792
        %v11802 = vmul.f32 %v10972, %v11790
        %v11803 = vmul.f32 %v10973, %v11792
        %v11804 = vmul.f32 %v10974, %v11790
        %v11805 = vmul.f32 %v10975, %v11792
        %v11806 = vmul.f32 %v10976, %v11790
        %v11807 = vmul.f32 %v10977, %v11792
        %v11808 = vmul.f32 %v10978, %v11790
        %v11809 = vmul.f32 %v10979, %v11792
        %v11810 = vld [vmem:[%s254 + $0x3] sm:$0x1]
        %v11811 = vlaneseq
        %v11812 = vshrl.u32 %v11811, 7
        %v11813 = vsub.s32 0, %v11812
        %v11814 = vrot.slane %v11810, %v11813
        %v11816 = vcombine.high %v11814, %v11814
        %v11818 = vadd.f32 %v11794, %v11814
        %v11819 = vadd.f32 %v11795, %v11816
        %v11820 = vadd.f32 %v11796, %v11814
        %v11821 = vadd.f32 %v11797, %v11816
        %v11822 = vadd.f32 %v11798, %v11814
        %v11823 = vadd.f32 %v11799, %v11816
        %v11824 = vadd.f32 %v11800, %v11814
        %v11825 = vadd.f32 %v11801, %v11816
        %v11826 = vadd.f32 %v11802, %v11814
        %v11827 = vadd.f32 %v11803, %v11816
        %v11828 = vadd.f32 %v11804, %v11814
        %v11829 = vadd.f32 %v11805, %v11816
        %v11830 = vadd.f32 %v11806, %v11814
        %v11831 = vadd.f32 %v11807, %v11816
        %v11832 = vadd.f32 %v11808, %v11814
        %v11833 = vadd.f32 %v11809, %v11816
        %v11842 = vcombine.high %v11756, %v11756
        %v11843 = vcombine.high %v11759, %v11759
        %v11844 = vcombine.high %v11764, %v11764
        %v11845 = vcombine.high %v11767, %v11767
        %v11846 = vcombine.high %v11772, %v11772
        %v11847 = vcombine.high %v11775, %v11775
        %v11848 = vcombine.high %v11780, %v11780
        %v11849 = vcombine.high %v11783, %v11783
        %v11858 = vadd.f32 %v11818, %v11756
        %v11859 = vadd.f32 %v11819, %v11842
        %v11860 = vadd.f32 %v11820, %v11759
        %v11861 = vadd.f32 %v11821, %v11843
        %v11862 = vadd.f32 %v11822, %v11764
        %v11863 = vadd.f32 %v11823, %v11844
        %v11864 = vadd.f32 %v11824, %v11767
        %v11865 = vadd.f32 %v11825, %v11845
        %v11866 = vadd.f32 %v11826, %v11772
        %v11867 = vadd.f32 %v11827, %v11846
        %v11868 = vadd.f32 %v11828, %v11775
        %v11869 = vadd.f32 %v11829, %v11847
        %v11870 = vadd.f32 %v11830, %v11780
        %v11871 = vadd.f32 %v11831, %v11848
        %v11872 = vadd.f32 %v11832, %v11783
        %v11873 = vadd.f32 %v11833, %v11849
        %v11874 = vmul.f32 %v11858, 0.2
        %v11875 = vmul.f32 %v11859, 0.2
        %v11876 = vmul.f32 %v11860, 0.2
        %v11877 = vmul.f32 %v11861, 0.2
        %v11878 = vmul.f32 %v11862, 0.2
        %v11879 = vmul.f32 %v11863, 0.2
        %v11880 = vmul.f32 %v11864, 0.2
        %v11881 = vmul.f32 %v11865, 0.2
        %v11882 = vmul.f32 %v11866, 0.2
        %v11883 = vmul.f32 %v11867, 0.2
        %v11884 = vmul.f32 %v11868, 0.2
        %v11885 = vmul.f32 %v11869, 0.2
        %v11886 = vmul.f32 %v11870, 0.2
        %v11887 = vmul.f32 %v11871, 0.2
        %v11888 = vmul.f32 %v11872, 0.2
        %v11889 = vmul.f32 %v11873, 0.2
        %v11890 = vmax.f32 %v11858, %v11874
        %v11891 = vmax.f32 %v11859, %v11875
        %v11892 = vmax.f32 %v11860, %v11876
        %v11893 = vmax.f32 %v11861, %v11877
        %v11894 = vmax.f32 %v11862, %v11878
        %v11895 = vmax.f32 %v11863, %v11879
        %v11896 = vmax.f32 %v11864, %v11880
        %v11897 = vmax.f32 %v11865, %v11881
        %v11898 = vmax.f32 %v11866, %v11882
        %v11899 = vmax.f32 %v11867, %v11883
        %v11900 = vmax.f32 %v11868, %v11884
        %v11901 = vmax.f32 %v11869, %v11885
        %v11902 = vmax.f32 %v11870, %v11886
        %v11903 = vmax.f32 %v11871, %v11887
        %v11904 = vmax.f32 %v11872, %v11888
        %v11905 = vmax.f32 %v11873, %v11889
        %v11922 = vcombine.low %v11890, %v11891
        %v11923 = vcombine.low %v11892, %v11893
        %v11924 = vcombine.low %v11894, %v11895
        %v11925 = vcombine.low %v11896, %v11897
        %v11926 = vcombine.low %v11898, %v11899
        %v11927 = vcombine.low %v11900, %v11901
        %v11928 = vcombine.low %v11902, %v11903
        %v11929 = vcombine.low %v11904, %v11905
        %11938 = vst [vmem:[%s245] sm:$0xff] %v11922
        %11939 = vst [vmem:[%s245 + $0x8] sm:$0xff] %v11923
        %11940 = vst [vmem:[%s245 + $0x10] sm:$0xff] %v11924
        %11941 = vst [vmem:[%s245 + $0x18] sm:$0xff] %v11925
        %11942 = vst [vmem:[%s245 + $0x20] sm:$0xff] %v11926
        %11943 = vst [vmem:[%s245 + $0x28] sm:$0xff] %v11927
        %11944 = vst [vmem:[%s245 + $0x30] sm:$0xff] %v11928
        %11945 = vst [vmem:[%s245 + $0x38] sm:$0xff] %v11929
        %s11946 = sand.u32 %s143, 1
        %s11947 = scalar_lea.sflag [#allocation5], %s11946
        %s11948 = sand.u32 %s143, 1
        %s11949 = smul.addr %s11948, 64
        %s11950 = scalar_lea.vmem [#allocation6], %s11949
        // Predicated region
        $region45: #{tpu_custom_call.1} parent=39 // pred_check
          %p11951 = pneg %p153
        $region46: #{tpu_custom_call.1} parent=39 // pred_check_branch
          %11953 = sbr.rel (%p11951) target = $region48
        $region47: #{tpu_custom_call.1} parent=39 // pred_region
          %s11955 = ssub.s32 1024, 1024
          %11956 = vsyncadd %s11947, %s11955
          %s11957 = smul.addr %s20, 8
          %s11958 = smul.addr %s11957, 128
          %s11959 = scalar_lea.hbm %s5, %s11958
          %s11960 = sshll.u32 %s11950, 4
          %s11961 = int_to_ptr.vmem [resolvable:$true] %s11960
          %11966 = dma.vmem_to_hbm [thread:$0]  %s11961, 1024, %s11959, %s11947, 128, 128, 8
        $region48: #{tpu_custom_call.1} parent=39 // pred_fallthru
          _
      $region40: #{tpu_custom_call.1} parent=5 // pred_fallthru
        _
      %p11967 = scmp.le.s32.totalorder 2, %s15
      // Predicated region
      $region49: #{tpu_custom_call.1} parent=5 // pred_check
        %p11968 = pneg %p11967
      $region50: #{tpu_custom_call.1} parent=5 // pred_check_branch
        %11970 = sbr.rel (%p11968) target = $region52
      $region51: #{tpu_custom_call.1} parent=5 // pred_region
        %s11971 = ssub.s32 %s15, 2
        // Predicated region
        $region53: #{tpu_custom_call.1} parent=51 // pred_check
          %p11972 = pneg %p159
        $region54: #{tpu_custom_call.1} parent=51 // pred_check_branch
          %11974 = sbr.rel (%p11972) target = $region56
        $region55: #{tpu_custom_call.1} parent=51 // pred_region
          %s11975 = sand.u32 %s144, 1
          %s11976 = scalar_lea.sflag [#allocation5], %s11975
          %s11977 = sand.u32 %s144, 1
          %s11978 = smul.addr %s11977, 64
          %s11979 = scalar_lea.vmem [#allocation6], %s11978
          %11980 = dma.done %s11976, 1024
        $region56: #{tpu_custom_call.1} parent=51 // pred_fallthru
          _
      $region52: #{tpu_custom_call.1} parent=5 // pred_fallthru
        _
    $region6: #{tpu_custom_call.1} parent=1 // loop_footer
      %s19 = sadd.s32 1, %s15
    $region7: #{tpu_custom_call.1} parent=1 // loop_footer_branch
      %14 = sbr.rel target = $region3
    $region8: #{tpu_custom_call.1} parent=1 // loop_exit
      _
    %11981 = vsyncpa [#allocation4], 1
    %s11982 = scalar_lea.sflag [#allocation4], 1
    %11983 = vsyncpa %s11982, 1
    %11984 = vsyncpa [#allocation5], 1
    %s11985 = scalar_lea.sflag [#allocation5], 1
    %11986 = vsyncpa %s11985, 1

</llo_original>
